<compile_context>
chip_gen: v7x
topology: tpu7x:2x2x1
jax: 0.10.0
libtpu: 0.0.40
codegen_flags: <defaults>
</compile_context>

<pallas_src>
import functools

import numpy as np

import jax
import jax.numpy as jnp
from jax.experimental import pallas as pl
from jax.experimental.pallas import tpu as pltpu


def _ceil8(n):
    return ((n + 7) // 8) * 8


# ----------------------------------------------------------------------------
# Kernel
# ----------------------------------------------------------------------------
def _cnn2d_mlp_kernel(x_ref, *refs, n_conv, n_mlp, vec_meta):
    """Whole CNN2DNet forward (eval mode) in one kernel invocation.

    Ref layout after x_ref (all full-array VMEM refs):
      per conv block : S_cat (n_out_pad, KK*n_in_pad)  bf16 (pool of the
                       previous block folded in)
                       W_bd  (KK, B*Ci, B*Co)          f32 (BN scale folded in,
                       block-diagonal over batch)
      Mw'            : (H_last, n_last_pad)            f32 (last pool folded in)
      per MLP layer  : W (d_in, d_out)                 f32
      vecs           : (n_vec, max_len) packed BN shifts + MLP biases
      o_ref          : (B, output_size)
    """
    idx = 0
    conv_refs = []
    for _ in range(n_conv):
        conv_refs.append((refs[idx], refs[idx + 1]))
        idx += 2
    mw_ref = refs[idx]; idx += 1
    mlp_w_refs = list(refs[idx:idx + n_mlp]); idx += n_mlp
    vec_ref = refs[idx]; idx += 1
    o_ref = refs[idx]

    batch = o_ref.shape[0]

    # ---- conv blocks: channel mix -> fused spatial gather -> +shift -> ReLU
    a = x_ref[...]                                     # (n_in_pad, B*Ci)  f32
    for li, (s_ref, w_ref) in enumerate(conv_refs):
        kk = w_ref.shape[0]
        # Per-tap channel mix (batch block-diagonal), then a sublane-aligned
        # vertical concat so the spatial gather is a SINGLE big-K MXU matmul.
        z = jnp.concatenate(
            [jnp.dot(a, w_ref[t], preferred_element_type=jnp.float32)
             for t in range(kk)], axis=0)              # (KK*n_in_pad, B*Co)
        s = s_ref[...].astype(jnp.float32)             # bf16 in VMEM, f32 compute
        acc = jnp.dot(s, z, preferred_element_type=jnp.float32)
        row, length = vec_meta[li]
        shift = vec_ref[row:row + 1, 0:length]         # (1, B*Co) BN shift (batch-tiled)
        a = jnp.maximum(acc + shift, 0.0)
        # Dropout: identity at inference.

    # ---- head: mean over W (last pool folded in), then max+mean over H
    g = jnp.dot(mw_ref[...], a, preferred_element_type=jnp.float32)  # (H_last, B*C_last)
    c_last = g.shape[1] // batch
    heads = []
    for b in range(batch):                             # tiny static batch
        gb = g[:, b * c_last:(b + 1) * c_last]         # (H_last, C_last)
        heads.append(jnp.max(gb, axis=0, keepdims=True) +
                     jnp.mean(gb, axis=0, keepdims=True))
    m = jnp.concatenate(heads, axis=0)                 # (B, C_last)

    # ---- MLP head: [Linear -> ReLU -> Dropout(identity)]* -> Linear
    for i, w_ref in enumerate(mlp_w_refs):
        row, length = vec_meta[n_conv + i]
        bias = vec_ref[row:row + 1, 0:length]
        m = jnp.dot(m, w_ref[...], preferred_element_type=jnp.float32) + bias
        if i != n_mlp - 1:
            m = jnp.maximum(m, 0.0)
    o_ref[...] = m.astype(o_ref.dtype)


# ----------------------------------------------------------------------------
# Host-side helpers: selection / pooling matrices (static per shape, exact)
# ----------------------------------------------------------------------------
def _build_shift_matrices(h, w, k, stride):
    """S[t, i*Wo+j, (i*s+kh)*W + (j*s+kw)] = 1 (valid padding), t = kh*k+kw."""
    ho = (h - k) // stride + 1
    wo = (w - k) // stride + 1
    s = np.zeros((k * k, ho * wo, h * w), np.float32)
    for kh in range(k):
        for kw in range(k):
            t = kh * k + kw
            for i in range(ho):
                for j in range(wo):
                    s[t, i * wo + j, (i * stride + kh) * w + (j * stride + kw)] = 1.0
    return s, ho, wo


def _build_avgpool_matrix(h, w):
    """AvgPool2d(2,2), floor semantics: P[(i,j), (2i+di, 2j+dj)] = 0.25."""
    hp, wp = h // 2, w // 2
    p = np.zeros((hp * wp, h * w), np.float32)
    for i in range(hp):
        for j in range(wp):
            for di in range(2):
                for dj in range(2):
                    p[i * wp + j, (2 * i + di) * w + (2 * j + dj)] = 0.25
    return p, hp, wp


def _build_wmean_matrix(h, w):
    """Mw[i, i*W + j] = 1/W  (mean over width)."""
    m = np.zeros((h, h * w), np.float32)
    rows = np.arange(h)[:, None]
    m[rows, rows * w + np.arange(w)[None, :]] = 1.0 / w
    return m


# ----------------------------------------------------------------------------
# Forward wrapper
# ----------------------------------------------------------------------------
def cnn2d_net_forward(x, conv_params, mlp_params, *, global_pooling="mean",
                      bn_eps=1e-5):
    """CNN2DNet forward (eval).  x: (B, H, W); channel dim added as in module."""
    if global_pooling != "mean":
        raise NotImplementedError("only global_pooling='mean' is supported")

    batch, h, w = x.shape
    c = 1                                       # x.unsqueeze(1)

    # Input activation: (HW_pad, B) — spatial on sublanes, batch on lanes.
    n_in = h * w
    n_in_pad = _ceil8(n_in)
    a0 = jnp.transpose(jnp.asarray(x, jnp.float32).reshape(batch, n_in))
    a0 = jnp.pad(a0, ((0, n_in_pad - n_in), (0, 0)))

    operands = [a0]
    vec_rows = []                               # small vectors, packed later
    vec_meta = []                               # (row_index, valid_length)
    flops = 0

    cur_h, cur_w = h, w                         # grid the next conv sees (post-pool)
    p_prev = None                               # pool matrix of the previous block
    for (cw, gamma, beta, rmean, rvar, stride) in conv_params:
        cw = np.asarray(cw, np.float32)
        c_out, c_in, k, _ = cw.shape
        assert c_in == c, "conv in_channels mismatch"
        kk = k * k

        # BN (eval) folding: scale into the conv weights, shift kept as bias.
        scale = np.asarray(gamma, np.float32) / np.sqrt(
            np.asarray(rvar, np.float32) + bn_eps)
        shift = np.asarray(beta, np.float32) - np.asarray(rmean, np.float32) * scale

        # Tap-selection matrices on this block's input grid, with the previous
        # block's AvgPool folded in; concatenated along the contraction dim and
        # zero-padded so every tap slab is 8-row aligned.
        s_taps, ho, wo = _build_shift_matrices(cur_h, cur_w, k, stride)
        if p_prev is not None:
            s_taps = s_taps @ p_prev            # (KK, HoWo, n_in_prev_prepool)
        n_out = ho * wo
        n_out_pad = _ceil8(n_out)
        s_cat = np.zeros((n_out_pad, kk * n_in_pad), np.float32)
        for t in range(kk):
            s_cat[:n_out, t * n_in_pad:t * n_in_pad + n_in] = s_taps[t]
        operands.append(jnp.asarray(s_cat, jnp.bfloat16))  # {0,1,0.25^k}: exact in bf16

        # Per-tap, batch-block-diagonal, BN-scaled conv weights (OIHW -> taps).
        w_taps = (np.transpose(cw, (2, 3, 1, 0)).reshape(kk, c_in, c_out)
                  * scale[None, None, :])
        w_bd = np.zeros((kk, batch * c_in, batch * c_out), np.float32)
        for t in range(kk):
            for bb in range(batch):
                w_bd[t, bb * c_in:(bb + 1) * c_in,
                     bb * c_out:(bb + 1) * c_out] = w_taps[t]
        operands.append(jnp.asarray(w_bd))

        vec_meta.append((len(vec_rows), batch * c_out))
        vec_rows.append(np.tile(shift, batch))

        flops += kk * 2 * n_in_pad * (batch * c_in) * (batch * c_out)
        flops += 2 * n_out_pad * (kk * n_in_pad) * (batch * c_out)

        # Pool matrix of THIS block (folded into the next S / into Mw).
        p_prev, hp, wp = _build_avgpool_matrix(ho, wo)
        c, cur_h, cur_w = c_out, hp, wp
        n_in, n_in_pad = n_out, n_out_pad

    # Global mean over W of the pooled last block, with the last pool folded in.
    mw = _build_wmean_matrix(cur_h, cur_w)
    if p_prev is not None:
        mw = mw @ p_prev                        # (H_last, n_last_prepool)
    mw_pad = np.zeros((cur_h, n_in_pad), np.float32)
    mw_pad[:, :n_in] = mw
    operands.append(jnp.asarray(mw_pad))
    flops += 2 * cur_h * n_in_pad * (batch * c)

    assert mlp_params[0][0].shape[0] == c, "mlp_input must equal last conv channels"
    for (wl, bl) in mlp_params:
        wl = np.asarray(wl, np.float32)
        operands.append(jnp.asarray(wl))
        vec_meta.append((len(vec_rows), wl.shape[1]))
        vec_rows.append(np.asarray(bl, np.float32))
        flops += 2 * batch * wl.shape[0] * wl.shape[1]
    out_size = mlp_params[-1][0].shape[1]

    # Pack all tiny vectors (BN shifts + MLP biases) into a single operand.
    max_len = max(v.shape[0] for v in vec_rows)
    vecs = np.zeros((len(vec_rows), max_len), np.float32)
    for i, v in enumerate(vec_rows):
        vecs[i, :v.shape[0]] = v
    operands.append(jnp.asarray(vecs))

    bytes_accessed = sum(int(np.prod(op.shape)) * op.dtype.itemsize
                         for op in operands) + batch * out_size * 4

    kernel = functools.partial(
        _cnn2d_mlp_kernel, n_conv=len(conv_params), n_mlp=len(mlp_params),
        vec_meta=tuple(vec_meta))
    vspec = pl.BlockSpec(memory_space=pltpu.MemorySpace.VMEM)
    return pl.pallas_call(
        kernel,
        out_shape=jax.ShapeDtypeStruct((batch, out_size), jnp.float32),
        in_specs=[vspec] * len(operands),
        out_specs=vspec,
        cost_estimate=pl.CostEstimate(flops=int(flops), transcendentals=0,
                                      bytes_accessed=int(bytes_accessed)),
    )(*operands)


# ----------------------------------------------------------------------------
# Parameter init (matches PyTorch module shapes; deterministic)
# ----------------------------------------------------------------------------
def init_cnn2d_params(key, in_channels, conv_layers, mlp_input, mlp_output_dims,
                      output_size):
    conv_params = []
    c_in = in_channels
    for (c_out, k, stride) in conv_layers:
        key, kw, kg, kb, km, kv = jax.random.split(key, 6)
        bound = 1.0 / np.sqrt(c_in * k * k)
        cw = jax.random.uniform(kw, (c_out, c_in, k, k), jnp.float32, -bound, bound)
        gamma = jax.random.uniform(kg, (c_out,), jnp.float32, 0.5, 1.5)
        beta = jax.random.uniform(kb, (c_out,), jnp.float32, -0.5, 0.5)
        rmean = 0.1 * jax.random.normal(km, (c_out,), jnp.float32)
        rvar = jax.random.uniform(kv, (c_out,), jnp.float32, 0.5, 1.5)
        conv_params.append((cw, gamma, beta, rmean, rvar, stride))
        c_in = c_out

    mlp_params = []
    dims = [mlp_input] + list(mlp_output_dims) + [output_size]
    for d_in, d_out in zip(dims[:-1], dims[1:]):
        key, kw, kb = jax.random.split(key, 3)
        bound = 1.0 / np.sqrt(d_in)
        wl = jax.random.uniform(kw, (d_in, d_out), jnp.float32, -bound, bound)
        bl = jax.random.uniform(kb, (d_out,), jnp.float32, -bound, bound)
        mlp_params.append((wl, bl))
    return conv_params, mlp_params


# ----------------------------------------------------------------------------
# Pure-JAX reference (mirrors the PyTorch forward, eval mode)
# ----------------------------------------------------------------------------
def reference_forward(x, conv_params, mlp_params, bn_eps=1e-5):
    h = x[:, None, :, :]                                  # unsqueeze(1) -> NCHW
    for (cw, gamma, beta, rmean, rvar, stride) in conv_params:
        h = jax.lax.conv_general_dilated(
            h, cw, window_strides=(stride, stride), padding="VALID",
            dimension_numbers=("NCHW", "OIHW", "NCHW"))
        scale = gamma / jnp.sqrt(rvar + bn_eps)
        h = h * scale[None, :, None, None] + (beta - rmean * scale)[None, :, None, None]
        h = jnp.maximum(h, 0.0)
        bb, cc, hh, ww = h.shape
        hp, wp = hh // 2, ww // 2
        h = h[:, :, :hp * 2, :wp * 2].reshape(bb, cc, hp, 2, wp, 2).mean(axis=(3, 5))
    g = h.mean(axis=3)                                    # mean over W
    m = g.max(axis=2) + g.mean(axis=2)                    # max + mean over H
    for i, (wl, bl) in enumerate(mlp_params):
        m = m @ wl + bl
        if i != len(mlp_params) - 1:
            m = jnp.maximum(m, 0.0)
    return m


if __name__ == "__main__":
    # Small shapes consistent with the module: x is (B, H, W); forward adds the
    # channel dim, so in_channels must be 1.
    batch, height, width = 2, 16, 16
    in_channels = 1
    conv_layers = [(8, 3, 1), (16, 3, 1)]      # (dim, k, stride)
    mlp_input = 16                             # == last conv channels
    mlp_output_dims = [32]
    output_size = 10
    dropout = 0.1                              # identity at inference

    key = jax.random.PRNGKey(0)
    k_x, k_p = jax.random.split(key)
    x = jax.random.normal(k_x, (batch, height, width), dtype=jnp.float32)
    conv_params, mlp_params = init_cnn2d_params(
        k_p, in_channels, conv_layers, mlp_input, mlp_output_dims, output_size)

    logits = cnn2d_net_forward(x, conv_params, mlp_params, global_pooling="mean")
    jax.block_until_ready(logits)

    ref = reference_forward(x, conv_params, mlp_params)
    assert logits.shape == (batch, output_size)
    assert jnp.allclose(logits, ref, atol=2e-4, rtol=2e-4), (
        float(jnp.max(jnp.abs(logits - ref))))

    print("KERNEL_OK")
</pallas_src>

<mosaic_0001>
module attributes {stable_mosaic.version = 11 : i64} {
  func.func @_cnn2d_mlp_kernel(%arg0: memref<256x2xf32, #tpu.memory_space<vmem>>, %arg1: memref<200x2304xbf16, #tpu.memory_space<vmem>>, %arg2: memref<9x2x16xf32, #tpu.memory_space<vmem>>, %arg3: memref<32x1800xbf16, #tpu.memory_space<vmem>>, %arg4: memref<9x16x32xf32, #tpu.memory_space<vmem>>, %arg5: memref<2x32xf32, #tpu.memory_space<vmem>>, %arg6: memref<16x32xf32, #tpu.memory_space<vmem>>, %arg7: memref<32x10xf32, #tpu.memory_space<vmem>>, %arg8: memref<4x32xf32, #tpu.memory_space<vmem>>, %arg9: memref<2x10xf32, #tpu.memory_space<vmem>>) attributes {dimension_semantics = [], scalar_prefetch = 0 : i64, scratch_operands = 0 : i64, tpu.core_type = #tpu.core_type<tc>} {
    %c0 = arith.constant 0 : index
    %c0_0 = arith.constant 0 : index
    %0 = vector.load %arg0[%c0, %c0_0] : memref<256x2xf32, #tpu.memory_space<vmem>>, vector<256x2xf32>
    %c0_1 = arith.constant 0 : index
    %c0_2 = arith.constant 0 : index
    %c0_3 = arith.constant 0 : index
    %1 = vector.load %arg2[%c0_1, %c0_2, %c0_3] : memref<9x2x16xf32, #tpu.memory_space<vmem>>, vector<1x2x16xf32>
    %2 = vector.shape_cast %1 : vector<1x2x16xf32> to vector<2x16xf32>
    %cst = arith.constant dense<0.000000e+00> : vector<256x16xf32>
    %3 = tpu.matmul %0, %2, %cst {dimension_numbers = #tpu.dot_dimension_numbers<[1], [0], [0], [1], [0, 0, 1, 1], [], []>} : vector<256x2xf32>, vector<2x16xf32>, vector<256x16xf32> -> vector<256x16xf32>
    %c1 = arith.constant 1 : index
    %c0_4 = arith.constant 0 : index
    %c0_5 = arith.constant 0 : index
    %4 = vector.load %arg2[%c1, %c0_4, %c0_5] : memref<9x2x16xf32, #tpu.memory_space<vmem>>, vector<1x2x16xf32>
    %5 = vector.shape_cast %4 : vector<1x2x16xf32> to vector<2x16xf32>
    %cst_6 = arith.constant dense<0.000000e+00> : vector<256x16xf32>
    %6 = tpu.matmul %0, %5, %cst_6 {dimension_numbers = #tpu.dot_dimension_numbers<[1], [0], [0], [1], [0, 0, 1, 1], [], []>} : vector<256x2xf32>, vector<2x16xf32>, vector<256x16xf32> -> vector<256x16xf32>
    %c2 = arith.constant 2 : index
    %c0_7 = arith.constant 0 : index
    %c0_8 = arith.constant 0 : index
    %7 = vector.load %arg2[%c2, %c0_7, %c0_8] : memref<9x2x16xf32, #tpu.memory_space<vmem>>, vector<1x2x16xf32>
    %8 = vector.shape_cast %7 : vector<1x2x16xf32> to vector<2x16xf32>
    %cst_9 = arith.constant dense<0.000000e+00> : vector<256x16xf32>
    %9 = tpu.matmul %0, %8, %cst_9 {dimension_numbers = #tpu.dot_dimension_numbers<[1], [0], [0], [1], [0, 0, 1, 1], [], []>} : vector<256x2xf32>, vector<2x16xf32>, vector<256x16xf32> -> vector<256x16xf32>
    %c3 = arith.constant 3 : index
    %c0_10 = arith.constant 0 : index
    %c0_11 = arith.constant 0 : index
    %10 = vector.load %arg2[%c3, %c0_10, %c0_11] : memref<9x2x16xf32, #tpu.memory_space<vmem>>, vector<1x2x16xf32>
    %11 = vector.shape_cast %10 : vector<1x2x16xf32> to vector<2x16xf32>
    %cst_12 = arith.constant dense<0.000000e+00> : vector<256x16xf32>
    %12 = tpu.matmul %0, %11, %cst_12 {dimension_numbers = #tpu.dot_dimension_numbers<[1], [0], [0], [1], [0, 0, 1, 1], [], []>} : vector<256x2xf32>, vector<2x16xf32>, vector<256x16xf32> -> vector<256x16xf32>
    %c4 = arith.constant 4 : index
    %c0_13 = arith.constant 0 : index
    %c0_14 = arith.constant 0 : index
    %13 = vector.load %arg2[%c4, %c0_13, %c0_14] : memref<9x2x16xf32, #tpu.memory_space<vmem>>, vector<1x2x16xf32>
    %14 = vector.shape_cast %13 : vector<1x2x16xf32> to vector<2x16xf32>
    %cst_15 = arith.constant dense<0.000000e+00> : vector<256x16xf32>
    %15 = tpu.matmul %0, %14, %cst_15 {dimension_numbers = #tpu.dot_dimension_numbers<[1], [0], [0], [1], [0, 0, 1, 1], [], []>} : vector<256x2xf32>, vector<2x16xf32>, vector<256x16xf32> -> vector<256x16xf32>
    %c5 = arith.constant 5 : index
    %c0_16 = arith.constant 0 : index
    %c0_17 = arith.constant 0 : index
    %16 = vector.load %arg2[%c5, %c0_16, %c0_17] : memref<9x2x16xf32, #tpu.memory_space<vmem>>, vector<1x2x16xf32>
    %17 = vector.shape_cast %16 : vector<1x2x16xf32> to vector<2x16xf32>
    %cst_18 = arith.constant dense<0.000000e+00> : vector<256x16xf32>
    %18 = tpu.matmul %0, %17, %cst_18 {dimension_numbers = #tpu.dot_dimension_numbers<[1], [0], [0], [1], [0, 0, 1, 1], [], []>} : vector<256x2xf32>, vector<2x16xf32>, vector<256x16xf32> -> vector<256x16xf32>
    %c6 = arith.constant 6 : index
    %c0_19 = arith.constant 0 : index
    %c0_20 = arith.constant 0 : index
    %19 = vector.load %arg2[%c6, %c0_19, %c0_20] : memref<9x2x16xf32, #tpu.memory_space<vmem>>, vector<1x2x16xf32>
    %20 = vector.shape_cast %19 : vector<1x2x16xf32> to vector<2x16xf32>
    %cst_21 = arith.constant dense<0.000000e+00> : vector<256x16xf32>
    %21 = tpu.matmul %0, %20, %cst_21 {dimension_numbers = #tpu.dot_dimension_numbers<[1], [0], [0], [1], [0, 0, 1, 1], [], []>} : vector<256x2xf32>, vector<2x16xf32>, vector<256x16xf32> -> vector<256x16xf32>
    %c7 = arith.constant 7 : index
    %c0_22 = arith.constant 0 : index
    %c0_23 = arith.constant 0 : index
    %22 = vector.load %arg2[%c7, %c0_22, %c0_23] : memref<9x2x16xf32, #tpu.memory_space<vmem>>, vector<1x2x16xf32>
    %23 = vector.shape_cast %22 : vector<1x2x16xf32> to vector<2x16xf32>
    %cst_24 = arith.constant dense<0.000000e+00> : vector<256x16xf32>
    %24 = tpu.matmul %0, %23, %cst_24 {dimension_numbers = #tpu.dot_dimension_numbers<[1], [0], [0], [1], [0, 0, 1, 1], [], []>} : vector<256x2xf32>, vector<2x16xf32>, vector<256x16xf32> -> vector<256x16xf32>
    %c8 = arith.constant 8 : index
    %c0_25 = arith.constant 0 : index
    %c0_26 = arith.constant 0 : index
    %25 = vector.load %arg2[%c8, %c0_25, %c0_26] : memref<9x2x16xf32, #tpu.memory_space<vmem>>, vector<1x2x16xf32>
    %26 = vector.shape_cast %25 : vector<1x2x16xf32> to vector<2x16xf32>
    %cst_27 = arith.constant dense<0.000000e+00> : vector<256x16xf32>
    %27 = tpu.matmul %0, %26, %cst_27 {dimension_numbers = #tpu.dot_dimension_numbers<[1], [0], [0], [1], [0, 0, 1, 1], [], []>} : vector<256x2xf32>, vector<2x16xf32>, vector<256x16xf32> -> vector<256x16xf32>
    %28 = tpu.concatenate %3, %6, %9, %12, %15, %18, %21, %24, %27 in 0 : vector<256x16xf32>, vector<256x16xf32>, vector<256x16xf32>, vector<256x16xf32>, vector<256x16xf32>, vector<256x16xf32>, vector<256x16xf32>, vector<256x16xf32>, vector<256x16xf32> -> vector<2304x16xf32>
    %c0_28 = arith.constant 0 : index
    %c0_29 = arith.constant 0 : index
    %29 = vector.load %arg1[%c0_28, %c0_29] : memref<200x2304xbf16, #tpu.memory_space<vmem>>, vector<200x2304xbf16>
    %30 = arith.extf %29 : vector<200x2304xbf16> to vector<200x2304xf32>
    %cst_30 = arith.constant dense<0.000000e+00> : vector<200x16xf32>
    %31 = tpu.matmul %30, %28, %cst_30 {dimension_numbers = #tpu.dot_dimension_numbers<[1], [0], [0], [1], [0, 0, 1, 1], [], []>} : vector<200x2304xf32>, vector<2304x16xf32>, vector<200x16xf32> -> vector<200x16xf32>
    %c0_31 = arith.constant 0 : index
    %c0_32 = arith.constant 0 : index
    %32 = vector.load %arg8[%c0_31, %c0_32] : memref<4x32xf32, #tpu.memory_space<vmem>>, vector<1x16xf32>
    %33 = vector.broadcast %32 : vector<1x16xf32> to vector<200x16xf32>
    %34 = arith.addf %31, %33 : vector<200x16xf32>
    %cst_33 = arith.constant 0.000000e+00 : f32
    %35 = vector.broadcast %cst_33 : f32 to vector<200x16xf32>
    %36 = arith.maximumf %34, %35 : vector<200x16xf32>
    %c0_34 = arith.constant 0 : index
    %c0_35 = arith.constant 0 : index
    %c0_36 = arith.constant 0 : index
    %37 = vector.load %arg4[%c0_34, %c0_35, %c0_36] : memref<9x16x32xf32, #tpu.memory_space<vmem>>, vector<1x16x32xf32>
    %38 = vector.shape_cast %37 : vector<1x16x32xf32> to vector<16x32xf32>
    %cst_37 = arith.constant dense<0.000000e+00> : vector<200x32xf32>
    %39 = tpu.matmul %36, %38, %cst_37 {dimension_numbers = #tpu.dot_dimension_numbers<[1], [0], [0], [1], [0, 0, 1, 1], [], []>} : vector<200x16xf32>, vector<16x32xf32>, vector<200x32xf32> -> vector<200x32xf32>
    %c1_38 = arith.constant 1 : index
    %c0_39 = arith.constant 0 : index
    %c0_40 = arith.constant 0 : index
    %40 = vector.load %arg4[%c1_38, %c0_39, %c0_40] : memref<9x16x32xf32, #tpu.memory_space<vmem>>, vector<1x16x32xf32>
    %41 = vector.shape_cast %40 : vector<1x16x32xf32> to vector<16x32xf32>
    %cst_41 = arith.constant dense<0.000000e+00> : vector<200x32xf32>
    %42 = tpu.matmul %36, %41, %cst_41 {dimension_numbers = #tpu.dot_dimension_numbers<[1], [0], [0], [1], [0, 0, 1, 1], [], []>} : vector<200x16xf32>, vector<16x32xf32>, vector<200x32xf32> -> vector<200x32xf32>
    %c2_42 = arith.constant 2 : index
    %c0_43 = arith.constant 0 : index
    %c0_44 = arith.constant 0 : index
    %43 = vector.load %arg4[%c2_42, %c0_43, %c0_44] : memref<9x16x32xf32, #tpu.memory_space<vmem>>, vector<1x16x32xf32>
    %44 = vector.shape_cast %43 : vector<1x16x32xf32> to vector<16x32xf32>
    %cst_45 = arith.constant dense<0.000000e+00> : vector<200x32xf32>
    %45 = tpu.matmul %36, %44, %cst_45 {dimension_numbers = #tpu.dot_dimension_numbers<[1], [0], [0], [1], [0, 0, 1, 1], [], []>} : vector<200x16xf32>, vector<16x32xf32>, vector<200x32xf32> -> vector<200x32xf32>
    %c3_46 = arith.constant 3 : index
    %c0_47 = arith.constant 0 : index
    %c0_48 = arith.constant 0 : index
    %46 = vector.load %arg4[%c3_46, %c0_47, %c0_48] : memref<9x16x32xf32, #tpu.memory_space<vmem>>, vector<1x16x32xf32>
    %47 = vector.shape_cast %46 : vector<1x16x32xf32> to vector<16x32xf32>
    %cst_49 = arith.constant dense<0.000000e+00> : vector<200x32xf32>
    %48 = tpu.matmul %36, %47, %cst_49 {dimension_numbers = #tpu.dot_dimension_numbers<[1], [0], [0], [1], [0, 0, 1, 1], [], []>} : vector<200x16xf32>, vector<16x32xf32>, vector<200x32xf32> -> vector<200x32xf32>
    %c4_50 = arith.constant 4 : index
    %c0_51 = arith.constant 0 : index
    %c0_52 = arith.constant 0 : index
    %49 = vector.load %arg4[%c4_50, %c0_51, %c0_52] : memref<9x16x32xf32, #tpu.memory_space<vmem>>, vector<1x16x32xf32>
    %50 = vector.shape_cast %49 : vector<1x16x32xf32> to vector<16x32xf32>
    %cst_53 = arith.constant dense<0.000000e+00> : vector<200x32xf32>
    %51 = tpu.matmul %36, %50, %cst_53 {dimension_numbers = #tpu.dot_dimension_numbers<[1], [0], [0], [1], [0, 0, 1, 1], [], []>} : vector<200x16xf32>, vector<16x32xf32>, vector<200x32xf32> -> vector<200x32xf32>
    %c5_54 = arith.constant 5 : index
    %c0_55 = arith.constant 0 : index
    %c0_56 = arith.constant 0 : index
    %52 = vector.load %arg4[%c5_54, %c0_55, %c0_56] : memref<9x16x32xf32, #tpu.memory_space<vmem>>, vector<1x16x32xf32>
    %53 = vector.shape_cast %52 : vector<1x16x32xf32> to vector<16x32xf32>
    %cst_57 = arith.constant dense<0.000000e+00> : vector<200x32xf32>
    %54 = tpu.matmul %36, %53, %cst_57 {dimension_numbers = #tpu.dot_dimension_numbers<[1], [0], [0], [1], [0, 0, 1, 1], [], []>} : vector<200x16xf32>, vector<16x32xf32>, vector<200x32xf32> -> vector<200x32xf32>
    %c6_58 = arith.constant 6 : index
    %c0_59 = arith.constant 0 : index
    %c0_60 = arith.constant 0 : index
    %55 = vector.load %arg4[%c6_58, %c0_59, %c0_60] : memref<9x16x32xf32, #tpu.memory_space<vmem>>, vector<1x16x32xf32>
    %56 = vector.shape_cast %55 : vector<1x16x32xf32> to vector<16x32xf32>
    %cst_61 = arith.constant dense<0.000000e+00> : vector<200x32xf32>
    %57 = tpu.matmul %36, %56, %cst_61 {dimension_numbers = #tpu.dot_dimension_numbers<[1], [0], [0], [1], [0, 0, 1, 1], [], []>} : vector<200x16xf32>, vector<16x32xf32>, vector<200x32xf32> -> vector<200x32xf32>
    %c7_62 = arith.constant 7 : index
    %c0_63 = arith.constant 0 : index
    %c0_64 = arith.constant 0 : index
    %58 = vector.load %arg4[%c7_62, %c0_63, %c0_64] : memref<9x16x32xf32, #tpu.memory_space<vmem>>, vector<1x16x32xf32>
    %59 = vector.shape_cast %58 : vector<1x16x32xf32> to vector<16x32xf32>
    %cst_65 = arith.constant dense<0.000000e+00> : vector<200x32xf32>
    %60 = tpu.matmul %36, %59, %cst_65 {dimension_numbers = #tpu.dot_dimension_numbers<[1], [0], [0], [1], [0, 0, 1, 1], [], []>} : vector<200x16xf32>, vector<16x32xf32>, vector<200x32xf32> -> vector<200x32xf32>
    %c8_66 = arith.constant 8 : index
    %c0_67 = arith.constant 0 : index
    %c0_68 = arith.constant 0 : index
    %61 = vector.load %arg4[%c8_66, %c0_67, %c0_68] : memref<9x16x32xf32, #tpu.memory_space<vmem>>, vector<1x16x32xf32>
    %62 = vector.shape_cast %61 : vector<1x16x32xf32> to vector<16x32xf32>
    %cst_69 = arith.constant dense<0.000000e+00> : vector<200x32xf32>
    %63 = tpu.matmul %36, %62, %cst_69 {dimension_numbers = #tpu.dot_dimension_numbers<[1], [0], [0], [1], [0, 0, 1, 1], [], []>} : vector<200x16xf32>, vector<16x32xf32>, vector<200x32xf32> -> vector<200x32xf32>
    %64 = tpu.concatenate %39, %42, %45, %48, %51, %54, %57, %60, %63 in 0 : vector<200x32xf32>, vector<200x32xf32>, vector<200x32xf32>, vector<200x32xf32>, vector<200x32xf32>, vector<200x32xf32>, vector<200x32xf32>, vector<200x32xf32>, vector<200x32xf32> -> vector<1800x32xf32>
    %c0_70 = arith.constant 0 : index
    %c0_71 = arith.constant 0 : index
    %65 = vector.load %arg3[%c0_70, %c0_71] : memref<32x1800xbf16, #tpu.memory_space<vmem>>, vector<32x1800xbf16>
    %66 = arith.extf %65 : vector<32x1800xbf16> to vector<32x1800xf32>
    %cst_72 = arith.constant dense<0.000000e+00> : vector<32x32xf32>
    %67 = tpu.matmul %66, %64, %cst_72 {dimension_numbers = #tpu.dot_dimension_numbers<[1], [0], [0], [1], [0, 0, 1, 1], [], []>} : vector<32x1800xf32>, vector<1800x32xf32>, vector<32x32xf32> -> vector<32x32xf32>
    %c1_73 = arith.constant 1 : index
    %c0_74 = arith.constant 0 : index
    %68 = vector.load %arg8[%c1_73, %c0_74] : memref<4x32xf32, #tpu.memory_space<vmem>>, vector<1x32xf32>
    %69 = vector.broadcast %68 : vector<1x32xf32> to vector<32x32xf32>
    %70 = arith.addf %67, %69 : vector<32x32xf32>
    %cst_75 = arith.constant 0.000000e+00 : f32
    %71 = vector.broadcast %cst_75 : f32 to vector<32x32xf32>
    %72 = arith.maximumf %70, %71 : vector<32x32xf32>
    %c0_76 = arith.constant 0 : index
    %c0_77 = arith.constant 0 : index
    %73 = vector.load %arg5[%c0_76, %c0_77] : memref<2x32xf32, #tpu.memory_space<vmem>>, vector<2x32xf32>
    %cst_78 = arith.constant dense<0.000000e+00> : vector<2x32xf32>
    %74 = tpu.matmul %73, %72, %cst_78 {dimension_numbers = #tpu.dot_dimension_numbers<[1], [0], [0], [1], [0, 0, 1, 1], [], []>} : vector<2x32xf32>, vector<32x32xf32>, vector<2x32xf32> -> vector<2x32xf32>
    %75 = vector.extract_strided_slice %74 {offsets = [0, 0], sizes = [2, 16], strides = [1, 1]} : vector<2x32xf32> to vector<2x16xf32>
    %cst_79 = arith.constant dense<0xFF800000> : vector<16xf32>
    %76 = vector.multi_reduction <maximumf>, %75, %cst_79 [0] : vector<2x16xf32> to vector<16xf32>
    %77 = vector.shape_cast %76 : vector<16xf32> to vector<1x16xf32>
    %cst_80 = arith.constant dense<0.000000e+00> : vector<16xf32>
    %78 = vector.multi_reduction <add>, %75, %cst_80 [0] : vector<2x16xf32> to vector<16xf32>
    %79 = vector.shape_cast %78 : vector<16xf32> to vector<1x16xf32>
    %cst_81 = arith.constant 2.000000e+00 : f32
    %80 = vector.broadcast %cst_81 : f32 to vector<1x16xf32>
    %81 = arith.divf %79, %80 : vector<1x16xf32>
    %82 = arith.addf %77, %81 : vector<1x16xf32>
    %83 = vector.extract_strided_slice %74 {offsets = [0, 16], sizes = [2, 16], strides = [1, 1]} : vector<2x32xf32> to vector<2x16xf32>
    %cst_82 = arith.constant dense<0xFF800000> : vector<16xf32>
    %84 = vector.multi_reduction <maximumf>, %83, %cst_82 [0] : vector<2x16xf32> to vector<16xf32>
    %85 = vector.shape_cast %84 : vector<16xf32> to vector<1x16xf32>
    %cst_83 = arith.constant dense<0.000000e+00> : vector<16xf32>
    %86 = vector.multi_reduction <add>, %83, %cst_83 [0] : vector<2x16xf32> to vector<16xf32>
    %87 = vector.shape_cast %86 : vector<16xf32> to vector<1x16xf32>
    %cst_84 = arith.constant 2.000000e+00 : f32
    %88 = vector.broadcast %cst_84 : f32 to vector<1x16xf32>
    %89 = arith.divf %87, %88 : vector<1x16xf32>
    %90 = arith.addf %85, %89 : vector<1x16xf32>
    %91 = tpu.concatenate %82, %90 in 0 : vector<1x16xf32>, vector<1x16xf32> -> vector<2x16xf32>
    %c2_85 = arith.constant 2 : index
    %c0_86 = arith.constant 0 : index
    %92 = vector.load %arg8[%c2_85, %c0_86] : memref<4x32xf32, #tpu.memory_space<vmem>>, vector<1x32xf32>
    %c0_87 = arith.constant 0 : index
    %c0_88 = arith.constant 0 : index
    %93 = vector.load %arg6[%c0_87, %c0_88] : memref<16x32xf32, #tpu.memory_space<vmem>>, vector<16x32xf32>
    %cst_89 = arith.constant dense<0.000000e+00> : vector<2x32xf32>
    %94 = tpu.matmul %91, %93, %cst_89 {dimension_numbers = #tpu.dot_dimension_numbers<[1], [0], [0], [1], [0, 0, 1, 1], [], []>} : vector<2x16xf32>, vector<16x32xf32>, vector<2x32xf32> -> vector<2x32xf32>
    %95 = vector.broadcast %92 : vector<1x32xf32> to vector<2x32xf32>
    %96 = arith.addf %94, %95 : vector<2x32xf32>
    %cst_90 = arith.constant 0.000000e+00 : f32
    %97 = vector.broadcast %cst_90 : f32 to vector<2x32xf32>
    %98 = arith.maximumf %96, %97 : vector<2x32xf32>
    %c3_91 = arith.constant 3 : index
    %c0_92 = arith.constant 0 : index
    %99 = vector.load %arg8[%c3_91, %c0_92] : memref<4x32xf32, #tpu.memory_space<vmem>>, vector<1x10xf32>
    %c0_93 = arith.constant 0 : index
    %c0_94 = arith.constant 0 : index
    %100 = vector.load %arg7[%c0_93, %c0_94] : memref<32x10xf32, #tpu.memory_space<vmem>>, vector<32x10xf32>
    %cst_95 = arith.constant dense<0.000000e+00> : vector<2x10xf32>
    %101 = tpu.matmul %98, %100, %cst_95 {dimension_numbers = #tpu.dot_dimension_numbers<[1], [0], [0], [1], [0, 0, 1, 1], [], []>} : vector<2x32xf32>, vector<32x10xf32>, vector<2x10xf32> -> vector<2x10xf32>
    %102 = vector.broadcast %99 : vector<1x10xf32> to vector<2x10xf32>
    %103 = arith.addf %101, %102 : vector<2x10xf32>
    %c0_96 = arith.constant 0 : index
    %c0_97 = arith.constant 0 : index
    %104 = vector.load %arg9[%c0_96, %c0_97] : memref<2x10xf32, #tpu.memory_space<vmem>>, vector<2x10xf32>
    tpu.vector_store %arg9[%c0_96, %c0_97], %103 {strides = array<i32>} : memref<2x10xf32, #tpu.memory_space<vmem>>, vector<2x10xf32>,
    return
  }
}

</mosaic_0001>

<llo_original>
// kernel: tpu_custom_call.1
$region0: #{tpu_custom_call.1}
  #allocation0 [shape = 'u32[]', space=smem, size = 0x4, offset = 0x4, fixed_abs, tag = 'smem constant byte address 0x4 - core index']
  #allocation1 [shape = 'u32[144,128]{1,0:T(1,128)}', space=vmem, size = 0x12000, scoped, tag = 'internal scratch']
  %s0 = inlined_call_operand.vmem [shape: f32[256,2], index: 0, kind: input, shape index: {}]
  %s1 = inlined_call_operand.hbm [shape: bf16[200,2304], index: 1, kind: input, shape index: {}]
  %s2 = inlined_call_operand.vmem [shape: f32[9,2,16], index: 2, kind: input, shape index: {}]
  %s3 = inlined_call_operand.vmem [shape: bf16[32,1800], index: 3, kind: input, shape index: {}]
  %s4 = inlined_call_operand.hbm [shape: f32[9,16,32], index: 4, kind: input, shape index: {}]
  %s5 = inlined_call_operand.vmem [shape: f32[2,32], index: 5, kind: input, shape index: {}]
  %s6 = inlined_call_operand.vmem [shape: f32[16,32], index: 6, kind: input, shape index: {}]
  %s7 = inlined_call_operand.vmem [shape: f32[32,10], index: 7, kind: input, shape index: {}]
  %s8 = inlined_call_operand.vmem [shape: f32[4,32], index: 8, kind: input, shape index: {}]
  %s9 = inlined_call_operand.hbm [shape: f32[2,10], index: 9, kind: output, shape index: {}]
  %s10 = sld [smem:[#allocation0]]
  $region54: #{tpu_custom_call.1} parent=0
    _
  %s12 = ssub.s32 1, %s10
  %s13 = scalar_select 0, %s12, %s10
  $region1: #{tpu_custom_call.1} parent=0
    #allocation2 [shape = 'u8[921600]{0}', space=vmem, size = 0xe1000, scoped, tag = 'input window, operand 1, single buffered']
    #allocation3 [shape = 's32[1]{0}', space=sflag, size = 0x4, scoped, tag = 'scoped memory for tpu_custom_call.1']
    #allocation4 [shape = 's32[1]{0}', space=sflag, size = 0x4, scoped, tag = 'scoped memory for tpu_custom_call.1']
    #allocation5 [shape = 'u8[73728]{0}', space=vmem, size = 0x12000, scoped, tag = 'input window, operand 4, single buffered']
    #allocation6 [shape = 's32[1]{0}', space=sflag, size = 0x4, scoped, tag = 'scoped memory for tpu_custom_call.1']
    #allocation7 [shape = 'u8[1024]{0}', space=vmem, size = 0x400, scoped, tag = 'output window, operand 0, single buffered']
    %14 = vsyncpa [#allocation3], 0
    %15 = vsyncpa [#allocation6], 0
    %16 = vsyncpa [#allocation4], 0
    // Predicated region
    $region2: #{tpu_custom_call.1} parent=1 // pred_check
      _
    $region3: #{tpu_custom_call.1} parent=1 // pred_check_branch
      %18 = sbr.rel (0) target = $region5
    $region4: #{tpu_custom_call.1} parent=1 // pred_region
      _
    $region5: #{tpu_custom_call.1} parent=1 // pred_fallthru
      _
    // Predicated region
    $region6: #{tpu_custom_call.1} parent=1 // pred_check
      _
    $region7: #{tpu_custom_call.1} parent=1 // pred_check_branch
      %20 = sbr.rel (0) target = $region9
    $region8: #{tpu_custom_call.1} parent=1 // pred_region
      %s22 = ssub.s32 28800, 28800
      %23 = vsyncadd [#allocation3], %s22
      %s24 = sshll.u32 [#allocation2], 4
      %s25 = int_to_ptr.vmem [resolvable:$true] %s24
      %30 = dma.hbm_to_vmem [thread:$0]  %s1, 28800, %s25, [#allocation3], 1152, 1152, 72
    $region9: #{tpu_custom_call.1} parent=1 // pred_fallthru
      _
    // Predicated region
    $region10: #{tpu_custom_call.1} parent=1 // pred_check
      _
    $region11: #{tpu_custom_call.1} parent=1 // pred_check_branch
      %32 = sbr.rel (0) target = $region13
    $region12: #{tpu_custom_call.1} parent=1 // pred_region
      _
    $region13: #{tpu_custom_call.1} parent=1 // pred_fallthru
      _
    // Predicated region
    $region14: #{tpu_custom_call.1} parent=1 // pred_check
      _
    $region15: #{tpu_custom_call.1} parent=1 // pred_check_branch
      %34 = sbr.rel (0) target = $region17
    $region16: #{tpu_custom_call.1} parent=1 // pred_region
      _
    $region17: #{tpu_custom_call.1} parent=1 // pred_fallthru
      _
    // Predicated region
    $region18: #{tpu_custom_call.1} parent=1 // pred_check
      _
    $region19: #{tpu_custom_call.1} parent=1 // pred_check_branch
      %36 = sbr.rel (0) target = $region21
    $region20: #{tpu_custom_call.1} parent=1 // pred_region
      %s38 = ssub.s32 2304, 2304
      %39 = vsyncadd [#allocation6], %s38
      %s40 = sshll.u32 [#allocation5], 4
      %s41 = int_to_ptr.vmem [resolvable:$true] %s40
      %46 = dma.hbm_to_vmem [thread:$0]  %s4, 2304, %s41, [#allocation6], 128, 128, 8
    $region21: #{tpu_custom_call.1} parent=1 // pred_fallthru
      _
    // Predicated region
    $region22: #{tpu_custom_call.1} parent=1 // pred_check
      _
    $region23: #{tpu_custom_call.1} parent=1 // pred_check_branch
      %48 = sbr.rel (0) target = $region25
    $region24: #{tpu_custom_call.1} parent=1 // pred_region
      _
    $region25: #{tpu_custom_call.1} parent=1 // pred_fallthru
      _
    // Predicated region
    $region26: #{tpu_custom_call.1} parent=1 // pred_check
      _
    $region27: #{tpu_custom_call.1} parent=1 // pred_check_branch
      %50 = sbr.rel (0) target = $region29
    $region28: #{tpu_custom_call.1} parent=1 // pred_region
      _
    $region29: #{tpu_custom_call.1} parent=1 // pred_fallthru
      _
    // Predicated region
    $region30: #{tpu_custom_call.1} parent=1 // pred_check
      _
    $region31: #{tpu_custom_call.1} parent=1 // pred_check_branch
      %52 = sbr.rel (0) target = $region33
    $region32: #{tpu_custom_call.1} parent=1 // pred_region
      _
    $region33: #{tpu_custom_call.1} parent=1 // pred_fallthru
      _
    // Predicated region
    $region34: #{tpu_custom_call.1} parent=1 // pred_check
      _
    $region35: #{tpu_custom_call.1} parent=1 // pred_check_branch
      %54 = sbr.rel (0) target = $region37
    $region36: #{tpu_custom_call.1} parent=1 // pred_region
      _
    $region37: #{tpu_custom_call.1} parent=1 // pred_fallthru
      _
    // Predicated region
    $region38: #{tpu_custom_call.1} parent=1 // pred_check
      _
    $region39: #{tpu_custom_call.1} parent=1 // pred_check_branch
      %56 = sbr.rel (0) target = $region41
    $region40: #{tpu_custom_call.1} parent=1 // pred_region
      %57 = dma.done [#allocation3], 28800
    $region41: #{tpu_custom_call.1} parent=1 // pred_fallthru
      _
    // Predicated region
    $region42: #{tpu_custom_call.1} parent=1 // pred_check
      _
    $region43: #{tpu_custom_call.1} parent=1 // pred_check_branch
      %59 = sbr.rel (0) target = $region45
    $region44: #{tpu_custom_call.1} parent=1 // pred_region
      %60 = dma.done [#allocation6], 2304
    $region45: #{tpu_custom_call.1} parent=1 // pred_fallthru
      _
    %v61 = vld [vmem:[%s0] sm:$0xff]
    %v62 = vld [vmem:[%s0 + $0x8] sm:$0xff]
    %v63 = vld [vmem:[%s0 + $0x10] sm:$0xff]
    %v64 = vld [vmem:[%s0 + $0x18] sm:$0xff]
    %v65 = vld [vmem:[%s0 + $0x20] sm:$0xff]
    %v66 = vld [vmem:[%s0 + $0x28] sm:$0xff]
    %v67 = vld [vmem:[%s0 + $0x30] sm:$0xff]
    %v68 = vld [vmem:[%s0 + $0x38] sm:$0xff]
    %v69 = vld [vmem:[%s0 + $0x40] sm:$0xff]
    %v70 = vld [vmem:[%s0 + $0x48] sm:$0xff]
    %v71 = vld [vmem:[%s0 + $0x50] sm:$0xff]
    %v72 = vld [vmem:[%s0 + $0x58] sm:$0xff]
    %v73 = vld [vmem:[%s0 + $0x60] sm:$0xff]
    %v74 = vld [vmem:[%s0 + $0x68] sm:$0xff]
    %v75 = vld [vmem:[%s0 + $0x70] sm:$0xff]
    %v76 = vld [vmem:[%s0 + $0x78] sm:$0xff]
    %v77 = vld [vmem:[%s0 + $0x80] sm:$0xff]
    %v78 = vld [vmem:[%s0 + $0x88] sm:$0xff]
    %v79 = vld [vmem:[%s0 + $0x90] sm:$0xff]
    %v80 = vld [vmem:[%s0 + $0x98] sm:$0xff]
    %v81 = vld [vmem:[%s0 + $0xa0] sm:$0xff]
    %v82 = vld [vmem:[%s0 + $0xa8] sm:$0xff]
    %v83 = vld [vmem:[%s0 + $0xb0] sm:$0xff]
    %v84 = vld [vmem:[%s0 + $0xb8] sm:$0xff]
    %v85 = vld [vmem:[%s0 + $0xc0] sm:$0xff]
    %v86 = vld [vmem:[%s0 + $0xc8] sm:$0xff]
    %v87 = vld [vmem:[%s0 + $0xd0] sm:$0xff]
    %v88 = vld [vmem:[%s0 + $0xd8] sm:$0xff]
    %v89 = vld [vmem:[%s0 + $0xe0] sm:$0xff]
    %v90 = vld [vmem:[%s0 + $0xe8] sm:$0xff]
    %v91 = vld [vmem:[%s0 + $0xf0] sm:$0xff]
    %v92 = vld [vmem:[%s0 + $0xf8] sm:$0xff]
    %v93 = vld [vmem:[%s2] sm:$0x3]
    %vm94 = vcmask 15360
    %v96 = vsel %vm94, %v61, 0
    %v99 = vsel %vm94, %v62, 0
    %v102 = vsel %vm94, %v63, 0
    %v105 = vsel %vm94, %v64, 0
    %v108 = vsel %vm94, %v65, 0
    %v111 = vsel %vm94, %v66, 0
    %v114 = vsel %vm94, %v67, 0
    %v117 = vsel %vm94, %v68, 0
    %v120 = vsel %vm94, %v69, 0
    %v123 = vsel %vm94, %v70, 0
    %v126 = vsel %vm94, %v71, 0
    %v129 = vsel %vm94, %v72, 0
    %v132 = vsel %vm94, %v73, 0
    %v135 = vsel %vm94, %v74, 0
    %v138 = vsel %vm94, %v75, 0
    %v141 = vsel %vm94, %v76, 0
    %v144 = vsel %vm94, %v77, 0
    %v147 = vsel %vm94, %v78, 0
    %v150 = vsel %vm94, %v79, 0
    %v153 = vsel %vm94, %v80, 0
    %v156 = vsel %vm94, %v81, 0
    %v159 = vsel %vm94, %v82, 0
    %v162 = vsel %vm94, %v83, 0
    %v165 = vsel %vm94, %v84, 0
    %v168 = vsel %vm94, %v85, 0
    %v171 = vsel %vm94, %v86, 0
    %v174 = vsel %vm94, %v87, 0
    %v177 = vsel %vm94, %v88, 0
    %v180 = vsel %vm94, %v89, 0
    %v183 = vsel %vm94, %v90, 0
    %v186 = vsel %vm94, %v91, 0
    %v189 = vsel %vm94, %v92, 0
    %vm191 = vcmask 1041408
    %v193 = vsel %vm191, %v93, 0
    %195 = vmatprep.subr.mxu0 0.0
    %196 = vmatpush1.msra.mxu0 %v193
    %197 = vmatprep.subr.mxu0 0.0
    %198 = vmatpush1.msra.mxu0 0.0
    %199 = vmatprep.subr.mxu0 0.0
    %200 = vmatpush1.msra.mxu0 0.0
    %201 = vmatprep.subr.mxu0 0.0
    %202 = vmatpush1.msra.mxu0 0.0
    %203 = vmatprep.subr.mxu0 0.0
    %204 = vmatpush1.msra.mxu0 0.0
    %205 = vmatprep.subr.mxu0 0.0
    %206 = vmatpush1.msra.mxu0 0.0
    %207 = vmatprep.subr.mxu0 0.0
    %208 = vmatpush1.msra.mxu0 0.0
    %209 = vmatprep.subr.mxu0 0.0
    %210 = vmatpush1.msra.mxu0 0.0
    %211 = vmatprep.subr.mxu0 0.0
    %212 = vmatpush1.msra.mxu0 0.0
    %213 = vmatprep.subr.mxu0 0.0
    %214 = vmatpush1.msra.mxu0 0.0
    %215 = vmatprep.subr.mxu0 0.0
    %216 = vmatpush1.msra.mxu0 0.0
    %217 = vmatprep.subr.mxu0 0.0
    %218 = vmatpush1.msra.mxu0 0.0
    %219 = vmatprep.subr.mxu0 0.0
    %220 = vmatpush1.msra.mxu0 0.0
    %221 = vmatprep.subr.mxu0 0.0
    %222 = vmatpush1.msra.mxu0 0.0
    %223 = vmatprep.subr.mxu0 0.0
    %224 = vmatpush1.msra.mxu0 0.0
    %225 = vmatprep.subr.mxu0 0.0
    %226 = vmatpush1.msra.mxu0 0.0
    %227 = vmatprep.subr.mxu0 0.0
    %228 = vmatpush1.msra.mxu0 0.0
    %229 = vmatprep.subr.mxu0 0.0
    %230 = vmatpush1.msra.mxu0 0.0
    %231 = vmatprep.subr.mxu0 0.0
    %232 = vmatpush1.msra.mxu0 0.0
    %233 = vmatprep.subr.mxu0 0.0
    %234 = vmatpush1.msra.mxu0 0.0
    %235 = vmatprep.subr.mxu0 0.0
    %236 = vmatpush1.msra.mxu0 0.0
    %237 = vmatprep.subr.mxu0 0.0
    %238 = vmatpush1.msra.mxu0 0.0
    %239 = vmatprep.subr.mxu0 0.0
    %240 = vmatpush1.msra.mxu0 0.0
    %241 = vmatprep.subr.mxu0 0.0
    %242 = vmatpush1.msra.mxu0 0.0
    %243 = vmatprep.subr.mxu0 0.0
    %244 = vmatpush1.msra.mxu0 0.0
    %245 = vmatprep.subr.mxu0 0.0
    %246 = vmatpush1.msra.mxu0 0.0
    %247 = vmatprep.subr.mxu0 0.0
    %248 = vmatpush1.msra.mxu0 0.0
    %249 = vmatprep.subr.mxu0 0.0
    %250 = vmatpush1.msra.mxu0 0.0
    %251 = vmatprep.subr.mxu0 0.0
    %252 = vmatpush1.msra.mxu0 0.0
    %253 = vmatprep.subr.mxu0 0.0
    %254 = vmatpush1.msra.mxu0 0.0
    %255 = vmatprep.subr.mxu0 0.0
    %256 = vmatpush1.msra.mxu0 0.0
    %257 = vmatprep.subr.mxu0 0.0
    %258 = vmatpush1.msra.mxu0 0.0
    %259 = vmatprep.mubr.f32.mxu0 0.0
    %260 = vmatmul.mubr.f32.gmra.mrb[0].mxu0 %v96
    %v261 = vpop.f32.mrb[0].mxu0
    %v262 = vadd.f32 0.0, %v261
    %v263 = vpop.f32.mrb[0].mxu0
    %264 = vmatprep.mubr.f32.mxu0 0.0
    %265 = vmatmul.mubr.f32.gmra.mrb[0].mxu0 %v99
    %v266 = vpop.f32.mrb[0].mxu0
    %v267 = vadd.f32 0.0, %v266
    %v268 = vpop.f32.mrb[0].mxu0
    %269 = vmatprep.mubr.f32.mxu0 0.0
    %270 = vmatmul.mubr.f32.gmra.mrb[0].mxu0 %v102
    %v271 = vpop.f32.mrb[0].mxu0
    %v272 = vadd.f32 0.0, %v271
    %v273 = vpop.f32.mrb[0].mxu0
    %274 = vmatprep.mubr.f32.mxu0 0.0
    %275 = vmatmul.mubr.f32.gmra.mrb[0].mxu0 %v105
    %v276 = vpop.f32.mrb[0].mxu0
    %v277 = vadd.f32 0.0, %v276
    %v278 = vpop.f32.mrb[0].mxu0
    %279 = vmatprep.mubr.f32.mxu0 0.0
    %280 = vmatmul.mubr.f32.gmra.mrb[0].mxu0 %v108
    %v281 = vpop.f32.mrb[0].mxu0
    %v282 = vadd.f32 0.0, %v281
    %v283 = vpop.f32.mrb[0].mxu0
    %284 = vmatprep.mubr.f32.mxu0 0.0
    %285 = vmatmul.mubr.f32.gmra.mrb[0].mxu0 %v111
    %v286 = vpop.f32.mrb[0].mxu0
    %v287 = vadd.f32 0.0, %v286
    %v288 = vpop.f32.mrb[0].mxu0
    %289 = vmatprep.mubr.f32.mxu0 0.0
    %290 = vmatmul.mubr.f32.gmra.mrb[0].mxu0 %v114
    %v291 = vpop.f32.mrb[0].mxu0
    %v292 = vadd.f32 0.0, %v291
    %v293 = vpop.f32.mrb[0].mxu0
    %294 = vmatprep.mubr.f32.mxu0 0.0
    %295 = vmatmul.mubr.f32.gmra.mrb[0].mxu0 %v117
    %v296 = vpop.f32.mrb[0].mxu0
    %v297 = vadd.f32 0.0, %v296
    %v298 = vpop.f32.mrb[0].mxu0
    %299 = vmatprep.mubr.f32.mxu0 0.0
    %300 = vmatmul.mubr.f32.gmra.mrb[0].mxu0 %v120
    %v301 = vpop.f32.mrb[0].mxu0
    %v302 = vadd.f32 0.0, %v301
    %v303 = vpop.f32.mrb[0].mxu0
    %304 = vmatprep.mubr.f32.mxu0 0.0
    %305 = vmatmul.mubr.f32.gmra.mrb[0].mxu0 %v123
    %v306 = vpop.f32.mrb[0].mxu0
    %v307 = vadd.f32 0.0, %v306
    %v308 = vpop.f32.mrb[0].mxu0
    %309 = vmatprep.mubr.f32.mxu0 0.0
    %310 = vmatmul.mubr.f32.gmra.mrb[0].mxu0 %v126
    %v311 = vpop.f32.mrb[0].mxu0
    %v312 = vadd.f32 0.0, %v311
    %v313 = vpop.f32.mrb[0].mxu0
    %314 = vmatprep.mubr.f32.mxu0 0.0
    %315 = vmatmul.mubr.f32.gmra.mrb[0].mxu0 %v129
    %v316 = vpop.f32.mrb[0].mxu0
    %v317 = vadd.f32 0.0, %v316
    %v318 = vpop.f32.mrb[0].mxu0
    %319 = vmatprep.mubr.f32.mxu0 0.0
    %320 = vmatmul.mubr.f32.gmra.mrb[0].mxu0 %v132
    %v321 = vpop.f32.mrb[0].mxu0
    %v322 = vadd.f32 0.0, %v321
    %v323 = vpop.f32.mrb[0].mxu0
    %324 = vmatprep.mubr.f32.mxu0 0.0
    %325 = vmatmul.mubr.f32.gmra.mrb[0].mxu0 %v135
    %v326 = vpop.f32.mrb[0].mxu0
    %v327 = vadd.f32 0.0, %v326
    %v328 = vpop.f32.mrb[0].mxu0
    %329 = vmatprep.mubr.f32.mxu0 0.0
    %330 = vmatmul.mubr.f32.gmra.mrb[0].mxu0 %v138
    %v331 = vpop.f32.mrb[0].mxu0
    %v332 = vadd.f32 0.0, %v331
    %v333 = vpop.f32.mrb[0].mxu0
    %334 = vmatprep.mubr.f32.mxu0 0.0
    %335 = vmatmul.mubr.f32.gmra.mrb[0].mxu0 %v141
    %v336 = vpop.f32.mrb[0].mxu0
    %v337 = vadd.f32 0.0, %v336
    %v338 = vpop.f32.mrb[0].mxu0
    %339 = vmatprep.mubr.f32.mxu0 0.0
    %340 = vmatmul.mubr.f32.gmra.mrb[0].mxu0 %v144
    %v341 = vpop.f32.mrb[0].mxu0
    %v342 = vadd.f32 0.0, %v341
    %v343 = vpop.f32.mrb[0].mxu0
    %344 = vmatprep.mubr.f32.mxu0 0.0
    %345 = vmatmul.mubr.f32.gmra.mrb[0].mxu0 %v147
    %v346 = vpop.f32.mrb[0].mxu0
    %v347 = vadd.f32 0.0, %v346
    %v348 = vpop.f32.mrb[0].mxu0
    %349 = vmatprep.mubr.f32.mxu0 0.0
    %350 = vmatmul.mubr.f32.gmra.mrb[0].mxu0 %v150
    %v351 = vpop.f32.mrb[0].mxu0
    %v352 = vadd.f32 0.0, %v351
    %v353 = vpop.f32.mrb[0].mxu0
    %354 = vmatprep.mubr.f32.mxu0 0.0
    %355 = vmatmul.mubr.f32.gmra.mrb[0].mxu0 %v153
    %v356 = vpop.f32.mrb[0].mxu0
    %v357 = vadd.f32 0.0, %v356
    %v358 = vpop.f32.mrb[0].mxu0
    %359 = vmatprep.mubr.f32.mxu0 0.0
    %360 = vmatmul.mubr.f32.gmra.mrb[0].mxu0 %v156
    %v361 = vpop.f32.mrb[0].mxu0
    %v362 = vadd.f32 0.0, %v361
    %v363 = vpop.f32.mrb[0].mxu0
    %364 = vmatprep.mubr.f32.mxu0 0.0
    %365 = vmatmul.mubr.f32.gmra.mrb[0].mxu0 %v159
    %v366 = vpop.f32.mrb[0].mxu0
    %v367 = vadd.f32 0.0, %v366
    %v368 = vpop.f32.mrb[0].mxu0
    %369 = vmatprep.mubr.f32.mxu0 0.0
    %370 = vmatmul.mubr.f32.gmra.mrb[0].mxu0 %v162
    %v371 = vpop.f32.mrb[0].mxu0
    %v372 = vadd.f32 0.0, %v371
    %v373 = vpop.f32.mrb[0].mxu0
    %374 = vmatprep.mubr.f32.mxu0 0.0
    %375 = vmatmul.mubr.f32.gmra.mrb[0].mxu0 %v165
    %v376 = vpop.f32.mrb[0].mxu0
    %v377 = vadd.f32 0.0, %v376
    %v378 = vpop.f32.mrb[0].mxu0
    %379 = vmatprep.mubr.f32.mxu0 0.0
    %380 = vmatmul.mubr.f32.gmra.mrb[0].mxu0 %v168
    %v381 = vpop.f32.mrb[0].mxu0
    %v382 = vadd.f32 0.0, %v381
    %v383 = vpop.f32.mrb[0].mxu0
    %384 = vmatprep.mubr.f32.mxu0 0.0
    %385 = vmatmul.mubr.f32.gmra.mrb[0].mxu0 %v171
    %v386 = vpop.f32.mrb[0].mxu0
    %v387 = vadd.f32 0.0, %v386
    %v388 = vpop.f32.mrb[0].mxu0
    %389 = vmatprep.mubr.f32.mxu0 0.0
    %390 = vmatmul.mubr.f32.gmra.mrb[0].mxu0 %v174
    %v391 = vpop.f32.mrb[0].mxu0
    %v392 = vadd.f32 0.0, %v391
    %v393 = vpop.f32.mrb[0].mxu0
    %394 = vmatprep.mubr.f32.mxu0 0.0
    %395 = vmatmul.mubr.f32.gmra.mrb[0].mxu0 %v177
    %v396 = vpop.f32.mrb[0].mxu0
    %v397 = vadd.f32 0.0, %v396
    %v398 = vpop.f32.mrb[0].mxu0
    %399 = vmatprep.mubr.f32.mxu0 0.0
    %400 = vmatmul.mubr.f32.gmra.mrb[0].mxu0 %v180
    %v401 = vpop.f32.mrb[0].mxu0
    %v402 = vadd.f32 0.0, %v401
    %v403 = vpop.f32.mrb[0].mxu0
    %404 = vmatprep.mubr.f32.mxu0 0.0
    %405 = vmatmul.mubr.f32.gmra.mrb[0].mxu0 %v183
    %v406 = vpop.f32.mrb[0].mxu0
    %v407 = vadd.f32 0.0, %v406
    %v408 = vpop.f32.mrb[0].mxu0
    %409 = vmatprep.mubr.f32.mxu0 0.0
    %410 = vmatmul.mubr.f32.gmra.mrb[0].mxu0 %v186
    %v411 = vpop.f32.mrb[0].mxu0
    %v412 = vadd.f32 0.0, %v411
    %v413 = vpop.f32.mrb[0].mxu0
    %414 = vmatprep.mubr.f32.mxu0 0.0
    %415 = vmatmul.mubr.f32.gmra.mrb[0].mxu0 %v189
    %v416 = vpop.f32.mrb[0].mxu0
    %v417 = vadd.f32 0.0, %v416
    %v418 = vpop.f32.mrb[0].mxu0
    %419 = vdwg.mxu0
    %s420 = scalar_lea.vmem %s2, 2
    %v421 = vld [vmem:[%s420] sm:$0x3]
    %v423 = vsel %vm191, %v421, 0
    %425 = vmatprep.subr.mxu0 0.0
    %426 = vmatpush1.msra.mxu0 %v423
    %427 = vmatprep.subr.mxu0 0.0
    %428 = vmatpush1.msra.mxu0 0.0
    %429 = vmatprep.subr.mxu0 0.0
    %430 = vmatpush1.msra.mxu0 0.0
    %431 = vmatprep.subr.mxu0 0.0
    %432 = vmatpush1.msra.mxu0 0.0
    %433 = vmatprep.subr.mxu0 0.0
    %434 = vmatpush1.msra.mxu0 0.0
    %435 = vmatprep.subr.mxu0 0.0
    %436 = vmatpush1.msra.mxu0 0.0
    %437 = vmatprep.subr.mxu0 0.0
    %438 = vmatpush1.msra.mxu0 0.0
    %439 = vmatprep.subr.mxu0 0.0
    %440 = vmatpush1.msra.mxu0 0.0
    %441 = vmatprep.subr.mxu0 0.0
    %442 = vmatpush1.msra.mxu0 0.0
    %443 = vmatprep.subr.mxu0 0.0
    %444 = vmatpush1.msra.mxu0 0.0
    %445 = vmatprep.subr.mxu0 0.0
    %446 = vmatpush1.msra.mxu0 0.0
    %447 = vmatprep.subr.mxu0 0.0
    %448 = vmatpush1.msra.mxu0 0.0
    %449 = vmatprep.subr.mxu0 0.0
    %450 = vmatpush1.msra.mxu0 0.0
    %451 = vmatprep.subr.mxu0 0.0
    %452 = vmatpush1.msra.mxu0 0.0
    %453 = vmatprep.subr.mxu0 0.0
    %454 = vmatpush1.msra.mxu0 0.0
    %455 = vmatprep.subr.mxu0 0.0
    %456 = vmatpush1.msra.mxu0 0.0
    %457 = vmatprep.subr.mxu0 0.0
    %458 = vmatpush1.msra.mxu0 0.0
    %459 = vmatprep.subr.mxu0 0.0
    %460 = vmatpush1.msra.mxu0 0.0
    %461 = vmatprep.subr.mxu0 0.0
    %462 = vmatpush1.msra.mxu0 0.0
    %463 = vmatprep.subr.mxu0 0.0
    %464 = vmatpush1.msra.mxu0 0.0
    %465 = vmatprep.subr.mxu0 0.0
    %466 = vmatpush1.msra.mxu0 0.0
    %467 = vmatprep.subr.mxu0 0.0
    %468 = vmatpush1.msra.mxu0 0.0
    %469 = vmatprep.subr.mxu0 0.0
    %470 = vmatpush1.msra.mxu0 0.0
    %471 = vmatprep.subr.mxu0 0.0
    %472 = vmatpush1.msra.mxu0 0.0
    %473 = vmatprep.subr.mxu0 0.0
    %474 = vmatpush1.msra.mxu0 0.0
    %475 = vmatprep.subr.mxu0 0.0
    %476 = vmatpush1.msra.mxu0 0.0
    %477 = vmatprep.subr.mxu0 0.0
    %478 = vmatpush1.msra.mxu0 0.0
    %479 = vmatprep.subr.mxu0 0.0
    %480 = vmatpush1.msra.mxu0 0.0
    %481 = vmatprep.subr.mxu0 0.0
    %482 = vmatpush1.msra.mxu0 0.0
    %483 = vmatprep.subr.mxu0 0.0
    %484 = vmatpush1.msra.mxu0 0.0
    %485 = vmatprep.subr.mxu0 0.0
    %486 = vmatpush1.msra.mxu0 0.0
    %487 = vmatprep.subr.mxu0 0.0
    %488 = vmatpush1.msra.mxu0 0.0
    %489 = vmatprep.mubr.f32.mxu0 0.0
    %490 = vmatmul.mubr.f32.gmra.mrb[0].mxu0 %v96
    %v491 = vpop.f32.mrb[0].mxu0
    %v492 = vadd.f32 0.0, %v491
    %v493 = vpop.f32.mrb[0].mxu0
    %494 = vmatprep.mubr.f32.mxu0 0.0
    %495 = vmatmul.mubr.f32.gmra.mrb[0].mxu0 %v99
    %v496 = vpop.f32.mrb[0].mxu0
    %v497 = vadd.f32 0.0, %v496
    %v498 = vpop.f32.mrb[0].mxu0
    %499 = vmatprep.mubr.f32.mxu0 0.0
    %500 = vmatmul.mubr.f32.gmra.mrb[0].mxu0 %v102
    %v501 = vpop.f32.mrb[0].mxu0
    %v502 = vadd.f32 0.0, %v501
    %v503 = vpop.f32.mrb[0].mxu0
    %504 = vmatprep.mubr.f32.mxu0 0.0
    %505 = vmatmul.mubr.f32.gmra.mrb[0].mxu0 %v105
    %v506 = vpop.f32.mrb[0].mxu0
    %v507 = vadd.f32 0.0, %v506
    %v508 = vpop.f32.mrb[0].mxu0
    %509 = vmatprep.mubr.f32.mxu0 0.0
    %510 = vmatmul.mubr.f32.gmra.mrb[0].mxu0 %v108
    %v511 = vpop.f32.mrb[0].mxu0
    %v512 = vadd.f32 0.0, %v511
    %v513 = vpop.f32.mrb[0].mxu0
    %514 = vmatprep.mubr.f32.mxu0 0.0
    %515 = vmatmul.mubr.f32.gmra.mrb[0].mxu0 %v111
    %v516 = vpop.f32.mrb[0].mxu0
    %v517 = vadd.f32 0.0, %v516
    %v518 = vpop.f32.mrb[0].mxu0
    %519 = vmatprep.mubr.f32.mxu0 0.0
    %520 = vmatmul.mubr.f32.gmra.mrb[0].mxu0 %v114
    %v521 = vpop.f32.mrb[0].mxu0
    %v522 = vadd.f32 0.0, %v521
    %v523 = vpop.f32.mrb[0].mxu0
    %524 = vmatprep.mubr.f32.mxu0 0.0
    %525 = vmatmul.mubr.f32.gmra.mrb[0].mxu0 %v117
    %v526 = vpop.f32.mrb[0].mxu0
    %v527 = vadd.f32 0.0, %v526
    %v528 = vpop.f32.mrb[0].mxu0
    %529 = vmatprep.mubr.f32.mxu0 0.0
    %530 = vmatmul.mubr.f32.gmra.mrb[0].mxu0 %v120
    %v531 = vpop.f32.mrb[0].mxu0
    %v532 = vadd.f32 0.0, %v531
    %v533 = vpop.f32.mrb[0].mxu0
    %534 = vmatprep.mubr.f32.mxu0 0.0
    %535 = vmatmul.mubr.f32.gmra.mrb[0].mxu0 %v123
    %v536 = vpop.f32.mrb[0].mxu0
    %v537 = vadd.f32 0.0, %v536
    %v538 = vpop.f32.mrb[0].mxu0
    %539 = vmatprep.mubr.f32.mxu0 0.0
    %540 = vmatmul.mubr.f32.gmra.mrb[0].mxu0 %v126
    %v541 = vpop.f32.mrb[0].mxu0
    %v542 = vadd.f32 0.0, %v541
    %v543 = vpop.f32.mrb[0].mxu0
    %544 = vmatprep.mubr.f32.mxu0 0.0
    %545 = vmatmul.mubr.f32.gmra.mrb[0].mxu0 %v129
    %v546 = vpop.f32.mrb[0].mxu0
    %v547 = vadd.f32 0.0, %v546
    %v548 = vpop.f32.mrb[0].mxu0
    %549 = vmatprep.mubr.f32.mxu0 0.0
    %550 = vmatmul.mubr.f32.gmra.mrb[0].mxu0 %v132
    %v551 = vpop.f32.mrb[0].mxu0
    %v552 = vadd.f32 0.0, %v551
    %v553 = vpop.f32.mrb[0].mxu0
    %554 = vmatprep.mubr.f32.mxu0 0.0
    %555 = vmatmul.mubr.f32.gmra.mrb[0].mxu0 %v135
    %v556 = vpop.f32.mrb[0].mxu0
    %v557 = vadd.f32 0.0, %v556
    %v558 = vpop.f32.mrb[0].mxu0
    %559 = vmatprep.mubr.f32.mxu0 0.0
    %560 = vmatmul.mubr.f32.gmra.mrb[0].mxu0 %v138
    %v561 = vpop.f32.mrb[0].mxu0
    %v562 = vadd.f32 0.0, %v561
    %v563 = vpop.f32.mrb[0].mxu0
    %564 = vmatprep.mubr.f32.mxu0 0.0
    %565 = vmatmul.mubr.f32.gmra.mrb[0].mxu0 %v141
    %v566 = vpop.f32.mrb[0].mxu0
    %v567 = vadd.f32 0.0, %v566
    %v568 = vpop.f32.mrb[0].mxu0
    %569 = vmatprep.mubr.f32.mxu0 0.0
    %570 = vmatmul.mubr.f32.gmra.mrb[0].mxu0 %v144
    %v571 = vpop.f32.mrb[0].mxu0
    %v572 = vadd.f32 0.0, %v571
    %v573 = vpop.f32.mrb[0].mxu0
    %574 = vmatprep.mubr.f32.mxu0 0.0
    %575 = vmatmul.mubr.f32.gmra.mrb[0].mxu0 %v147
    %v576 = vpop.f32.mrb[0].mxu0
    %v577 = vadd.f32 0.0, %v576
    %v578 = vpop.f32.mrb[0].mxu0
    %579 = vmatprep.mubr.f32.mxu0 0.0
    %580 = vmatmul.mubr.f32.gmra.mrb[0].mxu0 %v150
    %v581 = vpop.f32.mrb[0].mxu0
    %v582 = vadd.f32 0.0, %v581
    %v583 = vpop.f32.mrb[0].mxu0
    %584 = vmatprep.mubr.f32.mxu0 0.0
    %585 = vmatmul.mubr.f32.gmra.mrb[0].mxu0 %v153
    %v586 = vpop.f32.mrb[0].mxu0
    %v587 = vadd.f32 0.0, %v586
    %v588 = vpop.f32.mrb[0].mxu0
    %589 = vmatprep.mubr.f32.mxu0 0.0
    %590 = vmatmul.mubr.f32.gmra.mrb[0].mxu0 %v156
    %v591 = vpop.f32.mrb[0].mxu0
    %v592 = vadd.f32 0.0, %v591
    %v593 = vpop.f32.mrb[0].mxu0
    %594 = vmatprep.mubr.f32.mxu0 0.0
    %595 = vmatmul.mubr.f32.gmra.mrb[0].mxu0 %v159
    %v596 = vpop.f32.mrb[0].mxu0
    %v597 = vadd.f32 0.0, %v596
    %v598 = vpop.f32.mrb[0].mxu0
    %599 = vmatprep.mubr.f32.mxu0 0.0
    %600 = vmatmul.mubr.f32.gmra.mrb[0].mxu0 %v162
    %v601 = vpop.f32.mrb[0].mxu0
    %v602 = vadd.f32 0.0, %v601
    %v603 = vpop.f32.mrb[0].mxu0
    %604 = vmatprep.mubr.f32.mxu0 0.0
    %605 = vmatmul.mubr.f32.gmra.mrb[0].mxu0 %v165
    %v606 = vpop.f32.mrb[0].mxu0
    %v607 = vadd.f32 0.0, %v606
    %v608 = vpop.f32.mrb[0].mxu0
    %609 = vmatprep.mubr.f32.mxu0 0.0
    %610 = vmatmul.mubr.f32.gmra.mrb[0].mxu0 %v168
    %v611 = vpop.f32.mrb[0].mxu0
    %v612 = vadd.f32 0.0, %v611
    %v613 = vpop.f32.mrb[0].mxu0
    %614 = vmatprep.mubr.f32.mxu0 0.0
    %615 = vmatmul.mubr.f32.gmra.mrb[0].mxu0 %v171
    %v616 = vpop.f32.mrb[0].mxu0
    %v617 = vadd.f32 0.0, %v616
    %v618 = vpop.f32.mrb[0].mxu0
    %619 = vmatprep.mubr.f32.mxu0 0.0
    %620 = vmatmul.mubr.f32.gmra.mrb[0].mxu0 %v174
    %v621 = vpop.f32.mrb[0].mxu0
    %v622 = vadd.f32 0.0, %v621
    %v623 = vpop.f32.mrb[0].mxu0
    %624 = vmatprep.mubr.f32.mxu0 0.0
    %625 = vmatmul.mubr.f32.gmra.mrb[0].mxu0 %v177
    %v626 = vpop.f32.mrb[0].mxu0
    %v627 = vadd.f32 0.0, %v626
    %v628 = vpop.f32.mrb[0].mxu0
    %629 = vmatprep.mubr.f32.mxu0 0.0
    %630 = vmatmul.mubr.f32.gmra.mrb[0].mxu0 %v180
    %v631 = vpop.f32.mrb[0].mxu0
    %v632 = vadd.f32 0.0, %v631
    %v633 = vpop.f32.mrb[0].mxu0
    %634 = vmatprep.mubr.f32.mxu0 0.0
    %635 = vmatmul.mubr.f32.gmra.mrb[0].mxu0 %v183
    %v636 = vpop.f32.mrb[0].mxu0
    %v637 = vadd.f32 0.0, %v636
    %v638 = vpop.f32.mrb[0].mxu0
    %639 = vmatprep.mubr.f32.mxu0 0.0
    %640 = vmatmul.mubr.f32.gmra.mrb[0].mxu0 %v186
    %v641 = vpop.f32.mrb[0].mxu0
    %v642 = vadd.f32 0.0, %v641
    %v643 = vpop.f32.mrb[0].mxu0
    %644 = vmatprep.mubr.f32.mxu0 0.0
    %645 = vmatmul.mubr.f32.gmra.mrb[0].mxu0 %v189
    %v646 = vpop.f32.mrb[0].mxu0
    %v647 = vadd.f32 0.0, %v646
    %v648 = vpop.f32.mrb[0].mxu0
    %649 = vdwg.mxu0
    %s650 = scalar_lea.vmem %s2, 4
    %v651 = vld [vmem:[%s650] sm:$0x3]
    %v653 = vsel %vm191, %v651, 0
    %655 = vmatprep.subr.mxu0 0.0
    %656 = vmatpush1.msra.mxu0 %v653
    %657 = vmatprep.subr.mxu0 0.0
    %658 = vmatpush1.msra.mxu0 0.0
    %659 = vmatprep.subr.mxu0 0.0
    %660 = vmatpush1.msra.mxu0 0.0
    %661 = vmatprep.subr.mxu0 0.0
    %662 = vmatpush1.msra.mxu0 0.0
    %663 = vmatprep.subr.mxu0 0.0
    %664 = vmatpush1.msra.mxu0 0.0
    %665 = vmatprep.subr.mxu0 0.0
    %666 = vmatpush1.msra.mxu0 0.0
    %667 = vmatprep.subr.mxu0 0.0
    %668 = vmatpush1.msra.mxu0 0.0
    %669 = vmatprep.subr.mxu0 0.0
    %670 = vmatpush1.msra.mxu0 0.0
    %671 = vmatprep.subr.mxu0 0.0
    %672 = vmatpush1.msra.mxu0 0.0
    %673 = vmatprep.subr.mxu0 0.0
    %674 = vmatpush1.msra.mxu0 0.0
    %675 = vmatprep.subr.mxu0 0.0
    %676 = vmatpush1.msra.mxu0 0.0
    %677 = vmatprep.subr.mxu0 0.0
    %678 = vmatpush1.msra.mxu0 0.0
    %679 = vmatprep.subr.mxu0 0.0
    %680 = vmatpush1.msra.mxu0 0.0
    %681 = vmatprep.subr.mxu0 0.0
    %682 = vmatpush1.msra.mxu0 0.0
    %683 = vmatprep.subr.mxu0 0.0
    %684 = vmatpush1.msra.mxu0 0.0
    %685 = vmatprep.subr.mxu0 0.0
    %686 = vmatpush1.msra.mxu0 0.0
    %687 = vmatprep.subr.mxu0 0.0
    %688 = vmatpush1.msra.mxu0 0.0
    %689 = vmatprep.subr.mxu0 0.0
    %690 = vmatpush1.msra.mxu0 0.0
    %691 = vmatprep.subr.mxu0 0.0
    %692 = vmatpush1.msra.mxu0 0.0
    %693 = vmatprep.subr.mxu0 0.0
    %694 = vmatpush1.msra.mxu0 0.0
    %695 = vmatprep.subr.mxu0 0.0
    %696 = vmatpush1.msra.mxu0 0.0
    %697 = vmatprep.subr.mxu0 0.0
    %698 = vmatpush1.msra.mxu0 0.0
    %699 = vmatprep.subr.mxu0 0.0
    %700 = vmatpush1.msra.mxu0 0.0
    %701 = vmatprep.subr.mxu0 0.0
    %702 = vmatpush1.msra.mxu0 0.0
    %703 = vmatprep.subr.mxu0 0.0
    %704 = vmatpush1.msra.mxu0 0.0
    %705 = vmatprep.subr.mxu0 0.0
    %706 = vmatpush1.msra.mxu0 0.0
    %707 = vmatprep.subr.mxu0 0.0
    %708 = vmatpush1.msra.mxu0 0.0
    %709 = vmatprep.subr.mxu0 0.0
    %710 = vmatpush1.msra.mxu0 0.0
    %711 = vmatprep.subr.mxu0 0.0
    %712 = vmatpush1.msra.mxu0 0.0
    %713 = vmatprep.subr.mxu0 0.0
    %714 = vmatpush1.msra.mxu0 0.0
    %715 = vmatprep.subr.mxu0 0.0
    %716 = vmatpush1.msra.mxu0 0.0
    %717 = vmatprep.subr.mxu0 0.0
    %718 = vmatpush1.msra.mxu0 0.0
    %719 = vmatprep.mubr.f32.mxu0 0.0
    %720 = vmatmul.mubr.f32.gmra.mrb[0].mxu0 %v96
    %v721 = vpop.f32.mrb[0].mxu0
    %v722 = vadd.f32 0.0, %v721
    %v723 = vpop.f32.mrb[0].mxu0
    %724 = vmatprep.mubr.f32.mxu0 0.0
    %725 = vmatmul.mubr.f32.gmra.mrb[0].mxu0 %v99
    %v726 = vpop.f32.mrb[0].mxu0
    %v727 = vadd.f32 0.0, %v726
    %v728 = vpop.f32.mrb[0].mxu0
    %729 = vmatprep.mubr.f32.mxu0 0.0
    %730 = vmatmul.mubr.f32.gmra.mrb[0].mxu0 %v102
    %v731 = vpop.f32.mrb[0].mxu0
    %v732 = vadd.f32 0.0, %v731
    %v733 = vpop.f32.mrb[0].mxu0
    %734 = vmatprep.mubr.f32.mxu0 0.0
    %735 = vmatmul.mubr.f32.gmra.mrb[0].mxu0 %v105
    %v736 = vpop.f32.mrb[0].mxu0
    %v737 = vadd.f32 0.0, %v736
    %v738 = vpop.f32.mrb[0].mxu0
    %739 = vmatprep.mubr.f32.mxu0 0.0
    %740 = vmatmul.mubr.f32.gmra.mrb[0].mxu0 %v108
    %v741 = vpop.f32.mrb[0].mxu0
    %v742 = vadd.f32 0.0, %v741
    %v743 = vpop.f32.mrb[0].mxu0
    %744 = vmatprep.mubr.f32.mxu0 0.0
    %745 = vmatmul.mubr.f32.gmra.mrb[0].mxu0 %v111
    %v746 = vpop.f32.mrb[0].mxu0
    %v747 = vadd.f32 0.0, %v746
    %v748 = vpop.f32.mrb[0].mxu0
    %749 = vmatprep.mubr.f32.mxu0 0.0
    %750 = vmatmul.mubr.f32.gmra.mrb[0].mxu0 %v114
    %v751 = vpop.f32.mrb[0].mxu0
    %v752 = vadd.f32 0.0, %v751
    %v753 = vpop.f32.mrb[0].mxu0
    %754 = vmatprep.mubr.f32.mxu0 0.0
    %755 = vmatmul.mubr.f32.gmra.mrb[0].mxu0 %v117
    %v756 = vpop.f32.mrb[0].mxu0
    %v757 = vadd.f32 0.0, %v756
    %v758 = vpop.f32.mrb[0].mxu0
    %759 = vmatprep.mubr.f32.mxu0 0.0
    %760 = vmatmul.mubr.f32.gmra.mrb[0].mxu0 %v120
    %v761 = vpop.f32.mrb[0].mxu0
    %v762 = vadd.f32 0.0, %v761
    %v763 = vpop.f32.mrb[0].mxu0
    %764 = vmatprep.mubr.f32.mxu0 0.0
    %765 = vmatmul.mubr.f32.gmra.mrb[0].mxu0 %v123
    %v766 = vpop.f32.mrb[0].mxu0
    %v767 = vadd.f32 0.0, %v766
    %v768 = vpop.f32.mrb[0].mxu0
    %769 = vmatprep.mubr.f32.mxu0 0.0
    %770 = vmatmul.mubr.f32.gmra.mrb[0].mxu0 %v126
    %v771 = vpop.f32.mrb[0].mxu0
    %v772 = vadd.f32 0.0, %v771
    %v773 = vpop.f32.mrb[0].mxu0
    %774 = vmatprep.mubr.f32.mxu0 0.0
    %775 = vmatmul.mubr.f32.gmra.mrb[0].mxu0 %v129
    %v776 = vpop.f32.mrb[0].mxu0
    %v777 = vadd.f32 0.0, %v776
    %v778 = vpop.f32.mrb[0].mxu0
    %779 = vmatprep.mubr.f32.mxu0 0.0
    %780 = vmatmul.mubr.f32.gmra.mrb[0].mxu0 %v132
    %v781 = vpop.f32.mrb[0].mxu0
    %v782 = vadd.f32 0.0, %v781
    %v783 = vpop.f32.mrb[0].mxu0
    %784 = vmatprep.mubr.f32.mxu0 0.0
    %785 = vmatmul.mubr.f32.gmra.mrb[0].mxu0 %v135
    %v786 = vpop.f32.mrb[0].mxu0
    %v787 = vadd.f32 0.0, %v786
    %v788 = vpop.f32.mrb[0].mxu0
    %789 = vmatprep.mubr.f32.mxu0 0.0
    %790 = vmatmul.mubr.f32.gmra.mrb[0].mxu0 %v138
    %v791 = vpop.f32.mrb[0].mxu0
    %v792 = vadd.f32 0.0, %v791
    %v793 = vpop.f32.mrb[0].mxu0
    %794 = vmatprep.mubr.f32.mxu0 0.0
    %795 = vmatmul.mubr.f32.gmra.mrb[0].mxu0 %v141
    %v796 = vpop.f32.mrb[0].mxu0
    %v797 = vadd.f32 0.0, %v796
    %v798 = vpop.f32.mrb[0].mxu0
    %799 = vmatprep.mubr.f32.mxu0 0.0
    %800 = vmatmul.mubr.f32.gmra.mrb[0].mxu0 %v144
    %v801 = vpop.f32.mrb[0].mxu0
    %v802 = vadd.f32 0.0, %v801
    %v803 = vpop.f32.mrb[0].mxu0
    %804 = vmatprep.mubr.f32.mxu0 0.0
    %805 = vmatmul.mubr.f32.gmra.mrb[0].mxu0 %v147
    %v806 = vpop.f32.mrb[0].mxu0
    %v807 = vadd.f32 0.0, %v806
    %v808 = vpop.f32.mrb[0].mxu0
    %809 = vmatprep.mubr.f32.mxu0 0.0
    %810 = vmatmul.mubr.f32.gmra.mrb[0].mxu0 %v150
    %v811 = vpop.f32.mrb[0].mxu0
    %v812 = vadd.f32 0.0, %v811
    %v813 = vpop.f32.mrb[0].mxu0
    %814 = vmatprep.mubr.f32.mxu0 0.0
    %815 = vmatmul.mubr.f32.gmra.mrb[0].mxu0 %v153
    %v816 = vpop.f32.mrb[0].mxu0
    %v817 = vadd.f32 0.0, %v816
    %v818 = vpop.f32.mrb[0].mxu0
    %819 = vmatprep.mubr.f32.mxu0 0.0
    %820 = vmatmul.mubr.f32.gmra.mrb[0].mxu0 %v156
    %v821 = vpop.f32.mrb[0].mxu0
    %v822 = vadd.f32 0.0, %v821
    %v823 = vpop.f32.mrb[0].mxu0
    %824 = vmatprep.mubr.f32.mxu0 0.0
    %825 = vmatmul.mubr.f32.gmra.mrb[0].mxu0 %v159
    %v826 = vpop.f32.mrb[0].mxu0
    %v827 = vadd.f32 0.0, %v826
    %v828 = vpop.f32.mrb[0].mxu0
    %829 = vmatprep.mubr.f32.mxu0 0.0
    %830 = vmatmul.mubr.f32.gmra.mrb[0].mxu0 %v162
    %v831 = vpop.f32.mrb[0].mxu0
    %v832 = vadd.f32 0.0, %v831
    %v833 = vpop.f32.mrb[0].mxu0
    %834 = vmatprep.mubr.f32.mxu0 0.0
    %835 = vmatmul.mubr.f32.gmra.mrb[0].mxu0 %v165
    %v836 = vpop.f32.mrb[0].mxu0
    %v837 = vadd.f32 0.0, %v836
    %v838 = vpop.f32.mrb[0].mxu0
    %839 = vmatprep.mubr.f32.mxu0 0.0
    %840 = vmatmul.mubr.f32.gmra.mrb[0].mxu0 %v168
    %v841 = vpop.f32.mrb[0].mxu0
    %v842 = vadd.f32 0.0, %v841
    %v843 = vpop.f32.mrb[0].mxu0
    %844 = vmatprep.mubr.f32.mxu0 0.0
    %845 = vmatmul.mubr.f32.gmra.mrb[0].mxu0 %v171
    %v846 = vpop.f32.mrb[0].mxu0
    %v847 = vadd.f32 0.0, %v846
    %v848 = vpop.f32.mrb[0].mxu0
    %849 = vmatprep.mubr.f32.mxu0 0.0
    %850 = vmatmul.mubr.f32.gmra.mrb[0].mxu0 %v174
    %v851 = vpop.f32.mrb[0].mxu0
    %v852 = vadd.f32 0.0, %v851
    %v853 = vpop.f32.mrb[0].mxu0
    %854 = vmatprep.mubr.f32.mxu0 0.0
    %855 = vmatmul.mubr.f32.gmra.mrb[0].mxu0 %v177
    %v856 = vpop.f32.mrb[0].mxu0
    %v857 = vadd.f32 0.0, %v856
    %v858 = vpop.f32.mrb[0].mxu0
    %859 = vmatprep.mubr.f32.mxu0 0.0
    %860 = vmatmul.mubr.f32.gmra.mrb[0].mxu0 %v180
    %v861 = vpop.f32.mrb[0].mxu0
    %v862 = vadd.f32 0.0, %v861
    %v863 = vpop.f32.mrb[0].mxu0
    %864 = vmatprep.mubr.f32.mxu0 0.0
    %865 = vmatmul.mubr.f32.gmra.mrb[0].mxu0 %v183
    %v866 = vpop.f32.mrb[0].mxu0
    %v867 = vadd.f32 0.0, %v866
    %v868 = vpop.f32.mrb[0].mxu0
    %869 = vmatprep.mubr.f32.mxu0 0.0
    %870 = vmatmul.mubr.f32.gmra.mrb[0].mxu0 %v186
    %v871 = vpop.f32.mrb[0].mxu0
    %v872 = vadd.f32 0.0, %v871
    %v873 = vpop.f32.mrb[0].mxu0
    %874 = vmatprep.mubr.f32.mxu0 0.0
    %875 = vmatmul.mubr.f32.gmra.mrb[0].mxu0 %v189
    %v876 = vpop.f32.mrb[0].mxu0
    %v877 = vadd.f32 0.0, %v876
    %v878 = vpop.f32.mrb[0].mxu0
    %879 = vdwg.mxu0
    %s880 = scalar_lea.vmem %s2, 6
    %v881 = vld [vmem:[%s880] sm:$0x3]
    %v883 = vsel %vm191, %v881, 0
    %885 = vmatprep.subr.mxu0 0.0
    %886 = vmatpush1.msra.mxu0 %v883
    %887 = vmatprep.subr.mxu0 0.0
    %888 = vmatpush1.msra.mxu0 0.0
    %889 = vmatprep.subr.mxu0 0.0
    %890 = vmatpush1.msra.mxu0 0.0
    %891 = vmatprep.subr.mxu0 0.0
    %892 = vmatpush1.msra.mxu0 0.0
    %893 = vmatprep.subr.mxu0 0.0
    %894 = vmatpush1.msra.mxu0 0.0
    %895 = vmatprep.subr.mxu0 0.0
    %896 = vmatpush1.msra.mxu0 0.0
    %897 = vmatprep.subr.mxu0 0.0
    %898 = vmatpush1.msra.mxu0 0.0
    %899 = vmatprep.subr.mxu0 0.0
    %900 = vmatpush1.msra.mxu0 0.0
    %901 = vmatprep.subr.mxu0 0.0
    %902 = vmatpush1.msra.mxu0 0.0
    %903 = vmatprep.subr.mxu0 0.0
    %904 = vmatpush1.msra.mxu0 0.0
    %905 = vmatprep.subr.mxu0 0.0
    %906 = vmatpush1.msra.mxu0 0.0
    %907 = vmatprep.subr.mxu0 0.0
    %908 = vmatpush1.msra.mxu0 0.0
    %909 = vmatprep.subr.mxu0 0.0
    %910 = vmatpush1.msra.mxu0 0.0
    %911 = vmatprep.subr.mxu0 0.0
    %912 = vmatpush1.msra.mxu0 0.0
    %913 = vmatprep.subr.mxu0 0.0
    %914 = vmatpush1.msra.mxu0 0.0
    %915 = vmatprep.subr.mxu0 0.0
    %916 = vmatpush1.msra.mxu0 0.0
    %917 = vmatprep.subr.mxu0 0.0
    %918 = vmatpush1.msra.mxu0 0.0
    %919 = vmatprep.subr.mxu0 0.0
    %920 = vmatpush1.msra.mxu0 0.0
    %921 = vmatprep.subr.mxu0 0.0
    %922 = vmatpush1.msra.mxu0 0.0
    %923 = vmatprep.subr.mxu0 0.0
    %924 = vmatpush1.msra.mxu0 0.0
    %925 = vmatprep.subr.mxu0 0.0
    %926 = vmatpush1.msra.mxu0 0.0
    %927 = vmatprep.subr.mxu0 0.0
    %928 = vmatpush1.msra.mxu0 0.0
    %929 = vmatprep.subr.mxu0 0.0
    %930 = vmatpush1.msra.mxu0 0.0
    %931 = vmatprep.subr.mxu0 0.0
    %932 = vmatpush1.msra.mxu0 0.0
    %933 = vmatprep.subr.mxu0 0.0
    %934 = vmatpush1.msra.mxu0 0.0
    %935 = vmatprep.subr.mxu0 0.0
    %936 = vmatpush1.msra.mxu0 0.0
    %937 = vmatprep.subr.mxu0 0.0
    %938 = vmatpush1.msra.mxu0 0.0
    %939 = vmatprep.subr.mxu0 0.0
    %940 = vmatpush1.msra.mxu0 0.0
    %941 = vmatprep.subr.mxu0 0.0
    %942 = vmatpush1.msra.mxu0 0.0
    %943 = vmatprep.subr.mxu0 0.0
    %944 = vmatpush1.msra.mxu0 0.0
    %945 = vmatprep.subr.mxu0 0.0
    %946 = vmatpush1.msra.mxu0 0.0
    %947 = vmatprep.subr.mxu0 0.0
    %948 = vmatpush1.msra.mxu0 0.0
    %949 = vmatprep.mubr.f32.mxu0 0.0
    %950 = vmatmul.mubr.f32.gmra.mrb[0].mxu0 %v96
    %v951 = vpop.f32.mrb[0].mxu0
    %v952 = vadd.f32 0.0, %v951
    %v953 = vpop.f32.mrb[0].mxu0
    %954 = vmatprep.mubr.f32.mxu0 0.0
    %955 = vmatmul.mubr.f32.gmra.mrb[0].mxu0 %v99
    %v956 = vpop.f32.mrb[0].mxu0
    %v957 = vadd.f32 0.0, %v956
    %v958 = vpop.f32.mrb[0].mxu0
    %959 = vmatprep.mubr.f32.mxu0 0.0
    %960 = vmatmul.mubr.f32.gmra.mrb[0].mxu0 %v102
    %v961 = vpop.f32.mrb[0].mxu0
    %v962 = vadd.f32 0.0, %v961
    %v963 = vpop.f32.mrb[0].mxu0
    %964 = vmatprep.mubr.f32.mxu0 0.0
    %965 = vmatmul.mubr.f32.gmra.mrb[0].mxu0 %v105
    %v966 = vpop.f32.mrb[0].mxu0
    %v967 = vadd.f32 0.0, %v966
    %v968 = vpop.f32.mrb[0].mxu0
    %969 = vmatprep.mubr.f32.mxu0 0.0
    %970 = vmatmul.mubr.f32.gmra.mrb[0].mxu0 %v108
    %v971 = vpop.f32.mrb[0].mxu0
    %v972 = vadd.f32 0.0, %v971
    %v973 = vpop.f32.mrb[0].mxu0
    %974 = vmatprep.mubr.f32.mxu0 0.0
    %975 = vmatmul.mubr.f32.gmra.mrb[0].mxu0 %v111
    %v976 = vpop.f32.mrb[0].mxu0
    %v977 = vadd.f32 0.0, %v976
    %v978 = vpop.f32.mrb[0].mxu0
    %979 = vmatprep.mubr.f32.mxu0 0.0
    %980 = vmatmul.mubr.f32.gmra.mrb[0].mxu0 %v114
    %v981 = vpop.f32.mrb[0].mxu0
    %v982 = vadd.f32 0.0, %v981
    %v983 = vpop.f32.mrb[0].mxu0
    %984 = vmatprep.mubr.f32.mxu0 0.0
    %985 = vmatmul.mubr.f32.gmra.mrb[0].mxu0 %v117
    %v986 = vpop.f32.mrb[0].mxu0
    %v987 = vadd.f32 0.0, %v986
    %v988 = vpop.f32.mrb[0].mxu0
    %989 = vmatprep.mubr.f32.mxu0 0.0
    %990 = vmatmul.mubr.f32.gmra.mrb[0].mxu0 %v120
    %v991 = vpop.f32.mrb[0].mxu0
    %v992 = vadd.f32 0.0, %v991
    %v993 = vpop.f32.mrb[0].mxu0
    %994 = vmatprep.mubr.f32.mxu0 0.0
    %995 = vmatmul.mubr.f32.gmra.mrb[0].mxu0 %v123
    %v996 = vpop.f32.mrb[0].mxu0
    %v997 = vadd.f32 0.0, %v996
    %v998 = vpop.f32.mrb[0].mxu0
    %999 = vmatprep.mubr.f32.mxu0 0.0
    %1000 = vmatmul.mubr.f32.gmra.mrb[0].mxu0 %v126
    %v1001 = vpop.f32.mrb[0].mxu0
    %v1002 = vadd.f32 0.0, %v1001
    %v1003 = vpop.f32.mrb[0].mxu0
    %1004 = vmatprep.mubr.f32.mxu0 0.0
    %1005 = vmatmul.mubr.f32.gmra.mrb[0].mxu0 %v129
    %v1006 = vpop.f32.mrb[0].mxu0
    %v1007 = vadd.f32 0.0, %v1006
    %v1008 = vpop.f32.mrb[0].mxu0
    %1009 = vmatprep.mubr.f32.mxu0 0.0
    %1010 = vmatmul.mubr.f32.gmra.mrb[0].mxu0 %v132
    %v1011 = vpop.f32.mrb[0].mxu0
    %v1012 = vadd.f32 0.0, %v1011
    %v1013 = vpop.f32.mrb[0].mxu0
    %1014 = vmatprep.mubr.f32.mxu0 0.0
    %1015 = vmatmul.mubr.f32.gmra.mrb[0].mxu0 %v135
    %v1016 = vpop.f32.mrb[0].mxu0
    %v1017 = vadd.f32 0.0, %v1016
    %v1018 = vpop.f32.mrb[0].mxu0
    %1019 = vmatprep.mubr.f32.mxu0 0.0
    %1020 = vmatmul.mubr.f32.gmra.mrb[0].mxu0 %v138
    %v1021 = vpop.f32.mrb[0].mxu0
    %v1022 = vadd.f32 0.0, %v1021
    %v1023 = vpop.f32.mrb[0].mxu0
    %1024 = vmatprep.mubr.f32.mxu0 0.0
    %1025 = vmatmul.mubr.f32.gmra.mrb[0].mxu0 %v141
    %v1026 = vpop.f32.mrb[0].mxu0
    %v1027 = vadd.f32 0.0, %v1026
    %v1028 = vpop.f32.mrb[0].mxu0
    %1029 = vmatprep.mubr.f32.mxu0 0.0
    %1030 = vmatmul.mubr.f32.gmra.mrb[0].mxu0 %v144
    %v1031 = vpop.f32.mrb[0].mxu0
    %v1032 = vadd.f32 0.0, %v1031
    %v1033 = vpop.f32.mrb[0].mxu0
    %1034 = vmatprep.mubr.f32.mxu0 0.0
    %1035 = vmatmul.mubr.f32.gmra.mrb[0].mxu0 %v147
    %v1036 = vpop.f32.mrb[0].mxu0
    %v1037 = vadd.f32 0.0, %v1036
    %v1038 = vpop.f32.mrb[0].mxu0
    %1039 = vmatprep.mubr.f32.mxu0 0.0
    %1040 = vmatmul.mubr.f32.gmra.mrb[0].mxu0 %v150
    %v1041 = vpop.f32.mrb[0].mxu0
    %v1042 = vadd.f32 0.0, %v1041
    %v1043 = vpop.f32.mrb[0].mxu0
    %1044 = vmatprep.mubr.f32.mxu0 0.0
    %1045 = vmatmul.mubr.f32.gmra.mrb[0].mxu0 %v153
    %v1046 = vpop.f32.mrb[0].mxu0
    %v1047 = vadd.f32 0.0, %v1046
    %v1048 = vpop.f32.mrb[0].mxu0
    %1049 = vmatprep.mubr.f32.mxu0 0.0
    %1050 = vmatmul.mubr.f32.gmra.mrb[0].mxu0 %v156
    %v1051 = vpop.f32.mrb[0].mxu0
    %v1052 = vadd.f32 0.0, %v1051
    %v1053 = vpop.f32.mrb[0].mxu0
    %1054 = vmatprep.mubr.f32.mxu0 0.0
    %1055 = vmatmul.mubr.f32.gmra.mrb[0].mxu0 %v159
    %v1056 = vpop.f32.mrb[0].mxu0
    %v1057 = vadd.f32 0.0, %v1056
    %v1058 = vpop.f32.mrb[0].mxu0
    %1059 = vmatprep.mubr.f32.mxu0 0.0
    %1060 = vmatmul.mubr.f32.gmra.mrb[0].mxu0 %v162
    %v1061 = vpop.f32.mrb[0].mxu0
    %v1062 = vadd.f32 0.0, %v1061
    %v1063 = vpop.f32.mrb[0].mxu0
    %1064 = vmatprep.mubr.f32.mxu0 0.0
    %1065 = vmatmul.mubr.f32.gmra.mrb[0].mxu0 %v165
    %v1066 = vpop.f32.mrb[0].mxu0
    %v1067 = vadd.f32 0.0, %v1066
    %v1068 = vpop.f32.mrb[0].mxu0
    %1069 = vmatprep.mubr.f32.mxu0 0.0
    %1070 = vmatmul.mubr.f32.gmra.mrb[0].mxu0 %v168
    %v1071 = vpop.f32.mrb[0].mxu0
    %v1072 = vadd.f32 0.0, %v1071
    %v1073 = vpop.f32.mrb[0].mxu0
    %1074 = vmatprep.mubr.f32.mxu0 0.0
    %1075 = vmatmul.mubr.f32.gmra.mrb[0].mxu0 %v171
    %v1076 = vpop.f32.mrb[0].mxu0
    %v1077 = vadd.f32 0.0, %v1076
    %v1078 = vpop.f32.mrb[0].mxu0
    %1079 = vmatprep.mubr.f32.mxu0 0.0
    %1080 = vmatmul.mubr.f32.gmra.mrb[0].mxu0 %v174
    %v1081 = vpop.f32.mrb[0].mxu0
    %v1082 = vadd.f32 0.0, %v1081
    %v1083 = vpop.f32.mrb[0].mxu0
    %1084 = vmatprep.mubr.f32.mxu0 0.0
    %1085 = vmatmul.mubr.f32.gmra.mrb[0].mxu0 %v177
    %v1086 = vpop.f32.mrb[0].mxu0
    %v1087 = vadd.f32 0.0, %v1086
    %v1088 = vpop.f32.mrb[0].mxu0
    %1089 = vmatprep.mubr.f32.mxu0 0.0
    %1090 = vmatmul.mubr.f32.gmra.mrb[0].mxu0 %v180
    %v1091 = vpop.f32.mrb[0].mxu0
    %v1092 = vadd.f32 0.0, %v1091
    %v1093 = vpop.f32.mrb[0].mxu0
    %1094 = vmatprep.mubr.f32.mxu0 0.0
    %1095 = vmatmul.mubr.f32.gmra.mrb[0].mxu0 %v183
    %v1096 = vpop.f32.mrb[0].mxu0
    %v1097 = vadd.f32 0.0, %v1096
    %v1098 = vpop.f32.mrb[0].mxu0
    %1099 = vmatprep.mubr.f32.mxu0 0.0
    %1100 = vmatmul.mubr.f32.gmra.mrb[0].mxu0 %v186
    %v1101 = vpop.f32.mrb[0].mxu0
    %v1102 = vadd.f32 0.0, %v1101
    %v1103 = vpop.f32.mrb[0].mxu0
    %1104 = vmatprep.mubr.f32.mxu0 0.0
    %1105 = vmatmul.mubr.f32.gmra.mrb[0].mxu0 %v189
    %v1106 = vpop.f32.mrb[0].mxu0
    %v1107 = vadd.f32 0.0, %v1106
    %v1108 = vpop.f32.mrb[0].mxu0
    %1109 = vdwg.mxu0
    %s1110 = scalar_lea.vmem %s2, 8
    %v1111 = vld [vmem:[%s1110] sm:$0x3]
    %v1113 = vsel %vm191, %v1111, 0
    %1115 = vmatprep.subr.mxu0 0.0
    %1116 = vmatpush1.msra.mxu0 %v1113
    %1117 = vmatprep.subr.mxu0 0.0
    %1118 = vmatpush1.msra.mxu0 0.0
    %1119 = vmatprep.subr.mxu0 0.0
    %1120 = vmatpush1.msra.mxu0 0.0
    %1121 = vmatprep.subr.mxu0 0.0
    %1122 = vmatpush1.msra.mxu0 0.0
    %1123 = vmatprep.subr.mxu0 0.0
    %1124 = vmatpush1.msra.mxu0 0.0
    %1125 = vmatprep.subr.mxu0 0.0
    %1126 = vmatpush1.msra.mxu0 0.0
    %1127 = vmatprep.subr.mxu0 0.0
    %1128 = vmatpush1.msra.mxu0 0.0
    %1129 = vmatprep.subr.mxu0 0.0
    %1130 = vmatpush1.msra.mxu0 0.0
    %1131 = vmatprep.subr.mxu0 0.0
    %1132 = vmatpush1.msra.mxu0 0.0
    %1133 = vmatprep.subr.mxu0 0.0
    %1134 = vmatpush1.msra.mxu0 0.0
    %1135 = vmatprep.subr.mxu0 0.0
    %1136 = vmatpush1.msra.mxu0 0.0
    %1137 = vmatprep.subr.mxu0 0.0
    %1138 = vmatpush1.msra.mxu0 0.0
    %1139 = vmatprep.subr.mxu0 0.0
    %1140 = vmatpush1.msra.mxu0 0.0
    %1141 = vmatprep.subr.mxu0 0.0
    %1142 = vmatpush1.msra.mxu0 0.0
    %1143 = vmatprep.subr.mxu0 0.0
    %1144 = vmatpush1.msra.mxu0 0.0
    %1145 = vmatprep.subr.mxu0 0.0
    %1146 = vmatpush1.msra.mxu0 0.0
    %1147 = vmatprep.subr.mxu0 0.0
    %1148 = vmatpush1.msra.mxu0 0.0
    %1149 = vmatprep.subr.mxu0 0.0
    %1150 = vmatpush1.msra.mxu0 0.0
    %1151 = vmatprep.subr.mxu0 0.0
    %1152 = vmatpush1.msra.mxu0 0.0
    %1153 = vmatprep.subr.mxu0 0.0
    %1154 = vmatpush1.msra.mxu0 0.0
    %1155 = vmatprep.subr.mxu0 0.0
    %1156 = vmatpush1.msra.mxu0 0.0
    %1157 = vmatprep.subr.mxu0 0.0
    %1158 = vmatpush1.msra.mxu0 0.0
    %1159 = vmatprep.subr.mxu0 0.0
    %1160 = vmatpush1.msra.mxu0 0.0
    %1161 = vmatprep.subr.mxu0 0.0
    %1162 = vmatpush1.msra.mxu0 0.0
    %1163 = vmatprep.subr.mxu0 0.0
    %1164 = vmatpush1.msra.mxu0 0.0
    %1165 = vmatprep.subr.mxu0 0.0
    %1166 = vmatpush1.msra.mxu0 0.0
    %1167 = vmatprep.subr.mxu0 0.0
    %1168 = vmatpush1.msra.mxu0 0.0
    %1169 = vmatprep.subr.mxu0 0.0
    %1170 = vmatpush1.msra.mxu0 0.0
    %1171 = vmatprep.subr.mxu0 0.0
    %1172 = vmatpush1.msra.mxu0 0.0
    %1173 = vmatprep.subr.mxu0 0.0
    %1174 = vmatpush1.msra.mxu0 0.0
    %1175 = vmatprep.subr.mxu0 0.0
    %1176 = vmatpush1.msra.mxu0 0.0
    %1177 = vmatprep.subr.mxu0 0.0
    %1178 = vmatpush1.msra.mxu0 0.0
    %1179 = vmatprep.mubr.f32.mxu0 0.0
    %1180 = vmatmul.mubr.f32.gmra.mrb[0].mxu0 %v96
    %v1181 = vpop.f32.mrb[0].mxu0
    %v1182 = vadd.f32 0.0, %v1181
    %v1183 = vpop.f32.mrb[0].mxu0
    %1184 = vmatprep.mubr.f32.mxu0 0.0
    %1185 = vmatmul.mubr.f32.gmra.mrb[0].mxu0 %v99
    %v1186 = vpop.f32.mrb[0].mxu0
    %v1187 = vadd.f32 0.0, %v1186
    %v1188 = vpop.f32.mrb[0].mxu0
    %1189 = vmatprep.mubr.f32.mxu0 0.0
    %1190 = vmatmul.mubr.f32.gmra.mrb[0].mxu0 %v102
    %v1191 = vpop.f32.mrb[0].mxu0
    %v1192 = vadd.f32 0.0, %v1191
    %v1193 = vpop.f32.mrb[0].mxu0
    %1194 = vmatprep.mubr.f32.mxu0 0.0
    %1195 = vmatmul.mubr.f32.gmra.mrb[0].mxu0 %v105
    %v1196 = vpop.f32.mrb[0].mxu0
    %v1197 = vadd.f32 0.0, %v1196
    %v1198 = vpop.f32.mrb[0].mxu0
    %1199 = vmatprep.mubr.f32.mxu0 0.0
    %1200 = vmatmul.mubr.f32.gmra.mrb[0].mxu0 %v108
    %v1201 = vpop.f32.mrb[0].mxu0
    %v1202 = vadd.f32 0.0, %v1201
    %v1203 = vpop.f32.mrb[0].mxu0
    %1204 = vmatprep.mubr.f32.mxu0 0.0
    %1205 = vmatmul.mubr.f32.gmra.mrb[0].mxu0 %v111
    %v1206 = vpop.f32.mrb[0].mxu0
    %v1207 = vadd.f32 0.0, %v1206
    %v1208 = vpop.f32.mrb[0].mxu0
    %1209 = vmatprep.mubr.f32.mxu0 0.0
    %1210 = vmatmul.mubr.f32.gmra.mrb[0].mxu0 %v114
    %v1211 = vpop.f32.mrb[0].mxu0
    %v1212 = vadd.f32 0.0, %v1211
    %v1213 = vpop.f32.mrb[0].mxu0
    %1214 = vmatprep.mubr.f32.mxu0 0.0
    %1215 = vmatmul.mubr.f32.gmra.mrb[0].mxu0 %v117
    %v1216 = vpop.f32.mrb[0].mxu0
    %v1217 = vadd.f32 0.0, %v1216
    %v1218 = vpop.f32.mrb[0].mxu0
    %1219 = vmatprep.mubr.f32.mxu0 0.0
    %1220 = vmatmul.mubr.f32.gmra.mrb[0].mxu0 %v120
    %v1221 = vpop.f32.mrb[0].mxu0
    %v1222 = vadd.f32 0.0, %v1221
    %v1223 = vpop.f32.mrb[0].mxu0
    %1224 = vmatprep.mubr.f32.mxu0 0.0
    %1225 = vmatmul.mubr.f32.gmra.mrb[0].mxu0 %v123
    %v1226 = vpop.f32.mrb[0].mxu0
    %v1227 = vadd.f32 0.0, %v1226
    %v1228 = vpop.f32.mrb[0].mxu0
    %1229 = vmatprep.mubr.f32.mxu0 0.0
    %1230 = vmatmul.mubr.f32.gmra.mrb[0].mxu0 %v126
    %v1231 = vpop.f32.mrb[0].mxu0
    %v1232 = vadd.f32 0.0, %v1231
    %v1233 = vpop.f32.mrb[0].mxu0
    %1234 = vmatprep.mubr.f32.mxu0 0.0
    %1235 = vmatmul.mubr.f32.gmra.mrb[0].mxu0 %v129
    %v1236 = vpop.f32.mrb[0].mxu0
    %v1237 = vadd.f32 0.0, %v1236
    %v1238 = vpop.f32.mrb[0].mxu0
    %1239 = vmatprep.mubr.f32.mxu0 0.0
    %1240 = vmatmul.mubr.f32.gmra.mrb[0].mxu0 %v132
    %v1241 = vpop.f32.mrb[0].mxu0
    %v1242 = vadd.f32 0.0, %v1241
    %v1243 = vpop.f32.mrb[0].mxu0
    %1244 = vmatprep.mubr.f32.mxu0 0.0
    %1245 = vmatmul.mubr.f32.gmra.mrb[0].mxu0 %v135
    %v1246 = vpop.f32.mrb[0].mxu0
    %v1247 = vadd.f32 0.0, %v1246
    %v1248 = vpop.f32.mrb[0].mxu0
    %1249 = vmatprep.mubr.f32.mxu0 0.0
    %1250 = vmatmul.mubr.f32.gmra.mrb[0].mxu0 %v138
    %v1251 = vpop.f32.mrb[0].mxu0
    %v1252 = vadd.f32 0.0, %v1251
    %v1253 = vpop.f32.mrb[0].mxu0
    %1254 = vmatprep.mubr.f32.mxu0 0.0
    %1255 = vmatmul.mubr.f32.gmra.mrb[0].mxu0 %v141
    %v1256 = vpop.f32.mrb[0].mxu0
    %v1257 = vadd.f32 0.0, %v1256
    %v1258 = vpop.f32.mrb[0].mxu0
    %1259 = vmatprep.mubr.f32.mxu0 0.0
    %1260 = vmatmul.mubr.f32.gmra.mrb[0].mxu0 %v144
    %v1261 = vpop.f32.mrb[0].mxu0
    %v1262 = vadd.f32 0.0, %v1261
    %v1263 = vpop.f32.mrb[0].mxu0
    %1264 = vmatprep.mubr.f32.mxu0 0.0
    %1265 = vmatmul.mubr.f32.gmra.mrb[0].mxu0 %v147
    %v1266 = vpop.f32.mrb[0].mxu0
    %v1267 = vadd.f32 0.0, %v1266
    %v1268 = vpop.f32.mrb[0].mxu0
    %1269 = vmatprep.mubr.f32.mxu0 0.0
    %1270 = vmatmul.mubr.f32.gmra.mrb[0].mxu0 %v150
    %v1271 = vpop.f32.mrb[0].mxu0
    %v1272 = vadd.f32 0.0, %v1271
    %v1273 = vpop.f32.mrb[0].mxu0
    %1274 = vmatprep.mubr.f32.mxu0 0.0
    %1275 = vmatmul.mubr.f32.gmra.mrb[0].mxu0 %v153
    %v1276 = vpop.f32.mrb[0].mxu0
    %v1277 = vadd.f32 0.0, %v1276
    %v1278 = vpop.f32.mrb[0].mxu0
    %1279 = vmatprep.mubr.f32.mxu0 0.0
    %1280 = vmatmul.mubr.f32.gmra.mrb[0].mxu0 %v156
    %v1281 = vpop.f32.mrb[0].mxu0
    %v1282 = vadd.f32 0.0, %v1281
    %v1283 = vpop.f32.mrb[0].mxu0
    %1284 = vmatprep.mubr.f32.mxu0 0.0
    %1285 = vmatmul.mubr.f32.gmra.mrb[0].mxu0 %v159
    %v1286 = vpop.f32.mrb[0].mxu0
    %v1287 = vadd.f32 0.0, %v1286
    %v1288 = vpop.f32.mrb[0].mxu0
    %1289 = vmatprep.mubr.f32.mxu0 0.0
    %1290 = vmatmul.mubr.f32.gmra.mrb[0].mxu0 %v162
    %v1291 = vpop.f32.mrb[0].mxu0
    %v1292 = vadd.f32 0.0, %v1291
    %v1293 = vpop.f32.mrb[0].mxu0
    %1294 = vmatprep.mubr.f32.mxu0 0.0
    %1295 = vmatmul.mubr.f32.gmra.mrb[0].mxu0 %v165
    %v1296 = vpop.f32.mrb[0].mxu0
    %v1297 = vadd.f32 0.0, %v1296
    %v1298 = vpop.f32.mrb[0].mxu0
    %1299 = vmatprep.mubr.f32.mxu0 0.0
    %1300 = vmatmul.mubr.f32.gmra.mrb[0].mxu0 %v168
    %v1301 = vpop.f32.mrb[0].mxu0
    %v1302 = vadd.f32 0.0, %v1301
    %v1303 = vpop.f32.mrb[0].mxu0
    %1304 = vmatprep.mubr.f32.mxu0 0.0
    %1305 = vmatmul.mubr.f32.gmra.mrb[0].mxu0 %v171
    %v1306 = vpop.f32.mrb[0].mxu0
    %v1307 = vadd.f32 0.0, %v1306
    %v1308 = vpop.f32.mrb[0].mxu0
    %1309 = vmatprep.mubr.f32.mxu0 0.0
    %1310 = vmatmul.mubr.f32.gmra.mrb[0].mxu0 %v174
    %v1311 = vpop.f32.mrb[0].mxu0
    %v1312 = vadd.f32 0.0, %v1311
    %v1313 = vpop.f32.mrb[0].mxu0
    %1314 = vmatprep.mubr.f32.mxu0 0.0
    %1315 = vmatmul.mubr.f32.gmra.mrb[0].mxu0 %v177
    %v1316 = vpop.f32.mrb[0].mxu0
    %v1317 = vadd.f32 0.0, %v1316
    %v1318 = vpop.f32.mrb[0].mxu0
    %1319 = vmatprep.mubr.f32.mxu0 0.0
    %1320 = vmatmul.mubr.f32.gmra.mrb[0].mxu0 %v180
    %v1321 = vpop.f32.mrb[0].mxu0
    %v1322 = vadd.f32 0.0, %v1321
    %v1323 = vpop.f32.mrb[0].mxu0
    %1324 = vmatprep.mubr.f32.mxu0 0.0
    %1325 = vmatmul.mubr.f32.gmra.mrb[0].mxu0 %v183
    %v1326 = vpop.f32.mrb[0].mxu0
    %v1327 = vadd.f32 0.0, %v1326
    %v1328 = vpop.f32.mrb[0].mxu0
    %1329 = vmatprep.mubr.f32.mxu0 0.0
    %1330 = vmatmul.mubr.f32.gmra.mrb[0].mxu0 %v186
    %v1331 = vpop.f32.mrb[0].mxu0
    %v1332 = vadd.f32 0.0, %v1331
    %v1333 = vpop.f32.mrb[0].mxu0
    %1334 = vmatprep.mubr.f32.mxu0 0.0
    %1335 = vmatmul.mubr.f32.gmra.mrb[0].mxu0 %v189
    %v1336 = vpop.f32.mrb[0].mxu0
    %v1337 = vadd.f32 0.0, %v1336
    %v1338 = vpop.f32.mrb[0].mxu0
    %1339 = vdwg.mxu0
    %s1340 = scalar_lea.vmem %s2, 10
    %v1341 = vld [vmem:[%s1340] sm:$0x3]
    %v1343 = vsel %vm191, %v1341, 0
    %1345 = vmatprep.subr.mxu0 0.0
    %1346 = vmatpush1.msra.mxu0 %v1343
    %1347 = vmatprep.subr.mxu0 0.0
    %1348 = vmatpush1.msra.mxu0 0.0
    %1349 = vmatprep.subr.mxu0 0.0
    %1350 = vmatpush1.msra.mxu0 0.0
    %1351 = vmatprep.subr.mxu0 0.0
    %1352 = vmatpush1.msra.mxu0 0.0
    %1353 = vmatprep.subr.mxu0 0.0
    %1354 = vmatpush1.msra.mxu0 0.0
    %1355 = vmatprep.subr.mxu0 0.0
    %1356 = vmatpush1.msra.mxu0 0.0
    %1357 = vmatprep.subr.mxu0 0.0
    %1358 = vmatpush1.msra.mxu0 0.0
    %1359 = vmatprep.subr.mxu0 0.0
    %1360 = vmatpush1.msra.mxu0 0.0
    %1361 = vmatprep.subr.mxu0 0.0
    %1362 = vmatpush1.msra.mxu0 0.0
    %1363 = vmatprep.subr.mxu0 0.0
    %1364 = vmatpush1.msra.mxu0 0.0
    %1365 = vmatprep.subr.mxu0 0.0
    %1366 = vmatpush1.msra.mxu0 0.0
    %1367 = vmatprep.subr.mxu0 0.0
    %1368 = vmatpush1.msra.mxu0 0.0
    %1369 = vmatprep.subr.mxu0 0.0
    %1370 = vmatpush1.msra.mxu0 0.0
    %1371 = vmatprep.subr.mxu0 0.0
    %1372 = vmatpush1.msra.mxu0 0.0
    %1373 = vmatprep.subr.mxu0 0.0
    %1374 = vmatpush1.msra.mxu0 0.0
    %1375 = vmatprep.subr.mxu0 0.0
    %1376 = vmatpush1.msra.mxu0 0.0
    %1377 = vmatprep.subr.mxu0 0.0
    %1378 = vmatpush1.msra.mxu0 0.0
    %1379 = vmatprep.subr.mxu0 0.0
    %1380 = vmatpush1.msra.mxu0 0.0
    %1381 = vmatprep.subr.mxu0 0.0
    %1382 = vmatpush1.msra.mxu0 0.0
    %1383 = vmatprep.subr.mxu0 0.0
    %1384 = vmatpush1.msra.mxu0 0.0
    %1385 = vmatprep.subr.mxu0 0.0
    %1386 = vmatpush1.msra.mxu0 0.0
    %1387 = vmatprep.subr.mxu0 0.0
    %1388 = vmatpush1.msra.mxu0 0.0
    %1389 = vmatprep.subr.mxu0 0.0
    %1390 = vmatpush1.msra.mxu0 0.0
    %1391 = vmatprep.subr.mxu0 0.0
    %1392 = vmatpush1.msra.mxu0 0.0
    %1393 = vmatprep.subr.mxu0 0.0
    %1394 = vmatpush1.msra.mxu0 0.0
    %1395 = vmatprep.subr.mxu0 0.0
    %1396 = vmatpush1.msra.mxu0 0.0
    %1397 = vmatprep.subr.mxu0 0.0
    %1398 = vmatpush1.msra.mxu0 0.0
    %1399 = vmatprep.subr.mxu0 0.0
    %1400 = vmatpush1.msra.mxu0 0.0
    %1401 = vmatprep.subr.mxu0 0.0
    %1402 = vmatpush1.msra.mxu0 0.0
    %1403 = vmatprep.subr.mxu0 0.0
    %1404 = vmatpush1.msra.mxu0 0.0
    %1405 = vmatprep.subr.mxu0 0.0
    %1406 = vmatpush1.msra.mxu0 0.0
    %1407 = vmatprep.subr.mxu0 0.0
    %1408 = vmatpush1.msra.mxu0 0.0
    %1409 = vmatprep.mubr.f32.mxu0 0.0
    %1410 = vmatmul.mubr.f32.gmra.mrb[0].mxu0 %v96
    %v1411 = vpop.f32.mrb[0].mxu0
    %v1412 = vadd.f32 0.0, %v1411
    %v1413 = vpop.f32.mrb[0].mxu0
    %1414 = vmatprep.mubr.f32.mxu0 0.0
    %1415 = vmatmul.mubr.f32.gmra.mrb[0].mxu0 %v99
    %v1416 = vpop.f32.mrb[0].mxu0
    %v1417 = vadd.f32 0.0, %v1416
    %v1418 = vpop.f32.mrb[0].mxu0
    %1419 = vmatprep.mubr.f32.mxu0 0.0
    %1420 = vmatmul.mubr.f32.gmra.mrb[0].mxu0 %v102
    %v1421 = vpop.f32.mrb[0].mxu0
    %v1422 = vadd.f32 0.0, %v1421
    %v1423 = vpop.f32.mrb[0].mxu0
    %1424 = vmatprep.mubr.f32.mxu0 0.0
    %1425 = vmatmul.mubr.f32.gmra.mrb[0].mxu0 %v105
    %v1426 = vpop.f32.mrb[0].mxu0
    %v1427 = vadd.f32 0.0, %v1426
    %v1428 = vpop.f32.mrb[0].mxu0
    %1429 = vmatprep.mubr.f32.mxu0 0.0
    %1430 = vmatmul.mubr.f32.gmra.mrb[0].mxu0 %v108
    %v1431 = vpop.f32.mrb[0].mxu0
    %v1432 = vadd.f32 0.0, %v1431
    %v1433 = vpop.f32.mrb[0].mxu0
    %1434 = vmatprep.mubr.f32.mxu0 0.0
    %1435 = vmatmul.mubr.f32.gmra.mrb[0].mxu0 %v111
    %v1436 = vpop.f32.mrb[0].mxu0
    %v1437 = vadd.f32 0.0, %v1436
    %v1438 = vpop.f32.mrb[0].mxu0
    %1439 = vmatprep.mubr.f32.mxu0 0.0
    %1440 = vmatmul.mubr.f32.gmra.mrb[0].mxu0 %v114
    %v1441 = vpop.f32.mrb[0].mxu0
    %v1442 = vadd.f32 0.0, %v1441
    %v1443 = vpop.f32.mrb[0].mxu0
    %1444 = vmatprep.mubr.f32.mxu0 0.0
    %1445 = vmatmul.mubr.f32.gmra.mrb[0].mxu0 %v117
    %v1446 = vpop.f32.mrb[0].mxu0
    %v1447 = vadd.f32 0.0, %v1446
    %v1448 = vpop.f32.mrb[0].mxu0
    %1449 = vmatprep.mubr.f32.mxu0 0.0
    %1450 = vmatmul.mubr.f32.gmra.mrb[0].mxu0 %v120
    %v1451 = vpop.f32.mrb[0].mxu0
    %v1452 = vadd.f32 0.0, %v1451
    %v1453 = vpop.f32.mrb[0].mxu0
    %1454 = vmatprep.mubr.f32.mxu0 0.0
    %1455 = vmatmul.mubr.f32.gmra.mrb[0].mxu0 %v123
    %v1456 = vpop.f32.mrb[0].mxu0
    %v1457 = vadd.f32 0.0, %v1456
    %v1458 = vpop.f32.mrb[0].mxu0
    %1459 = vmatprep.mubr.f32.mxu0 0.0
    %1460 = vmatmul.mubr.f32.gmra.mrb[0].mxu0 %v126
    %v1461 = vpop.f32.mrb[0].mxu0
    %v1462 = vadd.f32 0.0, %v1461
    %v1463 = vpop.f32.mrb[0].mxu0
    %1464 = vmatprep.mubr.f32.mxu0 0.0
    %1465 = vmatmul.mubr.f32.gmra.mrb[0].mxu0 %v129
    %v1466 = vpop.f32.mrb[0].mxu0
    %v1467 = vadd.f32 0.0, %v1466
    %v1468 = vpop.f32.mrb[0].mxu0
    %1469 = vmatprep.mubr.f32.mxu0 0.0
    %1470 = vmatmul.mubr.f32.gmra.mrb[0].mxu0 %v132
    %v1471 = vpop.f32.mrb[0].mxu0
    %v1472 = vadd.f32 0.0, %v1471
    %v1473 = vpop.f32.mrb[0].mxu0
    %1474 = vmatprep.mubr.f32.mxu0 0.0
    %1475 = vmatmul.mubr.f32.gmra.mrb[0].mxu0 %v135
    %v1476 = vpop.f32.mrb[0].mxu0
    %v1477 = vadd.f32 0.0, %v1476
    %v1478 = vpop.f32.mrb[0].mxu0
    %1479 = vmatprep.mubr.f32.mxu0 0.0
    %1480 = vmatmul.mubr.f32.gmra.mrb[0].mxu0 %v138
    %v1481 = vpop.f32.mrb[0].mxu0
    %v1482 = vadd.f32 0.0, %v1481
    %v1483 = vpop.f32.mrb[0].mxu0
    %1484 = vmatprep.mubr.f32.mxu0 0.0
    %1485 = vmatmul.mubr.f32.gmra.mrb[0].mxu0 %v141
    %v1486 = vpop.f32.mrb[0].mxu0
    %v1487 = vadd.f32 0.0, %v1486
    %v1488 = vpop.f32.mrb[0].mxu0
    %1489 = vmatprep.mubr.f32.mxu0 0.0
    %1490 = vmatmul.mubr.f32.gmra.mrb[0].mxu0 %v144
    %v1491 = vpop.f32.mrb[0].mxu0
    %v1492 = vadd.f32 0.0, %v1491
    %v1493 = vpop.f32.mrb[0].mxu0
    %1494 = vmatprep.mubr.f32.mxu0 0.0
    %1495 = vmatmul.mubr.f32.gmra.mrb[0].mxu0 %v147
    %v1496 = vpop.f32.mrb[0].mxu0
    %v1497 = vadd.f32 0.0, %v1496
    %v1498 = vpop.f32.mrb[0].mxu0
    %1499 = vmatprep.mubr.f32.mxu0 0.0
    %1500 = vmatmul.mubr.f32.gmra.mrb[0].mxu0 %v150
    %v1501 = vpop.f32.mrb[0].mxu0
    %v1502 = vadd.f32 0.0, %v1501
    %v1503 = vpop.f32.mrb[0].mxu0
    %1504 = vmatprep.mubr.f32.mxu0 0.0
    %1505 = vmatmul.mubr.f32.gmra.mrb[0].mxu0 %v153
    %v1506 = vpop.f32.mrb[0].mxu0
    %v1507 = vadd.f32 0.0, %v1506
    %v1508 = vpop.f32.mrb[0].mxu0
    %1509 = vmatprep.mubr.f32.mxu0 0.0
    %1510 = vmatmul.mubr.f32.gmra.mrb[0].mxu0 %v156
    %v1511 = vpop.f32.mrb[0].mxu0
    %v1512 = vadd.f32 0.0, %v1511
    %v1513 = vpop.f32.mrb[0].mxu0
    %1514 = vmatprep.mubr.f32.mxu0 0.0
    %1515 = vmatmul.mubr.f32.gmra.mrb[0].mxu0 %v159
    %v1516 = vpop.f32.mrb[0].mxu0
    %v1517 = vadd.f32 0.0, %v1516
    %v1518 = vpop.f32.mrb[0].mxu0
    %1519 = vmatprep.mubr.f32.mxu0 0.0
    %1520 = vmatmul.mubr.f32.gmra.mrb[0].mxu0 %v162
    %v1521 = vpop.f32.mrb[0].mxu0
    %v1522 = vadd.f32 0.0, %v1521
    %v1523 = vpop.f32.mrb[0].mxu0
    %1524 = vmatprep.mubr.f32.mxu0 0.0
    %1525 = vmatmul.mubr.f32.gmra.mrb[0].mxu0 %v165
    %v1526 = vpop.f32.mrb[0].mxu0
    %v1527 = vadd.f32 0.0, %v1526
    %v1528 = vpop.f32.mrb[0].mxu0
    %1529 = vmatprep.mubr.f32.mxu0 0.0
    %1530 = vmatmul.mubr.f32.gmra.mrb[0].mxu0 %v168
    %v1531 = vpop.f32.mrb[0].mxu0
    %v1532 = vadd.f32 0.0, %v1531
    %v1533 = vpop.f32.mrb[0].mxu0
    %1534 = vmatprep.mubr.f32.mxu0 0.0
    %1535 = vmatmul.mubr.f32.gmra.mrb[0].mxu0 %v171
    %v1536 = vpop.f32.mrb[0].mxu0
    %v1537 = vadd.f32 0.0, %v1536
    %v1538 = vpop.f32.mrb[0].mxu0
    %1539 = vmatprep.mubr.f32.mxu0 0.0
    %1540 = vmatmul.mubr.f32.gmra.mrb[0].mxu0 %v174
    %v1541 = vpop.f32.mrb[0].mxu0
    %v1542 = vadd.f32 0.0, %v1541
    %v1543 = vpop.f32.mrb[0].mxu0
    %1544 = vmatprep.mubr.f32.mxu0 0.0
    %1545 = vmatmul.mubr.f32.gmra.mrb[0].mxu0 %v177
    %v1546 = vpop.f32.mrb[0].mxu0
    %v1547 = vadd.f32 0.0, %v1546
    %v1548 = vpop.f32.mrb[0].mxu0
    %1549 = vmatprep.mubr.f32.mxu0 0.0
    %1550 = vmatmul.mubr.f32.gmra.mrb[0].mxu0 %v180
    %v1551 = vpop.f32.mrb[0].mxu0
    %v1552 = vadd.f32 0.0, %v1551
    %v1553 = vpop.f32.mrb[0].mxu0
    %1554 = vmatprep.mubr.f32.mxu0 0.0
    %1555 = vmatmul.mubr.f32.gmra.mrb[0].mxu0 %v183
    %v1556 = vpop.f32.mrb[0].mxu0
    %v1557 = vadd.f32 0.0, %v1556
    %v1558 = vpop.f32.mrb[0].mxu0
    %1559 = vmatprep.mubr.f32.mxu0 0.0
    %1560 = vmatmul.mubr.f32.gmra.mrb[0].mxu0 %v186
    %v1561 = vpop.f32.mrb[0].mxu0
    %v1562 = vadd.f32 0.0, %v1561
    %v1563 = vpop.f32.mrb[0].mxu0
    %1564 = vmatprep.mubr.f32.mxu0 0.0
    %1565 = vmatmul.mubr.f32.gmra.mrb[0].mxu0 %v189
    %v1566 = vpop.f32.mrb[0].mxu0
    %v1567 = vadd.f32 0.0, %v1566
    %v1568 = vpop.f32.mrb[0].mxu0
    %1569 = vdwg.mxu0
    %s1570 = scalar_lea.vmem %s2, 12
    %v1571 = vld [vmem:[%s1570] sm:$0x3]
    %v1573 = vsel %vm191, %v1571, 0
    %1575 = vmatprep.subr.mxu0 0.0
    %1576 = vmatpush1.msra.mxu0 %v1573
    %1577 = vmatprep.subr.mxu0 0.0
    %1578 = vmatpush1.msra.mxu0 0.0
    %1579 = vmatprep.subr.mxu0 0.0
    %1580 = vmatpush1.msra.mxu0 0.0
    %1581 = vmatprep.subr.mxu0 0.0
    %1582 = vmatpush1.msra.mxu0 0.0
    %1583 = vmatprep.subr.mxu0 0.0
    %1584 = vmatpush1.msra.mxu0 0.0
    %1585 = vmatprep.subr.mxu0 0.0
    %1586 = vmatpush1.msra.mxu0 0.0
    %1587 = vmatprep.subr.mxu0 0.0
    %1588 = vmatpush1.msra.mxu0 0.0
    %1589 = vmatprep.subr.mxu0 0.0
    %1590 = vmatpush1.msra.mxu0 0.0
    %1591 = vmatprep.subr.mxu0 0.0
    %1592 = vmatpush1.msra.mxu0 0.0
    %1593 = vmatprep.subr.mxu0 0.0
    %1594 = vmatpush1.msra.mxu0 0.0
    %1595 = vmatprep.subr.mxu0 0.0
    %1596 = vmatpush1.msra.mxu0 0.0
    %1597 = vmatprep.subr.mxu0 0.0
    %1598 = vmatpush1.msra.mxu0 0.0
    %1599 = vmatprep.subr.mxu0 0.0
    %1600 = vmatpush1.msra.mxu0 0.0
    %1601 = vmatprep.subr.mxu0 0.0
    %1602 = vmatpush1.msra.mxu0 0.0
    %1603 = vmatprep.subr.mxu0 0.0
    %1604 = vmatpush1.msra.mxu0 0.0
    %1605 = vmatprep.subr.mxu0 0.0
    %1606 = vmatpush1.msra.mxu0 0.0
    %1607 = vmatprep.subr.mxu0 0.0
    %1608 = vmatpush1.msra.mxu0 0.0
    %1609 = vmatprep.subr.mxu0 0.0
    %1610 = vmatpush1.msra.mxu0 0.0
    %1611 = vmatprep.subr.mxu0 0.0
    %1612 = vmatpush1.msra.mxu0 0.0
    %1613 = vmatprep.subr.mxu0 0.0
    %1614 = vmatpush1.msra.mxu0 0.0
    %1615 = vmatprep.subr.mxu0 0.0
    %1616 = vmatpush1.msra.mxu0 0.0
    %1617 = vmatprep.subr.mxu0 0.0
    %1618 = vmatpush1.msra.mxu0 0.0
    %1619 = vmatprep.subr.mxu0 0.0
    %1620 = vmatpush1.msra.mxu0 0.0
    %1621 = vmatprep.subr.mxu0 0.0
    %1622 = vmatpush1.msra.mxu0 0.0
    %1623 = vmatprep.subr.mxu0 0.0
    %1624 = vmatpush1.msra.mxu0 0.0
    %1625 = vmatprep.subr.mxu0 0.0
    %1626 = vmatpush1.msra.mxu0 0.0
    %1627 = vmatprep.subr.mxu0 0.0
    %1628 = vmatpush1.msra.mxu0 0.0
    %1629 = vmatprep.subr.mxu0 0.0
    %1630 = vmatpush1.msra.mxu0 0.0
    %1631 = vmatprep.subr.mxu0 0.0
    %1632 = vmatpush1.msra.mxu0 0.0
    %1633 = vmatprep.subr.mxu0 0.0
    %1634 = vmatpush1.msra.mxu0 0.0
    %1635 = vmatprep.subr.mxu0 0.0
    %1636 = vmatpush1.msra.mxu0 0.0
    %1637 = vmatprep.subr.mxu0 0.0
    %1638 = vmatpush1.msra.mxu0 0.0
    %1639 = vmatprep.mubr.f32.mxu0 0.0
    %1640 = vmatmul.mubr.f32.gmra.mrb[0].mxu0 %v96
    %v1641 = vpop.f32.mrb[0].mxu0
    %v1642 = vadd.f32 0.0, %v1641
    %v1643 = vpop.f32.mrb[0].mxu0
    %1644 = vmatprep.mubr.f32.mxu0 0.0
    %1645 = vmatmul.mubr.f32.gmra.mrb[0].mxu0 %v99
    %v1646 = vpop.f32.mrb[0].mxu0
    %v1647 = vadd.f32 0.0, %v1646
    %v1648 = vpop.f32.mrb[0].mxu0
    %1649 = vmatprep.mubr.f32.mxu0 0.0
    %1650 = vmatmul.mubr.f32.gmra.mrb[0].mxu0 %v102
    %v1651 = vpop.f32.mrb[0].mxu0
    %v1652 = vadd.f32 0.0, %v1651
    %v1653 = vpop.f32.mrb[0].mxu0
    %1654 = vmatprep.mubr.f32.mxu0 0.0
    %1655 = vmatmul.mubr.f32.gmra.mrb[0].mxu0 %v105
    %v1656 = vpop.f32.mrb[0].mxu0
    %v1657 = vadd.f32 0.0, %v1656
    %v1658 = vpop.f32.mrb[0].mxu0
    %1659 = vmatprep.mubr.f32.mxu0 0.0
    %1660 = vmatmul.mubr.f32.gmra.mrb[0].mxu0 %v108
    %v1661 = vpop.f32.mrb[0].mxu0
    %v1662 = vadd.f32 0.0, %v1661
    %v1663 = vpop.f32.mrb[0].mxu0
    %1664 = vmatprep.mubr.f32.mxu0 0.0
    %1665 = vmatmul.mubr.f32.gmra.mrb[0].mxu0 %v111
    %v1666 = vpop.f32.mrb[0].mxu0
    %v1667 = vadd.f32 0.0, %v1666
    %v1668 = vpop.f32.mrb[0].mxu0
    %1669 = vmatprep.mubr.f32.mxu0 0.0
    %1670 = vmatmul.mubr.f32.gmra.mrb[0].mxu0 %v114
    %v1671 = vpop.f32.mrb[0].mxu0
    %v1672 = vadd.f32 0.0, %v1671
    %v1673 = vpop.f32.mrb[0].mxu0
    %1674 = vmatprep.mubr.f32.mxu0 0.0
    %1675 = vmatmul.mubr.f32.gmra.mrb[0].mxu0 %v117
    %v1676 = vpop.f32.mrb[0].mxu0
    %v1677 = vadd.f32 0.0, %v1676
    %v1678 = vpop.f32.mrb[0].mxu0
    %1679 = vmatprep.mubr.f32.mxu0 0.0
    %1680 = vmatmul.mubr.f32.gmra.mrb[0].mxu0 %v120
    %v1681 = vpop.f32.mrb[0].mxu0
    %v1682 = vadd.f32 0.0, %v1681
    %v1683 = vpop.f32.mrb[0].mxu0
    %1684 = vmatprep.mubr.f32.mxu0 0.0
    %1685 = vmatmul.mubr.f32.gmra.mrb[0].mxu0 %v123
    %v1686 = vpop.f32.mrb[0].mxu0
    %v1687 = vadd.f32 0.0, %v1686
    %v1688 = vpop.f32.mrb[0].mxu0
    %1689 = vmatprep.mubr.f32.mxu0 0.0
    %1690 = vmatmul.mubr.f32.gmra.mrb[0].mxu0 %v126
    %v1691 = vpop.f32.mrb[0].mxu0
    %v1692 = vadd.f32 0.0, %v1691
    %v1693 = vpop.f32.mrb[0].mxu0
    %1694 = vmatprep.mubr.f32.mxu0 0.0
    %1695 = vmatmul.mubr.f32.gmra.mrb[0].mxu0 %v129
    %v1696 = vpop.f32.mrb[0].mxu0
    %v1697 = vadd.f32 0.0, %v1696
    %v1698 = vpop.f32.mrb[0].mxu0
    %1699 = vmatprep.mubr.f32.mxu0 0.0
    %1700 = vmatmul.mubr.f32.gmra.mrb[0].mxu0 %v132
    %v1701 = vpop.f32.mrb[0].mxu0
    %v1702 = vadd.f32 0.0, %v1701
    %v1703 = vpop.f32.mrb[0].mxu0
    %1704 = vmatprep.mubr.f32.mxu0 0.0
    %1705 = vmatmul.mubr.f32.gmra.mrb[0].mxu0 %v135
    %v1706 = vpop.f32.mrb[0].mxu0
    %v1707 = vadd.f32 0.0, %v1706
    %v1708 = vpop.f32.mrb[0].mxu0
    %1709 = vmatprep.mubr.f32.mxu0 0.0
    %1710 = vmatmul.mubr.f32.gmra.mrb[0].mxu0 %v138
    %v1711 = vpop.f32.mrb[0].mxu0
    %v1712 = vadd.f32 0.0, %v1711
    %v1713 = vpop.f32.mrb[0].mxu0
    %1714 = vmatprep.mubr.f32.mxu0 0.0
    %1715 = vmatmul.mubr.f32.gmra.mrb[0].mxu0 %v141
    %v1716 = vpop.f32.mrb[0].mxu0
    %v1717 = vadd.f32 0.0, %v1716
    %v1718 = vpop.f32.mrb[0].mxu0
    %1719 = vmatprep.mubr.f32.mxu0 0.0
    %1720 = vmatmul.mubr.f32.gmra.mrb[0].mxu0 %v144
    %v1721 = vpop.f32.mrb[0].mxu0
    %v1722 = vadd.f32 0.0, %v1721
    %v1723 = vpop.f32.mrb[0].mxu0
    %1724 = vmatprep.mubr.f32.mxu0 0.0
    %1725 = vmatmul.mubr.f32.gmra.mrb[0].mxu0 %v147
    %v1726 = vpop.f32.mrb[0].mxu0
    %v1727 = vadd.f32 0.0, %v1726
    %v1728 = vpop.f32.mrb[0].mxu0
    %1729 = vmatprep.mubr.f32.mxu0 0.0
    %1730 = vmatmul.mubr.f32.gmra.mrb[0].mxu0 %v150
    %v1731 = vpop.f32.mrb[0].mxu0
    %v1732 = vadd.f32 0.0, %v1731
    %v1733 = vpop.f32.mrb[0].mxu0
    %1734 = vmatprep.mubr.f32.mxu0 0.0
    %1735 = vmatmul.mubr.f32.gmra.mrb[0].mxu0 %v153
    %v1736 = vpop.f32.mrb[0].mxu0
    %v1737 = vadd.f32 0.0, %v1736
    %v1738 = vpop.f32.mrb[0].mxu0
    %1739 = vmatprep.mubr.f32.mxu0 0.0
    %1740 = vmatmul.mubr.f32.gmra.mrb[0].mxu0 %v156
    %v1741 = vpop.f32.mrb[0].mxu0
    %v1742 = vadd.f32 0.0, %v1741
    %v1743 = vpop.f32.mrb[0].mxu0
    %1744 = vmatprep.mubr.f32.mxu0 0.0
    %1745 = vmatmul.mubr.f32.gmra.mrb[0].mxu0 %v159
    %v1746 = vpop.f32.mrb[0].mxu0
    %v1747 = vadd.f32 0.0, %v1746
    %v1748 = vpop.f32.mrb[0].mxu0
    %1749 = vmatprep.mubr.f32.mxu0 0.0
    %1750 = vmatmul.mubr.f32.gmra.mrb[0].mxu0 %v162
    %v1751 = vpop.f32.mrb[0].mxu0
    %v1752 = vadd.f32 0.0, %v1751
    %v1753 = vpop.f32.mrb[0].mxu0
    %1754 = vmatprep.mubr.f32.mxu0 0.0
    %1755 = vmatmul.mubr.f32.gmra.mrb[0].mxu0 %v165
    %v1756 = vpop.f32.mrb[0].mxu0
    %v1757 = vadd.f32 0.0, %v1756
    %v1758 = vpop.f32.mrb[0].mxu0
    %1759 = vmatprep.mubr.f32.mxu0 0.0
    %1760 = vmatmul.mubr.f32.gmra.mrb[0].mxu0 %v168
    %v1761 = vpop.f32.mrb[0].mxu0
    %v1762 = vadd.f32 0.0, %v1761
    %v1763 = vpop.f32.mrb[0].mxu0
    %1764 = vmatprep.mubr.f32.mxu0 0.0
    %1765 = vmatmul.mubr.f32.gmra.mrb[0].mxu0 %v171
    %v1766 = vpop.f32.mrb[0].mxu0
    %v1767 = vadd.f32 0.0, %v1766
    %v1768 = vpop.f32.mrb[0].mxu0
    %1769 = vmatprep.mubr.f32.mxu0 0.0
    %1770 = vmatmul.mubr.f32.gmra.mrb[0].mxu0 %v174
    %v1771 = vpop.f32.mrb[0].mxu0
    %v1772 = vadd.f32 0.0, %v1771
    %v1773 = vpop.f32.mrb[0].mxu0
    %1774 = vmatprep.mubr.f32.mxu0 0.0
    %1775 = vmatmul.mubr.f32.gmra.mrb[0].mxu0 %v177
    %v1776 = vpop.f32.mrb[0].mxu0
    %v1777 = vadd.f32 0.0, %v1776
    %v1778 = vpop.f32.mrb[0].mxu0
    %1779 = vmatprep.mubr.f32.mxu0 0.0
    %1780 = vmatmul.mubr.f32.gmra.mrb[0].mxu0 %v180
    %v1781 = vpop.f32.mrb[0].mxu0
    %v1782 = vadd.f32 0.0, %v1781
    %v1783 = vpop.f32.mrb[0].mxu0
    %1784 = vmatprep.mubr.f32.mxu0 0.0
    %1785 = vmatmul.mubr.f32.gmra.mrb[0].mxu0 %v183
    %v1786 = vpop.f32.mrb[0].mxu0
    %v1787 = vadd.f32 0.0, %v1786
    %v1788 = vpop.f32.mrb[0].mxu0
    %1789 = vmatprep.mubr.f32.mxu0 0.0
    %1790 = vmatmul.mubr.f32.gmra.mrb[0].mxu0 %v186
    %v1791 = vpop.f32.mrb[0].mxu0
    %v1792 = vadd.f32 0.0, %v1791
    %v1793 = vpop.f32.mrb[0].mxu0
    %1794 = vmatprep.mubr.f32.mxu0 0.0
    %1795 = vmatmul.mubr.f32.gmra.mrb[0].mxu0 %v189
    %v1796 = vpop.f32.mrb[0].mxu0
    %v1797 = vadd.f32 0.0, %v1796
    %v1798 = vpop.f32.mrb[0].mxu0
    %1799 = vdwg.mxu0
    %s1800 = scalar_lea.vmem %s2, 14
    %v1801 = vld [vmem:[%s1800] sm:$0x3]
    %v1803 = vsel %vm191, %v1801, 0
    %1805 = vmatprep.subr.mxu0 0.0
    %1806 = vmatpush1.msra.mxu0 %v1803
    %1807 = vmatprep.subr.mxu0 0.0
    %1808 = vmatpush1.msra.mxu0 0.0
    %1809 = vmatprep.subr.mxu0 0.0
    %1810 = vmatpush1.msra.mxu0 0.0
    %1811 = vmatprep.subr.mxu0 0.0
    %1812 = vmatpush1.msra.mxu0 0.0
    %1813 = vmatprep.subr.mxu0 0.0
    %1814 = vmatpush1.msra.mxu0 0.0
    %1815 = vmatprep.subr.mxu0 0.0
    %1816 = vmatpush1.msra.mxu0 0.0
    %1817 = vmatprep.subr.mxu0 0.0
    %1818 = vmatpush1.msra.mxu0 0.0
    %1819 = vmatprep.subr.mxu0 0.0
    %1820 = vmatpush1.msra.mxu0 0.0
    %1821 = vmatprep.subr.mxu0 0.0
    %1822 = vmatpush1.msra.mxu0 0.0
    %1823 = vmatprep.subr.mxu0 0.0
    %1824 = vmatpush1.msra.mxu0 0.0
    %1825 = vmatprep.subr.mxu0 0.0
    %1826 = vmatpush1.msra.mxu0 0.0
    %1827 = vmatprep.subr.mxu0 0.0
    %1828 = vmatpush1.msra.mxu0 0.0
    %1829 = vmatprep.subr.mxu0 0.0
    %1830 = vmatpush1.msra.mxu0 0.0
    %1831 = vmatprep.subr.mxu0 0.0
    %1832 = vmatpush1.msra.mxu0 0.0
    %1833 = vmatprep.subr.mxu0 0.0
    %1834 = vmatpush1.msra.mxu0 0.0
    %1835 = vmatprep.subr.mxu0 0.0
    %1836 = vmatpush1.msra.mxu0 0.0
    %1837 = vmatprep.subr.mxu0 0.0
    %1838 = vmatpush1.msra.mxu0 0.0
    %1839 = vmatprep.subr.mxu0 0.0
    %1840 = vmatpush1.msra.mxu0 0.0
    %1841 = vmatprep.subr.mxu0 0.0
    %1842 = vmatpush1.msra.mxu0 0.0
    %1843 = vmatprep.subr.mxu0 0.0
    %1844 = vmatpush1.msra.mxu0 0.0
    %1845 = vmatprep.subr.mxu0 0.0
    %1846 = vmatpush1.msra.mxu0 0.0
    %1847 = vmatprep.subr.mxu0 0.0
    %1848 = vmatpush1.msra.mxu0 0.0
    %1849 = vmatprep.subr.mxu0 0.0
    %1850 = vmatpush1.msra.mxu0 0.0
    %1851 = vmatprep.subr.mxu0 0.0
    %1852 = vmatpush1.msra.mxu0 0.0
    %1853 = vmatprep.subr.mxu0 0.0
    %1854 = vmatpush1.msra.mxu0 0.0
    %1855 = vmatprep.subr.mxu0 0.0
    %1856 = vmatpush1.msra.mxu0 0.0
    %1857 = vmatprep.subr.mxu0 0.0
    %1858 = vmatpush1.msra.mxu0 0.0
    %1859 = vmatprep.subr.mxu0 0.0
    %1860 = vmatpush1.msra.mxu0 0.0
    %1861 = vmatprep.subr.mxu0 0.0
    %1862 = vmatpush1.msra.mxu0 0.0
    %1863 = vmatprep.subr.mxu0 0.0
    %1864 = vmatpush1.msra.mxu0 0.0
    %1865 = vmatprep.subr.mxu0 0.0
    %1866 = vmatpush1.msra.mxu0 0.0
    %1867 = vmatprep.subr.mxu0 0.0
    %1868 = vmatpush1.msra.mxu0 0.0
    %1869 = vmatprep.mubr.f32.mxu0 0.0
    %1870 = vmatmul.mubr.f32.gmra.mrb[0].mxu0 %v96
    %v1871 = vpop.f32.mrb[0].mxu0
    %v1872 = vadd.f32 0.0, %v1871
    %v1873 = vpop.f32.mrb[0].mxu0
    %1874 = vmatprep.mubr.f32.mxu0 0.0
    %1875 = vmatmul.mubr.f32.gmra.mrb[0].mxu0 %v99
    %v1876 = vpop.f32.mrb[0].mxu0
    %v1877 = vadd.f32 0.0, %v1876
    %v1878 = vpop.f32.mrb[0].mxu0
    %1879 = vmatprep.mubr.f32.mxu0 0.0
    %1880 = vmatmul.mubr.f32.gmra.mrb[0].mxu0 %v102
    %v1881 = vpop.f32.mrb[0].mxu0
    %v1882 = vadd.f32 0.0, %v1881
    %v1883 = vpop.f32.mrb[0].mxu0
    %1884 = vmatprep.mubr.f32.mxu0 0.0
    %1885 = vmatmul.mubr.f32.gmra.mrb[0].mxu0 %v105
    %v1886 = vpop.f32.mrb[0].mxu0
    %v1887 = vadd.f32 0.0, %v1886
    %v1888 = vpop.f32.mrb[0].mxu0
    %1889 = vmatprep.mubr.f32.mxu0 0.0
    %1890 = vmatmul.mubr.f32.gmra.mrb[0].mxu0 %v108
    %v1891 = vpop.f32.mrb[0].mxu0
    %v1892 = vadd.f32 0.0, %v1891
    %v1893 = vpop.f32.mrb[0].mxu0
    %1894 = vmatprep.mubr.f32.mxu0 0.0
    %1895 = vmatmul.mubr.f32.gmra.mrb[0].mxu0 %v111
    %v1896 = vpop.f32.mrb[0].mxu0
    %v1897 = vadd.f32 0.0, %v1896
    %v1898 = vpop.f32.mrb[0].mxu0
    %1899 = vmatprep.mubr.f32.mxu0 0.0
    %1900 = vmatmul.mubr.f32.gmra.mrb[0].mxu0 %v114
    %v1901 = vpop.f32.mrb[0].mxu0
    %v1902 = vadd.f32 0.0, %v1901
    %v1903 = vpop.f32.mrb[0].mxu0
    %1904 = vmatprep.mubr.f32.mxu0 0.0
    %1905 = vmatmul.mubr.f32.gmra.mrb[0].mxu0 %v117
    %v1906 = vpop.f32.mrb[0].mxu0
    %v1907 = vadd.f32 0.0, %v1906
    %v1908 = vpop.f32.mrb[0].mxu0
    %1909 = vmatprep.mubr.f32.mxu0 0.0
    %1910 = vmatmul.mubr.f32.gmra.mrb[0].mxu0 %v120
    %v1911 = vpop.f32.mrb[0].mxu0
    %v1912 = vadd.f32 0.0, %v1911
    %v1913 = vpop.f32.mrb[0].mxu0
    %1914 = vmatprep.mubr.f32.mxu0 0.0
    %1915 = vmatmul.mubr.f32.gmra.mrb[0].mxu0 %v123
    %v1916 = vpop.f32.mrb[0].mxu0
    %v1917 = vadd.f32 0.0, %v1916
    %v1918 = vpop.f32.mrb[0].mxu0
    %1919 = vmatprep.mubr.f32.mxu0 0.0
    %1920 = vmatmul.mubr.f32.gmra.mrb[0].mxu0 %v126
    %v1921 = vpop.f32.mrb[0].mxu0
    %v1922 = vadd.f32 0.0, %v1921
    %v1923 = vpop.f32.mrb[0].mxu0
    %1924 = vmatprep.mubr.f32.mxu0 0.0
    %1925 = vmatmul.mubr.f32.gmra.mrb[0].mxu0 %v129
    %v1926 = vpop.f32.mrb[0].mxu0
    %v1927 = vadd.f32 0.0, %v1926
    %v1928 = vpop.f32.mrb[0].mxu0
    %1929 = vmatprep.mubr.f32.mxu0 0.0
    %1930 = vmatmul.mubr.f32.gmra.mrb[0].mxu0 %v132
    %v1931 = vpop.f32.mrb[0].mxu0
    %v1932 = vadd.f32 0.0, %v1931
    %v1933 = vpop.f32.mrb[0].mxu0
    %1934 = vmatprep.mubr.f32.mxu0 0.0
    %1935 = vmatmul.mubr.f32.gmra.mrb[0].mxu0 %v135
    %v1936 = vpop.f32.mrb[0].mxu0
    %v1937 = vadd.f32 0.0, %v1936
    %v1938 = vpop.f32.mrb[0].mxu0
    %1939 = vmatprep.mubr.f32.mxu0 0.0
    %1940 = vmatmul.mubr.f32.gmra.mrb[0].mxu0 %v138
    %v1941 = vpop.f32.mrb[0].mxu0
    %v1942 = vadd.f32 0.0, %v1941
    %v1943 = vpop.f32.mrb[0].mxu0
    %1944 = vmatprep.mubr.f32.mxu0 0.0
    %1945 = vmatmul.mubr.f32.gmra.mrb[0].mxu0 %v141
    %v1946 = vpop.f32.mrb[0].mxu0
    %v1947 = vadd.f32 0.0, %v1946
    %v1948 = vpop.f32.mrb[0].mxu0
    %1949 = vmatprep.mubr.f32.mxu0 0.0
    %1950 = vmatmul.mubr.f32.gmra.mrb[0].mxu0 %v144
    %v1951 = vpop.f32.mrb[0].mxu0
    %v1952 = vadd.f32 0.0, %v1951
    %v1953 = vpop.f32.mrb[0].mxu0
    %1954 = vmatprep.mubr.f32.mxu0 0.0
    %1955 = vmatmul.mubr.f32.gmra.mrb[0].mxu0 %v147
    %v1956 = vpop.f32.mrb[0].mxu0
    %v1957 = vadd.f32 0.0, %v1956
    %v1958 = vpop.f32.mrb[0].mxu0
    %1959 = vmatprep.mubr.f32.mxu0 0.0
    %1960 = vmatmul.mubr.f32.gmra.mrb[0].mxu0 %v150
    %v1961 = vpop.f32.mrb[0].mxu0
    %v1962 = vadd.f32 0.0, %v1961
    %v1963 = vpop.f32.mrb[0].mxu0
    %1964 = vmatprep.mubr.f32.mxu0 0.0
    %1965 = vmatmul.mubr.f32.gmra.mrb[0].mxu0 %v153
    %v1966 = vpop.f32.mrb[0].mxu0
    %v1967 = vadd.f32 0.0, %v1966
    %v1968 = vpop.f32.mrb[0].mxu0
    %1969 = vmatprep.mubr.f32.mxu0 0.0
    %1970 = vmatmul.mubr.f32.gmra.mrb[0].mxu0 %v156
    %v1971 = vpop.f32.mrb[0].mxu0
    %v1972 = vadd.f32 0.0, %v1971
    %v1973 = vpop.f32.mrb[0].mxu0
    %1974 = vmatprep.mubr.f32.mxu0 0.0
    %1975 = vmatmul.mubr.f32.gmra.mrb[0].mxu0 %v159
    %v1976 = vpop.f32.mrb[0].mxu0
    %v1977 = vadd.f32 0.0, %v1976
    %v1978 = vpop.f32.mrb[0].mxu0
    %1979 = vmatprep.mubr.f32.mxu0 0.0
    %1980 = vmatmul.mubr.f32.gmra.mrb[0].mxu0 %v162
    %v1981 = vpop.f32.mrb[0].mxu0
    %v1982 = vadd.f32 0.0, %v1981
    %v1983 = vpop.f32.mrb[0].mxu0
    %1984 = vmatprep.mubr.f32.mxu0 0.0
    %1985 = vmatmul.mubr.f32.gmra.mrb[0].mxu0 %v165
    %v1986 = vpop.f32.mrb[0].mxu0
    %v1987 = vadd.f32 0.0, %v1986
    %v1988 = vpop.f32.mrb[0].mxu0
    %1989 = vmatprep.mubr.f32.mxu0 0.0
    %1990 = vmatmul.mubr.f32.gmra.mrb[0].mxu0 %v168
    %v1991 = vpop.f32.mrb[0].mxu0
    %v1992 = vadd.f32 0.0, %v1991
    %v1993 = vpop.f32.mrb[0].mxu0
    %1994 = vmatprep.mubr.f32.mxu0 0.0
    %1995 = vmatmul.mubr.f32.gmra.mrb[0].mxu0 %v171
    %v1996 = vpop.f32.mrb[0].mxu0
    %v1997 = vadd.f32 0.0, %v1996
    %v1998 = vpop.f32.mrb[0].mxu0
    %1999 = vmatprep.mubr.f32.mxu0 0.0
    %2000 = vmatmul.mubr.f32.gmra.mrb[0].mxu0 %v174
    %v2001 = vpop.f32.mrb[0].mxu0
    %v2002 = vadd.f32 0.0, %v2001
    %v2003 = vpop.f32.mrb[0].mxu0
    %2004 = vmatprep.mubr.f32.mxu0 0.0
    %2005 = vmatmul.mubr.f32.gmra.mrb[0].mxu0 %v177
    %v2006 = vpop.f32.mrb[0].mxu0
    %v2007 = vadd.f32 0.0, %v2006
    %v2008 = vpop.f32.mrb[0].mxu0
    %2009 = vmatprep.mubr.f32.mxu0 0.0
    %2010 = vmatmul.mubr.f32.gmra.mrb[0].mxu0 %v180
    %v2011 = vpop.f32.mrb[0].mxu0
    %v2012 = vadd.f32 0.0, %v2011
    %v2013 = vpop.f32.mrb[0].mxu0
    %2014 = vmatprep.mubr.f32.mxu0 0.0
    %2015 = vmatmul.mubr.f32.gmra.mrb[0].mxu0 %v183
    %v2016 = vpop.f32.mrb[0].mxu0
    %v2017 = vadd.f32 0.0, %v2016
    %v2018 = vpop.f32.mrb[0].mxu0
    %2019 = vmatprep.mubr.f32.mxu0 0.0
    %2020 = vmatmul.mubr.f32.gmra.mrb[0].mxu0 %v186
    %v2021 = vpop.f32.mrb[0].mxu0
    %v2022 = vadd.f32 0.0, %v2021
    %v2023 = vpop.f32.mrb[0].mxu0
    %2024 = vmatprep.mubr.f32.mxu0 0.0
    %2025 = vmatmul.mubr.f32.gmra.mrb[0].mxu0 %v189
    %v2026 = vpop.f32.mrb[0].mxu0
    %v2027 = vadd.f32 0.0, %v2026
    %v2028 = vpop.f32.mrb[0].mxu0
    %2029 = vdwg.mxu0
    %s2030 = scalar_lea.vmem %s2, 16
    %v2031 = vld [vmem:[%s2030] sm:$0x3]
    %v2033 = vsel %vm191, %v2031, 0
    %2035 = vmatprep.subr.mxu0 0.0
    %2036 = vmatpush1.msra.mxu0 %v2033
    %2037 = vmatprep.subr.mxu0 0.0
    %2038 = vmatpush1.msra.mxu0 0.0
    %2039 = vmatprep.subr.mxu0 0.0
    %2040 = vmatpush1.msra.mxu0 0.0
    %2041 = vmatprep.subr.mxu0 0.0
    %2042 = vmatpush1.msra.mxu0 0.0
    %2043 = vmatprep.subr.mxu0 0.0
    %2044 = vmatpush1.msra.mxu0 0.0
    %2045 = vmatprep.subr.mxu0 0.0
    %2046 = vmatpush1.msra.mxu0 0.0
    %2047 = vmatprep.subr.mxu0 0.0
    %2048 = vmatpush1.msra.mxu0 0.0
    %2049 = vmatprep.subr.mxu0 0.0
    %2050 = vmatpush1.msra.mxu0 0.0
    %2051 = vmatprep.subr.mxu0 0.0
    %2052 = vmatpush1.msra.mxu0 0.0
    %2053 = vmatprep.subr.mxu0 0.0
    %2054 = vmatpush1.msra.mxu0 0.0
    %2055 = vmatprep.subr.mxu0 0.0
    %2056 = vmatpush1.msra.mxu0 0.0
    %2057 = vmatprep.subr.mxu0 0.0
    %2058 = vmatpush1.msra.mxu0 0.0
    %2059 = vmatprep.subr.mxu0 0.0
    %2060 = vmatpush1.msra.mxu0 0.0
    %2061 = vmatprep.subr.mxu0 0.0
    %2062 = vmatpush1.msra.mxu0 0.0
    %2063 = vmatprep.subr.mxu0 0.0
    %2064 = vmatpush1.msra.mxu0 0.0
    %2065 = vmatprep.subr.mxu0 0.0
    %2066 = vmatpush1.msra.mxu0 0.0
    %2067 = vmatprep.subr.mxu0 0.0
    %2068 = vmatpush1.msra.mxu0 0.0
    %2069 = vmatprep.subr.mxu0 0.0
    %2070 = vmatpush1.msra.mxu0 0.0
    %2071 = vmatprep.subr.mxu0 0.0
    %2072 = vmatpush1.msra.mxu0 0.0
    %2073 = vmatprep.subr.mxu0 0.0
    %2074 = vmatpush1.msra.mxu0 0.0
    %2075 = vmatprep.subr.mxu0 0.0
    %2076 = vmatpush1.msra.mxu0 0.0
    %2077 = vmatprep.subr.mxu0 0.0
    %2078 = vmatpush1.msra.mxu0 0.0
    %2079 = vmatprep.subr.mxu0 0.0
    %2080 = vmatpush1.msra.mxu0 0.0
    %2081 = vmatprep.subr.mxu0 0.0
    %2082 = vmatpush1.msra.mxu0 0.0
    %2083 = vmatprep.subr.mxu0 0.0
    %2084 = vmatpush1.msra.mxu0 0.0
    %2085 = vmatprep.subr.mxu0 0.0
    %2086 = vmatpush1.msra.mxu0 0.0
    %2087 = vmatprep.subr.mxu0 0.0
    %2088 = vmatpush1.msra.mxu0 0.0
    %2089 = vmatprep.subr.mxu0 0.0
    %2090 = vmatpush1.msra.mxu0 0.0
    %2091 = vmatprep.subr.mxu0 0.0
    %2092 = vmatpush1.msra.mxu0 0.0
    %2093 = vmatprep.subr.mxu0 0.0
    %2094 = vmatpush1.msra.mxu0 0.0
    %2095 = vmatprep.subr.mxu0 0.0
    %2096 = vmatpush1.msra.mxu0 0.0
    %2097 = vmatprep.subr.mxu0 0.0
    %2098 = vmatpush1.msra.mxu0 0.0
    %2099 = vmatprep.mubr.f32.mxu0 0.0
    %2100 = vmatmul.mubr.f32.gmra.mrb[0].mxu0 %v96
    %v2101 = vpop.f32.mrb[0].mxu0
    %v2102 = vadd.f32 0.0, %v2101
    %v2103 = vpop.f32.mrb[0].mxu0
    %2104 = vmatprep.mubr.f32.mxu0 0.0
    %2105 = vmatmul.mubr.f32.gmra.mrb[0].mxu0 %v99
    %v2106 = vpop.f32.mrb[0].mxu0
    %v2107 = vadd.f32 0.0, %v2106
    %v2108 = vpop.f32.mrb[0].mxu0
    %2109 = vmatprep.mubr.f32.mxu0 0.0
    %2110 = vmatmul.mubr.f32.gmra.mrb[0].mxu0 %v102
    %v2111 = vpop.f32.mrb[0].mxu0
    %v2112 = vadd.f32 0.0, %v2111
    %v2113 = vpop.f32.mrb[0].mxu0
    %2114 = vmatprep.mubr.f32.mxu0 0.0
    %2115 = vmatmul.mubr.f32.gmra.mrb[0].mxu0 %v105
    %v2116 = vpop.f32.mrb[0].mxu0
    %v2117 = vadd.f32 0.0, %v2116
    %v2118 = vpop.f32.mrb[0].mxu0
    %2119 = vmatprep.mubr.f32.mxu0 0.0
    %2120 = vmatmul.mubr.f32.gmra.mrb[0].mxu0 %v108
    %v2121 = vpop.f32.mrb[0].mxu0
    %v2122 = vadd.f32 0.0, %v2121
    %v2123 = vpop.f32.mrb[0].mxu0
    %2124 = vmatprep.mubr.f32.mxu0 0.0
    %2125 = vmatmul.mubr.f32.gmra.mrb[0].mxu0 %v111
    %v2126 = vpop.f32.mrb[0].mxu0
    %v2127 = vadd.f32 0.0, %v2126
    %v2128 = vpop.f32.mrb[0].mxu0
    %2129 = vmatprep.mubr.f32.mxu0 0.0
    %2130 = vmatmul.mubr.f32.gmra.mrb[0].mxu0 %v114
    %v2131 = vpop.f32.mrb[0].mxu0
    %v2132 = vadd.f32 0.0, %v2131
    %v2133 = vpop.f32.mrb[0].mxu0
    %2134 = vmatprep.mubr.f32.mxu0 0.0
    %2135 = vmatmul.mubr.f32.gmra.mrb[0].mxu0 %v117
    %v2136 = vpop.f32.mrb[0].mxu0
    %v2137 = vadd.f32 0.0, %v2136
    %v2138 = vpop.f32.mrb[0].mxu0
    %2139 = vmatprep.mubr.f32.mxu0 0.0
    %2140 = vmatmul.mubr.f32.gmra.mrb[0].mxu0 %v120
    %v2141 = vpop.f32.mrb[0].mxu0
    %v2142 = vadd.f32 0.0, %v2141
    %v2143 = vpop.f32.mrb[0].mxu0
    %2144 = vmatprep.mubr.f32.mxu0 0.0
    %2145 = vmatmul.mubr.f32.gmra.mrb[0].mxu0 %v123
    %v2146 = vpop.f32.mrb[0].mxu0
    %v2147 = vadd.f32 0.0, %v2146
    %v2148 = vpop.f32.mrb[0].mxu0
    %2149 = vmatprep.mubr.f32.mxu0 0.0
    %2150 = vmatmul.mubr.f32.gmra.mrb[0].mxu0 %v126
    %v2151 = vpop.f32.mrb[0].mxu0
    %v2152 = vadd.f32 0.0, %v2151
    %v2153 = vpop.f32.mrb[0].mxu0
    %2154 = vmatprep.mubr.f32.mxu0 0.0
    %2155 = vmatmul.mubr.f32.gmra.mrb[0].mxu0 %v129
    %v2156 = vpop.f32.mrb[0].mxu0
    %v2157 = vadd.f32 0.0, %v2156
    %v2158 = vpop.f32.mrb[0].mxu0
    %2159 = vmatprep.mubr.f32.mxu0 0.0
    %2160 = vmatmul.mubr.f32.gmra.mrb[0].mxu0 %v132
    %v2161 = vpop.f32.mrb[0].mxu0
    %v2162 = vadd.f32 0.0, %v2161
    %v2163 = vpop.f32.mrb[0].mxu0
    %2164 = vmatprep.mubr.f32.mxu0 0.0
    %2165 = vmatmul.mubr.f32.gmra.mrb[0].mxu0 %v135
    %v2166 = vpop.f32.mrb[0].mxu0
    %v2167 = vadd.f32 0.0, %v2166
    %v2168 = vpop.f32.mrb[0].mxu0
    %2169 = vmatprep.mubr.f32.mxu0 0.0
    %2170 = vmatmul.mubr.f32.gmra.mrb[0].mxu0 %v138
    %v2171 = vpop.f32.mrb[0].mxu0
    %v2172 = vadd.f32 0.0, %v2171
    %v2173 = vpop.f32.mrb[0].mxu0
    %2174 = vmatprep.mubr.f32.mxu0 0.0
    %2175 = vmatmul.mubr.f32.gmra.mrb[0].mxu0 %v141
    %v2176 = vpop.f32.mrb[0].mxu0
    %v2177 = vadd.f32 0.0, %v2176
    %v2178 = vpop.f32.mrb[0].mxu0
    %2179 = vmatprep.mubr.f32.mxu0 0.0
    %2180 = vmatmul.mubr.f32.gmra.mrb[0].mxu0 %v144
    %v2181 = vpop.f32.mrb[0].mxu0
    %v2182 = vadd.f32 0.0, %v2181
    %v2183 = vpop.f32.mrb[0].mxu0
    %2184 = vmatprep.mubr.f32.mxu0 0.0
    %2185 = vmatmul.mubr.f32.gmra.mrb[0].mxu0 %v147
    %v2186 = vpop.f32.mrb[0].mxu0
    %v2187 = vadd.f32 0.0, %v2186
    %v2188 = vpop.f32.mrb[0].mxu0
    %2189 = vmatprep.mubr.f32.mxu0 0.0
    %2190 = vmatmul.mubr.f32.gmra.mrb[0].mxu0 %v150
    %v2191 = vpop.f32.mrb[0].mxu0
    %v2192 = vadd.f32 0.0, %v2191
    %v2193 = vpop.f32.mrb[0].mxu0
    %2194 = vmatprep.mubr.f32.mxu0 0.0
    %2195 = vmatmul.mubr.f32.gmra.mrb[0].mxu0 %v153
    %v2196 = vpop.f32.mrb[0].mxu0
    %v2197 = vadd.f32 0.0, %v2196
    %v2198 = vpop.f32.mrb[0].mxu0
    %2199 = vmatprep.mubr.f32.mxu0 0.0
    %2200 = vmatmul.mubr.f32.gmra.mrb[0].mxu0 %v156
    %v2201 = vpop.f32.mrb[0].mxu0
    %v2202 = vadd.f32 0.0, %v2201
    %v2203 = vpop.f32.mrb[0].mxu0
    %2204 = vmatprep.mubr.f32.mxu0 0.0
    %2205 = vmatmul.mubr.f32.gmra.mrb[0].mxu0 %v159
    %v2206 = vpop.f32.mrb[0].mxu0
    %v2207 = vadd.f32 0.0, %v2206
    %v2208 = vpop.f32.mrb[0].mxu0
    %2209 = vmatprep.mubr.f32.mxu0 0.0
    %2210 = vmatmul.mubr.f32.gmra.mrb[0].mxu0 %v162
    %v2211 = vpop.f32.mrb[0].mxu0
    %v2212 = vadd.f32 0.0, %v2211
    %v2213 = vpop.f32.mrb[0].mxu0
    %2214 = vmatprep.mubr.f32.mxu0 0.0
    %2215 = vmatmul.mubr.f32.gmra.mrb[0].mxu0 %v165
    %v2216 = vpop.f32.mrb[0].mxu0
    %v2217 = vadd.f32 0.0, %v2216
    %v2218 = vpop.f32.mrb[0].mxu0
    %2219 = vmatprep.mubr.f32.mxu0 0.0
    %2220 = vmatmul.mubr.f32.gmra.mrb[0].mxu0 %v168
    %v2221 = vpop.f32.mrb[0].mxu0
    %v2222 = vadd.f32 0.0, %v2221
    %v2223 = vpop.f32.mrb[0].mxu0
    %2224 = vmatprep.mubr.f32.mxu0 0.0
    %2225 = vmatmul.mubr.f32.gmra.mrb[0].mxu0 %v171
    %v2226 = vpop.f32.mrb[0].mxu0
    %v2227 = vadd.f32 0.0, %v2226
    %v2228 = vpop.f32.mrb[0].mxu0
    %2229 = vmatprep.mubr.f32.mxu0 0.0
    %2230 = vmatmul.mubr.f32.gmra.mrb[0].mxu0 %v174
    %v2231 = vpop.f32.mrb[0].mxu0
    %v2232 = vadd.f32 0.0, %v2231
    %v2233 = vpop.f32.mrb[0].mxu0
    %2234 = vmatprep.mubr.f32.mxu0 0.0
    %2235 = vmatmul.mubr.f32.gmra.mrb[0].mxu0 %v177
    %v2236 = vpop.f32.mrb[0].mxu0
    %v2237 = vadd.f32 0.0, %v2236
    %v2238 = vpop.f32.mrb[0].mxu0
    %2239 = vmatprep.mubr.f32.mxu0 0.0
    %2240 = vmatmul.mubr.f32.gmra.mrb[0].mxu0 %v180
    %v2241 = vpop.f32.mrb[0].mxu0
    %v2242 = vadd.f32 0.0, %v2241
    %v2243 = vpop.f32.mrb[0].mxu0
    %2244 = vmatprep.mubr.f32.mxu0 0.0
    %2245 = vmatmul.mubr.f32.gmra.mrb[0].mxu0 %v183
    %v2246 = vpop.f32.mrb[0].mxu0
    %v2247 = vadd.f32 0.0, %v2246
    %v2248 = vpop.f32.mrb[0].mxu0
    %2249 = vmatprep.mubr.f32.mxu0 0.0
    %2250 = vmatmul.mubr.f32.gmra.mrb[0].mxu0 %v186
    %v2251 = vpop.f32.mrb[0].mxu0
    %v2252 = vadd.f32 0.0, %v2251
    %v2253 = vpop.f32.mrb[0].mxu0
    %2254 = vmatprep.mubr.f32.mxu0 0.0
    %2255 = vmatmul.mubr.f32.gmra.mrb[0].mxu0 %v189
    %v2256 = vpop.f32.mrb[0].mxu0
    %v2257 = vadd.f32 0.0, %v2256
    %v2258 = vpop.f32.mrb[0].mxu0
    %2259 = vdwg.mxu0
    %v2260 = vld [vmem:[#allocation2] sm:$0xff]
    %v2261 = vld [vmem:[#allocation2 + $0x8] sm:$0xff]
    %v2262 = vld [vmem:[#allocation2 + $0x10] sm:$0xff]
    %v2263 = vld [vmem:[#allocation2 + $0x18] sm:$0xff]
    %v2264 = vld [vmem:[#allocation2 + $0x20] sm:$0xff]
    %v2265 = vld [vmem:[#allocation2 + $0x28] sm:$0xff]
    %v2266 = vld [vmem:[#allocation2 + $0x30] sm:$0xff]
    %v2267 = vld [vmem:[#allocation2 + $0x38] sm:$0xff]
    %v2268 = vld [vmem:[#allocation2 + $0x40] sm:$0xff]
    %v2269 = vld [vmem:[#allocation2 + $0x48] sm:$0xff]
    %v2270 = vld [vmem:[#allocation2 + $0x50] sm:$0xff]
    %v2271 = vld [vmem:[#allocation2 + $0x58] sm:$0xff]
    %v2272 = vld [vmem:[#allocation2 + $0x60] sm:$0xff]
    %v2273 = vld [vmem:[#allocation2 + $0x68] sm:$0xff]
    %v2274 = vld [vmem:[#allocation2 + $0x70] sm:$0xff]
    %v2275 = vld [vmem:[#allocation2 + $0x78] sm:$0xff]
    %v2276 = vld [vmem:[#allocation2 + $0x80] sm:$0xff]
    %v2277 = vld [vmem:[#allocation2 + $0x88] sm:$0xff]
    %v2278 = vld [vmem:[#allocation2 + $0x90] sm:$0xff]
    %v2279 = vld [vmem:[#allocation2 + $0x98] sm:$0xff]
    %v2280 = vld [vmem:[#allocation2 + $0xa0] sm:$0xff]
    %v2281 = vld [vmem:[#allocation2 + $0xa8] sm:$0xff]
    %v2282 = vld [vmem:[#allocation2 + $0xb0] sm:$0xff]
    %v2283 = vld [vmem:[#allocation2 + $0xb8] sm:$0xff]
    %v2284 = vld [vmem:[#allocation2 + $0xc0] sm:$0xff]
    %v2285 = vld [vmem:[#allocation2 + $0xc8] sm:$0xff]
    %v2286 = vld [vmem:[#allocation2 + $0xd0] sm:$0xff]
    %v2287 = vld [vmem:[#allocation2 + $0xd8] sm:$0xff]
    %v2288 = vld [vmem:[#allocation2 + $0xe0] sm:$0xff]
    %v2289 = vld [vmem:[#allocation2 + $0xe8] sm:$0xff]
    %v2290 = vld [vmem:[#allocation2 + $0xf0] sm:$0xff]
    %v2291 = vld [vmem:[#allocation2 + $0xf8] sm:$0xff]
    %v2292 = vld [vmem:[#allocation2 + $0x100] sm:$0xff]
    %v2293 = vld [vmem:[#allocation2 + $0x108] sm:$0xff]
    %v2294 = vld [vmem:[#allocation2 + $0x110] sm:$0xff]
    %v2295 = vld [vmem:[#allocation2 + $0x118] sm:$0xff]
    %v2296 = vld [vmem:[#allocation2 + $0x120] sm:$0xff]
    %v2297 = vld [vmem:[#allocation2 + $0x128] sm:$0xff]
    %v2298 = vld [vmem:[#allocation2 + $0x130] sm:$0xff]
    %v2299 = vld [vmem:[#allocation2 + $0x138] sm:$0xff]
    %v2300 = vld [vmem:[#allocation2 + $0x140] sm:$0xff]
    %v2301 = vld [vmem:[#allocation2 + $0x148] sm:$0xff]
    %v2302 = vld [vmem:[#allocation2 + $0x150] sm:$0xff]
    %v2303 = vld [vmem:[#allocation2 + $0x158] sm:$0xff]
    %v2304 = vld [vmem:[#allocation2 + $0x160] sm:$0xff]
    %v2305 = vld [vmem:[#allocation2 + $0x168] sm:$0xff]
    %v2306 = vld [vmem:[#allocation2 + $0x170] sm:$0xff]
    %v2307 = vld [vmem:[#allocation2 + $0x178] sm:$0xff]
    %v2308 = vld [vmem:[#allocation2 + $0x180] sm:$0xff]
    %v2309 = vld [vmem:[#allocation2 + $0x188] sm:$0xff]
    %v2310 = vld [vmem:[#allocation2 + $0x190] sm:$0xff]
    %v2311 = vld [vmem:[#allocation2 + $0x198] sm:$0xff]
    %v2312 = vld [vmem:[#allocation2 + $0x1a0] sm:$0xff]
    %v2313 = vld [vmem:[#allocation2 + $0x1a8] sm:$0xff]
    %v2314 = vld [vmem:[#allocation2 + $0x1b0] sm:$0xff]
    %v2315 = vld [vmem:[#allocation2 + $0x1b8] sm:$0xff]
    %v2316 = vld [vmem:[#allocation2 + $0x1c0] sm:$0xff]
    %v2317 = vld [vmem:[#allocation2 + $0x1c8] sm:$0xff]
    %v2318 = vld [vmem:[#allocation2 + $0x1d0] sm:$0xff]
    %v2319 = vld [vmem:[#allocation2 + $0x1d8] sm:$0xff]
    %v2320 = vld [vmem:[#allocation2 + $0x1e0] sm:$0xff]
    %v2321 = vld [vmem:[#allocation2 + $0x1e8] sm:$0xff]
    %v2322 = vld [vmem:[#allocation2 + $0x1f0] sm:$0xff]
    %v2323 = vld [vmem:[#allocation2 + $0x1f8] sm:$0xff]
    %v2324 = vld [vmem:[#allocation2 + $0x200] sm:$0xff]
    %v2325 = vld [vmem:[#allocation2 + $0x208] sm:$0xff]
    %v2326 = vld [vmem:[#allocation2 + $0x210] sm:$0xff]
    %v2327 = vld [vmem:[#allocation2 + $0x218] sm:$0xff]
    %v2328 = vld [vmem:[#allocation2 + $0x220] sm:$0xff]
    %v2329 = vld [vmem:[#allocation2 + $0x228] sm:$0xff]
    %v2330 = vld [vmem:[#allocation2 + $0x230] sm:$0xff]
    %v2331 = vld [vmem:[#allocation2 + $0x238] sm:$0xff]
    %v2332 = vld [vmem:[#allocation2 + $0x240] sm:$0xff]
    %v2333 = vld [vmem:[#allocation2 + $0x248] sm:$0xff]
    %v2334 = vld [vmem:[#allocation2 + $0x250] sm:$0xff]
    %v2335 = vld [vmem:[#allocation2 + $0x258] sm:$0xff]
    %v2336 = vld [vmem:[#allocation2 + $0x260] sm:$0xff]
    %v2337 = vld [vmem:[#allocation2 + $0x268] sm:$0xff]
    %v2338 = vld [vmem:[#allocation2 + $0x270] sm:$0xff]
    %v2339 = vld [vmem:[#allocation2 + $0x278] sm:$0xff]
    %v2340 = vld [vmem:[#allocation2 + $0x280] sm:$0xff]
    %v2341 = vld [vmem:[#allocation2 + $0x288] sm:$0xff]
    %v2342 = vld [vmem:[#allocation2 + $0x290] sm:$0xff]
    %v2343 = vld [vmem:[#allocation2 + $0x298] sm:$0xff]
    %v2344 = vld [vmem:[#allocation2 + $0x2a0] sm:$0xff]
    %v2345 = vld [vmem:[#allocation2 + $0x2a8] sm:$0xff]
    %v2346 = vld [vmem:[#allocation2 + $0x2b0] sm:$0xff]
    %v2347 = vld [vmem:[#allocation2 + $0x2b8] sm:$0xff]
    %v2348 = vld [vmem:[#allocation2 + $0x2c0] sm:$0xff]
    %v2349 = vld [vmem:[#allocation2 + $0x2c8] sm:$0xff]
    %v2350 = vld [vmem:[#allocation2 + $0x2d0] sm:$0xff]
    %v2351 = vld [vmem:[#allocation2 + $0x2d8] sm:$0xff]
    %v2352 = vld [vmem:[#allocation2 + $0x2e0] sm:$0xff]
    %v2353 = vld [vmem:[#allocation2 + $0x2e8] sm:$0xff]
    %v2354 = vld [vmem:[#allocation2 + $0x2f0] sm:$0xff]
    %v2355 = vld [vmem:[#allocation2 + $0x2f8] sm:$0xff]
    %v2356 = vld [vmem:[#allocation2 + $0x300] sm:$0xff]
    %v2357 = vld [vmem:[#allocation2 + $0x308] sm:$0xff]
    %v2358 = vld [vmem:[#allocation2 + $0x310] sm:$0xff]
    %v2359 = vld [vmem:[#allocation2 + $0x318] sm:$0xff]
    %v2360 = vld [vmem:[#allocation2 + $0x320] sm:$0xff]
    %v2361 = vld [vmem:[#allocation2 + $0x328] sm:$0xff]
    %v2362 = vld [vmem:[#allocation2 + $0x330] sm:$0xff]
    %v2363 = vld [vmem:[#allocation2 + $0x338] sm:$0xff]
    %v2364 = vld [vmem:[#allocation2 + $0x340] sm:$0xff]
    %v2365 = vld [vmem:[#allocation2 + $0x348] sm:$0xff]
    %v2366 = vld [vmem:[#allocation2 + $0x350] sm:$0xff]
    %v2367 = vld [vmem:[#allocation2 + $0x358] sm:$0xff]
    %v2368 = vld [vmem:[#allocation2 + $0x360] sm:$0xff]
    %v2369 = vld [vmem:[#allocation2 + $0x368] sm:$0xff]
    %v2370 = vld [vmem:[#allocation2 + $0x370] sm:$0xff]
    %v2371 = vld [vmem:[#allocation2 + $0x378] sm:$0xff]
    %v2372 = vld [vmem:[#allocation2 + $0x380] sm:$0xff]
    %v2373 = vld [vmem:[#allocation2 + $0x388] sm:$0xff]
    %v2374 = vld [vmem:[#allocation2 + $0x390] sm:$0xff]
    %v2375 = vld [vmem:[#allocation2 + $0x398] sm:$0xff]
    %v2376 = vld [vmem:[#allocation2 + $0x3a0] sm:$0xff]
    %v2377 = vld [vmem:[#allocation2 + $0x3a8] sm:$0xff]
    %v2378 = vld [vmem:[#allocation2 + $0x3b0] sm:$0xff]
    %v2379 = vld [vmem:[#allocation2 + $0x3b8] sm:$0xff]
    %v2380 = vld [vmem:[#allocation2 + $0x3c0] sm:$0xff]
    %v2381 = vld [vmem:[#allocation2 + $0x3c8] sm:$0xff]
    %v2382 = vld [vmem:[#allocation2 + $0x3d0] sm:$0xff]
    %v2383 = vld [vmem:[#allocation2 + $0x3d8] sm:$0xff]
    %v2384 = vld [vmem:[#allocation2 + $0x3e0] sm:$0xff]
    %v2385 = vld [vmem:[#allocation2 + $0x3e8] sm:$0xff]
    %v2386 = vld [vmem:[#allocation2 + $0x3f0] sm:$0xff]
    %v2387 = vld [vmem:[#allocation2 + $0x3f8] sm:$0xff]
    %v2388 = vld [vmem:[#allocation2 + $0x400] sm:$0xff]
    %v2389 = vld [vmem:[#allocation2 + $0x408] sm:$0xff]
    %v2390 = vld [vmem:[#allocation2 + $0x410] sm:$0xff]
    %v2391 = vld [vmem:[#allocation2 + $0x418] sm:$0xff]
    %v2392 = vld [vmem:[#allocation2 + $0x420] sm:$0xff]
    %v2393 = vld [vmem:[#allocation2 + $0x428] sm:$0xff]
    %v2394 = vld [vmem:[#allocation2 + $0x430] sm:$0xff]
    %v2395 = vld [vmem:[#allocation2 + $0x438] sm:$0xff]
    %v2396 = vld [vmem:[#allocation2 + $0x440] sm:$0xff]
    %v2397 = vld [vmem:[#allocation2 + $0x448] sm:$0xff]
    %v2398 = vld [vmem:[#allocation2 + $0x450] sm:$0xff]
    %v2399 = vld [vmem:[#allocation2 + $0x458] sm:$0xff]
    %v2400 = vld [vmem:[#allocation2 + $0x460] sm:$0xff]
    %v2401 = vld [vmem:[#allocation2 + $0x468] sm:$0xff]
    %v2402 = vld [vmem:[#allocation2 + $0x470] sm:$0xff]
    %v2403 = vld [vmem:[#allocation2 + $0x478] sm:$0xff]
    %v2404 = vld [vmem:[#allocation2 + $0x480] sm:$0xff]
    %v2405 = vld [vmem:[#allocation2 + $0x488] sm:$0xff]
    %v2406 = vld [vmem:[#allocation2 + $0x490] sm:$0xff]
    %v2407 = vld [vmem:[#allocation2 + $0x498] sm:$0xff]
    %v2408 = vld [vmem:[#allocation2 + $0x4a0] sm:$0xff]
    %v2409 = vld [vmem:[#allocation2 + $0x4a8] sm:$0xff]
    %v2410 = vld [vmem:[#allocation2 + $0x4b0] sm:$0xff]
    %v2411 = vld [vmem:[#allocation2 + $0x4b8] sm:$0xff]
    %v2412 = vld [vmem:[#allocation2 + $0x4c0] sm:$0xff]
    %v2413 = vld [vmem:[#allocation2 + $0x4c8] sm:$0xff]
    %v2414 = vld [vmem:[#allocation2 + $0x4d0] sm:$0xff]
    %v2415 = vld [vmem:[#allocation2 + $0x4d8] sm:$0xff]
    %v2416 = vld [vmem:[#allocation2 + $0x4e0] sm:$0xff]
    %v2417 = vld [vmem:[#allocation2 + $0x4e8] sm:$0xff]
    %v2418 = vld [vmem:[#allocation2 + $0x4f0] sm:$0xff]
    %v2419 = vld [vmem:[#allocation2 + $0x4f8] sm:$0xff]
    %v2420 = vld [vmem:[#allocation2 + $0x500] sm:$0xff]
    %v2421 = vld [vmem:[#allocation2 + $0x508] sm:$0xff]
    %v2422 = vld [vmem:[#allocation2 + $0x510] sm:$0xff]
    %v2423 = vld [vmem:[#allocation2 + $0x518] sm:$0xff]
    %v2424 = vld [vmem:[#allocation2 + $0x520] sm:$0xff]
    %v2425 = vld [vmem:[#allocation2 + $0x528] sm:$0xff]
    %v2426 = vld [vmem:[#allocation2 + $0x530] sm:$0xff]
    %v2427 = vld [vmem:[#allocation2 + $0x538] sm:$0xff]
    %v2428 = vld [vmem:[#allocation2 + $0x540] sm:$0xff]
    %v2429 = vld [vmem:[#allocation2 + $0x548] sm:$0xff]
    %v2430 = vld [vmem:[#allocation2 + $0x550] sm:$0xff]
    %v2431 = vld [vmem:[#allocation2 + $0x558] sm:$0xff]
    %v2432 = vld [vmem:[#allocation2 + $0x560] sm:$0xff]
    %v2433 = vld [vmem:[#allocation2 + $0x568] sm:$0xff]
    %v2434 = vld [vmem:[#allocation2 + $0x570] sm:$0xff]
    %v2435 = vld [vmem:[#allocation2 + $0x578] sm:$0xff]
    %v2436 = vld [vmem:[#allocation2 + $0x580] sm:$0xff]
    %v2437 = vld [vmem:[#allocation2 + $0x588] sm:$0xff]
    %v2438 = vld [vmem:[#allocation2 + $0x590] sm:$0xff]
    %v2439 = vld [vmem:[#allocation2 + $0x598] sm:$0xff]
    %v2440 = vld [vmem:[#allocation2 + $0x5a0] sm:$0xff]
    %v2441 = vld [vmem:[#allocation2 + $0x5a8] sm:$0xff]
    %v2442 = vld [vmem:[#allocation2 + $0x5b0] sm:$0xff]
    %v2443 = vld [vmem:[#allocation2 + $0x5b8] sm:$0xff]
    %v2444 = vld [vmem:[#allocation2 + $0x5c0] sm:$0xff]
    %v2445 = vld [vmem:[#allocation2 + $0x5c8] sm:$0xff]
    %v2446 = vld [vmem:[#allocation2 + $0x5d0] sm:$0xff]
    %v2447 = vld [vmem:[#allocation2 + $0x5d8] sm:$0xff]
    %v2448 = vld [vmem:[#allocation2 + $0x5e0] sm:$0xff]
    %v2449 = vld [vmem:[#allocation2 + $0x5e8] sm:$0xff]
    %v2450 = vld [vmem:[#allocation2 + $0x5f0] sm:$0xff]
    %v2451 = vld [vmem:[#allocation2 + $0x5f8] sm:$0xff]
    %v2452 = vld [vmem:[#allocation2 + $0x600] sm:$0xff]
    %v2453 = vld [vmem:[#allocation2 + $0x608] sm:$0xff]
    %v2454 = vld [vmem:[#allocation2 + $0x610] sm:$0xff]
    %v2455 = vld [vmem:[#allocation2 + $0x618] sm:$0xff]
    %v2456 = vld [vmem:[#allocation2 + $0x620] sm:$0xff]
    %v2457 = vld [vmem:[#allocation2 + $0x628] sm:$0xff]
    %v2458 = vld [vmem:[#allocation2 + $0x630] sm:$0xff]
    %v2459 = vld [vmem:[#allocation2 + $0x638] sm:$0xff]
    %v2460 = vld [vmem:[#allocation2 + $0x640] sm:$0xff]
    %v2461 = vld [vmem:[#allocation2 + $0x648] sm:$0xff]
    %v2462 = vld [vmem:[#allocation2 + $0x650] sm:$0xff]
    %v2463 = vld [vmem:[#allocation2 + $0x658] sm:$0xff]
    %v2464 = vld [vmem:[#allocation2 + $0x660] sm:$0xff]
    %v2465 = vld [vmem:[#allocation2 + $0x668] sm:$0xff]
    %v2466 = vld [vmem:[#allocation2 + $0x670] sm:$0xff]
    %v2467 = vld [vmem:[#allocation2 + $0x678] sm:$0xff]
    %v2468 = vld [vmem:[#allocation2 + $0x680] sm:$0xff]
    %v2469 = vld [vmem:[#allocation2 + $0x688] sm:$0xff]
    %v2470 = vld [vmem:[#allocation2 + $0x690] sm:$0xff]
    %v2471 = vld [vmem:[#allocation2 + $0x698] sm:$0xff]
    %v2472 = vld [vmem:[#allocation2 + $0x6a0] sm:$0xff]
    %v2473 = vld [vmem:[#allocation2 + $0x6a8] sm:$0xff]
    %v2474 = vld [vmem:[#allocation2 + $0x6b0] sm:$0xff]
    %v2475 = vld [vmem:[#allocation2 + $0x6b8] sm:$0xff]
    %v2476 = vld [vmem:[#allocation2 + $0x6c0] sm:$0xff]
    %v2477 = vld [vmem:[#allocation2 + $0x6c8] sm:$0xff]
    %v2478 = vld [vmem:[#allocation2 + $0x6d0] sm:$0xff]
    %v2479 = vld [vmem:[#allocation2 + $0x6d8] sm:$0xff]
    %v2480 = vld [vmem:[#allocation2 + $0x6e0] sm:$0xff]
    %v2481 = vld [vmem:[#allocation2 + $0x6e8] sm:$0xff]
    %v2482 = vld [vmem:[#allocation2 + $0x6f0] sm:$0xff]
    %v2483 = vld [vmem:[#allocation2 + $0x6f8] sm:$0xff]
    %v2484 = vld [vmem:[#allocation2 + $0x700] sm:$0xff]
    %v2485 = vunpack.c.l.bf16 %v2260
    %v2486 = vunpack.c.h.bf16 %v2260
    %v2487 = vunpack.c.l.bf16 %v2261
    %v2488 = vunpack.c.h.bf16 %v2261
    %v2489 = vunpack.c.l.bf16 %v2262
    %v2490 = vunpack.c.h.bf16 %v2262
    %v2491 = vunpack.c.l.bf16 %v2263
    %v2492 = vunpack.c.h.bf16 %v2263
    %v2493 = vunpack.c.l.bf16 %v2264
    %v2494 = vunpack.c.h.bf16 %v2264
    %v2495 = vunpack.c.l.bf16 %v2265
    %v2496 = vunpack.c.h.bf16 %v2265
    %v2497 = vunpack.c.l.bf16 %v2266
    %v2498 = vunpack.c.h.bf16 %v2266
    %v2499 = vunpack.c.l.bf16 %v2267
    %v2500 = vunpack.c.h.bf16 %v2267
    %v2501 = vunpack.c.l.bf16 %v2268
    %v2502 = vunpack.c.h.bf16 %v2268
    %v2503 = vunpack.c.l.bf16 %v2269
    %v2504 = vunpack.c.h.bf16 %v2269
    %v2505 = vunpack.c.l.bf16 %v2270
    %v2506 = vunpack.c.h.bf16 %v2270
    %v2507 = vunpack.c.l.bf16 %v2271
    %v2508 = vunpack.c.h.bf16 %v2271
    %v2509 = vunpack.c.l.bf16 %v2272
    %v2510 = vunpack.c.h.bf16 %v2272
    %v2511 = vunpack.c.l.bf16 %v2273
    %v2512 = vunpack.c.h.bf16 %v2273
    %v2513 = vunpack.c.l.bf16 %v2274
    %v2514 = vunpack.c.h.bf16 %v2274
    %v2515 = vunpack.c.l.bf16 %v2275
    %v2516 = vunpack.c.h.bf16 %v2275
    %v2517 = vunpack.c.l.bf16 %v2276
    %v2518 = vunpack.c.h.bf16 %v2276
    %v2519 = vunpack.c.l.bf16 %v2277
    %v2520 = vunpack.c.h.bf16 %v2277
    %v2521 = vunpack.c.l.bf16 %v2278
    %v2522 = vunpack.c.h.bf16 %v2278
    %v2523 = vunpack.c.l.bf16 %v2279
    %v2524 = vunpack.c.h.bf16 %v2279
    %v2525 = vunpack.c.l.bf16 %v2280
    %v2526 = vunpack.c.h.bf16 %v2280
    %v2527 = vunpack.c.l.bf16 %v2281
    %v2528 = vunpack.c.h.bf16 %v2281
    %v2529 = vunpack.c.l.bf16 %v2282
    %v2530 = vunpack.c.h.bf16 %v2282
    %v2531 = vunpack.c.l.bf16 %v2283
    %v2532 = vunpack.c.h.bf16 %v2283
    %v2533 = vunpack.c.l.bf16 %v2284
    %v2534 = vunpack.c.h.bf16 %v2284
    %v2535 = vunpack.c.l.bf16 %v2285
    %v2536 = vunpack.c.h.bf16 %v2285
    %v2537 = vunpack.c.l.bf16 %v2286
    %v2538 = vunpack.c.h.bf16 %v2286
    %v2539 = vunpack.c.l.bf16 %v2287
    %v2540 = vunpack.c.h.bf16 %v2287
    %v2541 = vunpack.c.l.bf16 %v2288
    %v2542 = vunpack.c.h.bf16 %v2288
    %v2543 = vunpack.c.l.bf16 %v2289
    %v2544 = vunpack.c.h.bf16 %v2289
    %v2545 = vunpack.c.l.bf16 %v2290
    %v2546 = vunpack.c.h.bf16 %v2290
    %v2547 = vunpack.c.l.bf16 %v2291
    %v2548 = vunpack.c.h.bf16 %v2291
    %v2549 = vunpack.c.l.bf16 %v2292
    %v2550 = vunpack.c.h.bf16 %v2292
    %v2551 = vunpack.c.l.bf16 %v2293
    %v2552 = vunpack.c.h.bf16 %v2293
    %v2553 = vunpack.c.l.bf16 %v2294
    %v2554 = vunpack.c.h.bf16 %v2294
    %v2555 = vunpack.c.l.bf16 %v2295
    %v2556 = vunpack.c.h.bf16 %v2295
    %v2557 = vunpack.c.l.bf16 %v2296
    %v2558 = vunpack.c.h.bf16 %v2296
    %v2559 = vunpack.c.l.bf16 %v2297
    %v2560 = vunpack.c.h.bf16 %v2297
    %v2561 = vunpack.c.l.bf16 %v2298
    %v2562 = vunpack.c.h.bf16 %v2298
    %v2563 = vunpack.c.l.bf16 %v2299
    %v2564 = vunpack.c.h.bf16 %v2299
    %v2565 = vunpack.c.l.bf16 %v2300
    %v2566 = vunpack.c.h.bf16 %v2300
    %v2567 = vunpack.c.l.bf16 %v2301
    %v2568 = vunpack.c.h.bf16 %v2301
    %v2569 = vunpack.c.l.bf16 %v2302
    %v2570 = vunpack.c.h.bf16 %v2302
    %v2571 = vunpack.c.l.bf16 %v2303
    %v2572 = vunpack.c.h.bf16 %v2303
    %v2573 = vunpack.c.l.bf16 %v2304
    %v2574 = vunpack.c.h.bf16 %v2304
    %v2575 = vunpack.c.l.bf16 %v2305
    %v2576 = vunpack.c.h.bf16 %v2305
    %v2577 = vunpack.c.l.bf16 %v2306
    %v2578 = vunpack.c.h.bf16 %v2306
    %v2579 = vunpack.c.l.bf16 %v2307
    %v2580 = vunpack.c.h.bf16 %v2307
    %v2581 = vunpack.c.l.bf16 %v2308
    %v2582 = vunpack.c.h.bf16 %v2308
    %v2583 = vunpack.c.l.bf16 %v2309
    %v2584 = vunpack.c.h.bf16 %v2309
    %v2585 = vunpack.c.l.bf16 %v2310
    %v2586 = vunpack.c.h.bf16 %v2310
    %v2587 = vunpack.c.l.bf16 %v2311
    %v2588 = vunpack.c.h.bf16 %v2311
    %v2589 = vunpack.c.l.bf16 %v2312
    %v2590 = vunpack.c.h.bf16 %v2312
    %v2591 = vunpack.c.l.bf16 %v2313
    %v2592 = vunpack.c.h.bf16 %v2313
    %v2593 = vunpack.c.l.bf16 %v2314
    %v2594 = vunpack.c.h.bf16 %v2314
    %v2595 = vunpack.c.l.bf16 %v2315
    %v2596 = vunpack.c.h.bf16 %v2315
    %v2597 = vunpack.c.l.bf16 %v2316
    %v2598 = vunpack.c.h.bf16 %v2316
    %v2599 = vunpack.c.l.bf16 %v2317
    %v2600 = vunpack.c.h.bf16 %v2317
    %v2601 = vunpack.c.l.bf16 %v2318
    %v2602 = vunpack.c.h.bf16 %v2318
    %v2603 = vunpack.c.l.bf16 %v2319
    %v2604 = vunpack.c.h.bf16 %v2319
    %v2605 = vunpack.c.l.bf16 %v2320
    %v2606 = vunpack.c.h.bf16 %v2320
    %v2607 = vunpack.c.l.bf16 %v2321
    %v2608 = vunpack.c.h.bf16 %v2321
    %v2609 = vunpack.c.l.bf16 %v2322
    %v2610 = vunpack.c.h.bf16 %v2322
    %v2611 = vunpack.c.l.bf16 %v2323
    %v2612 = vunpack.c.h.bf16 %v2323
    %v2613 = vunpack.c.l.bf16 %v2324
    %v2614 = vunpack.c.h.bf16 %v2324
    %v2615 = vunpack.c.l.bf16 %v2325
    %v2616 = vunpack.c.h.bf16 %v2325
    %v2617 = vunpack.c.l.bf16 %v2326
    %v2618 = vunpack.c.h.bf16 %v2326
    %v2619 = vunpack.c.l.bf16 %v2327
    %v2620 = vunpack.c.h.bf16 %v2327
    %v2621 = vunpack.c.l.bf16 %v2328
    %v2622 = vunpack.c.h.bf16 %v2328
    %v2623 = vunpack.c.l.bf16 %v2329
    %v2624 = vunpack.c.h.bf16 %v2329
    %v2625 = vunpack.c.l.bf16 %v2330
    %v2626 = vunpack.c.h.bf16 %v2330
    %v2627 = vunpack.c.l.bf16 %v2331
    %v2628 = vunpack.c.h.bf16 %v2331
    %v2629 = vunpack.c.l.bf16 %v2332
    %v2630 = vunpack.c.h.bf16 %v2332
    %v2631 = vunpack.c.l.bf16 %v2333
    %v2632 = vunpack.c.h.bf16 %v2333
    %v2633 = vunpack.c.l.bf16 %v2334
    %v2634 = vunpack.c.h.bf16 %v2334
    %v2635 = vunpack.c.l.bf16 %v2335
    %v2636 = vunpack.c.h.bf16 %v2335
    %v2637 = vunpack.c.l.bf16 %v2336
    %v2638 = vunpack.c.h.bf16 %v2336
    %v2639 = vunpack.c.l.bf16 %v2337
    %v2640 = vunpack.c.h.bf16 %v2337
    %v2641 = vunpack.c.l.bf16 %v2338
    %v2642 = vunpack.c.h.bf16 %v2338
    %v2643 = vunpack.c.l.bf16 %v2339
    %v2644 = vunpack.c.h.bf16 %v2339
    %v2645 = vunpack.c.l.bf16 %v2340
    %v2646 = vunpack.c.h.bf16 %v2340
    %v2647 = vunpack.c.l.bf16 %v2341
    %v2648 = vunpack.c.h.bf16 %v2341
    %v2649 = vunpack.c.l.bf16 %v2342
    %v2650 = vunpack.c.h.bf16 %v2342
    %v2651 = vunpack.c.l.bf16 %v2343
    %v2652 = vunpack.c.h.bf16 %v2343
    %v2653 = vunpack.c.l.bf16 %v2344
    %v2654 = vunpack.c.h.bf16 %v2344
    %v2655 = vunpack.c.l.bf16 %v2345
    %v2656 = vunpack.c.h.bf16 %v2345
    %v2657 = vunpack.c.l.bf16 %v2346
    %v2658 = vunpack.c.h.bf16 %v2346
    %v2659 = vunpack.c.l.bf16 %v2347
    %v2660 = vunpack.c.h.bf16 %v2347
    %v2661 = vunpack.c.l.bf16 %v2348
    %v2662 = vunpack.c.h.bf16 %v2348
    %v2663 = vunpack.c.l.bf16 %v2349
    %v2664 = vunpack.c.h.bf16 %v2349
    %v2665 = vunpack.c.l.bf16 %v2350
    %v2666 = vunpack.c.h.bf16 %v2350
    %v2667 = vunpack.c.l.bf16 %v2351
    %v2668 = vunpack.c.h.bf16 %v2351
    %v2669 = vunpack.c.l.bf16 %v2352
    %v2670 = vunpack.c.h.bf16 %v2352
    %v2671 = vunpack.c.l.bf16 %v2353
    %v2672 = vunpack.c.h.bf16 %v2353
    %v2673 = vunpack.c.l.bf16 %v2354
    %v2674 = vunpack.c.h.bf16 %v2354
    %v2675 = vunpack.c.l.bf16 %v2355
    %v2676 = vunpack.c.h.bf16 %v2355
    %v2677 = vunpack.c.l.bf16 %v2356
    %v2678 = vunpack.c.h.bf16 %v2356
    %v2679 = vunpack.c.l.bf16 %v2357
    %v2680 = vunpack.c.h.bf16 %v2357
    %v2681 = vunpack.c.l.bf16 %v2358
    %v2682 = vunpack.c.h.bf16 %v2358
    %v2683 = vunpack.c.l.bf16 %v2359
    %v2684 = vunpack.c.h.bf16 %v2359
    %v2685 = vunpack.c.l.bf16 %v2360
    %v2686 = vunpack.c.h.bf16 %v2360
    %v2687 = vunpack.c.l.bf16 %v2361
    %v2688 = vunpack.c.h.bf16 %v2361
    %v2689 = vunpack.c.l.bf16 %v2362
    %v2690 = vunpack.c.h.bf16 %v2362
    %v2691 = vunpack.c.l.bf16 %v2363
    %v2692 = vunpack.c.h.bf16 %v2363
    %v2693 = vunpack.c.l.bf16 %v2364
    %v2694 = vunpack.c.h.bf16 %v2364
    %v2695 = vunpack.c.l.bf16 %v2365
    %v2696 = vunpack.c.h.bf16 %v2365
    %v2697 = vunpack.c.l.bf16 %v2366
    %v2698 = vunpack.c.h.bf16 %v2366
    %v2699 = vunpack.c.l.bf16 %v2367
    %v2700 = vunpack.c.h.bf16 %v2367
    %v2701 = vunpack.c.l.bf16 %v2368
    %v2702 = vunpack.c.h.bf16 %v2368
    %v2703 = vunpack.c.l.bf16 %v2369
    %v2704 = vunpack.c.h.bf16 %v2369
    %v2705 = vunpack.c.l.bf16 %v2370
    %v2706 = vunpack.c.h.bf16 %v2370
    %v2707 = vunpack.c.l.bf16 %v2371
    %v2708 = vunpack.c.h.bf16 %v2371
    %v2709 = vunpack.c.l.bf16 %v2372
    %v2710 = vunpack.c.h.bf16 %v2372
    %v2711 = vunpack.c.l.bf16 %v2373
    %v2712 = vunpack.c.h.bf16 %v2373
    %v2713 = vunpack.c.l.bf16 %v2374
    %v2714 = vunpack.c.h.bf16 %v2374
    %v2715 = vunpack.c.l.bf16 %v2375
    %v2716 = vunpack.c.h.bf16 %v2375
    %v2717 = vunpack.c.l.bf16 %v2376
    %v2718 = vunpack.c.h.bf16 %v2376
    %v2719 = vunpack.c.l.bf16 %v2377
    %v2720 = vunpack.c.h.bf16 %v2377
    %v2721 = vunpack.c.l.bf16 %v2378
    %v2722 = vunpack.c.h.bf16 %v2378
    %v2723 = vunpack.c.l.bf16 %v2379
    %v2724 = vunpack.c.h.bf16 %v2379
    %v2725 = vunpack.c.l.bf16 %v2380
    %v2726 = vunpack.c.h.bf16 %v2380
    %v2727 = vunpack.c.l.bf16 %v2381
    %v2728 = vunpack.c.h.bf16 %v2381
    %v2729 = vunpack.c.l.bf16 %v2382
    %v2730 = vunpack.c.h.bf16 %v2382
    %v2731 = vunpack.c.l.bf16 %v2383
    %v2732 = vunpack.c.h.bf16 %v2383
    %v2733 = vunpack.c.l.bf16 %v2384
    %v2734 = vunpack.c.h.bf16 %v2384
    %v2735 = vunpack.c.l.bf16 %v2385
    %v2736 = vunpack.c.h.bf16 %v2385
    %v2737 = vunpack.c.l.bf16 %v2386
    %v2738 = vunpack.c.h.bf16 %v2386
    %v2739 = vunpack.c.l.bf16 %v2387
    %v2740 = vunpack.c.h.bf16 %v2387
    %v2741 = vunpack.c.l.bf16 %v2388
    %v2742 = vunpack.c.h.bf16 %v2388
    %v2743 = vunpack.c.l.bf16 %v2389
    %v2744 = vunpack.c.h.bf16 %v2389
    %v2745 = vunpack.c.l.bf16 %v2390
    %v2746 = vunpack.c.h.bf16 %v2390
    %v2747 = vunpack.c.l.bf16 %v2391
    %v2748 = vunpack.c.h.bf16 %v2391
    %v2749 = vunpack.c.l.bf16 %v2392
    %v2750 = vunpack.c.h.bf16 %v2392
    %v2751 = vunpack.c.l.bf16 %v2393
    %v2752 = vunpack.c.h.bf16 %v2393
    %v2753 = vunpack.c.l.bf16 %v2394
    %v2754 = vunpack.c.h.bf16 %v2394
    %v2755 = vunpack.c.l.bf16 %v2395
    %v2756 = vunpack.c.h.bf16 %v2395
    %v2757 = vunpack.c.l.bf16 %v2396
    %v2758 = vunpack.c.h.bf16 %v2396
    %v2759 = vunpack.c.l.bf16 %v2397
    %v2760 = vunpack.c.h.bf16 %v2397
    %v2761 = vunpack.c.l.bf16 %v2398
    %v2762 = vunpack.c.h.bf16 %v2398
    %v2763 = vunpack.c.l.bf16 %v2399
    %v2764 = vunpack.c.h.bf16 %v2399
    %v2765 = vunpack.c.l.bf16 %v2400
    %v2766 = vunpack.c.h.bf16 %v2400
    %v2767 = vunpack.c.l.bf16 %v2401
    %v2768 = vunpack.c.h.bf16 %v2401
    %v2769 = vunpack.c.l.bf16 %v2402
    %v2770 = vunpack.c.h.bf16 %v2402
    %v2771 = vunpack.c.l.bf16 %v2403
    %v2772 = vunpack.c.h.bf16 %v2403
    %v2773 = vunpack.c.l.bf16 %v2404
    %v2774 = vunpack.c.h.bf16 %v2404
    %v2775 = vunpack.c.l.bf16 %v2405
    %v2776 = vunpack.c.h.bf16 %v2405
    %v2777 = vunpack.c.l.bf16 %v2406
    %v2778 = vunpack.c.h.bf16 %v2406
    %v2779 = vunpack.c.l.bf16 %v2407
    %v2780 = vunpack.c.h.bf16 %v2407
    %v2781 = vunpack.c.l.bf16 %v2408
    %v2782 = vunpack.c.h.bf16 %v2408
    %v2783 = vunpack.c.l.bf16 %v2409
    %v2784 = vunpack.c.h.bf16 %v2409
    %v2785 = vunpack.c.l.bf16 %v2410
    %v2786 = vunpack.c.h.bf16 %v2410
    %v2787 = vunpack.c.l.bf16 %v2411
    %v2788 = vunpack.c.h.bf16 %v2411
    %v2789 = vunpack.c.l.bf16 %v2412
    %v2790 = vunpack.c.h.bf16 %v2412
    %v2791 = vunpack.c.l.bf16 %v2413
    %v2792 = vunpack.c.h.bf16 %v2413
    %v2793 = vunpack.c.l.bf16 %v2414
    %v2794 = vunpack.c.h.bf16 %v2414
    %v2795 = vunpack.c.l.bf16 %v2415
    %v2796 = vunpack.c.h.bf16 %v2415
    %v2797 = vunpack.c.l.bf16 %v2416
    %v2798 = vunpack.c.h.bf16 %v2416
    %v2799 = vunpack.c.l.bf16 %v2417
    %v2800 = vunpack.c.h.bf16 %v2417
    %v2801 = vunpack.c.l.bf16 %v2418
    %v2802 = vunpack.c.h.bf16 %v2418
    %v2803 = vunpack.c.l.bf16 %v2419
    %v2804 = vunpack.c.h.bf16 %v2419
    %v2805 = vunpack.c.l.bf16 %v2420
    %v2806 = vunpack.c.h.bf16 %v2420
    %v2807 = vunpack.c.l.bf16 %v2421
    %v2808 = vunpack.c.h.bf16 %v2421
    %v2809 = vunpack.c.l.bf16 %v2422
    %v2810 = vunpack.c.h.bf16 %v2422
    %v2811 = vunpack.c.l.bf16 %v2423
    %v2812 = vunpack.c.h.bf16 %v2423
    %v2813 = vunpack.c.l.bf16 %v2424
    %v2814 = vunpack.c.h.bf16 %v2424
    %v2815 = vunpack.c.l.bf16 %v2425
    %v2816 = vunpack.c.h.bf16 %v2425
    %v2817 = vunpack.c.l.bf16 %v2426
    %v2818 = vunpack.c.h.bf16 %v2426
    %v2819 = vunpack.c.l.bf16 %v2427
    %v2820 = vunpack.c.h.bf16 %v2427
    %v2821 = vunpack.c.l.bf16 %v2428
    %v2822 = vunpack.c.h.bf16 %v2428
    %v2823 = vunpack.c.l.bf16 %v2429
    %v2824 = vunpack.c.h.bf16 %v2429
    %v2825 = vunpack.c.l.bf16 %v2430
    %v2826 = vunpack.c.h.bf16 %v2430
    %v2827 = vunpack.c.l.bf16 %v2431
    %v2828 = vunpack.c.h.bf16 %v2431
    %v2829 = vunpack.c.l.bf16 %v2432
    %v2830 = vunpack.c.h.bf16 %v2432
    %v2831 = vunpack.c.l.bf16 %v2433
    %v2832 = vunpack.c.h.bf16 %v2433
    %v2833 = vunpack.c.l.bf16 %v2434
    %v2834 = vunpack.c.h.bf16 %v2434
    %v2835 = vunpack.c.l.bf16 %v2435
    %v2836 = vunpack.c.h.bf16 %v2435
    %v2837 = vunpack.c.l.bf16 %v2436
    %v2838 = vunpack.c.h.bf16 %v2436
    %v2839 = vunpack.c.l.bf16 %v2437
    %v2840 = vunpack.c.h.bf16 %v2437
    %v2841 = vunpack.c.l.bf16 %v2438
    %v2842 = vunpack.c.h.bf16 %v2438
    %v2843 = vunpack.c.l.bf16 %v2439
    %v2844 = vunpack.c.h.bf16 %v2439
    %v2845 = vunpack.c.l.bf16 %v2440
    %v2846 = vunpack.c.h.bf16 %v2440
    %v2847 = vunpack.c.l.bf16 %v2441
    %v2848 = vunpack.c.h.bf16 %v2441
    %v2849 = vunpack.c.l.bf16 %v2442
    %v2850 = vunpack.c.h.bf16 %v2442
    %v2851 = vunpack.c.l.bf16 %v2443
    %v2852 = vunpack.c.h.bf16 %v2443
    %v2853 = vunpack.c.l.bf16 %v2444
    %v2854 = vunpack.c.h.bf16 %v2444
    %v2855 = vunpack.c.l.bf16 %v2445
    %v2856 = vunpack.c.h.bf16 %v2445
    %v2857 = vunpack.c.l.bf16 %v2446
    %v2858 = vunpack.c.h.bf16 %v2446
    %v2859 = vunpack.c.l.bf16 %v2447
    %v2860 = vunpack.c.h.bf16 %v2447
    %v2861 = vunpack.c.l.bf16 %v2448
    %v2862 = vunpack.c.h.bf16 %v2448
    %v2863 = vunpack.c.l.bf16 %v2449
    %v2864 = vunpack.c.h.bf16 %v2449
    %v2865 = vunpack.c.l.bf16 %v2450
    %v2866 = vunpack.c.h.bf16 %v2450
    %v2867 = vunpack.c.l.bf16 %v2451
    %v2868 = vunpack.c.h.bf16 %v2451
    %v2869 = vunpack.c.l.bf16 %v2452
    %v2870 = vunpack.c.h.bf16 %v2452
    %v2871 = vunpack.c.l.bf16 %v2453
    %v2872 = vunpack.c.h.bf16 %v2453
    %v2873 = vunpack.c.l.bf16 %v2454
    %v2874 = vunpack.c.h.bf16 %v2454
    %v2875 = vunpack.c.l.bf16 %v2455
    %v2876 = vunpack.c.h.bf16 %v2455
    %v2877 = vunpack.c.l.bf16 %v2456
    %v2878 = vunpack.c.h.bf16 %v2456
    %v2879 = vunpack.c.l.bf16 %v2457
    %v2880 = vunpack.c.h.bf16 %v2457
    %v2881 = vunpack.c.l.bf16 %v2458
    %v2882 = vunpack.c.h.bf16 %v2458
    %v2883 = vunpack.c.l.bf16 %v2459
    %v2884 = vunpack.c.h.bf16 %v2459
    %v2885 = vunpack.c.l.bf16 %v2460
    %v2886 = vunpack.c.h.bf16 %v2460
    %v2887 = vunpack.c.l.bf16 %v2461
    %v2888 = vunpack.c.h.bf16 %v2461
    %v2889 = vunpack.c.l.bf16 %v2462
    %v2890 = vunpack.c.h.bf16 %v2462
    %v2891 = vunpack.c.l.bf16 %v2463
    %v2892 = vunpack.c.h.bf16 %v2463
    %v2893 = vunpack.c.l.bf16 %v2464
    %v2894 = vunpack.c.h.bf16 %v2464
    %v2895 = vunpack.c.l.bf16 %v2465
    %v2896 = vunpack.c.h.bf16 %v2465
    %v2897 = vunpack.c.l.bf16 %v2466
    %v2898 = vunpack.c.h.bf16 %v2466
    %v2899 = vunpack.c.l.bf16 %v2467
    %v2900 = vunpack.c.h.bf16 %v2467
    %v2901 = vunpack.c.l.bf16 %v2468
    %v2902 = vunpack.c.h.bf16 %v2468
    %v2903 = vunpack.c.l.bf16 %v2469
    %v2904 = vunpack.c.h.bf16 %v2469
    %v2905 = vunpack.c.l.bf16 %v2470
    %v2906 = vunpack.c.h.bf16 %v2470
    %v2907 = vunpack.c.l.bf16 %v2471
    %v2908 = vunpack.c.h.bf16 %v2471
    %v2909 = vunpack.c.l.bf16 %v2472
    %v2910 = vunpack.c.h.bf16 %v2472
    %v2911 = vunpack.c.l.bf16 %v2473
    %v2912 = vunpack.c.h.bf16 %v2473
    %v2913 = vunpack.c.l.bf16 %v2474
    %v2914 = vunpack.c.h.bf16 %v2474
    %v2915 = vunpack.c.l.bf16 %v2475
    %v2916 = vunpack.c.h.bf16 %v2475
    %v2917 = vunpack.c.l.bf16 %v2476
    %v2918 = vunpack.c.h.bf16 %v2476
    %v2919 = vunpack.c.l.bf16 %v2477
    %v2920 = vunpack.c.h.bf16 %v2477
    %v2921 = vunpack.c.l.bf16 %v2478
    %v2922 = vunpack.c.h.bf16 %v2478
    %v2923 = vunpack.c.l.bf16 %v2479
    %v2924 = vunpack.c.h.bf16 %v2479
    %v2925 = vunpack.c.l.bf16 %v2480
    %v2926 = vunpack.c.h.bf16 %v2480
    %v2927 = vunpack.c.l.bf16 %v2481
    %v2928 = vunpack.c.h.bf16 %v2481
    %v2929 = vunpack.c.l.bf16 %v2482
    %v2930 = vunpack.c.h.bf16 %v2482
    %v2931 = vunpack.c.l.bf16 %v2483
    %v2932 = vunpack.c.h.bf16 %v2483
    %v2933 = vunpack.c.l.bf16 %v2484
    %v2934 = vunpack.c.h.bf16 %v2484
    %v2935 = vld [vmem:[%s8] sm:$0x1]
    %v2936 = vlaneseq
    %v2937 = vshrl.u32 %v2936, 7
    %v2938 = vsub.s32 0, %v2937
    %v2939 = vrot.slane %v2935, %v2938
    %2940 = vmatprep.subr.mxu0 0.0
    %2941 = vmatpush1.msra.mxu0 %v262
    %2942 = vmatprep.subr.mxu0 0.0
    %2943 = vmatpush1.msra.mxu0 %v267
    %2944 = vmatprep.subr.mxu0 0.0
    %2945 = vmatpush1.msra.mxu0 %v272
    %2946 = vmatprep.subr.mxu0 0.0
    %2947 = vmatpush1.msra.mxu0 %v277
    %2948 = vmatprep.subr.mxu0 0.0
    %2949 = vmatpush1.msra.mxu0 %v282
    %2950 = vmatprep.subr.mxu0 0.0
    %2951 = vmatpush1.msra.mxu0 %v287
    %2952 = vmatprep.subr.mxu0 0.0
    %2953 = vmatpush1.msra.mxu0 %v292
    %2954 = vmatprep.subr.mxu0 0.0
    %2955 = vmatpush1.msra.mxu0 %v297
    %2956 = vmatprep.subr.mxu0 0.0
    %2957 = vmatpush1.msra.mxu0 %v302
    %2958 = vmatprep.subr.mxu0 0.0
    %2959 = vmatpush1.msra.mxu0 %v307
    %2960 = vmatprep.subr.mxu0 0.0
    %2961 = vmatpush1.msra.mxu0 %v312
    %2962 = vmatprep.subr.mxu0 0.0
    %2963 = vmatpush1.msra.mxu0 %v317
    %2964 = vmatprep.subr.mxu0 0.0
    %2965 = vmatpush1.msra.mxu0 %v322
    %2966 = vmatprep.subr.mxu0 0.0
    %2967 = vmatpush1.msra.mxu0 %v327
    %2968 = vmatprep.subr.mxu0 0.0
    %2969 = vmatpush1.msra.mxu0 %v332
    %2970 = vmatprep.subr.mxu0 0.0
    %2971 = vmatpush1.msra.mxu0 %v337
    %2972 = vmatprep.subr.mxu0 0.0
    %2973 = vmatpush1.msra.mxu0 %v342
    %2974 = vmatprep.subr.mxu0 0.0
    %2975 = vmatpush1.msra.mxu0 %v347
    %2976 = vmatprep.subr.mxu0 0.0
    %2977 = vmatpush1.msra.mxu0 %v352
    %2978 = vmatprep.subr.mxu0 0.0
    %2979 = vmatpush1.msra.mxu0 %v357
    %2980 = vmatprep.subr.mxu0 0.0
    %2981 = vmatpush1.msra.mxu0 %v362
    %2982 = vmatprep.subr.mxu0 0.0
    %2983 = vmatpush1.msra.mxu0 %v367
    %2984 = vmatprep.subr.mxu0 0.0
    %2985 = vmatpush1.msra.mxu0 %v372
    %2986 = vmatprep.subr.mxu0 0.0
    %2987 = vmatpush1.msra.mxu0 %v377
    %2988 = vmatprep.subr.mxu0 0.0
    %2989 = vmatpush1.msra.mxu0 %v382
    %2990 = vmatprep.subr.mxu0 0.0
    %2991 = vmatpush1.msra.mxu0 %v387
    %2992 = vmatprep.subr.mxu0 0.0
    %2993 = vmatpush1.msra.mxu0 %v392
    %2994 = vmatprep.subr.mxu0 0.0
    %2995 = vmatpush1.msra.mxu0 %v397
    %2996 = vmatprep.subr.mxu0 0.0
    %2997 = vmatpush1.msra.mxu0 %v402
    %2998 = vmatprep.subr.mxu0 0.0
    %2999 = vmatpush1.msra.mxu0 %v407
    %3000 = vmatprep.subr.mxu0 0.0
    %3001 = vmatpush1.msra.mxu0 %v412
    %3002 = vmatprep.subr.mxu0 0.0
    %3003 = vmatpush1.msra.mxu0 %v417
    %3004 = vmatprep.mubr.f32.mxu0 %v2486
    %3005 = vmatmul.mubr.f32.gmra.mrb[0].mxu0 %v2485
    %v3006 = vpop.f32.mrb[0].mxu0
    %v3007 = vadd.f32 %v2939, %v3006
    %v3008 = vpop.f32.mrb[0].mxu0
    %3009 = vmatprep.mubr.f32.mxu0 %v2504
    %3010 = vmatmul.mubr.f32.gmra.mrb[0].mxu0 %v2503
    %v3011 = vpop.f32.mrb[0].mxu0
    %v3012 = vadd.f32 %v2939, %v3011
    %v3013 = vpop.f32.mrb[0].mxu0
    %3014 = vmatprep.mubr.f32.mxu0 %v2522
    %3015 = vmatmul.mubr.f32.gmra.mrb[0].mxu0 %v2521
    %v3016 = vpop.f32.mrb[0].mxu0
    %v3017 = vadd.f32 %v2939, %v3016
    %v3018 = vpop.f32.mrb[0].mxu0
    %3019 = vmatprep.mubr.f32.mxu0 %v2540
    %3020 = vmatmul.mubr.f32.gmra.mrb[0].mxu0 %v2539
    %v3021 = vpop.f32.mrb[0].mxu0
    %v3022 = vadd.f32 %v2939, %v3021
    %v3023 = vpop.f32.mrb[0].mxu0
    %3024 = vmatprep.mubr.f32.mxu0 %v2558
    %3025 = vmatmul.mubr.f32.gmra.mrb[0].mxu0 %v2557
    %v3026 = vpop.f32.mrb[0].mxu0
    %v3027 = vadd.f32 %v2939, %v3026
    %v3028 = vpop.f32.mrb[0].mxu0
    %3029 = vmatprep.mubr.f32.mxu0 %v2576
    %3030 = vmatmul.mubr.f32.gmra.mrb[0].mxu0 %v2575
    %v3031 = vpop.f32.mrb[0].mxu0
    %v3032 = vadd.f32 %v2939, %v3031
    %v3033 = vpop.f32.mrb[0].mxu0
    %3034 = vmatprep.mubr.f32.mxu0 %v2594
    %3035 = vmatmul.mubr.f32.gmra.mrb[0].mxu0 %v2593
    %v3036 = vpop.f32.mrb[0].mxu0
    %v3037 = vadd.f32 %v2939, %v3036
    %v3038 = vpop.f32.mrb[0].mxu0
    %3039 = vmatprep.mubr.f32.mxu0 %v2612
    %3040 = vmatmul.mubr.f32.gmra.mrb[0].mxu0 %v2611
    %v3041 = vpop.f32.mrb[0].mxu0
    %v3042 = vadd.f32 %v2939, %v3041
    %v3043 = vpop.f32.mrb[0].mxu0
    %3044 = vmatprep.mubr.f32.mxu0 %v2630
    %3045 = vmatmul.mubr.f32.gmra.mrb[0].mxu0 %v2629
    %v3046 = vpop.f32.mrb[0].mxu0
    %v3047 = vadd.f32 %v2939, %v3046
    %v3048 = vpop.f32.mrb[0].mxu0
    %3049 = vmatprep.mubr.f32.mxu0 %v2648
    %3050 = vmatmul.mubr.f32.gmra.mrb[0].mxu0 %v2647
    %v3051 = vpop.f32.mrb[0].mxu0
    %v3052 = vadd.f32 %v2939, %v3051
    %v3053 = vpop.f32.mrb[0].mxu0
    %3054 = vmatprep.mubr.f32.mxu0 %v2666
    %3055 = vmatmul.mubr.f32.gmra.mrb[0].mxu0 %v2665
    %v3056 = vpop.f32.mrb[0].mxu0
    %v3057 = vadd.f32 %v2939, %v3056
    %v3058 = vpop.f32.mrb[0].mxu0
    %3059 = vmatprep.mubr.f32.mxu0 %v2684
    %3060 = vmatmul.mubr.f32.gmra.mrb[0].mxu0 %v2683
    %v3061 = vpop.f32.mrb[0].mxu0
    %v3062 = vadd.f32 %v2939, %v3061
    %v3063 = vpop.f32.mrb[0].mxu0
    %3064 = vmatprep.mubr.f32.mxu0 %v2702
    %3065 = vmatmul.mubr.f32.gmra.mrb[0].mxu0 %v2701
    %v3066 = vpop.f32.mrb[0].mxu0
    %v3067 = vadd.f32 %v2939, %v3066
    %v3068 = vpop.f32.mrb[0].mxu0
    %3069 = vmatprep.mubr.f32.mxu0 %v2720
    %3070 = vmatmul.mubr.f32.gmra.mrb[0].mxu0 %v2719
    %v3071 = vpop.f32.mrb[0].mxu0
    %v3072 = vadd.f32 %v2939, %v3071
    %v3073 = vpop.f32.mrb[0].mxu0
    %3074 = vmatprep.mubr.f32.mxu0 %v2738
    %3075 = vmatmul.mubr.f32.gmra.mrb[0].mxu0 %v2737
    %v3076 = vpop.f32.mrb[0].mxu0
    %v3077 = vadd.f32 %v2939, %v3076
    %v3078 = vpop.f32.mrb[0].mxu0
    %3079 = vmatprep.mubr.f32.mxu0 %v2756
    %3080 = vmatmul.mubr.f32.gmra.mrb[0].mxu0 %v2755
    %v3081 = vpop.f32.mrb[0].mxu0
    %v3082 = vadd.f32 %v2939, %v3081
    %v3083 = vpop.f32.mrb[0].mxu0
    %3084 = vmatprep.mubr.f32.mxu0 %v2774
    %3085 = vmatmul.mubr.f32.gmra.mrb[0].mxu0 %v2773
    %v3086 = vpop.f32.mrb[0].mxu0
    %v3087 = vadd.f32 %v2939, %v3086
    %v3088 = vpop.f32.mrb[0].mxu0
    %3089 = vmatprep.mubr.f32.mxu0 %v2792
    %3090 = vmatmul.mubr.f32.gmra.mrb[0].mxu0 %v2791
    %v3091 = vpop.f32.mrb[0].mxu0
    %v3092 = vadd.f32 %v2939, %v3091
    %v3093 = vpop.f32.mrb[0].mxu0
    %3094 = vmatprep.mubr.f32.mxu0 %v2810
    %3095 = vmatmul.mubr.f32.gmra.mrb[0].mxu0 %v2809
    %v3096 = vpop.f32.mrb[0].mxu0
    %v3097 = vadd.f32 %v2939, %v3096
    %v3098 = vpop.f32.mrb[0].mxu0
    %3099 = vmatprep.mubr.f32.mxu0 %v2828
    %3100 = vmatmul.mubr.f32.gmra.mrb[0].mxu0 %v2827
    %v3101 = vpop.f32.mrb[0].mxu0
    %v3102 = vadd.f32 %v2939, %v3101
    %v3103 = vpop.f32.mrb[0].mxu0
    %3104 = vmatprep.mubr.f32.mxu0 %v2846
    %3105 = vmatmul.mubr.f32.gmra.mrb[0].mxu0 %v2845
    %v3106 = vpop.f32.mrb[0].mxu0
    %v3107 = vadd.f32 %v2939, %v3106
    %v3108 = vpop.f32.mrb[0].mxu0
    %3109 = vmatprep.mubr.f32.mxu0 %v2864
    %3110 = vmatmul.mubr.f32.gmra.mrb[0].mxu0 %v2863
    %v3111 = vpop.f32.mrb[0].mxu0
    %v3112 = vadd.f32 %v2939, %v3111
    %v3113 = vpop.f32.mrb[0].mxu0
    %3114 = vmatprep.mubr.f32.mxu0 %v2882
    %3115 = vmatmul.mubr.f32.gmra.mrb[0].mxu0 %v2881
    %v3116 = vpop.f32.mrb[0].mxu0
    %v3117 = vadd.f32 %v2939, %v3116
    %v3118 = vpop.f32.mrb[0].mxu0
    %3119 = vmatprep.mubr.f32.mxu0 %v2900
    %3120 = vmatmul.mubr.f32.gmra.mrb[0].mxu0 %v2899
    %v3121 = vpop.f32.mrb[0].mxu0
    %v3122 = vadd.f32 %v2939, %v3121
    %v3123 = vpop.f32.mrb[0].mxu0
    %3124 = vmatprep.mubr.f32.mxu0 %v2918
    %3125 = vmatmul.mubr.f32.gmra.mrb[0].mxu0 %v2917
    %v3126 = vpop.f32.mrb[0].mxu0
    %v3127 = vadd.f32 %v2939, %v3126
    %v3128 = vpop.f32.mrb[0].mxu0
    %3129 = vdwg.mxu0
    %3130 = vmatprep.subr.mxu0 0.0
    %3131 = vmatpush1.msra.mxu0 %v492
    %3132 = vmatprep.subr.mxu0 0.0
    %3133 = vmatpush1.msra.mxu0 %v497
    %3134 = vmatprep.subr.mxu0 0.0
    %3135 = vmatpush1.msra.mxu0 %v502
    %3136 = vmatprep.subr.mxu0 0.0
    %3137 = vmatpush1.msra.mxu0 %v507
    %3138 = vmatprep.subr.mxu0 0.0
    %3139 = vmatpush1.msra.mxu0 %v512
    %3140 = vmatprep.subr.mxu0 0.0
    %3141 = vmatpush1.msra.mxu0 %v517
    %3142 = vmatprep.subr.mxu0 0.0
    %3143 = vmatpush1.msra.mxu0 %v522
    %3144 = vmatprep.subr.mxu0 0.0
    %3145 = vmatpush1.msra.mxu0 %v527
    %3146 = vmatprep.subr.mxu0 0.0
    %3147 = vmatpush1.msra.mxu0 %v532
    %3148 = vmatprep.subr.mxu0 0.0
    %3149 = vmatpush1.msra.mxu0 %v537
    %3150 = vmatprep.subr.mxu0 0.0
    %3151 = vmatpush1.msra.mxu0 %v542
    %3152 = vmatprep.subr.mxu0 0.0
    %3153 = vmatpush1.msra.mxu0 %v547
    %3154 = vmatprep.subr.mxu0 0.0
    %3155 = vmatpush1.msra.mxu0 %v552
    %3156 = vmatprep.subr.mxu0 0.0
    %3157 = vmatpush1.msra.mxu0 %v557
    %3158 = vmatprep.subr.mxu0 0.0
    %3159 = vmatpush1.msra.mxu0 %v562
    %3160 = vmatprep.subr.mxu0 0.0
    %3161 = vmatpush1.msra.mxu0 %v567
    %3162 = vmatprep.subr.mxu0 0.0
    %3163 = vmatpush1.msra.mxu0 %v572
    %3164 = vmatprep.subr.mxu0 0.0
    %3165 = vmatpush1.msra.mxu0 %v577
    %3166 = vmatprep.subr.mxu0 0.0
    %3167 = vmatpush1.msra.mxu0 %v582
    %3168 = vmatprep.subr.mxu0 0.0
    %3169 = vmatpush1.msra.mxu0 %v587
    %3170 = vmatprep.subr.mxu0 0.0
    %3171 = vmatpush1.msra.mxu0 %v592
    %3172 = vmatprep.subr.mxu0 0.0
    %3173 = vmatpush1.msra.mxu0 %v597
    %3174 = vmatprep.subr.mxu0 0.0
    %3175 = vmatpush1.msra.mxu0 %v602
    %3176 = vmatprep.subr.mxu0 0.0
    %3177 = vmatpush1.msra.mxu0 %v607
    %3178 = vmatprep.subr.mxu0 0.0
    %3179 = vmatpush1.msra.mxu0 %v612
    %3180 = vmatprep.subr.mxu0 0.0
    %3181 = vmatpush1.msra.mxu0 %v617
    %3182 = vmatprep.subr.mxu0 0.0
    %3183 = vmatpush1.msra.mxu0 %v622
    %3184 = vmatprep.subr.mxu0 0.0
    %3185 = vmatpush1.msra.mxu0 %v627
    %3186 = vmatprep.subr.mxu0 0.0
    %3187 = vmatpush1.msra.mxu0 %v632
    %3188 = vmatprep.subr.mxu0 0.0
    %3189 = vmatpush1.msra.mxu0 %v637
    %3190 = vmatprep.subr.mxu0 0.0
    %3191 = vmatpush1.msra.mxu0 %v642
    %3192 = vmatprep.subr.mxu0 0.0
    %3193 = vmatpush1.msra.mxu0 %v647
    %3194 = vmatprep.mubr.f32.mxu0 %v2488
    %3195 = vmatmul.mubr.f32.gmra.mrb[0].mxu0 %v2487
    %v3196 = vpop.f32.mrb[0].mxu0
    %v3197 = vadd.f32 %v3007, %v3196
    %v3198 = vpop.f32.mrb[0].mxu0
    %3199 = vmatprep.mubr.f32.mxu0 %v2506
    %3200 = vmatmul.mubr.f32.gmra.mrb[0].mxu0 %v2505
    %v3201 = vpop.f32.mrb[0].mxu0
    %v3202 = vadd.f32 %v3012, %v3201
    %v3203 = vpop.f32.mrb[0].mxu0
    %3204 = vmatprep.mubr.f32.mxu0 %v2524
    %3205 = vmatmul.mubr.f32.gmra.mrb[0].mxu0 %v2523
    %v3206 = vpop.f32.mrb[0].mxu0
    %v3207 = vadd.f32 %v3017, %v3206
    %v3208 = vpop.f32.mrb[0].mxu0
    %3209 = vmatprep.mubr.f32.mxu0 %v2542
    %3210 = vmatmul.mubr.f32.gmra.mrb[0].mxu0 %v2541
    %v3211 = vpop.f32.mrb[0].mxu0
    %v3212 = vadd.f32 %v3022, %v3211
    %v3213 = vpop.f32.mrb[0].mxu0
    %3214 = vmatprep.mubr.f32.mxu0 %v2560
    %3215 = vmatmul.mubr.f32.gmra.mrb[0].mxu0 %v2559
    %v3216 = vpop.f32.mrb[0].mxu0
    %v3217 = vadd.f32 %v3027, %v3216
    %v3218 = vpop.f32.mrb[0].mxu0
    %3219 = vmatprep.mubr.f32.mxu0 %v2578
    %3220 = vmatmul.mubr.f32.gmra.mrb[0].mxu0 %v2577
    %v3221 = vpop.f32.mrb[0].mxu0
    %v3222 = vadd.f32 %v3032, %v3221
    %v3223 = vpop.f32.mrb[0].mxu0
    %3224 = vmatprep.mubr.f32.mxu0 %v2596
    %3225 = vmatmul.mubr.f32.gmra.mrb[0].mxu0 %v2595
    %v3226 = vpop.f32.mrb[0].mxu0
    %v3227 = vadd.f32 %v3037, %v3226
    %v3228 = vpop.f32.mrb[0].mxu0
    %3229 = vmatprep.mubr.f32.mxu0 %v2614
    %3230 = vmatmul.mubr.f32.gmra.mrb[0].mxu0 %v2613
    %v3231 = vpop.f32.mrb[0].mxu0
    %v3232 = vadd.f32 %v3042, %v3231
    %v3233 = vpop.f32.mrb[0].mxu0
    %3234 = vmatprep.mubr.f32.mxu0 %v2632
    %3235 = vmatmul.mubr.f32.gmra.mrb[0].mxu0 %v2631
    %v3236 = vpop.f32.mrb[0].mxu0
    %v3237 = vadd.f32 %v3047, %v3236
    %v3238 = vpop.f32.mrb[0].mxu0
    %3239 = vmatprep.mubr.f32.mxu0 %v2650
    %3240 = vmatmul.mubr.f32.gmra.mrb[0].mxu0 %v2649
    %v3241 = vpop.f32.mrb[0].mxu0
    %v3242 = vadd.f32 %v3052, %v3241
    %v3243 = vpop.f32.mrb[0].mxu0
    %3244 = vmatprep.mubr.f32.mxu0 %v2668
    %3245 = vmatmul.mubr.f32.gmra.mrb[0].mxu0 %v2667
    %v3246 = vpop.f32.mrb[0].mxu0
    %v3247 = vadd.f32 %v3057, %v3246
    %v3248 = vpop.f32.mrb[0].mxu0
    %3249 = vmatprep.mubr.f32.mxu0 %v2686
    %3250 = vmatmul.mubr.f32.gmra.mrb[0].mxu0 %v2685
    %v3251 = vpop.f32.mrb[0].mxu0
    %v3252 = vadd.f32 %v3062, %v3251
    %v3253 = vpop.f32.mrb[0].mxu0
    %3254 = vmatprep.mubr.f32.mxu0 %v2704
    %3255 = vmatmul.mubr.f32.gmra.mrb[0].mxu0 %v2703
    %v3256 = vpop.f32.mrb[0].mxu0
    %v3257 = vadd.f32 %v3067, %v3256
    %v3258 = vpop.f32.mrb[0].mxu0
    %3259 = vmatprep.mubr.f32.mxu0 %v2722
    %3260 = vmatmul.mubr.f32.gmra.mrb[0].mxu0 %v2721
    %v3261 = vpop.f32.mrb[0].mxu0
    %v3262 = vadd.f32 %v3072, %v3261
    %v3263 = vpop.f32.mrb[0].mxu0
    %3264 = vmatprep.mubr.f32.mxu0 %v2740
    %3265 = vmatmul.mubr.f32.gmra.mrb[0].mxu0 %v2739
    %v3266 = vpop.f32.mrb[0].mxu0
    %v3267 = vadd.f32 %v3077, %v3266
    %v3268 = vpop.f32.mrb[0].mxu0
    %3269 = vmatprep.mubr.f32.mxu0 %v2758
    %3270 = vmatmul.mubr.f32.gmra.mrb[0].mxu0 %v2757
    %v3271 = vpop.f32.mrb[0].mxu0
    %v3272 = vadd.f32 %v3082, %v3271
    %v3273 = vpop.f32.mrb[0].mxu0
    %3274 = vmatprep.mubr.f32.mxu0 %v2776
    %3275 = vmatmul.mubr.f32.gmra.mrb[0].mxu0 %v2775
    %v3276 = vpop.f32.mrb[0].mxu0
    %v3277 = vadd.f32 %v3087, %v3276
    %v3278 = vpop.f32.mrb[0].mxu0
    %3279 = vmatprep.mubr.f32.mxu0 %v2794
    %3280 = vmatmul.mubr.f32.gmra.mrb[0].mxu0 %v2793
    %v3281 = vpop.f32.mrb[0].mxu0
    %v3282 = vadd.f32 %v3092, %v3281
    %v3283 = vpop.f32.mrb[0].mxu0
    %3284 = vmatprep.mubr.f32.mxu0 %v2812
    %3285 = vmatmul.mubr.f32.gmra.mrb[0].mxu0 %v2811
    %v3286 = vpop.f32.mrb[0].mxu0
    %v3287 = vadd.f32 %v3097, %v3286
    %v3288 = vpop.f32.mrb[0].mxu0
    %3289 = vmatprep.mubr.f32.mxu0 %v2830
    %3290 = vmatmul.mubr.f32.gmra.mrb[0].mxu0 %v2829
    %v3291 = vpop.f32.mrb[0].mxu0
    %v3292 = vadd.f32 %v3102, %v3291
    %v3293 = vpop.f32.mrb[0].mxu0
    %3294 = vmatprep.mubr.f32.mxu0 %v2848
    %3295 = vmatmul.mubr.f32.gmra.mrb[0].mxu0 %v2847
    %v3296 = vpop.f32.mrb[0].mxu0
    %v3297 = vadd.f32 %v3107, %v3296
    %v3298 = vpop.f32.mrb[0].mxu0
    %3299 = vmatprep.mubr.f32.mxu0 %v2866
    %3300 = vmatmul.mubr.f32.gmra.mrb[0].mxu0 %v2865
    %v3301 = vpop.f32.mrb[0].mxu0
    %v3302 = vadd.f32 %v3112, %v3301
    %v3303 = vpop.f32.mrb[0].mxu0
    %3304 = vmatprep.mubr.f32.mxu0 %v2884
    %3305 = vmatmul.mubr.f32.gmra.mrb[0].mxu0 %v2883
    %v3306 = vpop.f32.mrb[0].mxu0
    %v3307 = vadd.f32 %v3117, %v3306
    %v3308 = vpop.f32.mrb[0].mxu0
    %3309 = vmatprep.mubr.f32.mxu0 %v2902
    %3310 = vmatmul.mubr.f32.gmra.mrb[0].mxu0 %v2901
    %v3311 = vpop.f32.mrb[0].mxu0
    %v3312 = vadd.f32 %v3122, %v3311
    %v3313 = vpop.f32.mrb[0].mxu0
    %3314 = vmatprep.mubr.f32.mxu0 %v2920
    %3315 = vmatmul.mubr.f32.gmra.mrb[0].mxu0 %v2919
    %v3316 = vpop.f32.mrb[0].mxu0
    %v3317 = vadd.f32 %v3127, %v3316
    %v3318 = vpop.f32.mrb[0].mxu0
    %3319 = vdwg.mxu0
    %3320 = vmatprep.subr.mxu0 0.0
    %3321 = vmatpush1.msra.mxu0 %v722
    %3322 = vmatprep.subr.mxu0 0.0
    %3323 = vmatpush1.msra.mxu0 %v727
    %3324 = vmatprep.subr.mxu0 0.0
    %3325 = vmatpush1.msra.mxu0 %v732
    %3326 = vmatprep.subr.mxu0 0.0
    %3327 = vmatpush1.msra.mxu0 %v737
    %3328 = vmatprep.subr.mxu0 0.0
    %3329 = vmatpush1.msra.mxu0 %v742
    %3330 = vmatprep.subr.mxu0 0.0
    %3331 = vmatpush1.msra.mxu0 %v747
    %3332 = vmatprep.subr.mxu0 0.0
    %3333 = vmatpush1.msra.mxu0 %v752
    %3334 = vmatprep.subr.mxu0 0.0
    %3335 = vmatpush1.msra.mxu0 %v757
    %3336 = vmatprep.subr.mxu0 0.0
    %3337 = vmatpush1.msra.mxu0 %v762
    %3338 = vmatprep.subr.mxu0 0.0
    %3339 = vmatpush1.msra.mxu0 %v767
    %3340 = vmatprep.subr.mxu0 0.0
    %3341 = vmatpush1.msra.mxu0 %v772
    %3342 = vmatprep.subr.mxu0 0.0
    %3343 = vmatpush1.msra.mxu0 %v777
    %3344 = vmatprep.subr.mxu0 0.0
    %3345 = vmatpush1.msra.mxu0 %v782
    %3346 = vmatprep.subr.mxu0 0.0
    %3347 = vmatpush1.msra.mxu0 %v787
    %3348 = vmatprep.subr.mxu0 0.0
    %3349 = vmatpush1.msra.mxu0 %v792
    %3350 = vmatprep.subr.mxu0 0.0
    %3351 = vmatpush1.msra.mxu0 %v797
    %3352 = vmatprep.subr.mxu0 0.0
    %3353 = vmatpush1.msra.mxu0 %v802
    %3354 = vmatprep.subr.mxu0 0.0
    %3355 = vmatpush1.msra.mxu0 %v807
    %3356 = vmatprep.subr.mxu0 0.0
    %3357 = vmatpush1.msra.mxu0 %v812
    %3358 = vmatprep.subr.mxu0 0.0
    %3359 = vmatpush1.msra.mxu0 %v817
    %3360 = vmatprep.subr.mxu0 0.0
    %3361 = vmatpush1.msra.mxu0 %v822
    %3362 = vmatprep.subr.mxu0 0.0
    %3363 = vmatpush1.msra.mxu0 %v827
    %3364 = vmatprep.subr.mxu0 0.0
    %3365 = vmatpush1.msra.mxu0 %v832
    %3366 = vmatprep.subr.mxu0 0.0
    %3367 = vmatpush1.msra.mxu0 %v837
    %3368 = vmatprep.subr.mxu0 0.0
    %3369 = vmatpush1.msra.mxu0 %v842
    %3370 = vmatprep.subr.mxu0 0.0
    %3371 = vmatpush1.msra.mxu0 %v847
    %3372 = vmatprep.subr.mxu0 0.0
    %3373 = vmatpush1.msra.mxu0 %v852
    %3374 = vmatprep.subr.mxu0 0.0
    %3375 = vmatpush1.msra.mxu0 %v857
    %3376 = vmatprep.subr.mxu0 0.0
    %3377 = vmatpush1.msra.mxu0 %v862
    %3378 = vmatprep.subr.mxu0 0.0
    %3379 = vmatpush1.msra.mxu0 %v867
    %3380 = vmatprep.subr.mxu0 0.0
    %3381 = vmatpush1.msra.mxu0 %v872
    %3382 = vmatprep.subr.mxu0 0.0
    %3383 = vmatpush1.msra.mxu0 %v877
    %3384 = vmatprep.mubr.f32.mxu0 %v2490
    %3385 = vmatmul.mubr.f32.gmra.mrb[0].mxu0 %v2489
    %v3386 = vpop.f32.mrb[0].mxu0
    %v3387 = vadd.f32 %v3197, %v3386
    %v3388 = vpop.f32.mrb[0].mxu0
    %3389 = vmatprep.mubr.f32.mxu0 %v2508
    %3390 = vmatmul.mubr.f32.gmra.mrb[0].mxu0 %v2507
    %v3391 = vpop.f32.mrb[0].mxu0
    %v3392 = vadd.f32 %v3202, %v3391
    %v3393 = vpop.f32.mrb[0].mxu0
    %3394 = vmatprep.mubr.f32.mxu0 %v2526
    %3395 = vmatmul.mubr.f32.gmra.mrb[0].mxu0 %v2525
    %v3396 = vpop.f32.mrb[0].mxu0
    %v3397 = vadd.f32 %v3207, %v3396
    %v3398 = vpop.f32.mrb[0].mxu0
    %3399 = vmatprep.mubr.f32.mxu0 %v2544
    %3400 = vmatmul.mubr.f32.gmra.mrb[0].mxu0 %v2543
    %v3401 = vpop.f32.mrb[0].mxu0
    %v3402 = vadd.f32 %v3212, %v3401
    %v3403 = vpop.f32.mrb[0].mxu0
    %3404 = vmatprep.mubr.f32.mxu0 %v2562
    %3405 = vmatmul.mubr.f32.gmra.mrb[0].mxu0 %v2561
    %v3406 = vpop.f32.mrb[0].mxu0
    %v3407 = vadd.f32 %v3217, %v3406
    %v3408 = vpop.f32.mrb[0].mxu0
    %3409 = vmatprep.mubr.f32.mxu0 %v2580
    %3410 = vmatmul.mubr.f32.gmra.mrb[0].mxu0 %v2579
    %v3411 = vpop.f32.mrb[0].mxu0
    %v3412 = vadd.f32 %v3222, %v3411
    %v3413 = vpop.f32.mrb[0].mxu0
    %3414 = vmatprep.mubr.f32.mxu0 %v2598
    %3415 = vmatmul.mubr.f32.gmra.mrb[0].mxu0 %v2597
    %v3416 = vpop.f32.mrb[0].mxu0
    %v3417 = vadd.f32 %v3227, %v3416
    %v3418 = vpop.f32.mrb[0].mxu0
    %3419 = vmatprep.mubr.f32.mxu0 %v2616
    %3420 = vmatmul.mubr.f32.gmra.mrb[0].mxu0 %v2615
    %v3421 = vpop.f32.mrb[0].mxu0
    %v3422 = vadd.f32 %v3232, %v3421
    %v3423 = vpop.f32.mrb[0].mxu0
    %3424 = vmatprep.mubr.f32.mxu0 %v2634
    %3425 = vmatmul.mubr.f32.gmra.mrb[0].mxu0 %v2633
    %v3426 = vpop.f32.mrb[0].mxu0
    %v3427 = vadd.f32 %v3237, %v3426
    %v3428 = vpop.f32.mrb[0].mxu0
    %3429 = vmatprep.mubr.f32.mxu0 %v2652
    %3430 = vmatmul.mubr.f32.gmra.mrb[0].mxu0 %v2651
    %v3431 = vpop.f32.mrb[0].mxu0
    %v3432 = vadd.f32 %v3242, %v3431
    %v3433 = vpop.f32.mrb[0].mxu0
    %3434 = vmatprep.mubr.f32.mxu0 %v2670
    %3435 = vmatmul.mubr.f32.gmra.mrb[0].mxu0 %v2669
    %v3436 = vpop.f32.mrb[0].mxu0
    %v3437 = vadd.f32 %v3247, %v3436
    %v3438 = vpop.f32.mrb[0].mxu0
    %3439 = vmatprep.mubr.f32.mxu0 %v2688
    %3440 = vmatmul.mubr.f32.gmra.mrb[0].mxu0 %v2687
    %v3441 = vpop.f32.mrb[0].mxu0
    %v3442 = vadd.f32 %v3252, %v3441
    %v3443 = vpop.f32.mrb[0].mxu0
    %3444 = vmatprep.mubr.f32.mxu0 %v2706
    %3445 = vmatmul.mubr.f32.gmra.mrb[0].mxu0 %v2705
    %v3446 = vpop.f32.mrb[0].mxu0
    %v3447 = vadd.f32 %v3257, %v3446
    %v3448 = vpop.f32.mrb[0].mxu0
    %3449 = vmatprep.mubr.f32.mxu0 %v2724
    %3450 = vmatmul.mubr.f32.gmra.mrb[0].mxu0 %v2723
    %v3451 = vpop.f32.mrb[0].mxu0
    %v3452 = vadd.f32 %v3262, %v3451
    %v3453 = vpop.f32.mrb[0].mxu0
    %3454 = vmatprep.mubr.f32.mxu0 %v2742
    %3455 = vmatmul.mubr.f32.gmra.mrb[0].mxu0 %v2741
    %v3456 = vpop.f32.mrb[0].mxu0
    %v3457 = vadd.f32 %v3267, %v3456
    %v3458 = vpop.f32.mrb[0].mxu0
    %3459 = vmatprep.mubr.f32.mxu0 %v2760
    %3460 = vmatmul.mubr.f32.gmra.mrb[0].mxu0 %v2759
    %v3461 = vpop.f32.mrb[0].mxu0
    %v3462 = vadd.f32 %v3272, %v3461
    %v3463 = vpop.f32.mrb[0].mxu0
    %3464 = vmatprep.mubr.f32.mxu0 %v2778
    %3465 = vmatmul.mubr.f32.gmra.mrb[0].mxu0 %v2777
    %v3466 = vpop.f32.mrb[0].mxu0
    %v3467 = vadd.f32 %v3277, %v3466
    %v3468 = vpop.f32.mrb[0].mxu0
    %3469 = vmatprep.mubr.f32.mxu0 %v2796
    %3470 = vmatmul.mubr.f32.gmra.mrb[0].mxu0 %v2795
    %v3471 = vpop.f32.mrb[0].mxu0
    %v3472 = vadd.f32 %v3282, %v3471
    %v3473 = vpop.f32.mrb[0].mxu0
    %3474 = vmatprep.mubr.f32.mxu0 %v2814
    %3475 = vmatmul.mubr.f32.gmra.mrb[0].mxu0 %v2813
    %v3476 = vpop.f32.mrb[0].mxu0
    %v3477 = vadd.f32 %v3287, %v3476
    %v3478 = vpop.f32.mrb[0].mxu0
    %3479 = vmatprep.mubr.f32.mxu0 %v2832
    %3480 = vmatmul.mubr.f32.gmra.mrb[0].mxu0 %v2831
    %v3481 = vpop.f32.mrb[0].mxu0
    %v3482 = vadd.f32 %v3292, %v3481
    %v3483 = vpop.f32.mrb[0].mxu0
    %3484 = vmatprep.mubr.f32.mxu0 %v2850
    %3485 = vmatmul.mubr.f32.gmra.mrb[0].mxu0 %v2849
    %v3486 = vpop.f32.mrb[0].mxu0
    %v3487 = vadd.f32 %v3297, %v3486
    %v3488 = vpop.f32.mrb[0].mxu0
    %3489 = vmatprep.mubr.f32.mxu0 %v2868
    %3490 = vmatmul.mubr.f32.gmra.mrb[0].mxu0 %v2867
    %v3491 = vpop.f32.mrb[0].mxu0
    %v3492 = vadd.f32 %v3302, %v3491
    %v3493 = vpop.f32.mrb[0].mxu0
    %3494 = vmatprep.mubr.f32.mxu0 %v2886
    %3495 = vmatmul.mubr.f32.gmra.mrb[0].mxu0 %v2885
    %v3496 = vpop.f32.mrb[0].mxu0
    %v3497 = vadd.f32 %v3307, %v3496
    %v3498 = vpop.f32.mrb[0].mxu0
    %3499 = vmatprep.mubr.f32.mxu0 %v2904
    %3500 = vmatmul.mubr.f32.gmra.mrb[0].mxu0 %v2903
    %v3501 = vpop.f32.mrb[0].mxu0
    %v3502 = vadd.f32 %v3312, %v3501
    %v3503 = vpop.f32.mrb[0].mxu0
    %3504 = vmatprep.mubr.f32.mxu0 %v2922
    %3505 = vmatmul.mubr.f32.gmra.mrb[0].mxu0 %v2921
    %v3506 = vpop.f32.mrb[0].mxu0
    %v3507 = vadd.f32 %v3317, %v3506
    %v3508 = vpop.f32.mrb[0].mxu0
    %3509 = vdwg.mxu0
    %3510 = vmatprep.subr.mxu0 0.0
    %3511 = vmatpush1.msra.mxu0 %v952
    %3512 = vmatprep.subr.mxu0 0.0
    %3513 = vmatpush1.msra.mxu0 %v957
    %3514 = vmatprep.subr.mxu0 0.0
    %3515 = vmatpush1.msra.mxu0 %v962
    %3516 = vmatprep.subr.mxu0 0.0
    %3517 = vmatpush1.msra.mxu0 %v967
    %3518 = vmatprep.subr.mxu0 0.0
    %3519 = vmatpush1.msra.mxu0 %v972
    %3520 = vmatprep.subr.mxu0 0.0
    %3521 = vmatpush1.msra.mxu0 %v977
    %3522 = vmatprep.subr.mxu0 0.0
    %3523 = vmatpush1.msra.mxu0 %v982
    %3524 = vmatprep.subr.mxu0 0.0
    %3525 = vmatpush1.msra.mxu0 %v987
    %3526 = vmatprep.subr.mxu0 0.0
    %3527 = vmatpush1.msra.mxu0 %v992
    %3528 = vmatprep.subr.mxu0 0.0
    %3529 = vmatpush1.msra.mxu0 %v997
    %3530 = vmatprep.subr.mxu0 0.0
    %3531 = vmatpush1.msra.mxu0 %v1002
    %3532 = vmatprep.subr.mxu0 0.0
    %3533 = vmatpush1.msra.mxu0 %v1007
    %3534 = vmatprep.subr.mxu0 0.0
    %3535 = vmatpush1.msra.mxu0 %v1012
    %3536 = vmatprep.subr.mxu0 0.0
    %3537 = vmatpush1.msra.mxu0 %v1017
    %3538 = vmatprep.subr.mxu0 0.0
    %3539 = vmatpush1.msra.mxu0 %v1022
    %3540 = vmatprep.subr.mxu0 0.0
    %3541 = vmatpush1.msra.mxu0 %v1027
    %3542 = vmatprep.subr.mxu0 0.0
    %3543 = vmatpush1.msra.mxu0 %v1032
    %3544 = vmatprep.subr.mxu0 0.0
    %3545 = vmatpush1.msra.mxu0 %v1037
    %3546 = vmatprep.subr.mxu0 0.0
    %3547 = vmatpush1.msra.mxu0 %v1042
    %3548 = vmatprep.subr.mxu0 0.0
    %3549 = vmatpush1.msra.mxu0 %v1047
    %3550 = vmatprep.subr.mxu0 0.0
    %3551 = vmatpush1.msra.mxu0 %v1052
    %3552 = vmatprep.subr.mxu0 0.0
    %3553 = vmatpush1.msra.mxu0 %v1057
    %3554 = vmatprep.subr.mxu0 0.0
    %3555 = vmatpush1.msra.mxu0 %v1062
    %3556 = vmatprep.subr.mxu0 0.0
    %3557 = vmatpush1.msra.mxu0 %v1067
    %3558 = vmatprep.subr.mxu0 0.0
    %3559 = vmatpush1.msra.mxu0 %v1072
    %3560 = vmatprep.subr.mxu0 0.0
    %3561 = vmatpush1.msra.mxu0 %v1077
    %3562 = vmatprep.subr.mxu0 0.0
    %3563 = vmatpush1.msra.mxu0 %v1082
    %3564 = vmatprep.subr.mxu0 0.0
    %3565 = vmatpush1.msra.mxu0 %v1087
    %3566 = vmatprep.subr.mxu0 0.0
    %3567 = vmatpush1.msra.mxu0 %v1092
    %3568 = vmatprep.subr.mxu0 0.0
    %3569 = vmatpush1.msra.mxu0 %v1097
    %3570 = vmatprep.subr.mxu0 0.0
    %3571 = vmatpush1.msra.mxu0 %v1102
    %3572 = vmatprep.subr.mxu0 0.0
    %3573 = vmatpush1.msra.mxu0 %v1107
    %3574 = vmatprep.mubr.f32.mxu0 %v2492
    %3575 = vmatmul.mubr.f32.gmra.mrb[0].mxu0 %v2491
    %v3576 = vpop.f32.mrb[0].mxu0
    %v3577 = vadd.f32 %v3387, %v3576
    %v3578 = vpop.f32.mrb[0].mxu0
    %3579 = vmatprep.mubr.f32.mxu0 %v2510
    %3580 = vmatmul.mubr.f32.gmra.mrb[0].mxu0 %v2509
    %v3581 = vpop.f32.mrb[0].mxu0
    %v3582 = vadd.f32 %v3392, %v3581
    %v3583 = vpop.f32.mrb[0].mxu0
    %3584 = vmatprep.mubr.f32.mxu0 %v2528
    %3585 = vmatmul.mubr.f32.gmra.mrb[0].mxu0 %v2527
    %v3586 = vpop.f32.mrb[0].mxu0
    %v3587 = vadd.f32 %v3397, %v3586
    %v3588 = vpop.f32.mrb[0].mxu0
    %3589 = vmatprep.mubr.f32.mxu0 %v2546
    %3590 = vmatmul.mubr.f32.gmra.mrb[0].mxu0 %v2545
    %v3591 = vpop.f32.mrb[0].mxu0
    %v3592 = vadd.f32 %v3402, %v3591
    %v3593 = vpop.f32.mrb[0].mxu0
    %3594 = vmatprep.mubr.f32.mxu0 %v2564
    %3595 = vmatmul.mubr.f32.gmra.mrb[0].mxu0 %v2563
    %v3596 = vpop.f32.mrb[0].mxu0
    %v3597 = vadd.f32 %v3407, %v3596
    %v3598 = vpop.f32.mrb[0].mxu0
    %3599 = vmatprep.mubr.f32.mxu0 %v2582
    %3600 = vmatmul.mubr.f32.gmra.mrb[0].mxu0 %v2581
    %v3601 = vpop.f32.mrb[0].mxu0
    %v3602 = vadd.f32 %v3412, %v3601
    %v3603 = vpop.f32.mrb[0].mxu0
    %3604 = vmatprep.mubr.f32.mxu0 %v2600
    %3605 = vmatmul.mubr.f32.gmra.mrb[0].mxu0 %v2599
    %v3606 = vpop.f32.mrb[0].mxu0
    %v3607 = vadd.f32 %v3417, %v3606
    %v3608 = vpop.f32.mrb[0].mxu0
    %3609 = vmatprep.mubr.f32.mxu0 %v2618
    %3610 = vmatmul.mubr.f32.gmra.mrb[0].mxu0 %v2617
    %v3611 = vpop.f32.mrb[0].mxu0
    %v3612 = vadd.f32 %v3422, %v3611
    %v3613 = vpop.f32.mrb[0].mxu0
    %3614 = vmatprep.mubr.f32.mxu0 %v2636
    %3615 = vmatmul.mubr.f32.gmra.mrb[0].mxu0 %v2635
    %v3616 = vpop.f32.mrb[0].mxu0
    %v3617 = vadd.f32 %v3427, %v3616
    %v3618 = vpop.f32.mrb[0].mxu0
    %3619 = vmatprep.mubr.f32.mxu0 %v2654
    %3620 = vmatmul.mubr.f32.gmra.mrb[0].mxu0 %v2653
    %v3621 = vpop.f32.mrb[0].mxu0
    %v3622 = vadd.f32 %v3432, %v3621
    %v3623 = vpop.f32.mrb[0].mxu0
    %3624 = vmatprep.mubr.f32.mxu0 %v2672
    %3625 = vmatmul.mubr.f32.gmra.mrb[0].mxu0 %v2671
    %v3626 = vpop.f32.mrb[0].mxu0
    %v3627 = vadd.f32 %v3437, %v3626
    %v3628 = vpop.f32.mrb[0].mxu0
    %3629 = vmatprep.mubr.f32.mxu0 %v2690
    %3630 = vmatmul.mubr.f32.gmra.mrb[0].mxu0 %v2689
    %v3631 = vpop.f32.mrb[0].mxu0
    %v3632 = vadd.f32 %v3442, %v3631
    %v3633 = vpop.f32.mrb[0].mxu0
    %3634 = vmatprep.mubr.f32.mxu0 %v2708
    %3635 = vmatmul.mubr.f32.gmra.mrb[0].mxu0 %v2707
    %v3636 = vpop.f32.mrb[0].mxu0
    %v3637 = vadd.f32 %v3447, %v3636
    %v3638 = vpop.f32.mrb[0].mxu0
    %3639 = vmatprep.mubr.f32.mxu0 %v2726
    %3640 = vmatmul.mubr.f32.gmra.mrb[0].mxu0 %v2725
    %v3641 = vpop.f32.mrb[0].mxu0
    %v3642 = vadd.f32 %v3452, %v3641
    %v3643 = vpop.f32.mrb[0].mxu0
    %3644 = vmatprep.mubr.f32.mxu0 %v2744
    %3645 = vmatmul.mubr.f32.gmra.mrb[0].mxu0 %v2743
    %v3646 = vpop.f32.mrb[0].mxu0
    %v3647 = vadd.f32 %v3457, %v3646
    %v3648 = vpop.f32.mrb[0].mxu0
    %3649 = vmatprep.mubr.f32.mxu0 %v2762
    %3650 = vmatmul.mubr.f32.gmra.mrb[0].mxu0 %v2761
    %v3651 = vpop.f32.mrb[0].mxu0
    %v3652 = vadd.f32 %v3462, %v3651
    %v3653 = vpop.f32.mrb[0].mxu0
    %3654 = vmatprep.mubr.f32.mxu0 %v2780
    %3655 = vmatmul.mubr.f32.gmra.mrb[0].mxu0 %v2779
    %v3656 = vpop.f32.mrb[0].mxu0
    %v3657 = vadd.f32 %v3467, %v3656
    %v3658 = vpop.f32.mrb[0].mxu0
    %3659 = vmatprep.mubr.f32.mxu0 %v2798
    %3660 = vmatmul.mubr.f32.gmra.mrb[0].mxu0 %v2797
    %v3661 = vpop.f32.mrb[0].mxu0
    %v3662 = vadd.f32 %v3472, %v3661
    %v3663 = vpop.f32.mrb[0].mxu0
    %3664 = vmatprep.mubr.f32.mxu0 %v2816
    %3665 = vmatmul.mubr.f32.gmra.mrb[0].mxu0 %v2815
    %v3666 = vpop.f32.mrb[0].mxu0
    %v3667 = vadd.f32 %v3477, %v3666
    %v3668 = vpop.f32.mrb[0].mxu0
    %3669 = vmatprep.mubr.f32.mxu0 %v2834
    %3670 = vmatmul.mubr.f32.gmra.mrb[0].mxu0 %v2833
    %v3671 = vpop.f32.mrb[0].mxu0
    %v3672 = vadd.f32 %v3482, %v3671
    %v3673 = vpop.f32.mrb[0].mxu0
    %3674 = vmatprep.mubr.f32.mxu0 %v2852
    %3675 = vmatmul.mubr.f32.gmra.mrb[0].mxu0 %v2851
    %v3676 = vpop.f32.mrb[0].mxu0
    %v3677 = vadd.f32 %v3487, %v3676
    %v3678 = vpop.f32.mrb[0].mxu0
    %3679 = vmatprep.mubr.f32.mxu0 %v2870
    %3680 = vmatmul.mubr.f32.gmra.mrb[0].mxu0 %v2869
    %v3681 = vpop.f32.mrb[0].mxu0
    %v3682 = vadd.f32 %v3492, %v3681
    %v3683 = vpop.f32.mrb[0].mxu0
    %3684 = vmatprep.mubr.f32.mxu0 %v2888
    %3685 = vmatmul.mubr.f32.gmra.mrb[0].mxu0 %v2887
    %v3686 = vpop.f32.mrb[0].mxu0
    %v3687 = vadd.f32 %v3497, %v3686
    %v3688 = vpop.f32.mrb[0].mxu0
    %3689 = vmatprep.mubr.f32.mxu0 %v2906
    %3690 = vmatmul.mubr.f32.gmra.mrb[0].mxu0 %v2905
    %v3691 = vpop.f32.mrb[0].mxu0
    %v3692 = vadd.f32 %v3502, %v3691
    %v3693 = vpop.f32.mrb[0].mxu0
    %3694 = vmatprep.mubr.f32.mxu0 %v2924
    %3695 = vmatmul.mubr.f32.gmra.mrb[0].mxu0 %v2923
    %v3696 = vpop.f32.mrb[0].mxu0
    %v3697 = vadd.f32 %v3507, %v3696
    %v3698 = vpop.f32.mrb[0].mxu0
    %3699 = vdwg.mxu0
    %3700 = vmatprep.subr.mxu0 0.0
    %3701 = vmatpush1.msra.mxu0 %v1182
    %3702 = vmatprep.subr.mxu0 0.0
    %3703 = vmatpush1.msra.mxu0 %v1187
    %3704 = vmatprep.subr.mxu0 0.0
    %3705 = vmatpush1.msra.mxu0 %v1192
    %3706 = vmatprep.subr.mxu0 0.0
    %3707 = vmatpush1.msra.mxu0 %v1197
    %3708 = vmatprep.subr.mxu0 0.0
    %3709 = vmatpush1.msra.mxu0 %v1202
    %3710 = vmatprep.subr.mxu0 0.0
    %3711 = vmatpush1.msra.mxu0 %v1207
    %3712 = vmatprep.subr.mxu0 0.0
    %3713 = vmatpush1.msra.mxu0 %v1212
    %3714 = vmatprep.subr.mxu0 0.0
    %3715 = vmatpush1.msra.mxu0 %v1217
    %3716 = vmatprep.subr.mxu0 0.0
    %3717 = vmatpush1.msra.mxu0 %v1222
    %3718 = vmatprep.subr.mxu0 0.0
    %3719 = vmatpush1.msra.mxu0 %v1227
    %3720 = vmatprep.subr.mxu0 0.0
    %3721 = vmatpush1.msra.mxu0 %v1232
    %3722 = vmatprep.subr.mxu0 0.0
    %3723 = vmatpush1.msra.mxu0 %v1237
    %3724 = vmatprep.subr.mxu0 0.0
    %3725 = vmatpush1.msra.mxu0 %v1242
    %3726 = vmatprep.subr.mxu0 0.0
    %3727 = vmatpush1.msra.mxu0 %v1247
    %3728 = vmatprep.subr.mxu0 0.0
    %3729 = vmatpush1.msra.mxu0 %v1252
    %3730 = vmatprep.subr.mxu0 0.0
    %3731 = vmatpush1.msra.mxu0 %v1257
    %3732 = vmatprep.subr.mxu0 0.0
    %3733 = vmatpush1.msra.mxu0 %v1262
    %3734 = vmatprep.subr.mxu0 0.0
    %3735 = vmatpush1.msra.mxu0 %v1267
    %3736 = vmatprep.subr.mxu0 0.0
    %3737 = vmatpush1.msra.mxu0 %v1272
    %3738 = vmatprep.subr.mxu0 0.0
    %3739 = vmatpush1.msra.mxu0 %v1277
    %3740 = vmatprep.subr.mxu0 0.0
    %3741 = vmatpush1.msra.mxu0 %v1282
    %3742 = vmatprep.subr.mxu0 0.0
    %3743 = vmatpush1.msra.mxu0 %v1287
    %3744 = vmatprep.subr.mxu0 0.0
    %3745 = vmatpush1.msra.mxu0 %v1292
    %3746 = vmatprep.subr.mxu0 0.0
    %3747 = vmatpush1.msra.mxu0 %v1297
    %3748 = vmatprep.subr.mxu0 0.0
    %3749 = vmatpush1.msra.mxu0 %v1302
    %3750 = vmatprep.subr.mxu0 0.0
    %3751 = vmatpush1.msra.mxu0 %v1307
    %3752 = vmatprep.subr.mxu0 0.0
    %3753 = vmatpush1.msra.mxu0 %v1312
    %3754 = vmatprep.subr.mxu0 0.0
    %3755 = vmatpush1.msra.mxu0 %v1317
    %3756 = vmatprep.subr.mxu0 0.0
    %3757 = vmatpush1.msra.mxu0 %v1322
    %3758 = vmatprep.subr.mxu0 0.0
    %3759 = vmatpush1.msra.mxu0 %v1327
    %3760 = vmatprep.subr.mxu0 0.0
    %3761 = vmatpush1.msra.mxu0 %v1332
    %3762 = vmatprep.subr.mxu0 0.0
    %3763 = vmatpush1.msra.mxu0 %v1337
    %3764 = vmatprep.mubr.f32.mxu0 %v2494
    %3765 = vmatmul.mubr.f32.gmra.mrb[0].mxu0 %v2493
    %v3766 = vpop.f32.mrb[0].mxu0
    %v3767 = vadd.f32 %v3577, %v3766
    %v3768 = vpop.f32.mrb[0].mxu0
    %3769 = vmatprep.mubr.f32.mxu0 %v2512
    %3770 = vmatmul.mubr.f32.gmra.mrb[0].mxu0 %v2511
    %v3771 = vpop.f32.mrb[0].mxu0
    %v3772 = vadd.f32 %v3582, %v3771
    %v3773 = vpop.f32.mrb[0].mxu0
    %3774 = vmatprep.mubr.f32.mxu0 %v2530
    %3775 = vmatmul.mubr.f32.gmra.mrb[0].mxu0 %v2529
    %v3776 = vpop.f32.mrb[0].mxu0
    %v3777 = vadd.f32 %v3587, %v3776
    %v3778 = vpop.f32.mrb[0].mxu0
    %3779 = vmatprep.mubr.f32.mxu0 %v2548
    %3780 = vmatmul.mubr.f32.gmra.mrb[0].mxu0 %v2547
    %v3781 = vpop.f32.mrb[0].mxu0
    %v3782 = vadd.f32 %v3592, %v3781
    %v3783 = vpop.f32.mrb[0].mxu0
    %3784 = vmatprep.mubr.f32.mxu0 %v2566
    %3785 = vmatmul.mubr.f32.gmra.mrb[0].mxu0 %v2565
    %v3786 = vpop.f32.mrb[0].mxu0
    %v3787 = vadd.f32 %v3597, %v3786
    %v3788 = vpop.f32.mrb[0].mxu0
    %3789 = vmatprep.mubr.f32.mxu0 %v2584
    %3790 = vmatmul.mubr.f32.gmra.mrb[0].mxu0 %v2583
    %v3791 = vpop.f32.mrb[0].mxu0
    %v3792 = vadd.f32 %v3602, %v3791
    %v3793 = vpop.f32.mrb[0].mxu0
    %3794 = vmatprep.mubr.f32.mxu0 %v2602
    %3795 = vmatmul.mubr.f32.gmra.mrb[0].mxu0 %v2601
    %v3796 = vpop.f32.mrb[0].mxu0
    %v3797 = vadd.f32 %v3607, %v3796
    %v3798 = vpop.f32.mrb[0].mxu0
    %3799 = vmatprep.mubr.f32.mxu0 %v2620
    %3800 = vmatmul.mubr.f32.gmra.mrb[0].mxu0 %v2619
    %v3801 = vpop.f32.mrb[0].mxu0
    %v3802 = vadd.f32 %v3612, %v3801
    %v3803 = vpop.f32.mrb[0].mxu0
    %3804 = vmatprep.mubr.f32.mxu0 %v2638
    %3805 = vmatmul.mubr.f32.gmra.mrb[0].mxu0 %v2637
    %v3806 = vpop.f32.mrb[0].mxu0
    %v3807 = vadd.f32 %v3617, %v3806
    %v3808 = vpop.f32.mrb[0].mxu0
    %3809 = vmatprep.mubr.f32.mxu0 %v2656
    %3810 = vmatmul.mubr.f32.gmra.mrb[0].mxu0 %v2655
    %v3811 = vpop.f32.mrb[0].mxu0
    %v3812 = vadd.f32 %v3622, %v3811
    %v3813 = vpop.f32.mrb[0].mxu0
    %3814 = vmatprep.mubr.f32.mxu0 %v2674
    %3815 = vmatmul.mubr.f32.gmra.mrb[0].mxu0 %v2673
    %v3816 = vpop.f32.mrb[0].mxu0
    %v3817 = vadd.f32 %v3627, %v3816
    %v3818 = vpop.f32.mrb[0].mxu0
    %3819 = vmatprep.mubr.f32.mxu0 %v2692
    %3820 = vmatmul.mubr.f32.gmra.mrb[0].mxu0 %v2691
    %v3821 = vpop.f32.mrb[0].mxu0
    %v3822 = vadd.f32 %v3632, %v3821
    %v3823 = vpop.f32.mrb[0].mxu0
    %3824 = vmatprep.mubr.f32.mxu0 %v2710
    %3825 = vmatmul.mubr.f32.gmra.mrb[0].mxu0 %v2709
    %v3826 = vpop.f32.mrb[0].mxu0
    %v3827 = vadd.f32 %v3637, %v3826
    %v3828 = vpop.f32.mrb[0].mxu0
    %3829 = vmatprep.mubr.f32.mxu0 %v2728
    %3830 = vmatmul.mubr.f32.gmra.mrb[0].mxu0 %v2727
    %v3831 = vpop.f32.mrb[0].mxu0
    %v3832 = vadd.f32 %v3642, %v3831
    %v3833 = vpop.f32.mrb[0].mxu0
    %3834 = vmatprep.mubr.f32.mxu0 %v2746
    %3835 = vmatmul.mubr.f32.gmra.mrb[0].mxu0 %v2745
    %v3836 = vpop.f32.mrb[0].mxu0
    %v3837 = vadd.f32 %v3647, %v3836
    %v3838 = vpop.f32.mrb[0].mxu0
    %3839 = vmatprep.mubr.f32.mxu0 %v2764
    %3840 = vmatmul.mubr.f32.gmra.mrb[0].mxu0 %v2763
    %v3841 = vpop.f32.mrb[0].mxu0
    %v3842 = vadd.f32 %v3652, %v3841
    %v3843 = vpop.f32.mrb[0].mxu0
    %3844 = vmatprep.mubr.f32.mxu0 %v2782
    %3845 = vmatmul.mubr.f32.gmra.mrb[0].mxu0 %v2781
    %v3846 = vpop.f32.mrb[0].mxu0
    %v3847 = vadd.f32 %v3657, %v3846
    %v3848 = vpop.f32.mrb[0].mxu0
    %3849 = vmatprep.mubr.f32.mxu0 %v2800
    %3850 = vmatmul.mubr.f32.gmra.mrb[0].mxu0 %v2799
    %v3851 = vpop.f32.mrb[0].mxu0
    %v3852 = vadd.f32 %v3662, %v3851
    %v3853 = vpop.f32.mrb[0].mxu0
    %3854 = vmatprep.mubr.f32.mxu0 %v2818
    %3855 = vmatmul.mubr.f32.gmra.mrb[0].mxu0 %v2817
    %v3856 = vpop.f32.mrb[0].mxu0
    %v3857 = vadd.f32 %v3667, %v3856
    %v3858 = vpop.f32.mrb[0].mxu0
    %3859 = vmatprep.mubr.f32.mxu0 %v2836
    %3860 = vmatmul.mubr.f32.gmra.mrb[0].mxu0 %v2835
    %v3861 = vpop.f32.mrb[0].mxu0
    %v3862 = vadd.f32 %v3672, %v3861
    %v3863 = vpop.f32.mrb[0].mxu0
    %3864 = vmatprep.mubr.f32.mxu0 %v2854
    %3865 = vmatmul.mubr.f32.gmra.mrb[0].mxu0 %v2853
    %v3866 = vpop.f32.mrb[0].mxu0
    %v3867 = vadd.f32 %v3677, %v3866
    %v3868 = vpop.f32.mrb[0].mxu0
    %3869 = vmatprep.mubr.f32.mxu0 %v2872
    %3870 = vmatmul.mubr.f32.gmra.mrb[0].mxu0 %v2871
    %v3871 = vpop.f32.mrb[0].mxu0
    %v3872 = vadd.f32 %v3682, %v3871
    %v3873 = vpop.f32.mrb[0].mxu0
    %3874 = vmatprep.mubr.f32.mxu0 %v2890
    %3875 = vmatmul.mubr.f32.gmra.mrb[0].mxu0 %v2889
    %v3876 = vpop.f32.mrb[0].mxu0
    %v3877 = vadd.f32 %v3687, %v3876
    %v3878 = vpop.f32.mrb[0].mxu0
    %3879 = vmatprep.mubr.f32.mxu0 %v2908
    %3880 = vmatmul.mubr.f32.gmra.mrb[0].mxu0 %v2907
    %v3881 = vpop.f32.mrb[0].mxu0
    %v3882 = vadd.f32 %v3692, %v3881
    %v3883 = vpop.f32.mrb[0].mxu0
    %3884 = vmatprep.mubr.f32.mxu0 %v2926
    %3885 = vmatmul.mubr.f32.gmra.mrb[0].mxu0 %v2925
    %v3886 = vpop.f32.mrb[0].mxu0
    %v3887 = vadd.f32 %v3697, %v3886
    %v3888 = vpop.f32.mrb[0].mxu0
    %3889 = vdwg.mxu0
    %3890 = vmatprep.subr.mxu0 0.0
    %3891 = vmatpush1.msra.mxu0 %v1412
    %3892 = vmatprep.subr.mxu0 0.0
    %3893 = vmatpush1.msra.mxu0 %v1417
    %3894 = vmatprep.subr.mxu0 0.0
    %3895 = vmatpush1.msra.mxu0 %v1422
    %3896 = vmatprep.subr.mxu0 0.0
    %3897 = vmatpush1.msra.mxu0 %v1427
    %3898 = vmatprep.subr.mxu0 0.0
    %3899 = vmatpush1.msra.mxu0 %v1432
    %3900 = vmatprep.subr.mxu0 0.0
    %3901 = vmatpush1.msra.mxu0 %v1437
    %3902 = vmatprep.subr.mxu0 0.0
    %3903 = vmatpush1.msra.mxu0 %v1442
    %3904 = vmatprep.subr.mxu0 0.0
    %3905 = vmatpush1.msra.mxu0 %v1447
    %3906 = vmatprep.subr.mxu0 0.0
    %3907 = vmatpush1.msra.mxu0 %v1452
    %3908 = vmatprep.subr.mxu0 0.0
    %3909 = vmatpush1.msra.mxu0 %v1457
    %3910 = vmatprep.subr.mxu0 0.0
    %3911 = vmatpush1.msra.mxu0 %v1462
    %3912 = vmatprep.subr.mxu0 0.0
    %3913 = vmatpush1.msra.mxu0 %v1467
    %3914 = vmatprep.subr.mxu0 0.0
    %3915 = vmatpush1.msra.mxu0 %v1472
    %3916 = vmatprep.subr.mxu0 0.0
    %3917 = vmatpush1.msra.mxu0 %v1477
    %3918 = vmatprep.subr.mxu0 0.0
    %3919 = vmatpush1.msra.mxu0 %v1482
    %3920 = vmatprep.subr.mxu0 0.0
    %3921 = vmatpush1.msra.mxu0 %v1487
    %3922 = vmatprep.subr.mxu0 0.0
    %3923 = vmatpush1.msra.mxu0 %v1492
    %3924 = vmatprep.subr.mxu0 0.0
    %3925 = vmatpush1.msra.mxu0 %v1497
    %3926 = vmatprep.subr.mxu0 0.0
    %3927 = vmatpush1.msra.mxu0 %v1502
    %3928 = vmatprep.subr.mxu0 0.0
    %3929 = vmatpush1.msra.mxu0 %v1507
    %3930 = vmatprep.subr.mxu0 0.0
    %3931 = vmatpush1.msra.mxu0 %v1512
    %3932 = vmatprep.subr.mxu0 0.0
    %3933 = vmatpush1.msra.mxu0 %v1517
    %3934 = vmatprep.subr.mxu0 0.0
    %3935 = vmatpush1.msra.mxu0 %v1522
    %3936 = vmatprep.subr.mxu0 0.0
    %3937 = vmatpush1.msra.mxu0 %v1527
    %3938 = vmatprep.subr.mxu0 0.0
    %3939 = vmatpush1.msra.mxu0 %v1532
    %3940 = vmatprep.subr.mxu0 0.0
    %3941 = vmatpush1.msra.mxu0 %v1537
    %3942 = vmatprep.subr.mxu0 0.0
    %3943 = vmatpush1.msra.mxu0 %v1542
    %3944 = vmatprep.subr.mxu0 0.0
    %3945 = vmatpush1.msra.mxu0 %v1547
    %3946 = vmatprep.subr.mxu0 0.0
    %3947 = vmatpush1.msra.mxu0 %v1552
    %3948 = vmatprep.subr.mxu0 0.0
    %3949 = vmatpush1.msra.mxu0 %v1557
    %3950 = vmatprep.subr.mxu0 0.0
    %3951 = vmatpush1.msra.mxu0 %v1562
    %3952 = vmatprep.subr.mxu0 0.0
    %3953 = vmatpush1.msra.mxu0 %v1567
    %3954 = vmatprep.mubr.f32.mxu0 %v2496
    %3955 = vmatmul.mubr.f32.gmra.mrb[0].mxu0 %v2495
    %v3956 = vpop.f32.mrb[0].mxu0
    %v3957 = vadd.f32 %v3767, %v3956
    %v3958 = vpop.f32.mrb[0].mxu0
    %3959 = vmatprep.mubr.f32.mxu0 %v2514
    %3960 = vmatmul.mubr.f32.gmra.mrb[0].mxu0 %v2513
    %v3961 = vpop.f32.mrb[0].mxu0
    %v3962 = vadd.f32 %v3772, %v3961
    %v3963 = vpop.f32.mrb[0].mxu0
    %3964 = vmatprep.mubr.f32.mxu0 %v2532
    %3965 = vmatmul.mubr.f32.gmra.mrb[0].mxu0 %v2531
    %v3966 = vpop.f32.mrb[0].mxu0
    %v3967 = vadd.f32 %v3777, %v3966
    %v3968 = vpop.f32.mrb[0].mxu0
    %3969 = vmatprep.mubr.f32.mxu0 %v2550
    %3970 = vmatmul.mubr.f32.gmra.mrb[0].mxu0 %v2549
    %v3971 = vpop.f32.mrb[0].mxu0
    %v3972 = vadd.f32 %v3782, %v3971
    %v3973 = vpop.f32.mrb[0].mxu0
    %3974 = vmatprep.mubr.f32.mxu0 %v2568
    %3975 = vmatmul.mubr.f32.gmra.mrb[0].mxu0 %v2567
    %v3976 = vpop.f32.mrb[0].mxu0
    %v3977 = vadd.f32 %v3787, %v3976
    %v3978 = vpop.f32.mrb[0].mxu0
    %3979 = vmatprep.mubr.f32.mxu0 %v2586
    %3980 = vmatmul.mubr.f32.gmra.mrb[0].mxu0 %v2585
    %v3981 = vpop.f32.mrb[0].mxu0
    %v3982 = vadd.f32 %v3792, %v3981
    %v3983 = vpop.f32.mrb[0].mxu0
    %3984 = vmatprep.mubr.f32.mxu0 %v2604
    %3985 = vmatmul.mubr.f32.gmra.mrb[0].mxu0 %v2603
    %v3986 = vpop.f32.mrb[0].mxu0
    %v3987 = vadd.f32 %v3797, %v3986
    %v3988 = vpop.f32.mrb[0].mxu0
    %3989 = vmatprep.mubr.f32.mxu0 %v2622
    %3990 = vmatmul.mubr.f32.gmra.mrb[0].mxu0 %v2621
    %v3991 = vpop.f32.mrb[0].mxu0
    %v3992 = vadd.f32 %v3802, %v3991
    %v3993 = vpop.f32.mrb[0].mxu0
    %3994 = vmatprep.mubr.f32.mxu0 %v2640
    %3995 = vmatmul.mubr.f32.gmra.mrb[0].mxu0 %v2639
    %v3996 = vpop.f32.mrb[0].mxu0
    %v3997 = vadd.f32 %v3807, %v3996
    %v3998 = vpop.f32.mrb[0].mxu0
    %3999 = vmatprep.mubr.f32.mxu0 %v2658
    %4000 = vmatmul.mubr.f32.gmra.mrb[0].mxu0 %v2657
    %v4001 = vpop.f32.mrb[0].mxu0
    %v4002 = vadd.f32 %v3812, %v4001
    %v4003 = vpop.f32.mrb[0].mxu0
    %4004 = vmatprep.mubr.f32.mxu0 %v2676
    %4005 = vmatmul.mubr.f32.gmra.mrb[0].mxu0 %v2675
    %v4006 = vpop.f32.mrb[0].mxu0
    %v4007 = vadd.f32 %v3817, %v4006
    %v4008 = vpop.f32.mrb[0].mxu0
    %4009 = vmatprep.mubr.f32.mxu0 %v2694
    %4010 = vmatmul.mubr.f32.gmra.mrb[0].mxu0 %v2693
    %v4011 = vpop.f32.mrb[0].mxu0
    %v4012 = vadd.f32 %v3822, %v4011
    %v4013 = vpop.f32.mrb[0].mxu0
    %4014 = vmatprep.mubr.f32.mxu0 %v2712
    %4015 = vmatmul.mubr.f32.gmra.mrb[0].mxu0 %v2711
    %v4016 = vpop.f32.mrb[0].mxu0
    %v4017 = vadd.f32 %v3827, %v4016
    %v4018 = vpop.f32.mrb[0].mxu0
    %4019 = vmatprep.mubr.f32.mxu0 %v2730
    %4020 = vmatmul.mubr.f32.gmra.mrb[0].mxu0 %v2729
    %v4021 = vpop.f32.mrb[0].mxu0
    %v4022 = vadd.f32 %v3832, %v4021
    %v4023 = vpop.f32.mrb[0].mxu0
    %4024 = vmatprep.mubr.f32.mxu0 %v2748
    %4025 = vmatmul.mubr.f32.gmra.mrb[0].mxu0 %v2747
    %v4026 = vpop.f32.mrb[0].mxu0
    %v4027 = vadd.f32 %v3837, %v4026
    %v4028 = vpop.f32.mrb[0].mxu0
    %4029 = vmatprep.mubr.f32.mxu0 %v2766
    %4030 = vmatmul.mubr.f32.gmra.mrb[0].mxu0 %v2765
    %v4031 = vpop.f32.mrb[0].mxu0
    %v4032 = vadd.f32 %v3842, %v4031
    %v4033 = vpop.f32.mrb[0].mxu0
    %4034 = vmatprep.mubr.f32.mxu0 %v2784
    %4035 = vmatmul.mubr.f32.gmra.mrb[0].mxu0 %v2783
    %v4036 = vpop.f32.mrb[0].mxu0
    %v4037 = vadd.f32 %v3847, %v4036
    %v4038 = vpop.f32.mrb[0].mxu0
    %4039 = vmatprep.mubr.f32.mxu0 %v2802
    %4040 = vmatmul.mubr.f32.gmra.mrb[0].mxu0 %v2801
    %v4041 = vpop.f32.mrb[0].mxu0
    %v4042 = vadd.f32 %v3852, %v4041
    %v4043 = vpop.f32.mrb[0].mxu0
    %4044 = vmatprep.mubr.f32.mxu0 %v2820
    %4045 = vmatmul.mubr.f32.gmra.mrb[0].mxu0 %v2819
    %v4046 = vpop.f32.mrb[0].mxu0
    %v4047 = vadd.f32 %v3857, %v4046
    %v4048 = vpop.f32.mrb[0].mxu0
    %4049 = vmatprep.mubr.f32.mxu0 %v2838
    %4050 = vmatmul.mubr.f32.gmra.mrb[0].mxu0 %v2837
    %v4051 = vpop.f32.mrb[0].mxu0
    %v4052 = vadd.f32 %v3862, %v4051
    %v4053 = vpop.f32.mrb[0].mxu0
    %4054 = vmatprep.mubr.f32.mxu0 %v2856
    %4055 = vmatmul.mubr.f32.gmra.mrb[0].mxu0 %v2855
    %v4056 = vpop.f32.mrb[0].mxu0
    %v4057 = vadd.f32 %v3867, %v4056
    %v4058 = vpop.f32.mrb[0].mxu0
    %4059 = vmatprep.mubr.f32.mxu0 %v2874
    %4060 = vmatmul.mubr.f32.gmra.mrb[0].mxu0 %v2873
    %v4061 = vpop.f32.mrb[0].mxu0
    %v4062 = vadd.f32 %v3872, %v4061
    %v4063 = vpop.f32.mrb[0].mxu0
    %4064 = vmatprep.mubr.f32.mxu0 %v2892
    %4065 = vmatmul.mubr.f32.gmra.mrb[0].mxu0 %v2891
    %v4066 = vpop.f32.mrb[0].mxu0
    %v4067 = vadd.f32 %v3877, %v4066
    %v4068 = vpop.f32.mrb[0].mxu0
    %4069 = vmatprep.mubr.f32.mxu0 %v2910
    %4070 = vmatmul.mubr.f32.gmra.mrb[0].mxu0 %v2909
    %v4071 = vpop.f32.mrb[0].mxu0
    %v4072 = vadd.f32 %v3882, %v4071
    %v4073 = vpop.f32.mrb[0].mxu0
    %4074 = vmatprep.mubr.f32.mxu0 %v2928
    %4075 = vmatmul.mubr.f32.gmra.mrb[0].mxu0 %v2927
    %v4076 = vpop.f32.mrb[0].mxu0
    %v4077 = vadd.f32 %v3887, %v4076
    %v4078 = vpop.f32.mrb[0].mxu0
    %4079 = vdwg.mxu0
    %4080 = vmatprep.subr.mxu0 0.0
    %4081 = vmatpush1.msra.mxu0 %v1642
    %4082 = vmatprep.subr.mxu0 0.0
    %4083 = vmatpush1.msra.mxu0 %v1647
    %4084 = vmatprep.subr.mxu0 0.0
    %4085 = vmatpush1.msra.mxu0 %v1652
    %4086 = vmatprep.subr.mxu0 0.0
    %4087 = vmatpush1.msra.mxu0 %v1657
    %4088 = vmatprep.subr.mxu0 0.0
    %4089 = vmatpush1.msra.mxu0 %v1662
    %4090 = vmatprep.subr.mxu0 0.0
    %4091 = vmatpush1.msra.mxu0 %v1667
    %4092 = vmatprep.subr.mxu0 0.0
    %4093 = vmatpush1.msra.mxu0 %v1672
    %4094 = vmatprep.subr.mxu0 0.0
    %4095 = vmatpush1.msra.mxu0 %v1677
    %4096 = vmatprep.subr.mxu0 0.0
    %4097 = vmatpush1.msra.mxu0 %v1682
    %4098 = vmatprep.subr.mxu0 0.0
    %4099 = vmatpush1.msra.mxu0 %v1687
    %4100 = vmatprep.subr.mxu0 0.0
    %4101 = vmatpush1.msra.mxu0 %v1692
    %4102 = vmatprep.subr.mxu0 0.0
    %4103 = vmatpush1.msra.mxu0 %v1697
    %4104 = vmatprep.subr.mxu0 0.0
    %4105 = vmatpush1.msra.mxu0 %v1702
    %4106 = vmatprep.subr.mxu0 0.0
    %4107 = vmatpush1.msra.mxu0 %v1707
    %4108 = vmatprep.subr.mxu0 0.0
    %4109 = vmatpush1.msra.mxu0 %v1712
    %4110 = vmatprep.subr.mxu0 0.0
    %4111 = vmatpush1.msra.mxu0 %v1717
    %4112 = vmatprep.subr.mxu0 0.0
    %4113 = vmatpush1.msra.mxu0 %v1722
    %4114 = vmatprep.subr.mxu0 0.0
    %4115 = vmatpush1.msra.mxu0 %v1727
    %4116 = vmatprep.subr.mxu0 0.0
    %4117 = vmatpush1.msra.mxu0 %v1732
    %4118 = vmatprep.subr.mxu0 0.0
    %4119 = vmatpush1.msra.mxu0 %v1737
    %4120 = vmatprep.subr.mxu0 0.0
    %4121 = vmatpush1.msra.mxu0 %v1742
    %4122 = vmatprep.subr.mxu0 0.0
    %4123 = vmatpush1.msra.mxu0 %v1747
    %4124 = vmatprep.subr.mxu0 0.0
    %4125 = vmatpush1.msra.mxu0 %v1752
    %4126 = vmatprep.subr.mxu0 0.0
    %4127 = vmatpush1.msra.mxu0 %v1757
    %4128 = vmatprep.subr.mxu0 0.0
    %4129 = vmatpush1.msra.mxu0 %v1762
    %4130 = vmatprep.subr.mxu0 0.0
    %4131 = vmatpush1.msra.mxu0 %v1767
    %4132 = vmatprep.subr.mxu0 0.0
    %4133 = vmatpush1.msra.mxu0 %v1772
    %4134 = vmatprep.subr.mxu0 0.0
    %4135 = vmatpush1.msra.mxu0 %v1777
    %4136 = vmatprep.subr.mxu0 0.0
    %4137 = vmatpush1.msra.mxu0 %v1782
    %4138 = vmatprep.subr.mxu0 0.0
    %4139 = vmatpush1.msra.mxu0 %v1787
    %4140 = vmatprep.subr.mxu0 0.0
    %4141 = vmatpush1.msra.mxu0 %v1792
    %4142 = vmatprep.subr.mxu0 0.0
    %4143 = vmatpush1.msra.mxu0 %v1797
    %4144 = vmatprep.mubr.f32.mxu0 %v2498
    %4145 = vmatmul.mubr.f32.gmra.mrb[0].mxu0 %v2497
    %v4146 = vpop.f32.mrb[0].mxu0
    %v4147 = vadd.f32 %v3957, %v4146
    %v4148 = vpop.f32.mrb[0].mxu0
    %4149 = vmatprep.mubr.f32.mxu0 %v2516
    %4150 = vmatmul.mubr.f32.gmra.mrb[0].mxu0 %v2515
    %v4151 = vpop.f32.mrb[0].mxu0
    %v4152 = vadd.f32 %v3962, %v4151
    %v4153 = vpop.f32.mrb[0].mxu0
    %4154 = vmatprep.mubr.f32.mxu0 %v2534
    %4155 = vmatmul.mubr.f32.gmra.mrb[0].mxu0 %v2533
    %v4156 = vpop.f32.mrb[0].mxu0
    %v4157 = vadd.f32 %v3967, %v4156
    %v4158 = vpop.f32.mrb[0].mxu0
    %4159 = vmatprep.mubr.f32.mxu0 %v2552
    %4160 = vmatmul.mubr.f32.gmra.mrb[0].mxu0 %v2551
    %v4161 = vpop.f32.mrb[0].mxu0
    %v4162 = vadd.f32 %v3972, %v4161
    %v4163 = vpop.f32.mrb[0].mxu0
    %4164 = vmatprep.mubr.f32.mxu0 %v2570
    %4165 = vmatmul.mubr.f32.gmra.mrb[0].mxu0 %v2569
    %v4166 = vpop.f32.mrb[0].mxu0
    %v4167 = vadd.f32 %v3977, %v4166
    %v4168 = vpop.f32.mrb[0].mxu0
    %4169 = vmatprep.mubr.f32.mxu0 %v2588
    %4170 = vmatmul.mubr.f32.gmra.mrb[0].mxu0 %v2587
    %v4171 = vpop.f32.mrb[0].mxu0
    %v4172 = vadd.f32 %v3982, %v4171
    %v4173 = vpop.f32.mrb[0].mxu0
    %4174 = vmatprep.mubr.f32.mxu0 %v2606
    %4175 = vmatmul.mubr.f32.gmra.mrb[0].mxu0 %v2605
    %v4176 = vpop.f32.mrb[0].mxu0
    %v4177 = vadd.f32 %v3987, %v4176
    %v4178 = vpop.f32.mrb[0].mxu0
    %4179 = vmatprep.mubr.f32.mxu0 %v2624
    %4180 = vmatmul.mubr.f32.gmra.mrb[0].mxu0 %v2623
    %v4181 = vpop.f32.mrb[0].mxu0
    %v4182 = vadd.f32 %v3992, %v4181
    %v4183 = vpop.f32.mrb[0].mxu0
    %4184 = vmatprep.mubr.f32.mxu0 %v2642
    %4185 = vmatmul.mubr.f32.gmra.mrb[0].mxu0 %v2641
    %v4186 = vpop.f32.mrb[0].mxu0
    %v4187 = vadd.f32 %v3997, %v4186
    %v4188 = vpop.f32.mrb[0].mxu0
    %4189 = vmatprep.mubr.f32.mxu0 %v2660
    %4190 = vmatmul.mubr.f32.gmra.mrb[0].mxu0 %v2659
    %v4191 = vpop.f32.mrb[0].mxu0
    %v4192 = vadd.f32 %v4002, %v4191
    %v4193 = vpop.f32.mrb[0].mxu0
    %4194 = vmatprep.mubr.f32.mxu0 %v2678
    %4195 = vmatmul.mubr.f32.gmra.mrb[0].mxu0 %v2677
    %v4196 = vpop.f32.mrb[0].mxu0
    %v4197 = vadd.f32 %v4007, %v4196
    %v4198 = vpop.f32.mrb[0].mxu0
    %4199 = vmatprep.mubr.f32.mxu0 %v2696
    %4200 = vmatmul.mubr.f32.gmra.mrb[0].mxu0 %v2695
    %v4201 = vpop.f32.mrb[0].mxu0
    %v4202 = vadd.f32 %v4012, %v4201
    %v4203 = vpop.f32.mrb[0].mxu0
    %4204 = vmatprep.mubr.f32.mxu0 %v2714
    %4205 = vmatmul.mubr.f32.gmra.mrb[0].mxu0 %v2713
    %v4206 = vpop.f32.mrb[0].mxu0
    %v4207 = vadd.f32 %v4017, %v4206
    %v4208 = vpop.f32.mrb[0].mxu0
    %4209 = vmatprep.mubr.f32.mxu0 %v2732
    %4210 = vmatmul.mubr.f32.gmra.mrb[0].mxu0 %v2731
    %v4211 = vpop.f32.mrb[0].mxu0
    %v4212 = vadd.f32 %v4022, %v4211
    %v4213 = vpop.f32.mrb[0].mxu0
    %4214 = vmatprep.mubr.f32.mxu0 %v2750
    %4215 = vmatmul.mubr.f32.gmra.mrb[0].mxu0 %v2749
    %v4216 = vpop.f32.mrb[0].mxu0
    %v4217 = vadd.f32 %v4027, %v4216
    %v4218 = vpop.f32.mrb[0].mxu0
    %4219 = vmatprep.mubr.f32.mxu0 %v2768
    %4220 = vmatmul.mubr.f32.gmra.mrb[0].mxu0 %v2767
    %v4221 = vpop.f32.mrb[0].mxu0
    %v4222 = vadd.f32 %v4032, %v4221
    %v4223 = vpop.f32.mrb[0].mxu0
    %4224 = vmatprep.mubr.f32.mxu0 %v2786
    %4225 = vmatmul.mubr.f32.gmra.mrb[0].mxu0 %v2785
    %v4226 = vpop.f32.mrb[0].mxu0
    %v4227 = vadd.f32 %v4037, %v4226
    %v4228 = vpop.f32.mrb[0].mxu0
    %4229 = vmatprep.mubr.f32.mxu0 %v2804
    %4230 = vmatmul.mubr.f32.gmra.mrb[0].mxu0 %v2803
    %v4231 = vpop.f32.mrb[0].mxu0
    %v4232 = vadd.f32 %v4042, %v4231
    %v4233 = vpop.f32.mrb[0].mxu0
    %4234 = vmatprep.mubr.f32.mxu0 %v2822
    %4235 = vmatmul.mubr.f32.gmra.mrb[0].mxu0 %v2821
    %v4236 = vpop.f32.mrb[0].mxu0
    %v4237 = vadd.f32 %v4047, %v4236
    %v4238 = vpop.f32.mrb[0].mxu0
    %4239 = vmatprep.mubr.f32.mxu0 %v2840
    %4240 = vmatmul.mubr.f32.gmra.mrb[0].mxu0 %v2839
    %v4241 = vpop.f32.mrb[0].mxu0
    %v4242 = vadd.f32 %v4052, %v4241
    %v4243 = vpop.f32.mrb[0].mxu0
    %4244 = vmatprep.mubr.f32.mxu0 %v2858
    %4245 = vmatmul.mubr.f32.gmra.mrb[0].mxu0 %v2857
    %v4246 = vpop.f32.mrb[0].mxu0
    %v4247 = vadd.f32 %v4057, %v4246
    %v4248 = vpop.f32.mrb[0].mxu0
    %4249 = vmatprep.mubr.f32.mxu0 %v2876
    %4250 = vmatmul.mubr.f32.gmra.mrb[0].mxu0 %v2875
    %v4251 = vpop.f32.mrb[0].mxu0
    %v4252 = vadd.f32 %v4062, %v4251
    %v4253 = vpop.f32.mrb[0].mxu0
    %4254 = vmatprep.mubr.f32.mxu0 %v2894
    %4255 = vmatmul.mubr.f32.gmra.mrb[0].mxu0 %v2893
    %v4256 = vpop.f32.mrb[0].mxu0
    %v4257 = vadd.f32 %v4067, %v4256
    %v4258 = vpop.f32.mrb[0].mxu0
    %4259 = vmatprep.mubr.f32.mxu0 %v2912
    %4260 = vmatmul.mubr.f32.gmra.mrb[0].mxu0 %v2911
    %v4261 = vpop.f32.mrb[0].mxu0
    %v4262 = vadd.f32 %v4072, %v4261
    %v4263 = vpop.f32.mrb[0].mxu0
    %4264 = vmatprep.mubr.f32.mxu0 %v2930
    %4265 = vmatmul.mubr.f32.gmra.mrb[0].mxu0 %v2929
    %v4266 = vpop.f32.mrb[0].mxu0
    %v4267 = vadd.f32 %v4077, %v4266
    %v4268 = vpop.f32.mrb[0].mxu0
    %4269 = vdwg.mxu0
    %4270 = vmatprep.subr.mxu0 0.0
    %4271 = vmatpush1.msra.mxu0 %v1872
    %4272 = vmatprep.subr.mxu0 0.0
    %4273 = vmatpush1.msra.mxu0 %v1877
    %4274 = vmatprep.subr.mxu0 0.0
    %4275 = vmatpush1.msra.mxu0 %v1882
    %4276 = vmatprep.subr.mxu0 0.0
    %4277 = vmatpush1.msra.mxu0 %v1887
    %4278 = vmatprep.subr.mxu0 0.0
    %4279 = vmatpush1.msra.mxu0 %v1892
    %4280 = vmatprep.subr.mxu0 0.0
    %4281 = vmatpush1.msra.mxu0 %v1897
    %4282 = vmatprep.subr.mxu0 0.0
    %4283 = vmatpush1.msra.mxu0 %v1902
    %4284 = vmatprep.subr.mxu0 0.0
    %4285 = vmatpush1.msra.mxu0 %v1907
    %4286 = vmatprep.subr.mxu0 0.0
    %4287 = vmatpush1.msra.mxu0 %v1912
    %4288 = vmatprep.subr.mxu0 0.0
    %4289 = vmatpush1.msra.mxu0 %v1917
    %4290 = vmatprep.subr.mxu0 0.0
    %4291 = vmatpush1.msra.mxu0 %v1922
    %4292 = vmatprep.subr.mxu0 0.0
    %4293 = vmatpush1.msra.mxu0 %v1927
    %4294 = vmatprep.subr.mxu0 0.0
    %4295 = vmatpush1.msra.mxu0 %v1932
    %4296 = vmatprep.subr.mxu0 0.0
    %4297 = vmatpush1.msra.mxu0 %v1937
    %4298 = vmatprep.subr.mxu0 0.0
    %4299 = vmatpush1.msra.mxu0 %v1942
    %4300 = vmatprep.subr.mxu0 0.0
    %4301 = vmatpush1.msra.mxu0 %v1947
    %4302 = vmatprep.subr.mxu0 0.0
    %4303 = vmatpush1.msra.mxu0 %v1952
    %4304 = vmatprep.subr.mxu0 0.0
    %4305 = vmatpush1.msra.mxu0 %v1957
    %4306 = vmatprep.subr.mxu0 0.0
    %4307 = vmatpush1.msra.mxu0 %v1962
    %4308 = vmatprep.subr.mxu0 0.0
    %4309 = vmatpush1.msra.mxu0 %v1967
    %4310 = vmatprep.subr.mxu0 0.0
    %4311 = vmatpush1.msra.mxu0 %v1972
    %4312 = vmatprep.subr.mxu0 0.0
    %4313 = vmatpush1.msra.mxu0 %v1977
    %4314 = vmatprep.subr.mxu0 0.0
    %4315 = vmatpush1.msra.mxu0 %v1982
    %4316 = vmatprep.subr.mxu0 0.0
    %4317 = vmatpush1.msra.mxu0 %v1987
    %4318 = vmatprep.subr.mxu0 0.0
    %4319 = vmatpush1.msra.mxu0 %v1992
    %4320 = vmatprep.subr.mxu0 0.0
    %4321 = vmatpush1.msra.mxu0 %v1997
    %4322 = vmatprep.subr.mxu0 0.0
    %4323 = vmatpush1.msra.mxu0 %v2002
    %4324 = vmatprep.subr.mxu0 0.0
    %4325 = vmatpush1.msra.mxu0 %v2007
    %4326 = vmatprep.subr.mxu0 0.0
    %4327 = vmatpush1.msra.mxu0 %v2012
    %4328 = vmatprep.subr.mxu0 0.0
    %4329 = vmatpush1.msra.mxu0 %v2017
    %4330 = vmatprep.subr.mxu0 0.0
    %4331 = vmatpush1.msra.mxu0 %v2022
    %4332 = vmatprep.subr.mxu0 0.0
    %4333 = vmatpush1.msra.mxu0 %v2027
    %4334 = vmatprep.mubr.f32.mxu0 %v2500
    %4335 = vmatmul.mubr.f32.gmra.mrb[0].mxu0 %v2499
    %v4336 = vpop.f32.mrb[0].mxu0
    %v4337 = vadd.f32 %v4147, %v4336
    %v4338 = vpop.f32.mrb[0].mxu0
    %4339 = vmatprep.mubr.f32.mxu0 %v2518
    %4340 = vmatmul.mubr.f32.gmra.mrb[0].mxu0 %v2517
    %v4341 = vpop.f32.mrb[0].mxu0
    %v4342 = vadd.f32 %v4152, %v4341
    %v4343 = vpop.f32.mrb[0].mxu0
    %4344 = vmatprep.mubr.f32.mxu0 %v2536
    %4345 = vmatmul.mubr.f32.gmra.mrb[0].mxu0 %v2535
    %v4346 = vpop.f32.mrb[0].mxu0
    %v4347 = vadd.f32 %v4157, %v4346
    %v4348 = vpop.f32.mrb[0].mxu0
    %4349 = vmatprep.mubr.f32.mxu0 %v2554
    %4350 = vmatmul.mubr.f32.gmra.mrb[0].mxu0 %v2553
    %v4351 = vpop.f32.mrb[0].mxu0
    %v4352 = vadd.f32 %v4162, %v4351
    %v4353 = vpop.f32.mrb[0].mxu0
    %4354 = vmatprep.mubr.f32.mxu0 %v2572
    %4355 = vmatmul.mubr.f32.gmra.mrb[0].mxu0 %v2571
    %v4356 = vpop.f32.mrb[0].mxu0
    %v4357 = vadd.f32 %v4167, %v4356
    %v4358 = vpop.f32.mrb[0].mxu0
    %4359 = vmatprep.mubr.f32.mxu0 %v2590
    %4360 = vmatmul.mubr.f32.gmra.mrb[0].mxu0 %v2589
    %v4361 = vpop.f32.mrb[0].mxu0
    %v4362 = vadd.f32 %v4172, %v4361
    %v4363 = vpop.f32.mrb[0].mxu0
    %4364 = vmatprep.mubr.f32.mxu0 %v2608
    %4365 = vmatmul.mubr.f32.gmra.mrb[0].mxu0 %v2607
    %v4366 = vpop.f32.mrb[0].mxu0
    %v4367 = vadd.f32 %v4177, %v4366
    %v4368 = vpop.f32.mrb[0].mxu0
    %4369 = vmatprep.mubr.f32.mxu0 %v2626
    %4370 = vmatmul.mubr.f32.gmra.mrb[0].mxu0 %v2625
    %v4371 = vpop.f32.mrb[0].mxu0
    %v4372 = vadd.f32 %v4182, %v4371
    %v4373 = vpop.f32.mrb[0].mxu0
    %4374 = vmatprep.mubr.f32.mxu0 %v2644
    %4375 = vmatmul.mubr.f32.gmra.mrb[0].mxu0 %v2643
    %v4376 = vpop.f32.mrb[0].mxu0
    %v4377 = vadd.f32 %v4187, %v4376
    %v4378 = vpop.f32.mrb[0].mxu0
    %4379 = vmatprep.mubr.f32.mxu0 %v2662
    %4380 = vmatmul.mubr.f32.gmra.mrb[0].mxu0 %v2661
    %v4381 = vpop.f32.mrb[0].mxu0
    %v4382 = vadd.f32 %v4192, %v4381
    %v4383 = vpop.f32.mrb[0].mxu0
    %4384 = vmatprep.mubr.f32.mxu0 %v2680
    %4385 = vmatmul.mubr.f32.gmra.mrb[0].mxu0 %v2679
    %v4386 = vpop.f32.mrb[0].mxu0
    %v4387 = vadd.f32 %v4197, %v4386
    %v4388 = vpop.f32.mrb[0].mxu0
    %4389 = vmatprep.mubr.f32.mxu0 %v2698
    %4390 = vmatmul.mubr.f32.gmra.mrb[0].mxu0 %v2697
    %v4391 = vpop.f32.mrb[0].mxu0
    %v4392 = vadd.f32 %v4202, %v4391
    %v4393 = vpop.f32.mrb[0].mxu0
    %4394 = vmatprep.mubr.f32.mxu0 %v2716
    %4395 = vmatmul.mubr.f32.gmra.mrb[0].mxu0 %v2715
    %v4396 = vpop.f32.mrb[0].mxu0
    %v4397 = vadd.f32 %v4207, %v4396
    %v4398 = vpop.f32.mrb[0].mxu0
    %4399 = vmatprep.mubr.f32.mxu0 %v2734
    %4400 = vmatmul.mubr.f32.gmra.mrb[0].mxu0 %v2733
    %v4401 = vpop.f32.mrb[0].mxu0
    %v4402 = vadd.f32 %v4212, %v4401
    %v4403 = vpop.f32.mrb[0].mxu0
    %4404 = vmatprep.mubr.f32.mxu0 %v2752
    %4405 = vmatmul.mubr.f32.gmra.mrb[0].mxu0 %v2751
    %v4406 = vpop.f32.mrb[0].mxu0
    %v4407 = vadd.f32 %v4217, %v4406
    %v4408 = vpop.f32.mrb[0].mxu0
    %4409 = vmatprep.mubr.f32.mxu0 %v2770
    %4410 = vmatmul.mubr.f32.gmra.mrb[0].mxu0 %v2769
    %v4411 = vpop.f32.mrb[0].mxu0
    %v4412 = vadd.f32 %v4222, %v4411
    %v4413 = vpop.f32.mrb[0].mxu0
    %4414 = vmatprep.mubr.f32.mxu0 %v2788
    %4415 = vmatmul.mubr.f32.gmra.mrb[0].mxu0 %v2787
    %v4416 = vpop.f32.mrb[0].mxu0
    %v4417 = vadd.f32 %v4227, %v4416
    %v4418 = vpop.f32.mrb[0].mxu0
    %4419 = vmatprep.mubr.f32.mxu0 %v2806
    %4420 = vmatmul.mubr.f32.gmra.mrb[0].mxu0 %v2805
    %v4421 = vpop.f32.mrb[0].mxu0
    %v4422 = vadd.f32 %v4232, %v4421
    %v4423 = vpop.f32.mrb[0].mxu0
    %4424 = vmatprep.mubr.f32.mxu0 %v2824
    %4425 = vmatmul.mubr.f32.gmra.mrb[0].mxu0 %v2823
    %v4426 = vpop.f32.mrb[0].mxu0
    %v4427 = vadd.f32 %v4237, %v4426
    %v4428 = vpop.f32.mrb[0].mxu0
    %4429 = vmatprep.mubr.f32.mxu0 %v2842
    %4430 = vmatmul.mubr.f32.gmra.mrb[0].mxu0 %v2841
    %v4431 = vpop.f32.mrb[0].mxu0
    %v4432 = vadd.f32 %v4242, %v4431
    %v4433 = vpop.f32.mrb[0].mxu0
    %4434 = vmatprep.mubr.f32.mxu0 %v2860
    %4435 = vmatmul.mubr.f32.gmra.mrb[0].mxu0 %v2859
    %v4436 = vpop.f32.mrb[0].mxu0
    %v4437 = vadd.f32 %v4247, %v4436
    %v4438 = vpop.f32.mrb[0].mxu0
    %4439 = vmatprep.mubr.f32.mxu0 %v2878
    %4440 = vmatmul.mubr.f32.gmra.mrb[0].mxu0 %v2877
    %v4441 = vpop.f32.mrb[0].mxu0
    %v4442 = vadd.f32 %v4252, %v4441
    %v4443 = vpop.f32.mrb[0].mxu0
    %4444 = vmatprep.mubr.f32.mxu0 %v2896
    %4445 = vmatmul.mubr.f32.gmra.mrb[0].mxu0 %v2895
    %v4446 = vpop.f32.mrb[0].mxu0
    %v4447 = vadd.f32 %v4257, %v4446
    %v4448 = vpop.f32.mrb[0].mxu0
    %4449 = vmatprep.mubr.f32.mxu0 %v2914
    %4450 = vmatmul.mubr.f32.gmra.mrb[0].mxu0 %v2913
    %v4451 = vpop.f32.mrb[0].mxu0
    %v4452 = vadd.f32 %v4262, %v4451
    %v4453 = vpop.f32.mrb[0].mxu0
    %4454 = vmatprep.mubr.f32.mxu0 %v2932
    %4455 = vmatmul.mubr.f32.gmra.mrb[0].mxu0 %v2931
    %v4456 = vpop.f32.mrb[0].mxu0
    %v4457 = vadd.f32 %v4267, %v4456
    %v4458 = vpop.f32.mrb[0].mxu0
    %4459 = vdwg.mxu0
    %4460 = vmatprep.subr.mxu0 0.0
    %4461 = vmatpush1.msra.mxu0 %v2102
    %4462 = vmatprep.subr.mxu0 0.0
    %4463 = vmatpush1.msra.mxu0 %v2107
    %4464 = vmatprep.subr.mxu0 0.0
    %4465 = vmatpush1.msra.mxu0 %v2112
    %4466 = vmatprep.subr.mxu0 0.0
    %4467 = vmatpush1.msra.mxu0 %v2117
    %4468 = vmatprep.subr.mxu0 0.0
    %4469 = vmatpush1.msra.mxu0 %v2122
    %4470 = vmatprep.subr.mxu0 0.0
    %4471 = vmatpush1.msra.mxu0 %v2127
    %4472 = vmatprep.subr.mxu0 0.0
    %4473 = vmatpush1.msra.mxu0 %v2132
    %4474 = vmatprep.subr.mxu0 0.0
    %4475 = vmatpush1.msra.mxu0 %v2137
    %4476 = vmatprep.subr.mxu0 0.0
    %4477 = vmatpush1.msra.mxu0 %v2142
    %4478 = vmatprep.subr.mxu0 0.0
    %4479 = vmatpush1.msra.mxu0 %v2147
    %4480 = vmatprep.subr.mxu0 0.0
    %4481 = vmatpush1.msra.mxu0 %v2152
    %4482 = vmatprep.subr.mxu0 0.0
    %4483 = vmatpush1.msra.mxu0 %v2157
    %4484 = vmatprep.subr.mxu0 0.0
    %4485 = vmatpush1.msra.mxu0 %v2162
    %4486 = vmatprep.subr.mxu0 0.0
    %4487 = vmatpush1.msra.mxu0 %v2167
    %4488 = vmatprep.subr.mxu0 0.0
    %4489 = vmatpush1.msra.mxu0 %v2172
    %4490 = vmatprep.subr.mxu0 0.0
    %4491 = vmatpush1.msra.mxu0 %v2177
    %4492 = vmatprep.subr.mxu0 0.0
    %4493 = vmatpush1.msra.mxu0 %v2182
    %4494 = vmatprep.subr.mxu0 0.0
    %4495 = vmatpush1.msra.mxu0 %v2187
    %4496 = vmatprep.subr.mxu0 0.0
    %4497 = vmatpush1.msra.mxu0 %v2192
    %4498 = vmatprep.subr.mxu0 0.0
    %4499 = vmatpush1.msra.mxu0 %v2197
    %4500 = vmatprep.subr.mxu0 0.0
    %4501 = vmatpush1.msra.mxu0 %v2202
    %4502 = vmatprep.subr.mxu0 0.0
    %4503 = vmatpush1.msra.mxu0 %v2207
    %4504 = vmatprep.subr.mxu0 0.0
    %4505 = vmatpush1.msra.mxu0 %v2212
    %4506 = vmatprep.subr.mxu0 0.0
    %4507 = vmatpush1.msra.mxu0 %v2217
    %4508 = vmatprep.subr.mxu0 0.0
    %4509 = vmatpush1.msra.mxu0 %v2222
    %4510 = vmatprep.subr.mxu0 0.0
    %4511 = vmatpush1.msra.mxu0 %v2227
    %4512 = vmatprep.subr.mxu0 0.0
    %4513 = vmatpush1.msra.mxu0 %v2232
    %4514 = vmatprep.subr.mxu0 0.0
    %4515 = vmatpush1.msra.mxu0 %v2237
    %4516 = vmatprep.subr.mxu0 0.0
    %4517 = vmatpush1.msra.mxu0 %v2242
    %4518 = vmatprep.subr.mxu0 0.0
    %4519 = vmatpush1.msra.mxu0 %v2247
    %4520 = vmatprep.subr.mxu0 0.0
    %4521 = vmatpush1.msra.mxu0 %v2252
    %4522 = vmatprep.subr.mxu0 0.0
    %4523 = vmatpush1.msra.mxu0 %v2257
    %4524 = vmatprep.mubr.f32.mxu0 %v2502
    %4525 = vmatmul.mubr.f32.gmra.mrb[0].mxu0 %v2501
    %v4526 = vpop.f32.mrb[0].mxu0
    %v4527 = vadd.f32 %v4337, %v4526
    %v4528 = vpop.f32.mrb[0].mxu0
    %4529 = vmatprep.mubr.f32.mxu0 %v2520
    %4530 = vmatmul.mubr.f32.gmra.mrb[0].mxu0 %v2519
    %v4531 = vpop.f32.mrb[0].mxu0
    %v4532 = vadd.f32 %v4342, %v4531
    %v4533 = vpop.f32.mrb[0].mxu0
    %4534 = vmatprep.mubr.f32.mxu0 %v2538
    %4535 = vmatmul.mubr.f32.gmra.mrb[0].mxu0 %v2537
    %v4536 = vpop.f32.mrb[0].mxu0
    %v4537 = vadd.f32 %v4347, %v4536
    %v4538 = vpop.f32.mrb[0].mxu0
    %4539 = vmatprep.mubr.f32.mxu0 %v2556
    %4540 = vmatmul.mubr.f32.gmra.mrb[0].mxu0 %v2555
    %v4541 = vpop.f32.mrb[0].mxu0
    %v4542 = vadd.f32 %v4352, %v4541
    %v4543 = vpop.f32.mrb[0].mxu0
    %4544 = vmatprep.mubr.f32.mxu0 %v2574
    %4545 = vmatmul.mubr.f32.gmra.mrb[0].mxu0 %v2573
    %v4546 = vpop.f32.mrb[0].mxu0
    %v4547 = vadd.f32 %v4357, %v4546
    %v4548 = vpop.f32.mrb[0].mxu0
    %4549 = vmatprep.mubr.f32.mxu0 %v2592
    %4550 = vmatmul.mubr.f32.gmra.mrb[0].mxu0 %v2591
    %v4551 = vpop.f32.mrb[0].mxu0
    %v4552 = vadd.f32 %v4362, %v4551
    %v4553 = vpop.f32.mrb[0].mxu0
    %4554 = vmatprep.mubr.f32.mxu0 %v2610
    %4555 = vmatmul.mubr.f32.gmra.mrb[0].mxu0 %v2609
    %v4556 = vpop.f32.mrb[0].mxu0
    %v4557 = vadd.f32 %v4367, %v4556
    %v4558 = vpop.f32.mrb[0].mxu0
    %4559 = vmatprep.mubr.f32.mxu0 %v2628
    %4560 = vmatmul.mubr.f32.gmra.mrb[0].mxu0 %v2627
    %v4561 = vpop.f32.mrb[0].mxu0
    %v4562 = vadd.f32 %v4372, %v4561
    %v4563 = vpop.f32.mrb[0].mxu0
    %4564 = vmatprep.mubr.f32.mxu0 %v2646
    %4565 = vmatmul.mubr.f32.gmra.mrb[0].mxu0 %v2645
    %v4566 = vpop.f32.mrb[0].mxu0
    %v4567 = vadd.f32 %v4377, %v4566
    %v4568 = vpop.f32.mrb[0].mxu0
    %4569 = vmatprep.mubr.f32.mxu0 %v2664
    %4570 = vmatmul.mubr.f32.gmra.mrb[0].mxu0 %v2663
    %v4571 = vpop.f32.mrb[0].mxu0
    %v4572 = vadd.f32 %v4382, %v4571
    %v4573 = vpop.f32.mrb[0].mxu0
    %4574 = vmatprep.mubr.f32.mxu0 %v2682
    %4575 = vmatmul.mubr.f32.gmra.mrb[0].mxu0 %v2681
    %v4576 = vpop.f32.mrb[0].mxu0
    %v4577 = vadd.f32 %v4387, %v4576
    %v4578 = vpop.f32.mrb[0].mxu0
    %4579 = vmatprep.mubr.f32.mxu0 %v2700
    %4580 = vmatmul.mubr.f32.gmra.mrb[0].mxu0 %v2699
    %v4581 = vpop.f32.mrb[0].mxu0
    %v4582 = vadd.f32 %v4392, %v4581
    %v4583 = vpop.f32.mrb[0].mxu0
    %4584 = vmatprep.mubr.f32.mxu0 %v2718
    %4585 = vmatmul.mubr.f32.gmra.mrb[0].mxu0 %v2717
    %v4586 = vpop.f32.mrb[0].mxu0
    %v4587 = vadd.f32 %v4397, %v4586
    %v4588 = vpop.f32.mrb[0].mxu0
    %4589 = vmatprep.mubr.f32.mxu0 %v2736
    %4590 = vmatmul.mubr.f32.gmra.mrb[0].mxu0 %v2735
    %v4591 = vpop.f32.mrb[0].mxu0
    %v4592 = vadd.f32 %v4402, %v4591
    %v4593 = vpop.f32.mrb[0].mxu0
    %4594 = vmatprep.mubr.f32.mxu0 %v2754
    %4595 = vmatmul.mubr.f32.gmra.mrb[0].mxu0 %v2753
    %v4596 = vpop.f32.mrb[0].mxu0
    %v4597 = vadd.f32 %v4407, %v4596
    %v4598 = vpop.f32.mrb[0].mxu0
    %4599 = vmatprep.mubr.f32.mxu0 %v2772
    %4600 = vmatmul.mubr.f32.gmra.mrb[0].mxu0 %v2771
    %v4601 = vpop.f32.mrb[0].mxu0
    %v4602 = vadd.f32 %v4412, %v4601
    %v4603 = vpop.f32.mrb[0].mxu0
    %4604 = vmatprep.mubr.f32.mxu0 %v2790
    %4605 = vmatmul.mubr.f32.gmra.mrb[0].mxu0 %v2789
    %v4606 = vpop.f32.mrb[0].mxu0
    %v4607 = vadd.f32 %v4417, %v4606
    %v4608 = vpop.f32.mrb[0].mxu0
    %4609 = vmatprep.mubr.f32.mxu0 %v2808
    %4610 = vmatmul.mubr.f32.gmra.mrb[0].mxu0 %v2807
    %v4611 = vpop.f32.mrb[0].mxu0
    %v4612 = vadd.f32 %v4422, %v4611
    %v4613 = vpop.f32.mrb[0].mxu0
    %4614 = vmatprep.mubr.f32.mxu0 %v2826
    %4615 = vmatmul.mubr.f32.gmra.mrb[0].mxu0 %v2825
    %v4616 = vpop.f32.mrb[0].mxu0
    %v4617 = vadd.f32 %v4427, %v4616
    %v4618 = vpop.f32.mrb[0].mxu0
    %4619 = vmatprep.mubr.f32.mxu0 %v2844
    %4620 = vmatmul.mubr.f32.gmra.mrb[0].mxu0 %v2843
    %v4621 = vpop.f32.mrb[0].mxu0
    %v4622 = vadd.f32 %v4432, %v4621
    %v4623 = vpop.f32.mrb[0].mxu0
    %4624 = vmatprep.mubr.f32.mxu0 %v2862
    %4625 = vmatmul.mubr.f32.gmra.mrb[0].mxu0 %v2861
    %v4626 = vpop.f32.mrb[0].mxu0
    %v4627 = vadd.f32 %v4437, %v4626
    %v4628 = vpop.f32.mrb[0].mxu0
    %4629 = vmatprep.mubr.f32.mxu0 %v2880
    %4630 = vmatmul.mubr.f32.gmra.mrb[0].mxu0 %v2879
    %v4631 = vpop.f32.mrb[0].mxu0
    %v4632 = vadd.f32 %v4442, %v4631
    %v4633 = vpop.f32.mrb[0].mxu0
    %4634 = vmatprep.mubr.f32.mxu0 %v2898
    %4635 = vmatmul.mubr.f32.gmra.mrb[0].mxu0 %v2897
    %v4636 = vpop.f32.mrb[0].mxu0
    %v4637 = vadd.f32 %v4447, %v4636
    %v4638 = vpop.f32.mrb[0].mxu0
    %4639 = vmatprep.mubr.f32.mxu0 %v2916
    %4640 = vmatmul.mubr.f32.gmra.mrb[0].mxu0 %v2915
    %v4641 = vpop.f32.mrb[0].mxu0
    %v4642 = vadd.f32 %v4452, %v4641
    %v4643 = vpop.f32.mrb[0].mxu0
    %4644 = vmatprep.mubr.f32.mxu0 %v2934
    %4645 = vmatmul.mubr.f32.gmra.mrb[0].mxu0 %v2933
    %v4646 = vpop.f32.mrb[0].mxu0
    %v4647 = vadd.f32 %v4457, %v4646
    %v4648 = vpop.f32.mrb[0].mxu0
    %4649 = vdwg.mxu0
    %v4650 = vmax.f32 %v4527, 0.0
    %v4651 = vmax.f32 %v4532, 0.0
    %v4652 = vmax.f32 %v4537, 0.0
    %v4653 = vmax.f32 %v4542, 0.0
    %v4654 = vmax.f32 %v4547, 0.0
    %v4655 = vmax.f32 %v4552, 0.0
    %v4656 = vmax.f32 %v4557, 0.0
    %v4657 = vmax.f32 %v4562, 0.0
    %v4658 = vmax.f32 %v4567, 0.0
    %v4659 = vmax.f32 %v4572, 0.0
    %v4660 = vmax.f32 %v4577, 0.0
    %v4661 = vmax.f32 %v4582, 0.0
    %v4662 = vmax.f32 %v4587, 0.0
    %v4663 = vmax.f32 %v4592, 0.0
    %v4664 = vmax.f32 %v4597, 0.0
    %v4665 = vmax.f32 %v4602, 0.0
    %v4666 = vmax.f32 %v4607, 0.0
    %v4667 = vmax.f32 %v4612, 0.0
    %v4668 = vmax.f32 %v4617, 0.0
    %v4669 = vmax.f32 %v4622, 0.0
    %v4670 = vmax.f32 %v4627, 0.0
    %v4671 = vmax.f32 %v4632, 0.0
    %v4672 = vmax.f32 %v4637, 0.0
    %v4673 = vmax.f32 %v4642, 0.0
    %v4674 = vmax.f32 %v4647, 0.0
    %v4675 = vld [vmem:[#allocation5] sm:$0xff]
    %v4676 = vld [vmem:[#allocation5 + $0x8] sm:$0xff]
    %vm4677 = vcmask 130048
    %v4679 = vsel %vm4677, %v4650, 0
    %v4682 = vsel %vm4677, %v4651, 0
    %v4685 = vsel %vm4677, %v4652, 0
    %v4688 = vsel %vm4677, %v4653, 0
    %v4691 = vsel %vm4677, %v4654, 0
    %v4694 = vsel %vm4677, %v4655, 0
    %v4697 = vsel %vm4677, %v4656, 0
    %v4700 = vsel %vm4677, %v4657, 0
    %v4703 = vsel %vm4677, %v4658, 0
    %v4706 = vsel %vm4677, %v4659, 0
    %v4709 = vsel %vm4677, %v4660, 0
    %v4712 = vsel %vm4677, %v4661, 0
    %v4715 = vsel %vm4677, %v4662, 0
    %v4718 = vsel %vm4677, %v4663, 0
    %v4721 = vsel %vm4677, %v4664, 0
    %v4724 = vsel %vm4677, %v4665, 0
    %v4727 = vsel %vm4677, %v4666, 0
    %v4730 = vsel %vm4677, %v4667, 0
    %v4733 = vsel %vm4677, %v4668, 0
    %v4736 = vsel %vm4677, %v4669, 0
    %v4739 = vsel %vm4677, %v4670, 0
    %v4742 = vsel %vm4677, %v4671, 0
    %v4745 = vsel %vm4677, %v4672, 0
    %v4748 = vsel %vm4677, %v4673, 0
    %v4751 = vsel %vm4677, %v4674, 0
    %4753 = vmatprep.subr.mxu0 0.0
    %4754 = vmatpush1.msra.mxu0 %v4675
    %4755 = vmatprep.subr.mxu0 0.0
    %4756 = vmatpush1.msra.mxu0 %v4676
    %4757 = vmatprep.subr.mxu0 0.0
    %4758 = vmatpush1.msra.mxu0 0.0
    %4759 = vmatprep.subr.mxu0 0.0
    %4760 = vmatpush1.msra.mxu0 0.0
    %4761 = vmatprep.subr.mxu0 0.0
    %4762 = vmatpush1.msra.mxu0 0.0
    %4763 = vmatprep.subr.mxu0 0.0
    %4764 = vmatpush1.msra.mxu0 0.0
    %4765 = vmatprep.subr.mxu0 0.0
    %4766 = vmatpush1.msra.mxu0 0.0
    %4767 = vmatprep.subr.mxu0 0.0
    %4768 = vmatpush1.msra.mxu0 0.0
    %4769 = vmatprep.subr.mxu0 0.0
    %4770 = vmatpush1.msra.mxu0 0.0
    %4771 = vmatprep.subr.mxu0 0.0
    %4772 = vmatpush1.msra.mxu0 0.0
    %4773 = vmatprep.subr.mxu0 0.0
    %4774 = vmatpush1.msra.mxu0 0.0
    %4775 = vmatprep.subr.mxu0 0.0
    %4776 = vmatpush1.msra.mxu0 0.0
    %4777 = vmatprep.subr.mxu0 0.0
    %4778 = vmatpush1.msra.mxu0 0.0
    %4779 = vmatprep.subr.mxu0 0.0
    %4780 = vmatpush1.msra.mxu0 0.0
    %4781 = vmatprep.subr.mxu0 0.0
    %4782 = vmatpush1.msra.mxu0 0.0
    %4783 = vmatprep.subr.mxu0 0.0
    %4784 = vmatpush1.msra.mxu0 0.0
    %4785 = vmatprep.subr.mxu0 0.0
    %4786 = vmatpush1.msra.mxu0 0.0
    %4787 = vmatprep.subr.mxu0 0.0
    %4788 = vmatpush1.msra.mxu0 0.0
    %4789 = vmatprep.subr.mxu0 0.0
    %4790 = vmatpush1.msra.mxu0 0.0
    %4791 = vmatprep.subr.mxu0 0.0
    %4792 = vmatpush1.msra.mxu0 0.0
    %4793 = vmatprep.subr.mxu0 0.0
    %4794 = vmatpush1.msra.mxu0 0.0
    %4795 = vmatprep.subr.mxu0 0.0
    %4796 = vmatpush1.msra.mxu0 0.0
    %4797 = vmatprep.subr.mxu0 0.0
    %4798 = vmatpush1.msra.mxu0 0.0
    %4799 = vmatprep.subr.mxu0 0.0
    %4800 = vmatpush1.msra.mxu0 0.0
    %4801 = vmatprep.subr.mxu0 0.0
    %4802 = vmatpush1.msra.mxu0 0.0
    %4803 = vmatprep.subr.mxu0 0.0
    %4804 = vmatpush1.msra.mxu0 0.0
    %4805 = vmatprep.subr.mxu0 0.0
    %4806 = vmatpush1.msra.mxu0 0.0
    %4807 = vmatprep.subr.mxu0 0.0
    %4808 = vmatpush1.msra.mxu0 0.0
    %4809 = vmatprep.subr.mxu0 0.0
    %4810 = vmatpush1.msra.mxu0 0.0
    %4811 = vmatprep.subr.mxu0 0.0
    %4812 = vmatpush1.msra.mxu0 0.0
    %4813 = vmatprep.subr.mxu0 0.0
    %4814 = vmatpush1.msra.mxu0 0.0
    %4815 = vmatprep.subr.mxu0 0.0
    %4816 = vmatpush1.msra.mxu0 0.0
    %4817 = vmatprep.mubr.f32.mxu0 0.0
    %4818 = vmatmul.mubr.f32.gmra.mrb[0].mxu0 %v4679
    %v4819 = vpop.f32.mrb[0].mxu0
    %v4820 = vadd.f32 0.0, %v4819
    %v4821 = vpop.f32.mrb[0].mxu0
    %4822 = vmatprep.mubr.f32.mxu0 0.0
    %4823 = vmatmul.mubr.f32.gmra.mrb[0].mxu0 %v4682
    %v4824 = vpop.f32.mrb[0].mxu0
    %v4825 = vadd.f32 0.0, %v4824
    %v4826 = vpop.f32.mrb[0].mxu0
    %4827 = vmatprep.mubr.f32.mxu0 0.0
    %4828 = vmatmul.mubr.f32.gmra.mrb[0].mxu0 %v4685
    %v4829 = vpop.f32.mrb[0].mxu0
    %v4830 = vadd.f32 0.0, %v4829
    %v4831 = vpop.f32.mrb[0].mxu0
    %4832 = vmatprep.mubr.f32.mxu0 0.0
    %4833 = vmatmul.mubr.f32.gmra.mrb[0].mxu0 %v4688
    %v4834 = vpop.f32.mrb[0].mxu0
    %v4835 = vadd.f32 0.0, %v4834
    %v4836 = vpop.f32.mrb[0].mxu0
    %4837 = vmatprep.mubr.f32.mxu0 0.0
    %4838 = vmatmul.mubr.f32.gmra.mrb[0].mxu0 %v4691
    %v4839 = vpop.f32.mrb[0].mxu0
    %v4840 = vadd.f32 0.0, %v4839
    %v4841 = vpop.f32.mrb[0].mxu0
    %4842 = vmatprep.mubr.f32.mxu0 0.0
    %4843 = vmatmul.mubr.f32.gmra.mrb[0].mxu0 %v4694
    %v4844 = vpop.f32.mrb[0].mxu0
    %v4845 = vadd.f32 0.0, %v4844
    %v4846 = vpop.f32.mrb[0].mxu0
    %4847 = vmatprep.mubr.f32.mxu0 0.0
    %4848 = vmatmul.mubr.f32.gmra.mrb[0].mxu0 %v4697
    %v4849 = vpop.f32.mrb[0].mxu0
    %v4850 = vadd.f32 0.0, %v4849
    %v4851 = vpop.f32.mrb[0].mxu0
    %4852 = vmatprep.mubr.f32.mxu0 0.0
    %4853 = vmatmul.mubr.f32.gmra.mrb[0].mxu0 %v4700
    %v4854 = vpop.f32.mrb[0].mxu0
    %v4855 = vadd.f32 0.0, %v4854
    %v4856 = vpop.f32.mrb[0].mxu0
    %4857 = vmatprep.mubr.f32.mxu0 0.0
    %4858 = vmatmul.mubr.f32.gmra.mrb[0].mxu0 %v4703
    %v4859 = vpop.f32.mrb[0].mxu0
    %v4860 = vadd.f32 0.0, %v4859
    %v4861 = vpop.f32.mrb[0].mxu0
    %4862 = vmatprep.mubr.f32.mxu0 0.0
    %4863 = vmatmul.mubr.f32.gmra.mrb[0].mxu0 %v4706
    %v4864 = vpop.f32.mrb[0].mxu0
    %v4865 = vadd.f32 0.0, %v4864
    %v4866 = vpop.f32.mrb[0].mxu0
    %4867 = vmatprep.mubr.f32.mxu0 0.0
    %4868 = vmatmul.mubr.f32.gmra.mrb[0].mxu0 %v4709
    %v4869 = vpop.f32.mrb[0].mxu0
    %v4870 = vadd.f32 0.0, %v4869
    %v4871 = vpop.f32.mrb[0].mxu0
    %4872 = vmatprep.mubr.f32.mxu0 0.0
    %4873 = vmatmul.mubr.f32.gmra.mrb[0].mxu0 %v4712
    %v4874 = vpop.f32.mrb[0].mxu0
    %v4875 = vadd.f32 0.0, %v4874
    %v4876 = vpop.f32.mrb[0].mxu0
    %4877 = vmatprep.mubr.f32.mxu0 0.0
    %4878 = vmatmul.mubr.f32.gmra.mrb[0].mxu0 %v4715
    %v4879 = vpop.f32.mrb[0].mxu0
    %v4880 = vadd.f32 0.0, %v4879
    %v4881 = vpop.f32.mrb[0].mxu0
    %4882 = vmatprep.mubr.f32.mxu0 0.0
    %4883 = vmatmul.mubr.f32.gmra.mrb[0].mxu0 %v4718
    %v4884 = vpop.f32.mrb[0].mxu0
    %v4885 = vadd.f32 0.0, %v4884
    %v4886 = vpop.f32.mrb[0].mxu0
    %4887 = vmatprep.mubr.f32.mxu0 0.0
    %4888 = vmatmul.mubr.f32.gmra.mrb[0].mxu0 %v4721
    %v4889 = vpop.f32.mrb[0].mxu0
    %v4890 = vadd.f32 0.0, %v4889
    %v4891 = vpop.f32.mrb[0].mxu0
    %4892 = vmatprep.mubr.f32.mxu0 0.0
    %4893 = vmatmul.mubr.f32.gmra.mrb[0].mxu0 %v4724
    %v4894 = vpop.f32.mrb[0].mxu0
    %v4895 = vadd.f32 0.0, %v4894
    %v4896 = vpop.f32.mrb[0].mxu0
    %4897 = vmatprep.mubr.f32.mxu0 0.0
    %4898 = vmatmul.mubr.f32.gmra.mrb[0].mxu0 %v4727
    %v4899 = vpop.f32.mrb[0].mxu0
    %v4900 = vadd.f32 0.0, %v4899
    %v4901 = vpop.f32.mrb[0].mxu0
    %4902 = vmatprep.mubr.f32.mxu0 0.0
    %4903 = vmatmul.mubr.f32.gmra.mrb[0].mxu0 %v4730
    %v4904 = vpop.f32.mrb[0].mxu0
    %v4905 = vadd.f32 0.0, %v4904
    %v4906 = vpop.f32.mrb[0].mxu0
    %4907 = vmatprep.mubr.f32.mxu0 0.0
    %4908 = vmatmul.mubr.f32.gmra.mrb[0].mxu0 %v4733
    %v4909 = vpop.f32.mrb[0].mxu0
    %v4910 = vadd.f32 0.0, %v4909
    %v4911 = vpop.f32.mrb[0].mxu0
    %4912 = vmatprep.mubr.f32.mxu0 0.0
    %4913 = vmatmul.mubr.f32.gmra.mrb[0].mxu0 %v4736
    %v4914 = vpop.f32.mrb[0].mxu0
    %v4915 = vadd.f32 0.0, %v4914
    %v4916 = vpop.f32.mrb[0].mxu0
    %4917 = vmatprep.mubr.f32.mxu0 0.0
    %4918 = vmatmul.mubr.f32.gmra.mrb[0].mxu0 %v4739
    %v4919 = vpop.f32.mrb[0].mxu0
    %v4920 = vadd.f32 0.0, %v4919
    %v4921 = vpop.f32.mrb[0].mxu0
    %4922 = vmatprep.mubr.f32.mxu0 0.0
    %4923 = vmatmul.mubr.f32.gmra.mrb[0].mxu0 %v4742
    %v4924 = vpop.f32.mrb[0].mxu0
    %v4925 = vadd.f32 0.0, %v4924
    %v4926 = vpop.f32.mrb[0].mxu0
    %4927 = vmatprep.mubr.f32.mxu0 0.0
    %4928 = vmatmul.mubr.f32.gmra.mrb[0].mxu0 %v4745
    %v4929 = vpop.f32.mrb[0].mxu0
    %v4930 = vadd.f32 0.0, %v4929
    %v4931 = vpop.f32.mrb[0].mxu0
    %4932 = vmatprep.mubr.f32.mxu0 0.0
    %4933 = vmatmul.mubr.f32.gmra.mrb[0].mxu0 %v4748
    %v4934 = vpop.f32.mrb[0].mxu0
    %v4935 = vadd.f32 0.0, %v4934
    %v4936 = vpop.f32.mrb[0].mxu0
    %4937 = vmatprep.mubr.f32.mxu0 0.0
    %4938 = vmatmul.mubr.f32.gmra.mrb[0].mxu0 %v4751
    %v4939 = vpop.f32.mrb[0].mxu0
    %v4940 = vadd.f32 0.0, %v4939
    %v4941 = vpop.f32.mrb[0].mxu0
    %4942 = vdwg.mxu0
    %s4943 = scalar_lea.vmem [#allocation5], 16
    %v4944 = vld [vmem:[%s4943] sm:$0xff]
    %v4945 = vld [vmem:[%s4943 + $0x8] sm:$0xff]
    %4946 = vmatprep.subr.mxu0 0.0
    %4947 = vmatpush1.msra.mxu0 %v4944
    %4948 = vmatprep.subr.mxu0 0.0
    %4949 = vmatpush1.msra.mxu0 %v4945
    %4950 = vmatprep.subr.mxu0 0.0
    %4951 = vmatpush1.msra.mxu0 0.0
    %4952 = vmatprep.subr.mxu0 0.0
    %4953 = vmatpush1.msra.mxu0 0.0
    %4954 = vmatprep.subr.mxu0 0.0
    %4955 = vmatpush1.msra.mxu0 0.0
    %4956 = vmatprep.subr.mxu0 0.0
    %4957 = vmatpush1.msra.mxu0 0.0
    %4958 = vmatprep.subr.mxu0 0.0
    %4959 = vmatpush1.msra.mxu0 0.0
    %4960 = vmatprep.subr.mxu0 0.0
    %4961 = vmatpush1.msra.mxu0 0.0
    %4962 = vmatprep.subr.mxu0 0.0
    %4963 = vmatpush1.msra.mxu0 0.0
    %4964 = vmatprep.subr.mxu0 0.0
    %4965 = vmatpush1.msra.mxu0 0.0
    %4966 = vmatprep.subr.mxu0 0.0
    %4967 = vmatpush1.msra.mxu0 0.0
    %4968 = vmatprep.subr.mxu0 0.0
    %4969 = vmatpush1.msra.mxu0 0.0
    %4970 = vmatprep.subr.mxu0 0.0
    %4971 = vmatpush1.msra.mxu0 0.0
    %4972 = vmatprep.subr.mxu0 0.0
    %4973 = vmatpush1.msra.mxu0 0.0
    %4974 = vmatprep.subr.mxu0 0.0
    %4975 = vmatpush1.msra.mxu0 0.0
    %4976 = vmatprep.subr.mxu0 0.0
    %4977 = vmatpush1.msra.mxu0 0.0
    %4978 = vmatprep.subr.mxu0 0.0
    %4979 = vmatpush1.msra.mxu0 0.0
    %4980 = vmatprep.subr.mxu0 0.0
    %4981 = vmatpush1.msra.mxu0 0.0
    %4982 = vmatprep.subr.mxu0 0.0
    %4983 = vmatpush1.msra.mxu0 0.0
    %4984 = vmatprep.subr.mxu0 0.0
    %4985 = vmatpush1.msra.mxu0 0.0
    %4986 = vmatprep.subr.mxu0 0.0
    %4987 = vmatpush1.msra.mxu0 0.0
    %4988 = vmatprep.subr.mxu0 0.0
    %4989 = vmatpush1.msra.mxu0 0.0
    %4990 = vmatprep.subr.mxu0 0.0
    %4991 = vmatpush1.msra.mxu0 0.0
    %4992 = vmatprep.subr.mxu0 0.0
    %4993 = vmatpush1.msra.mxu0 0.0
    %4994 = vmatprep.subr.mxu0 0.0
    %4995 = vmatpush1.msra.mxu0 0.0
    %4996 = vmatprep.subr.mxu0 0.0
    %4997 = vmatpush1.msra.mxu0 0.0
    %4998 = vmatprep.subr.mxu0 0.0
    %4999 = vmatpush1.msra.mxu0 0.0
    %5000 = vmatprep.subr.mxu0 0.0
    %5001 = vmatpush1.msra.mxu0 0.0
    %5002 = vmatprep.subr.mxu0 0.0
    %5003 = vmatpush1.msra.mxu0 0.0
    %5004 = vmatprep.subr.mxu0 0.0
    %5005 = vmatpush1.msra.mxu0 0.0
    %5006 = vmatprep.subr.mxu0 0.0
    %5007 = vmatpush1.msra.mxu0 0.0
    %5008 = vmatprep.subr.mxu0 0.0
    %5009 = vmatpush1.msra.mxu0 0.0
    %5010 = vmatprep.mubr.f32.mxu0 0.0
    %5011 = vmatmul.mubr.f32.gmra.mrb[0].mxu0 %v4679
    %v5012 = vpop.f32.mrb[0].mxu0
    %v5013 = vadd.f32 0.0, %v5012
    %v5014 = vpop.f32.mrb[0].mxu0
    %5015 = vmatprep.mubr.f32.mxu0 0.0
    %5016 = vmatmul.mubr.f32.gmra.mrb[0].mxu0 %v4682
    %v5017 = vpop.f32.mrb[0].mxu0
    %v5018 = vadd.f32 0.0, %v5017
    %v5019 = vpop.f32.mrb[0].mxu0
    %5020 = vmatprep.mubr.f32.mxu0 0.0
    %5021 = vmatmul.mubr.f32.gmra.mrb[0].mxu0 %v4685
    %v5022 = vpop.f32.mrb[0].mxu0
    %v5023 = vadd.f32 0.0, %v5022
    %v5024 = vpop.f32.mrb[0].mxu0
    %5025 = vmatprep.mubr.f32.mxu0 0.0
    %5026 = vmatmul.mubr.f32.gmra.mrb[0].mxu0 %v4688
    %v5027 = vpop.f32.mrb[0].mxu0
    %v5028 = vadd.f32 0.0, %v5027
    %v5029 = vpop.f32.mrb[0].mxu0
    %5030 = vmatprep.mubr.f32.mxu0 0.0
    %5031 = vmatmul.mubr.f32.gmra.mrb[0].mxu0 %v4691
    %v5032 = vpop.f32.mrb[0].mxu0
    %v5033 = vadd.f32 0.0, %v5032
    %v5034 = vpop.f32.mrb[0].mxu0
    %5035 = vmatprep.mubr.f32.mxu0 0.0
    %5036 = vmatmul.mubr.f32.gmra.mrb[0].mxu0 %v4694
    %v5037 = vpop.f32.mrb[0].mxu0
    %v5038 = vadd.f32 0.0, %v5037
    %v5039 = vpop.f32.mrb[0].mxu0
    %5040 = vmatprep.mubr.f32.mxu0 0.0
    %5041 = vmatmul.mubr.f32.gmra.mrb[0].mxu0 %v4697
    %v5042 = vpop.f32.mrb[0].mxu0
    %v5043 = vadd.f32 0.0, %v5042
    %v5044 = vpop.f32.mrb[0].mxu0
    %5045 = vmatprep.mubr.f32.mxu0 0.0
    %5046 = vmatmul.mubr.f32.gmra.mrb[0].mxu0 %v4700
    %v5047 = vpop.f32.mrb[0].mxu0
    %v5048 = vadd.f32 0.0, %v5047
    %v5049 = vpop.f32.mrb[0].mxu0
    %5050 = vmatprep.mubr.f32.mxu0 0.0
    %5051 = vmatmul.mubr.f32.gmra.mrb[0].mxu0 %v4703
    %v5052 = vpop.f32.mrb[0].mxu0
    %v5053 = vadd.f32 0.0, %v5052
    %v5054 = vpop.f32.mrb[0].mxu0
    %5055 = vmatprep.mubr.f32.mxu0 0.0
    %5056 = vmatmul.mubr.f32.gmra.mrb[0].mxu0 %v4706
    %v5057 = vpop.f32.mrb[0].mxu0
    %v5058 = vadd.f32 0.0, %v5057
    %v5059 = vpop.f32.mrb[0].mxu0
    %5060 = vmatprep.mubr.f32.mxu0 0.0
    %5061 = vmatmul.mubr.f32.gmra.mrb[0].mxu0 %v4709
    %v5062 = vpop.f32.mrb[0].mxu0
    %v5063 = vadd.f32 0.0, %v5062
    %v5064 = vpop.f32.mrb[0].mxu0
    %5065 = vmatprep.mubr.f32.mxu0 0.0
    %5066 = vmatmul.mubr.f32.gmra.mrb[0].mxu0 %v4712
    %v5067 = vpop.f32.mrb[0].mxu0
    %v5068 = vadd.f32 0.0, %v5067
    %v5069 = vpop.f32.mrb[0].mxu0
    %5070 = vmatprep.mubr.f32.mxu0 0.0
    %5071 = vmatmul.mubr.f32.gmra.mrb[0].mxu0 %v4715
    %v5072 = vpop.f32.mrb[0].mxu0
    %v5073 = vadd.f32 0.0, %v5072
    %v5074 = vpop.f32.mrb[0].mxu0
    %5075 = vmatprep.mubr.f32.mxu0 0.0
    %5076 = vmatmul.mubr.f32.gmra.mrb[0].mxu0 %v4718
    %v5077 = vpop.f32.mrb[0].mxu0
    %v5078 = vadd.f32 0.0, %v5077
    %v5079 = vpop.f32.mrb[0].mxu0
    %5080 = vmatprep.mubr.f32.mxu0 0.0
    %5081 = vmatmul.mubr.f32.gmra.mrb[0].mxu0 %v4721
    %v5082 = vpop.f32.mrb[0].mxu0
    %v5083 = vadd.f32 0.0, %v5082
    %v5084 = vpop.f32.mrb[0].mxu0
    %5085 = vmatprep.mubr.f32.mxu0 0.0
    %5086 = vmatmul.mubr.f32.gmra.mrb[0].mxu0 %v4724
    %v5087 = vpop.f32.mrb[0].mxu0
    %v5088 = vadd.f32 0.0, %v5087
    %v5089 = vpop.f32.mrb[0].mxu0
    %5090 = vmatprep.mubr.f32.mxu0 0.0
    %5091 = vmatmul.mubr.f32.gmra.mrb[0].mxu0 %v4727
    %v5092 = vpop.f32.mrb[0].mxu0
    %v5093 = vadd.f32 0.0, %v5092
    %v5094 = vpop.f32.mrb[0].mxu0
    %5095 = vmatprep.mubr.f32.mxu0 0.0
    %5096 = vmatmul.mubr.f32.gmra.mrb[0].mxu0 %v4730
    %v5097 = vpop.f32.mrb[0].mxu0
    %v5098 = vadd.f32 0.0, %v5097
    %v5099 = vpop.f32.mrb[0].mxu0
    %5100 = vmatprep.mubr.f32.mxu0 0.0
    %5101 = vmatmul.mubr.f32.gmra.mrb[0].mxu0 %v4733
    %v5102 = vpop.f32.mrb[0].mxu0
    %v5103 = vadd.f32 0.0, %v5102
    %v5104 = vpop.f32.mrb[0].mxu0
    %5105 = vmatprep.mubr.f32.mxu0 0.0
    %5106 = vmatmul.mubr.f32.gmra.mrb[0].mxu0 %v4736
    %v5107 = vpop.f32.mrb[0].mxu0
    %v5108 = vadd.f32 0.0, %v5107
    %v5109 = vpop.f32.mrb[0].mxu0
    %5110 = vmatprep.mubr.f32.mxu0 0.0
    %5111 = vmatmul.mubr.f32.gmra.mrb[0].mxu0 %v4739
    %v5112 = vpop.f32.mrb[0].mxu0
    %v5113 = vadd.f32 0.0, %v5112
    %v5114 = vpop.f32.mrb[0].mxu0
    %5115 = vmatprep.mubr.f32.mxu0 0.0
    %5116 = vmatmul.mubr.f32.gmra.mrb[0].mxu0 %v4742
    %v5117 = vpop.f32.mrb[0].mxu0
    %v5118 = vadd.f32 0.0, %v5117
    %v5119 = vpop.f32.mrb[0].mxu0
    %5120 = vmatprep.mubr.f32.mxu0 0.0
    %5121 = vmatmul.mubr.f32.gmra.mrb[0].mxu0 %v4745
    %v5122 = vpop.f32.mrb[0].mxu0
    %v5123 = vadd.f32 0.0, %v5122
    %v5124 = vpop.f32.mrb[0].mxu0
    %5125 = vmatprep.mubr.f32.mxu0 0.0
    %5126 = vmatmul.mubr.f32.gmra.mrb[0].mxu0 %v4748
    %v5127 = vpop.f32.mrb[0].mxu0
    %v5128 = vadd.f32 0.0, %v5127
    %v5129 = vpop.f32.mrb[0].mxu0
    %5130 = vmatprep.mubr.f32.mxu0 0.0
    %5131 = vmatmul.mubr.f32.gmra.mrb[0].mxu0 %v4751
    %v5132 = vpop.f32.mrb[0].mxu0
    %v5133 = vadd.f32 0.0, %v5132
    %v5134 = vpop.f32.mrb[0].mxu0
    %5135 = vdwg.mxu0
    %s5136 = scalar_lea.vmem [#allocation5], 32
    %v5137 = vld [vmem:[%s5136] sm:$0xff]
    %v5138 = vld [vmem:[%s5136 + $0x8] sm:$0xff]
    %5139 = vmatprep.subr.mxu0 0.0
    %5140 = vmatpush1.msra.mxu0 %v5137
    %5141 = vmatprep.subr.mxu0 0.0
    %5142 = vmatpush1.msra.mxu0 %v5138
    %5143 = vmatprep.subr.mxu0 0.0
    %5144 = vmatpush1.msra.mxu0 0.0
    %5145 = vmatprep.subr.mxu0 0.0
    %5146 = vmatpush1.msra.mxu0 0.0
    %5147 = vmatprep.subr.mxu0 0.0
    %5148 = vmatpush1.msra.mxu0 0.0
    %5149 = vmatprep.subr.mxu0 0.0
    %5150 = vmatpush1.msra.mxu0 0.0
    %5151 = vmatprep.subr.mxu0 0.0
    %5152 = vmatpush1.msra.mxu0 0.0
    %5153 = vmatprep.subr.mxu0 0.0
    %5154 = vmatpush1.msra.mxu0 0.0
    %5155 = vmatprep.subr.mxu0 0.0
    %5156 = vmatpush1.msra.mxu0 0.0
    %5157 = vmatprep.subr.mxu0 0.0
    %5158 = vmatpush1.msra.mxu0 0.0
    %5159 = vmatprep.subr.mxu0 0.0
    %5160 = vmatpush1.msra.mxu0 0.0
    %5161 = vmatprep.subr.mxu0 0.0
    %5162 = vmatpush1.msra.mxu0 0.0
    %5163 = vmatprep.subr.mxu0 0.0
    %5164 = vmatpush1.msra.mxu0 0.0
    %5165 = vmatprep.subr.mxu0 0.0
    %5166 = vmatpush1.msra.mxu0 0.0
    %5167 = vmatprep.subr.mxu0 0.0
    %5168 = vmatpush1.msra.mxu0 0.0
    %5169 = vmatprep.subr.mxu0 0.0
    %5170 = vmatpush1.msra.mxu0 0.0
    %5171 = vmatprep.subr.mxu0 0.0
    %5172 = vmatpush1.msra.mxu0 0.0
    %5173 = vmatprep.subr.mxu0 0.0
    %5174 = vmatpush1.msra.mxu0 0.0
    %5175 = vmatprep.subr.mxu0 0.0
    %5176 = vmatpush1.msra.mxu0 0.0
    %5177 = vmatprep.subr.mxu0 0.0
    %5178 = vmatpush1.msra.mxu0 0.0
    %5179 = vmatprep.subr.mxu0 0.0
    %5180 = vmatpush1.msra.mxu0 0.0
    %5181 = vmatprep.subr.mxu0 0.0
    %5182 = vmatpush1.msra.mxu0 0.0
    %5183 = vmatprep.subr.mxu0 0.0
    %5184 = vmatpush1.msra.mxu0 0.0
    %5185 = vmatprep.subr.mxu0 0.0
    %5186 = vmatpush1.msra.mxu0 0.0
    %5187 = vmatprep.subr.mxu0 0.0
    %5188 = vmatpush1.msra.mxu0 0.0
    %5189 = vmatprep.subr.mxu0 0.0
    %5190 = vmatpush1.msra.mxu0 0.0
    %5191 = vmatprep.subr.mxu0 0.0
    %5192 = vmatpush1.msra.mxu0 0.0
    %5193 = vmatprep.subr.mxu0 0.0
    %5194 = vmatpush1.msra.mxu0 0.0
    %5195 = vmatprep.subr.mxu0 0.0
    %5196 = vmatpush1.msra.mxu0 0.0
    %5197 = vmatprep.subr.mxu0 0.0
    %5198 = vmatpush1.msra.mxu0 0.0
    %5199 = vmatprep.subr.mxu0 0.0
    %5200 = vmatpush1.msra.mxu0 0.0
    %5201 = vmatprep.subr.mxu0 0.0
    %5202 = vmatpush1.msra.mxu0 0.0
    %5203 = vmatprep.mubr.f32.mxu0 0.0
    %5204 = vmatmul.mubr.f32.gmra.mrb[0].mxu0 %v4679
    %v5205 = vpop.f32.mrb[0].mxu0
    %v5206 = vadd.f32 0.0, %v5205
    %v5207 = vpop.f32.mrb[0].mxu0
    %5208 = vmatprep.mubr.f32.mxu0 0.0
    %5209 = vmatmul.mubr.f32.gmra.mrb[0].mxu0 %v4682
    %v5210 = vpop.f32.mrb[0].mxu0
    %v5211 = vadd.f32 0.0, %v5210
    %v5212 = vpop.f32.mrb[0].mxu0
    %5213 = vmatprep.mubr.f32.mxu0 0.0
    %5214 = vmatmul.mubr.f32.gmra.mrb[0].mxu0 %v4685
    %v5215 = vpop.f32.mrb[0].mxu0
    %v5216 = vadd.f32 0.0, %v5215
    %v5217 = vpop.f32.mrb[0].mxu0
    %5218 = vmatprep.mubr.f32.mxu0 0.0
    %5219 = vmatmul.mubr.f32.gmra.mrb[0].mxu0 %v4688
    %v5220 = vpop.f32.mrb[0].mxu0
    %v5221 = vadd.f32 0.0, %v5220
    %v5222 = vpop.f32.mrb[0].mxu0
    %5223 = vmatprep.mubr.f32.mxu0 0.0
    %5224 = vmatmul.mubr.f32.gmra.mrb[0].mxu0 %v4691
    %v5225 = vpop.f32.mrb[0].mxu0
    %v5226 = vadd.f32 0.0, %v5225
    %v5227 = vpop.f32.mrb[0].mxu0
    %5228 = vmatprep.mubr.f32.mxu0 0.0
    %5229 = vmatmul.mubr.f32.gmra.mrb[0].mxu0 %v4694
    %v5230 = vpop.f32.mrb[0].mxu0
    %v5231 = vadd.f32 0.0, %v5230
    %v5232 = vpop.f32.mrb[0].mxu0
    %5233 = vmatprep.mubr.f32.mxu0 0.0
    %5234 = vmatmul.mubr.f32.gmra.mrb[0].mxu0 %v4697
    %v5235 = vpop.f32.mrb[0].mxu0
    %v5236 = vadd.f32 0.0, %v5235
    %v5237 = vpop.f32.mrb[0].mxu0
    %5238 = vmatprep.mubr.f32.mxu0 0.0
    %5239 = vmatmul.mubr.f32.gmra.mrb[0].mxu0 %v4700
    %v5240 = vpop.f32.mrb[0].mxu0
    %v5241 = vadd.f32 0.0, %v5240
    %v5242 = vpop.f32.mrb[0].mxu0
    %5243 = vmatprep.mubr.f32.mxu0 0.0
    %5244 = vmatmul.mubr.f32.gmra.mrb[0].mxu0 %v4703
    %v5245 = vpop.f32.mrb[0].mxu0
    %v5246 = vadd.f32 0.0, %v5245
    %v5247 = vpop.f32.mrb[0].mxu0
    %5248 = vmatprep.mubr.f32.mxu0 0.0
    %5249 = vmatmul.mubr.f32.gmra.mrb[0].mxu0 %v4706
    %v5250 = vpop.f32.mrb[0].mxu0
    %v5251 = vadd.f32 0.0, %v5250
    %v5252 = vpop.f32.mrb[0].mxu0
    %5253 = vmatprep.mubr.f32.mxu0 0.0
    %5254 = vmatmul.mubr.f32.gmra.mrb[0].mxu0 %v4709
    %v5255 = vpop.f32.mrb[0].mxu0
    %v5256 = vadd.f32 0.0, %v5255
    %v5257 = vpop.f32.mrb[0].mxu0
    %5258 = vmatprep.mubr.f32.mxu0 0.0
    %5259 = vmatmul.mubr.f32.gmra.mrb[0].mxu0 %v4712
    %v5260 = vpop.f32.mrb[0].mxu0
    %v5261 = vadd.f32 0.0, %v5260
    %v5262 = vpop.f32.mrb[0].mxu0
    %5263 = vmatprep.mubr.f32.mxu0 0.0
    %5264 = vmatmul.mubr.f32.gmra.mrb[0].mxu0 %v4715
    %v5265 = vpop.f32.mrb[0].mxu0
    %v5266 = vadd.f32 0.0, %v5265
    %v5267 = vpop.f32.mrb[0].mxu0
    %5268 = vmatprep.mubr.f32.mxu0 0.0
    %5269 = vmatmul.mubr.f32.gmra.mrb[0].mxu0 %v4718
    %v5270 = vpop.f32.mrb[0].mxu0
    %v5271 = vadd.f32 0.0, %v5270
    %v5272 = vpop.f32.mrb[0].mxu0
    %5273 = vmatprep.mubr.f32.mxu0 0.0
    %5274 = vmatmul.mubr.f32.gmra.mrb[0].mxu0 %v4721
    %v5275 = vpop.f32.mrb[0].mxu0
    %v5276 = vadd.f32 0.0, %v5275
    %v5277 = vpop.f32.mrb[0].mxu0
    %5278 = vmatprep.mubr.f32.mxu0 0.0
    %5279 = vmatmul.mubr.f32.gmra.mrb[0].mxu0 %v4724
    %v5280 = vpop.f32.mrb[0].mxu0
    %v5281 = vadd.f32 0.0, %v5280
    %v5282 = vpop.f32.mrb[0].mxu0
    %5283 = vmatprep.mubr.f32.mxu0 0.0
    %5284 = vmatmul.mubr.f32.gmra.mrb[0].mxu0 %v4727
    %v5285 = vpop.f32.mrb[0].mxu0
    %v5286 = vadd.f32 0.0, %v5285
    %v5287 = vpop.f32.mrb[0].mxu0
    %5288 = vmatprep.mubr.f32.mxu0 0.0
    %5289 = vmatmul.mubr.f32.gmra.mrb[0].mxu0 %v4730
    %v5290 = vpop.f32.mrb[0].mxu0
    %v5291 = vadd.f32 0.0, %v5290
    %v5292 = vpop.f32.mrb[0].mxu0
    %5293 = vmatprep.mubr.f32.mxu0 0.0
    %5294 = vmatmul.mubr.f32.gmra.mrb[0].mxu0 %v4733
    %v5295 = vpop.f32.mrb[0].mxu0
    %v5296 = vadd.f32 0.0, %v5295
    %v5297 = vpop.f32.mrb[0].mxu0
    %5298 = vmatprep.mubr.f32.mxu0 0.0
    %5299 = vmatmul.mubr.f32.gmra.mrb[0].mxu0 %v4736
    %v5300 = vpop.f32.mrb[0].mxu0
    %v5301 = vadd.f32 0.0, %v5300
    %v5302 = vpop.f32.mrb[0].mxu0
    %5303 = vmatprep.mubr.f32.mxu0 0.0
    %5304 = vmatmul.mubr.f32.gmra.mrb[0].mxu0 %v4739
    %v5305 = vpop.f32.mrb[0].mxu0
    %v5306 = vadd.f32 0.0, %v5305
    %v5307 = vpop.f32.mrb[0].mxu0
    %5308 = vmatprep.mubr.f32.mxu0 0.0
    %5309 = vmatmul.mubr.f32.gmra.mrb[0].mxu0 %v4742
    %v5310 = vpop.f32.mrb[0].mxu0
    %v5311 = vadd.f32 0.0, %v5310
    %v5312 = vpop.f32.mrb[0].mxu0
    %5313 = vmatprep.mubr.f32.mxu0 0.0
    %5314 = vmatmul.mubr.f32.gmra.mrb[0].mxu0 %v4745
    %v5315 = vpop.f32.mrb[0].mxu0
    %v5316 = vadd.f32 0.0, %v5315
    %v5317 = vpop.f32.mrb[0].mxu0
    %5318 = vmatprep.mubr.f32.mxu0 0.0
    %5319 = vmatmul.mubr.f32.gmra.mrb[0].mxu0 %v4748
    %v5320 = vpop.f32.mrb[0].mxu0
    %v5321 = vadd.f32 0.0, %v5320
    %v5322 = vpop.f32.mrb[0].mxu0
    %5323 = vmatprep.mubr.f32.mxu0 0.0
    %5324 = vmatmul.mubr.f32.gmra.mrb[0].mxu0 %v4751
    %v5325 = vpop.f32.mrb[0].mxu0
    %v5326 = vadd.f32 0.0, %v5325
    %v5327 = vpop.f32.mrb[0].mxu0
    %5328 = vdwg.mxu0
    %s5329 = scalar_lea.vmem [#allocation5], 48
    %v5330 = vld [vmem:[%s5329] sm:$0xff]
    %v5331 = vld [vmem:[%s5329 + $0x8] sm:$0xff]
    %5332 = vmatprep.subr.mxu0 0.0
    %5333 = vmatpush1.msra.mxu0 %v5330
    %5334 = vmatprep.subr.mxu0 0.0
    %5335 = vmatpush1.msra.mxu0 %v5331
    %5336 = vmatprep.subr.mxu0 0.0
    %5337 = vmatpush1.msra.mxu0 0.0
    %5338 = vmatprep.subr.mxu0 0.0
    %5339 = vmatpush1.msra.mxu0 0.0
    %5340 = vmatprep.subr.mxu0 0.0
    %5341 = vmatpush1.msra.mxu0 0.0
    %5342 = vmatprep.subr.mxu0 0.0
    %5343 = vmatpush1.msra.mxu0 0.0
    %5344 = vmatprep.subr.mxu0 0.0
    %5345 = vmatpush1.msra.mxu0 0.0
    %5346 = vmatprep.subr.mxu0 0.0
    %5347 = vmatpush1.msra.mxu0 0.0
    %5348 = vmatprep.subr.mxu0 0.0
    %5349 = vmatpush1.msra.mxu0 0.0
    %5350 = vmatprep.subr.mxu0 0.0
    %5351 = vmatpush1.msra.mxu0 0.0
    %5352 = vmatprep.subr.mxu0 0.0
    %5353 = vmatpush1.msra.mxu0 0.0
    %5354 = vmatprep.subr.mxu0 0.0
    %5355 = vmatpush1.msra.mxu0 0.0
    %5356 = vmatprep.subr.mxu0 0.0
    %5357 = vmatpush1.msra.mxu0 0.0
    %5358 = vmatprep.subr.mxu0 0.0
    %5359 = vmatpush1.msra.mxu0 0.0
    %5360 = vmatprep.subr.mxu0 0.0
    %5361 = vmatpush1.msra.mxu0 0.0
    %5362 = vmatprep.subr.mxu0 0.0
    %5363 = vmatpush1.msra.mxu0 0.0
    %5364 = vmatprep.subr.mxu0 0.0
    %5365 = vmatpush1.msra.mxu0 0.0
    %5366 = vmatprep.subr.mxu0 0.0
    %5367 = vmatpush1.msra.mxu0 0.0
    %5368 = vmatprep.subr.mxu0 0.0
    %5369 = vmatpush1.msra.mxu0 0.0
    %5370 = vmatprep.subr.mxu0 0.0
    %5371 = vmatpush1.msra.mxu0 0.0
    %5372 = vmatprep.subr.mxu0 0.0
    %5373 = vmatpush1.msra.mxu0 0.0
    %5374 = vmatprep.subr.mxu0 0.0
    %5375 = vmatpush1.msra.mxu0 0.0
    %5376 = vmatprep.subr.mxu0 0.0
    %5377 = vmatpush1.msra.mxu0 0.0
    %5378 = vmatprep.subr.mxu0 0.0
    %5379 = vmatpush1.msra.mxu0 0.0
    %5380 = vmatprep.subr.mxu0 0.0
    %5381 = vmatpush1.msra.mxu0 0.0
    %5382 = vmatprep.subr.mxu0 0.0
    %5383 = vmatpush1.msra.mxu0 0.0
    %5384 = vmatprep.subr.mxu0 0.0
    %5385 = vmatpush1.msra.mxu0 0.0
    %5386 = vmatprep.subr.mxu0 0.0
    %5387 = vmatpush1.msra.mxu0 0.0
    %5388 = vmatprep.subr.mxu0 0.0
    %5389 = vmatpush1.msra.mxu0 0.0
    %5390 = vmatprep.subr.mxu0 0.0
    %5391 = vmatpush1.msra.mxu0 0.0
    %5392 = vmatprep.subr.mxu0 0.0
    %5393 = vmatpush1.msra.mxu0 0.0
    %5394 = vmatprep.subr.mxu0 0.0
    %5395 = vmatpush1.msra.mxu0 0.0
    %5396 = vmatprep.mubr.f32.mxu0 0.0
    %5397 = vmatmul.mubr.f32.gmra.mrb[0].mxu0 %v4679
    %v5398 = vpop.f32.mrb[0].mxu0
    %v5399 = vadd.f32 0.0, %v5398
    %v5400 = vpop.f32.mrb[0].mxu0
    %5401 = vmatprep.mubr.f32.mxu0 0.0
    %5402 = vmatmul.mubr.f32.gmra.mrb[0].mxu0 %v4682
    %v5403 = vpop.f32.mrb[0].mxu0
    %v5404 = vadd.f32 0.0, %v5403
    %v5405 = vpop.f32.mrb[0].mxu0
    %5406 = vmatprep.mubr.f32.mxu0 0.0
    %5407 = vmatmul.mubr.f32.gmra.mrb[0].mxu0 %v4685
    %v5408 = vpop.f32.mrb[0].mxu0
    %v5409 = vadd.f32 0.0, %v5408
    %v5410 = vpop.f32.mrb[0].mxu0
    %5411 = vmatprep.mubr.f32.mxu0 0.0
    %5412 = vmatmul.mubr.f32.gmra.mrb[0].mxu0 %v4688
    %v5413 = vpop.f32.mrb[0].mxu0
    %v5414 = vadd.f32 0.0, %v5413
    %v5415 = vpop.f32.mrb[0].mxu0
    %5416 = vmatprep.mubr.f32.mxu0 0.0
    %5417 = vmatmul.mubr.f32.gmra.mrb[0].mxu0 %v4691
    %v5418 = vpop.f32.mrb[0].mxu0
    %v5419 = vadd.f32 0.0, %v5418
    %v5420 = vpop.f32.mrb[0].mxu0
    %5421 = vmatprep.mubr.f32.mxu0 0.0
    %5422 = vmatmul.mubr.f32.gmra.mrb[0].mxu0 %v4694
    %v5423 = vpop.f32.mrb[0].mxu0
    %v5424 = vadd.f32 0.0, %v5423
    %v5425 = vpop.f32.mrb[0].mxu0
    %5426 = vmatprep.mubr.f32.mxu0 0.0
    %5427 = vmatmul.mubr.f32.gmra.mrb[0].mxu0 %v4697
    %v5428 = vpop.f32.mrb[0].mxu0
    %v5429 = vadd.f32 0.0, %v5428
    %v5430 = vpop.f32.mrb[0].mxu0
    %5431 = vmatprep.mubr.f32.mxu0 0.0
    %5432 = vmatmul.mubr.f32.gmra.mrb[0].mxu0 %v4700
    %v5433 = vpop.f32.mrb[0].mxu0
    %v5434 = vadd.f32 0.0, %v5433
    %v5435 = vpop.f32.mrb[0].mxu0
    %5436 = vmatprep.mubr.f32.mxu0 0.0
    %5437 = vmatmul.mubr.f32.gmra.mrb[0].mxu0 %v4703
    %v5438 = vpop.f32.mrb[0].mxu0
    %v5439 = vadd.f32 0.0, %v5438
    %v5440 = vpop.f32.mrb[0].mxu0
    %5441 = vmatprep.mubr.f32.mxu0 0.0
    %5442 = vmatmul.mubr.f32.gmra.mrb[0].mxu0 %v4706
    %v5443 = vpop.f32.mrb[0].mxu0
    %v5444 = vadd.f32 0.0, %v5443
    %v5445 = vpop.f32.mrb[0].mxu0
    %5446 = vmatprep.mubr.f32.mxu0 0.0
    %5447 = vmatmul.mubr.f32.gmra.mrb[0].mxu0 %v4709
    %v5448 = vpop.f32.mrb[0].mxu0
    %v5449 = vadd.f32 0.0, %v5448
    %v5450 = vpop.f32.mrb[0].mxu0
    %5451 = vmatprep.mubr.f32.mxu0 0.0
    %5452 = vmatmul.mubr.f32.gmra.mrb[0].mxu0 %v4712
    %v5453 = vpop.f32.mrb[0].mxu0
    %v5454 = vadd.f32 0.0, %v5453
    %v5455 = vpop.f32.mrb[0].mxu0
    %5456 = vmatprep.mubr.f32.mxu0 0.0
    %5457 = vmatmul.mubr.f32.gmra.mrb[0].mxu0 %v4715
    %v5458 = vpop.f32.mrb[0].mxu0
    %v5459 = vadd.f32 0.0, %v5458
    %v5460 = vpop.f32.mrb[0].mxu0
    %5461 = vmatprep.mubr.f32.mxu0 0.0
    %5462 = vmatmul.mubr.f32.gmra.mrb[0].mxu0 %v4718
    %v5463 = vpop.f32.mrb[0].mxu0
    %v5464 = vadd.f32 0.0, %v5463
    %v5465 = vpop.f32.mrb[0].mxu0
    %5466 = vmatprep.mubr.f32.mxu0 0.0
    %5467 = vmatmul.mubr.f32.gmra.mrb[0].mxu0 %v4721
    %v5468 = vpop.f32.mrb[0].mxu0
    %v5469 = vadd.f32 0.0, %v5468
    %v5470 = vpop.f32.mrb[0].mxu0
    %5471 = vmatprep.mubr.f32.mxu0 0.0
    %5472 = vmatmul.mubr.f32.gmra.mrb[0].mxu0 %v4724
    %v5473 = vpop.f32.mrb[0].mxu0
    %v5474 = vadd.f32 0.0, %v5473
    %v5475 = vpop.f32.mrb[0].mxu0
    %5476 = vmatprep.mubr.f32.mxu0 0.0
    %5477 = vmatmul.mubr.f32.gmra.mrb[0].mxu0 %v4727
    %v5478 = vpop.f32.mrb[0].mxu0
    %v5479 = vadd.f32 0.0, %v5478
    %v5480 = vpop.f32.mrb[0].mxu0
    %5481 = vmatprep.mubr.f32.mxu0 0.0
    %5482 = vmatmul.mubr.f32.gmra.mrb[0].mxu0 %v4730
    %v5483 = vpop.f32.mrb[0].mxu0
    %v5484 = vadd.f32 0.0, %v5483
    %v5485 = vpop.f32.mrb[0].mxu0
    %5486 = vmatprep.mubr.f32.mxu0 0.0
    %5487 = vmatmul.mubr.f32.gmra.mrb[0].mxu0 %v4733
    %v5488 = vpop.f32.mrb[0].mxu0
    %v5489 = vadd.f32 0.0, %v5488
    %v5490 = vpop.f32.mrb[0].mxu0
    %5491 = vmatprep.mubr.f32.mxu0 0.0
    %5492 = vmatmul.mubr.f32.gmra.mrb[0].mxu0 %v4736
    %v5493 = vpop.f32.mrb[0].mxu0
    %v5494 = vadd.f32 0.0, %v5493
    %v5495 = vpop.f32.mrb[0].mxu0
    %5496 = vmatprep.mubr.f32.mxu0 0.0
    %5497 = vmatmul.mubr.f32.gmra.mrb[0].mxu0 %v4739
    %v5498 = vpop.f32.mrb[0].mxu0
    %v5499 = vadd.f32 0.0, %v5498
    %v5500 = vpop.f32.mrb[0].mxu0
    %5501 = vmatprep.mubr.f32.mxu0 0.0
    %5502 = vmatmul.mubr.f32.gmra.mrb[0].mxu0 %v4742
    %v5503 = vpop.f32.mrb[0].mxu0
    %v5504 = vadd.f32 0.0, %v5503
    %v5505 = vpop.f32.mrb[0].mxu0
    %5506 = vmatprep.mubr.f32.mxu0 0.0
    %5507 = vmatmul.mubr.f32.gmra.mrb[0].mxu0 %v4745
    %v5508 = vpop.f32.mrb[0].mxu0
    %v5509 = vadd.f32 0.0, %v5508
    %v5510 = vpop.f32.mrb[0].mxu0
    %5511 = vmatprep.mubr.f32.mxu0 0.0
    %5512 = vmatmul.mubr.f32.gmra.mrb[0].mxu0 %v4748
    %v5513 = vpop.f32.mrb[0].mxu0
    %v5514 = vadd.f32 0.0, %v5513
    %v5515 = vpop.f32.mrb[0].mxu0
    %5516 = vmatprep.mubr.f32.mxu0 0.0
    %5517 = vmatmul.mubr.f32.gmra.mrb[0].mxu0 %v4751
    %v5518 = vpop.f32.mrb[0].mxu0
    %v5519 = vadd.f32 0.0, %v5518
    %v5520 = vpop.f32.mrb[0].mxu0
    %5521 = vdwg.mxu0
    %s5522 = scalar_lea.vmem [#allocation5], 64
    %v5523 = vld [vmem:[%s5522] sm:$0xff]
    %v5524 = vld [vmem:[%s5522 + $0x8] sm:$0xff]
    %5525 = vmatprep.subr.mxu0 0.0
    %5526 = vmatpush1.msra.mxu0 %v5523
    %5527 = vmatprep.subr.mxu0 0.0
    %5528 = vmatpush1.msra.mxu0 %v5524
    %5529 = vmatprep.subr.mxu0 0.0
    %5530 = vmatpush1.msra.mxu0 0.0
    %5531 = vmatprep.subr.mxu0 0.0
    %5532 = vmatpush1.msra.mxu0 0.0
    %5533 = vmatprep.subr.mxu0 0.0
    %5534 = vmatpush1.msra.mxu0 0.0
    %5535 = vmatprep.subr.mxu0 0.0
    %5536 = vmatpush1.msra.mxu0 0.0
    %5537 = vmatprep.subr.mxu0 0.0
    %5538 = vmatpush1.msra.mxu0 0.0
    %5539 = vmatprep.subr.mxu0 0.0
    %5540 = vmatpush1.msra.mxu0 0.0
    %5541 = vmatprep.subr.mxu0 0.0
    %5542 = vmatpush1.msra.mxu0 0.0
    %5543 = vmatprep.subr.mxu0 0.0
    %5544 = vmatpush1.msra.mxu0 0.0
    %5545 = vmatprep.subr.mxu0 0.0
    %5546 = vmatpush1.msra.mxu0 0.0
    %5547 = vmatprep.subr.mxu0 0.0
    %5548 = vmatpush1.msra.mxu0 0.0
    %5549 = vmatprep.subr.mxu0 0.0
    %5550 = vmatpush1.msra.mxu0 0.0
    %5551 = vmatprep.subr.mxu0 0.0
    %5552 = vmatpush1.msra.mxu0 0.0
    %5553 = vmatprep.subr.mxu0 0.0
    %5554 = vmatpush1.msra.mxu0 0.0
    %5555 = vmatprep.subr.mxu0 0.0
    %5556 = vmatpush1.msra.mxu0 0.0
    %5557 = vmatprep.subr.mxu0 0.0
    %5558 = vmatpush1.msra.mxu0 0.0
    %5559 = vmatprep.subr.mxu0 0.0
    %5560 = vmatpush1.msra.mxu0 0.0
    %5561 = vmatprep.subr.mxu0 0.0
    %5562 = vmatpush1.msra.mxu0 0.0
    %5563 = vmatprep.subr.mxu0 0.0
    %5564 = vmatpush1.msra.mxu0 0.0
    %5565 = vmatprep.subr.mxu0 0.0
    %5566 = vmatpush1.msra.mxu0 0.0
    %5567 = vmatprep.subr.mxu0 0.0
    %5568 = vmatpush1.msra.mxu0 0.0
    %5569 = vmatprep.subr.mxu0 0.0
    %5570 = vmatpush1.msra.mxu0 0.0
    %5571 = vmatprep.subr.mxu0 0.0
    %5572 = vmatpush1.msra.mxu0 0.0
    %5573 = vmatprep.subr.mxu0 0.0
    %5574 = vmatpush1.msra.mxu0 0.0
    %5575 = vmatprep.subr.mxu0 0.0
    %5576 = vmatpush1.msra.mxu0 0.0
    %5577 = vmatprep.subr.mxu0 0.0
    %5578 = vmatpush1.msra.mxu0 0.0
    %5579 = vmatprep.subr.mxu0 0.0
    %5580 = vmatpush1.msra.mxu0 0.0
    %5581 = vmatprep.subr.mxu0 0.0
    %5582 = vmatpush1.msra.mxu0 0.0
    %5583 = vmatprep.subr.mxu0 0.0
    %5584 = vmatpush1.msra.mxu0 0.0
    %5585 = vmatprep.subr.mxu0 0.0
    %5586 = vmatpush1.msra.mxu0 0.0
    %5587 = vmatprep.subr.mxu0 0.0
    %5588 = vmatpush1.msra.mxu0 0.0
    %5589 = vmatprep.mubr.f32.mxu0 0.0
    %5590 = vmatmul.mubr.f32.gmra.mrb[0].mxu0 %v4679
    %v5591 = vpop.f32.mrb[0].mxu0
    %v5592 = vadd.f32 0.0, %v5591
    %v5593 = vpop.f32.mrb[0].mxu0
    %5594 = vmatprep.mubr.f32.mxu0 0.0
    %5595 = vmatmul.mubr.f32.gmra.mrb[0].mxu0 %v4682
    %v5596 = vpop.f32.mrb[0].mxu0
    %v5597 = vadd.f32 0.0, %v5596
    %v5598 = vpop.f32.mrb[0].mxu0
    %5599 = vmatprep.mubr.f32.mxu0 0.0
    %5600 = vmatmul.mubr.f32.gmra.mrb[0].mxu0 %v4685
    %v5601 = vpop.f32.mrb[0].mxu0
    %v5602 = vadd.f32 0.0, %v5601
    %v5603 = vpop.f32.mrb[0].mxu0
    %5604 = vmatprep.mubr.f32.mxu0 0.0
    %5605 = vmatmul.mubr.f32.gmra.mrb[0].mxu0 %v4688
    %v5606 = vpop.f32.mrb[0].mxu0
    %v5607 = vadd.f32 0.0, %v5606
    %v5608 = vpop.f32.mrb[0].mxu0
    %5609 = vmatprep.mubr.f32.mxu0 0.0
    %5610 = vmatmul.mubr.f32.gmra.mrb[0].mxu0 %v4691
    %v5611 = vpop.f32.mrb[0].mxu0
    %v5612 = vadd.f32 0.0, %v5611
    %v5613 = vpop.f32.mrb[0].mxu0
    %5614 = vmatprep.mubr.f32.mxu0 0.0
    %5615 = vmatmul.mubr.f32.gmra.mrb[0].mxu0 %v4694
    %v5616 = vpop.f32.mrb[0].mxu0
    %v5617 = vadd.f32 0.0, %v5616
    %v5618 = vpop.f32.mrb[0].mxu0
    %5619 = vmatprep.mubr.f32.mxu0 0.0
    %5620 = vmatmul.mubr.f32.gmra.mrb[0].mxu0 %v4697
    %v5621 = vpop.f32.mrb[0].mxu0
    %v5622 = vadd.f32 0.0, %v5621
    %v5623 = vpop.f32.mrb[0].mxu0
    %5624 = vmatprep.mubr.f32.mxu0 0.0
    %5625 = vmatmul.mubr.f32.gmra.mrb[0].mxu0 %v4700
    %v5626 = vpop.f32.mrb[0].mxu0
    %v5627 = vadd.f32 0.0, %v5626
    %v5628 = vpop.f32.mrb[0].mxu0
    %5629 = vmatprep.mubr.f32.mxu0 0.0
    %5630 = vmatmul.mubr.f32.gmra.mrb[0].mxu0 %v4703
    %v5631 = vpop.f32.mrb[0].mxu0
    %v5632 = vadd.f32 0.0, %v5631
    %v5633 = vpop.f32.mrb[0].mxu0
    %5634 = vmatprep.mubr.f32.mxu0 0.0
    %5635 = vmatmul.mubr.f32.gmra.mrb[0].mxu0 %v4706
    %v5636 = vpop.f32.mrb[0].mxu0
    %v5637 = vadd.f32 0.0, %v5636
    %v5638 = vpop.f32.mrb[0].mxu0
    %5639 = vmatprep.mubr.f32.mxu0 0.0
    %5640 = vmatmul.mubr.f32.gmra.mrb[0].mxu0 %v4709
    %v5641 = vpop.f32.mrb[0].mxu0
    %v5642 = vadd.f32 0.0, %v5641
    %v5643 = vpop.f32.mrb[0].mxu0
    %5644 = vmatprep.mubr.f32.mxu0 0.0
    %5645 = vmatmul.mubr.f32.gmra.mrb[0].mxu0 %v4712
    %v5646 = vpop.f32.mrb[0].mxu0
    %v5647 = vadd.f32 0.0, %v5646
    %v5648 = vpop.f32.mrb[0].mxu0
    %5649 = vmatprep.mubr.f32.mxu0 0.0
    %5650 = vmatmul.mubr.f32.gmra.mrb[0].mxu0 %v4715
    %v5651 = vpop.f32.mrb[0].mxu0
    %v5652 = vadd.f32 0.0, %v5651
    %v5653 = vpop.f32.mrb[0].mxu0
    %5654 = vmatprep.mubr.f32.mxu0 0.0
    %5655 = vmatmul.mubr.f32.gmra.mrb[0].mxu0 %v4718
    %v5656 = vpop.f32.mrb[0].mxu0
    %v5657 = vadd.f32 0.0, %v5656
    %v5658 = vpop.f32.mrb[0].mxu0
    %5659 = vmatprep.mubr.f32.mxu0 0.0
    %5660 = vmatmul.mubr.f32.gmra.mrb[0].mxu0 %v4721
    %v5661 = vpop.f32.mrb[0].mxu0
    %v5662 = vadd.f32 0.0, %v5661
    %v5663 = vpop.f32.mrb[0].mxu0
    %5664 = vmatprep.mubr.f32.mxu0 0.0
    %5665 = vmatmul.mubr.f32.gmra.mrb[0].mxu0 %v4724
    %v5666 = vpop.f32.mrb[0].mxu0
    %v5667 = vadd.f32 0.0, %v5666
    %v5668 = vpop.f32.mrb[0].mxu0
    %5669 = vmatprep.mubr.f32.mxu0 0.0
    %5670 = vmatmul.mubr.f32.gmra.mrb[0].mxu0 %v4727
    %v5671 = vpop.f32.mrb[0].mxu0
    %v5672 = vadd.f32 0.0, %v5671
    %v5673 = vpop.f32.mrb[0].mxu0
    %5674 = vmatprep.mubr.f32.mxu0 0.0
    %5675 = vmatmul.mubr.f32.gmra.mrb[0].mxu0 %v4730
    %v5676 = vpop.f32.mrb[0].mxu0
    %v5677 = vadd.f32 0.0, %v5676
    %v5678 = vpop.f32.mrb[0].mxu0
    %5679 = vmatprep.mubr.f32.mxu0 0.0
    %5680 = vmatmul.mubr.f32.gmra.mrb[0].mxu0 %v4733
    %v5681 = vpop.f32.mrb[0].mxu0
    %v5682 = vadd.f32 0.0, %v5681
    %v5683 = vpop.f32.mrb[0].mxu0
    %5684 = vmatprep.mubr.f32.mxu0 0.0
    %5685 = vmatmul.mubr.f32.gmra.mrb[0].mxu0 %v4736
    %v5686 = vpop.f32.mrb[0].mxu0
    %v5687 = vadd.f32 0.0, %v5686
    %v5688 = vpop.f32.mrb[0].mxu0
    %5689 = vmatprep.mubr.f32.mxu0 0.0
    %5690 = vmatmul.mubr.f32.gmra.mrb[0].mxu0 %v4739
    %v5691 = vpop.f32.mrb[0].mxu0
    %v5692 = vadd.f32 0.0, %v5691
    %v5693 = vpop.f32.mrb[0].mxu0
    %5694 = vmatprep.mubr.f32.mxu0 0.0
    %5695 = vmatmul.mubr.f32.gmra.mrb[0].mxu0 %v4742
    %v5696 = vpop.f32.mrb[0].mxu0
    %v5697 = vadd.f32 0.0, %v5696
    %v5698 = vpop.f32.mrb[0].mxu0
    %5699 = vmatprep.mubr.f32.mxu0 0.0
    %5700 = vmatmul.mubr.f32.gmra.mrb[0].mxu0 %v4745
    %v5701 = vpop.f32.mrb[0].mxu0
    %v5702 = vadd.f32 0.0, %v5701
    %v5703 = vpop.f32.mrb[0].mxu0
    %5704 = vmatprep.mubr.f32.mxu0 0.0
    %5705 = vmatmul.mubr.f32.gmra.mrb[0].mxu0 %v4748
    %v5706 = vpop.f32.mrb[0].mxu0
    %v5707 = vadd.f32 0.0, %v5706
    %v5708 = vpop.f32.mrb[0].mxu0
    %5709 = vmatprep.mubr.f32.mxu0 0.0
    %5710 = vmatmul.mubr.f32.gmra.mrb[0].mxu0 %v4751
    %v5711 = vpop.f32.mrb[0].mxu0
    %v5712 = vadd.f32 0.0, %v5711
    %v5713 = vpop.f32.mrb[0].mxu0
    %5714 = vdwg.mxu0
    %s5715 = scalar_lea.vmem [#allocation5], 80
    %v5716 = vld [vmem:[%s5715] sm:$0xff]
    %v5717 = vld [vmem:[%s5715 + $0x8] sm:$0xff]
    %5718 = vmatprep.subr.mxu0 0.0
    %5719 = vmatpush1.msra.mxu0 %v5716
    %5720 = vmatprep.subr.mxu0 0.0
    %5721 = vmatpush1.msra.mxu0 %v5717
    %5722 = vmatprep.subr.mxu0 0.0
    %5723 = vmatpush1.msra.mxu0 0.0
    %5724 = vmatprep.subr.mxu0 0.0
    %5725 = vmatpush1.msra.mxu0 0.0
    %5726 = vmatprep.subr.mxu0 0.0
    %5727 = vmatpush1.msra.mxu0 0.0
    %5728 = vmatprep.subr.mxu0 0.0
    %5729 = vmatpush1.msra.mxu0 0.0
    %5730 = vmatprep.subr.mxu0 0.0
    %5731 = vmatpush1.msra.mxu0 0.0
    %5732 = vmatprep.subr.mxu0 0.0
    %5733 = vmatpush1.msra.mxu0 0.0
    %5734 = vmatprep.subr.mxu0 0.0
    %5735 = vmatpush1.msra.mxu0 0.0
    %5736 = vmatprep.subr.mxu0 0.0
    %5737 = vmatpush1.msra.mxu0 0.0
    %5738 = vmatprep.subr.mxu0 0.0
    %5739 = vmatpush1.msra.mxu0 0.0
    %5740 = vmatprep.subr.mxu0 0.0
    %5741 = vmatpush1.msra.mxu0 0.0
    %5742 = vmatprep.subr.mxu0 0.0
    %5743 = vmatpush1.msra.mxu0 0.0
    %5744 = vmatprep.subr.mxu0 0.0
    %5745 = vmatpush1.msra.mxu0 0.0
    %5746 = vmatprep.subr.mxu0 0.0
    %5747 = vmatpush1.msra.mxu0 0.0
    %5748 = vmatprep.subr.mxu0 0.0
    %5749 = vmatpush1.msra.mxu0 0.0
    %5750 = vmatprep.subr.mxu0 0.0
    %5751 = vmatpush1.msra.mxu0 0.0
    %5752 = vmatprep.subr.mxu0 0.0
    %5753 = vmatpush1.msra.mxu0 0.0
    %5754 = vmatprep.subr.mxu0 0.0
    %5755 = vmatpush1.msra.mxu0 0.0
    %5756 = vmatprep.subr.mxu0 0.0
    %5757 = vmatpush1.msra.mxu0 0.0
    %5758 = vmatprep.subr.mxu0 0.0
    %5759 = vmatpush1.msra.mxu0 0.0
    %5760 = vmatprep.subr.mxu0 0.0
    %5761 = vmatpush1.msra.mxu0 0.0
    %5762 = vmatprep.subr.mxu0 0.0
    %5763 = vmatpush1.msra.mxu0 0.0
    %5764 = vmatprep.subr.mxu0 0.0
    %5765 = vmatpush1.msra.mxu0 0.0
    %5766 = vmatprep.subr.mxu0 0.0
    %5767 = vmatpush1.msra.mxu0 0.0
    %5768 = vmatprep.subr.mxu0 0.0
    %5769 = vmatpush1.msra.mxu0 0.0
    %5770 = vmatprep.subr.mxu0 0.0
    %5771 = vmatpush1.msra.mxu0 0.0
    %5772 = vmatprep.subr.mxu0 0.0
    %5773 = vmatpush1.msra.mxu0 0.0
    %5774 = vmatprep.subr.mxu0 0.0
    %5775 = vmatpush1.msra.mxu0 0.0
    %5776 = vmatprep.subr.mxu0 0.0
    %5777 = vmatpush1.msra.mxu0 0.0
    %5778 = vmatprep.subr.mxu0 0.0
    %5779 = vmatpush1.msra.mxu0 0.0
    %5780 = vmatprep.subr.mxu0 0.0
    %5781 = vmatpush1.msra.mxu0 0.0
    %5782 = vmatprep.mubr.f32.mxu0 0.0
    %5783 = vmatmul.mubr.f32.gmra.mrb[0].mxu0 %v4679
    %v5784 = vpop.f32.mrb[0].mxu0
    %v5785 = vadd.f32 0.0, %v5784
    %v5786 = vpop.f32.mrb[0].mxu0
    %5787 = vmatprep.mubr.f32.mxu0 0.0
    %5788 = vmatmul.mubr.f32.gmra.mrb[0].mxu0 %v4682
    %v5789 = vpop.f32.mrb[0].mxu0
    %v5790 = vadd.f32 0.0, %v5789
    %v5791 = vpop.f32.mrb[0].mxu0
    %5792 = vmatprep.mubr.f32.mxu0 0.0
    %5793 = vmatmul.mubr.f32.gmra.mrb[0].mxu0 %v4685
    %v5794 = vpop.f32.mrb[0].mxu0
    %v5795 = vadd.f32 0.0, %v5794
    %v5796 = vpop.f32.mrb[0].mxu0
    %5797 = vmatprep.mubr.f32.mxu0 0.0
    %5798 = vmatmul.mubr.f32.gmra.mrb[0].mxu0 %v4688
    %v5799 = vpop.f32.mrb[0].mxu0
    %v5800 = vadd.f32 0.0, %v5799
    %v5801 = vpop.f32.mrb[0].mxu0
    %5802 = vmatprep.mubr.f32.mxu0 0.0
    %5803 = vmatmul.mubr.f32.gmra.mrb[0].mxu0 %v4691
    %v5804 = vpop.f32.mrb[0].mxu0
    %v5805 = vadd.f32 0.0, %v5804
    %v5806 = vpop.f32.mrb[0].mxu0
    %5807 = vmatprep.mubr.f32.mxu0 0.0
    %5808 = vmatmul.mubr.f32.gmra.mrb[0].mxu0 %v4694
    %v5809 = vpop.f32.mrb[0].mxu0
    %v5810 = vadd.f32 0.0, %v5809
    %v5811 = vpop.f32.mrb[0].mxu0
    %5812 = vmatprep.mubr.f32.mxu0 0.0
    %5813 = vmatmul.mubr.f32.gmra.mrb[0].mxu0 %v4697
    %v5814 = vpop.f32.mrb[0].mxu0
    %v5815 = vadd.f32 0.0, %v5814
    %v5816 = vpop.f32.mrb[0].mxu0
    %5817 = vmatprep.mubr.f32.mxu0 0.0
    %5818 = vmatmul.mubr.f32.gmra.mrb[0].mxu0 %v4700
    %v5819 = vpop.f32.mrb[0].mxu0
    %v5820 = vadd.f32 0.0, %v5819
    %v5821 = vpop.f32.mrb[0].mxu0
    %5822 = vmatprep.mubr.f32.mxu0 0.0
    %5823 = vmatmul.mubr.f32.gmra.mrb[0].mxu0 %v4703
    %v5824 = vpop.f32.mrb[0].mxu0
    %v5825 = vadd.f32 0.0, %v5824
    %v5826 = vpop.f32.mrb[0].mxu0
    %5827 = vmatprep.mubr.f32.mxu0 0.0
    %5828 = vmatmul.mubr.f32.gmra.mrb[0].mxu0 %v4706
    %v5829 = vpop.f32.mrb[0].mxu0
    %v5830 = vadd.f32 0.0, %v5829
    %v5831 = vpop.f32.mrb[0].mxu0
    %5832 = vmatprep.mubr.f32.mxu0 0.0
    %5833 = vmatmul.mubr.f32.gmra.mrb[0].mxu0 %v4709
    %v5834 = vpop.f32.mrb[0].mxu0
    %v5835 = vadd.f32 0.0, %v5834
    %v5836 = vpop.f32.mrb[0].mxu0
    %5837 = vmatprep.mubr.f32.mxu0 0.0
    %5838 = vmatmul.mubr.f32.gmra.mrb[0].mxu0 %v4712
    %v5839 = vpop.f32.mrb[0].mxu0
    %v5840 = vadd.f32 0.0, %v5839
    %v5841 = vpop.f32.mrb[0].mxu0
    %5842 = vmatprep.mubr.f32.mxu0 0.0
    %5843 = vmatmul.mubr.f32.gmra.mrb[0].mxu0 %v4715
    %v5844 = vpop.f32.mrb[0].mxu0
    %v5845 = vadd.f32 0.0, %v5844
    %v5846 = vpop.f32.mrb[0].mxu0
    %5847 = vmatprep.mubr.f32.mxu0 0.0
    %5848 = vmatmul.mubr.f32.gmra.mrb[0].mxu0 %v4718
    %v5849 = vpop.f32.mrb[0].mxu0
    %v5850 = vadd.f32 0.0, %v5849
    %v5851 = vpop.f32.mrb[0].mxu0
    %5852 = vmatprep.mubr.f32.mxu0 0.0
    %5853 = vmatmul.mubr.f32.gmra.mrb[0].mxu0 %v4721
    %v5854 = vpop.f32.mrb[0].mxu0
    %v5855 = vadd.f32 0.0, %v5854
    %v5856 = vpop.f32.mrb[0].mxu0
    %5857 = vmatprep.mubr.f32.mxu0 0.0
    %5858 = vmatmul.mubr.f32.gmra.mrb[0].mxu0 %v4724
    %v5859 = vpop.f32.mrb[0].mxu0
    %v5860 = vadd.f32 0.0, %v5859
    %v5861 = vpop.f32.mrb[0].mxu0
    %5862 = vmatprep.mubr.f32.mxu0 0.0
    %5863 = vmatmul.mubr.f32.gmra.mrb[0].mxu0 %v4727
    %v5864 = vpop.f32.mrb[0].mxu0
    %v5865 = vadd.f32 0.0, %v5864
    %v5866 = vpop.f32.mrb[0].mxu0
    %5867 = vmatprep.mubr.f32.mxu0 0.0
    %5868 = vmatmul.mubr.f32.gmra.mrb[0].mxu0 %v4730
    %v5869 = vpop.f32.mrb[0].mxu0
    %v5870 = vadd.f32 0.0, %v5869
    %v5871 = vpop.f32.mrb[0].mxu0
    %5872 = vmatprep.mubr.f32.mxu0 0.0
    %5873 = vmatmul.mubr.f32.gmra.mrb[0].mxu0 %v4733
    %v5874 = vpop.f32.mrb[0].mxu0
    %v5875 = vadd.f32 0.0, %v5874
    %v5876 = vpop.f32.mrb[0].mxu0
    %5877 = vmatprep.mubr.f32.mxu0 0.0
    %5878 = vmatmul.mubr.f32.gmra.mrb[0].mxu0 %v4736
    %v5879 = vpop.f32.mrb[0].mxu0
    %v5880 = vadd.f32 0.0, %v5879
    %v5881 = vpop.f32.mrb[0].mxu0
    %5882 = vmatprep.mubr.f32.mxu0 0.0
    %5883 = vmatmul.mubr.f32.gmra.mrb[0].mxu0 %v4739
    %v5884 = vpop.f32.mrb[0].mxu0
    %v5885 = vadd.f32 0.0, %v5884
    %v5886 = vpop.f32.mrb[0].mxu0
    %5887 = vmatprep.mubr.f32.mxu0 0.0
    %5888 = vmatmul.mubr.f32.gmra.mrb[0].mxu0 %v4742
    %v5889 = vpop.f32.mrb[0].mxu0
    %v5890 = vadd.f32 0.0, %v5889
    %v5891 = vpop.f32.mrb[0].mxu0
    %5892 = vmatprep.mubr.f32.mxu0 0.0
    %5893 = vmatmul.mubr.f32.gmra.mrb[0].mxu0 %v4745
    %v5894 = vpop.f32.mrb[0].mxu0
    %v5895 = vadd.f32 0.0, %v5894
    %v5896 = vpop.f32.mrb[0].mxu0
    %5897 = vmatprep.mubr.f32.mxu0 0.0
    %5898 = vmatmul.mubr.f32.gmra.mrb[0].mxu0 %v4748
    %v5899 = vpop.f32.mrb[0].mxu0
    %v5900 = vadd.f32 0.0, %v5899
    %v5901 = vpop.f32.mrb[0].mxu0
    %5902 = vmatprep.mubr.f32.mxu0 0.0
    %5903 = vmatmul.mubr.f32.gmra.mrb[0].mxu0 %v4751
    %v5904 = vpop.f32.mrb[0].mxu0
    %v5905 = vadd.f32 0.0, %v5904
    %v5906 = vpop.f32.mrb[0].mxu0
    %5907 = vdwg.mxu0
    %s5908 = scalar_lea.vmem [#allocation5], 96
    %v5909 = vld [vmem:[%s5908] sm:$0xff]
    %v5910 = vld [vmem:[%s5908 + $0x8] sm:$0xff]
    %5911 = vmatprep.subr.mxu0 0.0
    %5912 = vmatpush1.msra.mxu0 %v5909
    %5913 = vmatprep.subr.mxu0 0.0
    %5914 = vmatpush1.msra.mxu0 %v5910
    %5915 = vmatprep.subr.mxu0 0.0
    %5916 = vmatpush1.msra.mxu0 0.0
    %5917 = vmatprep.subr.mxu0 0.0
    %5918 = vmatpush1.msra.mxu0 0.0
    %5919 = vmatprep.subr.mxu0 0.0
    %5920 = vmatpush1.msra.mxu0 0.0
    %5921 = vmatprep.subr.mxu0 0.0
    %5922 = vmatpush1.msra.mxu0 0.0
    %5923 = vmatprep.subr.mxu0 0.0
    %5924 = vmatpush1.msra.mxu0 0.0
    %5925 = vmatprep.subr.mxu0 0.0
    %5926 = vmatpush1.msra.mxu0 0.0
    %5927 = vmatprep.subr.mxu0 0.0
    %5928 = vmatpush1.msra.mxu0 0.0
    %5929 = vmatprep.subr.mxu0 0.0
    %5930 = vmatpush1.msra.mxu0 0.0
    %5931 = vmatprep.subr.mxu0 0.0
    %5932 = vmatpush1.msra.mxu0 0.0
    %5933 = vmatprep.subr.mxu0 0.0
    %5934 = vmatpush1.msra.mxu0 0.0
    %5935 = vmatprep.subr.mxu0 0.0
    %5936 = vmatpush1.msra.mxu0 0.0
    %5937 = vmatprep.subr.mxu0 0.0
    %5938 = vmatpush1.msra.mxu0 0.0
    %5939 = vmatprep.subr.mxu0 0.0
    %5940 = vmatpush1.msra.mxu0 0.0
    %5941 = vmatprep.subr.mxu0 0.0
    %5942 = vmatpush1.msra.mxu0 0.0
    %5943 = vmatprep.subr.mxu0 0.0
    %5944 = vmatpush1.msra.mxu0 0.0
    %5945 = vmatprep.subr.mxu0 0.0
    %5946 = vmatpush1.msra.mxu0 0.0
    %5947 = vmatprep.subr.mxu0 0.0
    %5948 = vmatpush1.msra.mxu0 0.0
    %5949 = vmatprep.subr.mxu0 0.0
    %5950 = vmatpush1.msra.mxu0 0.0
    %5951 = vmatprep.subr.mxu0 0.0
    %5952 = vmatpush1.msra.mxu0 0.0
    %5953 = vmatprep.subr.mxu0 0.0
    %5954 = vmatpush1.msra.mxu0 0.0
    %5955 = vmatprep.subr.mxu0 0.0
    %5956 = vmatpush1.msra.mxu0 0.0
    %5957 = vmatprep.subr.mxu0 0.0
    %5958 = vmatpush1.msra.mxu0 0.0
    %5959 = vmatprep.subr.mxu0 0.0
    %5960 = vmatpush1.msra.mxu0 0.0
    %5961 = vmatprep.subr.mxu0 0.0
    %5962 = vmatpush1.msra.mxu0 0.0
    %5963 = vmatprep.subr.mxu0 0.0
    %5964 = vmatpush1.msra.mxu0 0.0
    %5965 = vmatprep.subr.mxu0 0.0
    %5966 = vmatpush1.msra.mxu0 0.0
    %5967 = vmatprep.subr.mxu0 0.0
    %5968 = vmatpush1.msra.mxu0 0.0
    %5969 = vmatprep.subr.mxu0 0.0
    %5970 = vmatpush1.msra.mxu0 0.0
    %5971 = vmatprep.subr.mxu0 0.0
    %5972 = vmatpush1.msra.mxu0 0.0
    %5973 = vmatprep.subr.mxu0 0.0
    %5974 = vmatpush1.msra.mxu0 0.0
    %5975 = vmatprep.mubr.f32.mxu0 0.0
    %5976 = vmatmul.mubr.f32.gmra.mrb[0].mxu0 %v4679
    %v5977 = vpop.f32.mrb[0].mxu0
    %v5978 = vadd.f32 0.0, %v5977
    %v5979 = vpop.f32.mrb[0].mxu0
    %5980 = vmatprep.mubr.f32.mxu0 0.0
    %5981 = vmatmul.mubr.f32.gmra.mrb[0].mxu0 %v4682
    %v5982 = vpop.f32.mrb[0].mxu0
    %v5983 = vadd.f32 0.0, %v5982
    %v5984 = vpop.f32.mrb[0].mxu0
    %5985 = vmatprep.mubr.f32.mxu0 0.0
    %5986 = vmatmul.mubr.f32.gmra.mrb[0].mxu0 %v4685
    %v5987 = vpop.f32.mrb[0].mxu0
    %v5988 = vadd.f32 0.0, %v5987
    %v5989 = vpop.f32.mrb[0].mxu0
    %5990 = vmatprep.mubr.f32.mxu0 0.0
    %5991 = vmatmul.mubr.f32.gmra.mrb[0].mxu0 %v4688
    %v5992 = vpop.f32.mrb[0].mxu0
    %v5993 = vadd.f32 0.0, %v5992
    %v5994 = vpop.f32.mrb[0].mxu0
    %5995 = vmatprep.mubr.f32.mxu0 0.0
    %5996 = vmatmul.mubr.f32.gmra.mrb[0].mxu0 %v4691
    %v5997 = vpop.f32.mrb[0].mxu0
    %v5998 = vadd.f32 0.0, %v5997
    %v5999 = vpop.f32.mrb[0].mxu0
    %6000 = vmatprep.mubr.f32.mxu0 0.0
    %6001 = vmatmul.mubr.f32.gmra.mrb[0].mxu0 %v4694
    %v6002 = vpop.f32.mrb[0].mxu0
    %v6003 = vadd.f32 0.0, %v6002
    %v6004 = vpop.f32.mrb[0].mxu0
    %6005 = vmatprep.mubr.f32.mxu0 0.0
    %6006 = vmatmul.mubr.f32.gmra.mrb[0].mxu0 %v4697
    %v6007 = vpop.f32.mrb[0].mxu0
    %v6008 = vadd.f32 0.0, %v6007
    %v6009 = vpop.f32.mrb[0].mxu0
    %6010 = vmatprep.mubr.f32.mxu0 0.0
    %6011 = vmatmul.mubr.f32.gmra.mrb[0].mxu0 %v4700
    %v6012 = vpop.f32.mrb[0].mxu0
    %v6013 = vadd.f32 0.0, %v6012
    %v6014 = vpop.f32.mrb[0].mxu0
    %6015 = vmatprep.mubr.f32.mxu0 0.0
    %6016 = vmatmul.mubr.f32.gmra.mrb[0].mxu0 %v4703
    %v6017 = vpop.f32.mrb[0].mxu0
    %v6018 = vadd.f32 0.0, %v6017
    %v6019 = vpop.f32.mrb[0].mxu0
    %6020 = vmatprep.mubr.f32.mxu0 0.0
    %6021 = vmatmul.mubr.f32.gmra.mrb[0].mxu0 %v4706
    %v6022 = vpop.f32.mrb[0].mxu0
    %v6023 = vadd.f32 0.0, %v6022
    %v6024 = vpop.f32.mrb[0].mxu0
    %6025 = vmatprep.mubr.f32.mxu0 0.0
    %6026 = vmatmul.mubr.f32.gmra.mrb[0].mxu0 %v4709
    %v6027 = vpop.f32.mrb[0].mxu0
    %v6028 = vadd.f32 0.0, %v6027
    %v6029 = vpop.f32.mrb[0].mxu0
    %6030 = vmatprep.mubr.f32.mxu0 0.0
    %6031 = vmatmul.mubr.f32.gmra.mrb[0].mxu0 %v4712
    %v6032 = vpop.f32.mrb[0].mxu0
    %v6033 = vadd.f32 0.0, %v6032
    %v6034 = vpop.f32.mrb[0].mxu0
    %6035 = vmatprep.mubr.f32.mxu0 0.0
    %6036 = vmatmul.mubr.f32.gmra.mrb[0].mxu0 %v4715
    %v6037 = vpop.f32.mrb[0].mxu0
    %v6038 = vadd.f32 0.0, %v6037
    %v6039 = vpop.f32.mrb[0].mxu0
    %6040 = vmatprep.mubr.f32.mxu0 0.0
    %6041 = vmatmul.mubr.f32.gmra.mrb[0].mxu0 %v4718
    %v6042 = vpop.f32.mrb[0].mxu0
    %v6043 = vadd.f32 0.0, %v6042
    %v6044 = vpop.f32.mrb[0].mxu0
    %6045 = vmatprep.mubr.f32.mxu0 0.0
    %6046 = vmatmul.mubr.f32.gmra.mrb[0].mxu0 %v4721
    %v6047 = vpop.f32.mrb[0].mxu0
    %v6048 = vadd.f32 0.0, %v6047
    %v6049 = vpop.f32.mrb[0].mxu0
    %6050 = vmatprep.mubr.f32.mxu0 0.0
    %6051 = vmatmul.mubr.f32.gmra.mrb[0].mxu0 %v4724
    %v6052 = vpop.f32.mrb[0].mxu0
    %v6053 = vadd.f32 0.0, %v6052
    %v6054 = vpop.f32.mrb[0].mxu0
    %6055 = vmatprep.mubr.f32.mxu0 0.0
    %6056 = vmatmul.mubr.f32.gmra.mrb[0].mxu0 %v4727
    %v6057 = vpop.f32.mrb[0].mxu0
    %v6058 = vadd.f32 0.0, %v6057
    %v6059 = vpop.f32.mrb[0].mxu0
    %6060 = vmatprep.mubr.f32.mxu0 0.0
    %6061 = vmatmul.mubr.f32.gmra.mrb[0].mxu0 %v4730
    %v6062 = vpop.f32.mrb[0].mxu0
    %v6063 = vadd.f32 0.0, %v6062
    %v6064 = vpop.f32.mrb[0].mxu0
    %6065 = vmatprep.mubr.f32.mxu0 0.0
    %6066 = vmatmul.mubr.f32.gmra.mrb[0].mxu0 %v4733
    %v6067 = vpop.f32.mrb[0].mxu0
    %v6068 = vadd.f32 0.0, %v6067
    %v6069 = vpop.f32.mrb[0].mxu0
    %6070 = vmatprep.mubr.f32.mxu0 0.0
    %6071 = vmatmul.mubr.f32.gmra.mrb[0].mxu0 %v4736
    %v6072 = vpop.f32.mrb[0].mxu0
    %v6073 = vadd.f32 0.0, %v6072
    %v6074 = vpop.f32.mrb[0].mxu0
    %6075 = vmatprep.mubr.f32.mxu0 0.0
    %6076 = vmatmul.mubr.f32.gmra.mrb[0].mxu0 %v4739
    %v6077 = vpop.f32.mrb[0].mxu0
    %v6078 = vadd.f32 0.0, %v6077
    %v6079 = vpop.f32.mrb[0].mxu0
    %6080 = vmatprep.mubr.f32.mxu0 0.0
    %6081 = vmatmul.mubr.f32.gmra.mrb[0].mxu0 %v4742
    %v6082 = vpop.f32.mrb[0].mxu0
    %v6083 = vadd.f32 0.0, %v6082
    %v6084 = vpop.f32.mrb[0].mxu0
    %6085 = vmatprep.mubr.f32.mxu0 0.0
    %6086 = vmatmul.mubr.f32.gmra.mrb[0].mxu0 %v4745
    %v6087 = vpop.f32.mrb[0].mxu0
    %v6088 = vadd.f32 0.0, %v6087
    %v6089 = vpop.f32.mrb[0].mxu0
    %6090 = vmatprep.mubr.f32.mxu0 0.0
    %6091 = vmatmul.mubr.f32.gmra.mrb[0].mxu0 %v4748
    %v6092 = vpop.f32.mrb[0].mxu0
    %v6093 = vadd.f32 0.0, %v6092
    %v6094 = vpop.f32.mrb[0].mxu0
    %6095 = vmatprep.mubr.f32.mxu0 0.0
    %6096 = vmatmul.mubr.f32.gmra.mrb[0].mxu0 %v4751
    %v6097 = vpop.f32.mrb[0].mxu0
    %v6098 = vadd.f32 0.0, %v6097
    %v6099 = vpop.f32.mrb[0].mxu0
    %6100 = vdwg.mxu0
    %s6101 = scalar_lea.vmem [#allocation5], 112
    %v6102 = vld [vmem:[%s6101] sm:$0xff]
    %v6103 = vld [vmem:[%s6101 + $0x8] sm:$0xff]
    %6104 = vmatprep.subr.mxu0 0.0
    %6105 = vmatpush1.msra.mxu0 %v6102
    %6106 = vmatprep.subr.mxu0 0.0
    %6107 = vmatpush1.msra.mxu0 %v6103
    %6108 = vmatprep.subr.mxu0 0.0
    %6109 = vmatpush1.msra.mxu0 0.0
    %6110 = vmatprep.subr.mxu0 0.0
    %6111 = vmatpush1.msra.mxu0 0.0
    %6112 = vmatprep.subr.mxu0 0.0
    %6113 = vmatpush1.msra.mxu0 0.0
    %6114 = vmatprep.subr.mxu0 0.0
    %6115 = vmatpush1.msra.mxu0 0.0
    %6116 = vmatprep.subr.mxu0 0.0
    %6117 = vmatpush1.msra.mxu0 0.0
    %6118 = vmatprep.subr.mxu0 0.0
    %6119 = vmatpush1.msra.mxu0 0.0
    %6120 = vmatprep.subr.mxu0 0.0
    %6121 = vmatpush1.msra.mxu0 0.0
    %6122 = vmatprep.subr.mxu0 0.0
    %6123 = vmatpush1.msra.mxu0 0.0
    %6124 = vmatprep.subr.mxu0 0.0
    %6125 = vmatpush1.msra.mxu0 0.0
    %6126 = vmatprep.subr.mxu0 0.0
    %6127 = vmatpush1.msra.mxu0 0.0
    %6128 = vmatprep.subr.mxu0 0.0
    %6129 = vmatpush1.msra.mxu0 0.0
    %6130 = vmatprep.subr.mxu0 0.0
    %6131 = vmatpush1.msra.mxu0 0.0
    %6132 = vmatprep.subr.mxu0 0.0
    %6133 = vmatpush1.msra.mxu0 0.0
    %6134 = vmatprep.subr.mxu0 0.0
    %6135 = vmatpush1.msra.mxu0 0.0
    %6136 = vmatprep.subr.mxu0 0.0
    %6137 = vmatpush1.msra.mxu0 0.0
    %6138 = vmatprep.subr.mxu0 0.0
    %6139 = vmatpush1.msra.mxu0 0.0
    %6140 = vmatprep.subr.mxu0 0.0
    %6141 = vmatpush1.msra.mxu0 0.0
    %6142 = vmatprep.subr.mxu0 0.0
    %6143 = vmatpush1.msra.mxu0 0.0
    %6144 = vmatprep.subr.mxu0 0.0
    %6145 = vmatpush1.msra.mxu0 0.0
    %6146 = vmatprep.subr.mxu0 0.0
    %6147 = vmatpush1.msra.mxu0 0.0
    %6148 = vmatprep.subr.mxu0 0.0
    %6149 = vmatpush1.msra.mxu0 0.0
    %6150 = vmatprep.subr.mxu0 0.0
    %6151 = vmatpush1.msra.mxu0 0.0
    %6152 = vmatprep.subr.mxu0 0.0
    %6153 = vmatpush1.msra.mxu0 0.0
    %6154 = vmatprep.subr.mxu0 0.0
    %6155 = vmatpush1.msra.mxu0 0.0
    %6156 = vmatprep.subr.mxu0 0.0
    %6157 = vmatpush1.msra.mxu0 0.0
    %6158 = vmatprep.subr.mxu0 0.0
    %6159 = vmatpush1.msra.mxu0 0.0
    %6160 = vmatprep.subr.mxu0 0.0
    %6161 = vmatpush1.msra.mxu0 0.0
    %6162 = vmatprep.subr.mxu0 0.0
    %6163 = vmatpush1.msra.mxu0 0.0
    %6164 = vmatprep.subr.mxu0 0.0
    %6165 = vmatpush1.msra.mxu0 0.0
    %6166 = vmatprep.subr.mxu0 0.0
    %6167 = vmatpush1.msra.mxu0 0.0
    %6168 = vmatprep.mubr.f32.mxu0 0.0
    %6169 = vmatmul.mubr.f32.gmra.mrb[0].mxu0 %v4679
    %v6170 = vpop.f32.mrb[0].mxu0
    %v6171 = vadd.f32 0.0, %v6170
    %v6172 = vpop.f32.mrb[0].mxu0
    %6173 = vmatprep.mubr.f32.mxu0 0.0
    %6174 = vmatmul.mubr.f32.gmra.mrb[0].mxu0 %v4682
    %v6175 = vpop.f32.mrb[0].mxu0
    %v6176 = vadd.f32 0.0, %v6175
    %v6177 = vpop.f32.mrb[0].mxu0
    %6178 = vmatprep.mubr.f32.mxu0 0.0
    %6179 = vmatmul.mubr.f32.gmra.mrb[0].mxu0 %v4685
    %v6180 = vpop.f32.mrb[0].mxu0
    %v6181 = vadd.f32 0.0, %v6180
    %v6182 = vpop.f32.mrb[0].mxu0
    %6183 = vmatprep.mubr.f32.mxu0 0.0
    %6184 = vmatmul.mubr.f32.gmra.mrb[0].mxu0 %v4688
    %v6185 = vpop.f32.mrb[0].mxu0
    %v6186 = vadd.f32 0.0, %v6185
    %v6187 = vpop.f32.mrb[0].mxu0
    %6188 = vmatprep.mubr.f32.mxu0 0.0
    %6189 = vmatmul.mubr.f32.gmra.mrb[0].mxu0 %v4691
    %v6190 = vpop.f32.mrb[0].mxu0
    %v6191 = vadd.f32 0.0, %v6190
    %v6192 = vpop.f32.mrb[0].mxu0
    %6193 = vmatprep.mubr.f32.mxu0 0.0
    %6194 = vmatmul.mubr.f32.gmra.mrb[0].mxu0 %v4694
    %v6195 = vpop.f32.mrb[0].mxu0
    %v6196 = vadd.f32 0.0, %v6195
    %v6197 = vpop.f32.mrb[0].mxu0
    %6198 = vmatprep.mubr.f32.mxu0 0.0
    %6199 = vmatmul.mubr.f32.gmra.mrb[0].mxu0 %v4697
    %v6200 = vpop.f32.mrb[0].mxu0
    %v6201 = vadd.f32 0.0, %v6200
    %v6202 = vpop.f32.mrb[0].mxu0
    %6203 = vmatprep.mubr.f32.mxu0 0.0
    %6204 = vmatmul.mubr.f32.gmra.mrb[0].mxu0 %v4700
    %v6205 = vpop.f32.mrb[0].mxu0
    %v6206 = vadd.f32 0.0, %v6205
    %v6207 = vpop.f32.mrb[0].mxu0
    %6208 = vmatprep.mubr.f32.mxu0 0.0
    %6209 = vmatmul.mubr.f32.gmra.mrb[0].mxu0 %v4703
    %v6210 = vpop.f32.mrb[0].mxu0
    %v6211 = vadd.f32 0.0, %v6210
    %v6212 = vpop.f32.mrb[0].mxu0
    %6213 = vmatprep.mubr.f32.mxu0 0.0
    %6214 = vmatmul.mubr.f32.gmra.mrb[0].mxu0 %v4706
    %v6215 = vpop.f32.mrb[0].mxu0
    %v6216 = vadd.f32 0.0, %v6215
    %v6217 = vpop.f32.mrb[0].mxu0
    %6218 = vmatprep.mubr.f32.mxu0 0.0
    %6219 = vmatmul.mubr.f32.gmra.mrb[0].mxu0 %v4709
    %v6220 = vpop.f32.mrb[0].mxu0
    %v6221 = vadd.f32 0.0, %v6220
    %v6222 = vpop.f32.mrb[0].mxu0
    %6223 = vmatprep.mubr.f32.mxu0 0.0
    %6224 = vmatmul.mubr.f32.gmra.mrb[0].mxu0 %v4712
    %v6225 = vpop.f32.mrb[0].mxu0
    %v6226 = vadd.f32 0.0, %v6225
    %v6227 = vpop.f32.mrb[0].mxu0
    %6228 = vmatprep.mubr.f32.mxu0 0.0
    %6229 = vmatmul.mubr.f32.gmra.mrb[0].mxu0 %v4715
    %v6230 = vpop.f32.mrb[0].mxu0
    %v6231 = vadd.f32 0.0, %v6230
    %v6232 = vpop.f32.mrb[0].mxu0
    %6233 = vmatprep.mubr.f32.mxu0 0.0
    %6234 = vmatmul.mubr.f32.gmra.mrb[0].mxu0 %v4718
    %v6235 = vpop.f32.mrb[0].mxu0
    %v6236 = vadd.f32 0.0, %v6235
    %v6237 = vpop.f32.mrb[0].mxu0
    %6238 = vmatprep.mubr.f32.mxu0 0.0
    %6239 = vmatmul.mubr.f32.gmra.mrb[0].mxu0 %v4721
    %v6240 = vpop.f32.mrb[0].mxu0
    %v6241 = vadd.f32 0.0, %v6240
    %v6242 = vpop.f32.mrb[0].mxu0
    %6243 = vmatprep.mubr.f32.mxu0 0.0
    %6244 = vmatmul.mubr.f32.gmra.mrb[0].mxu0 %v4724
    %v6245 = vpop.f32.mrb[0].mxu0
    %v6246 = vadd.f32 0.0, %v6245
    %v6247 = vpop.f32.mrb[0].mxu0
    %6248 = vmatprep.mubr.f32.mxu0 0.0
    %6249 = vmatmul.mubr.f32.gmra.mrb[0].mxu0 %v4727
    %v6250 = vpop.f32.mrb[0].mxu0
    %v6251 = vadd.f32 0.0, %v6250
    %v6252 = vpop.f32.mrb[0].mxu0
    %6253 = vmatprep.mubr.f32.mxu0 0.0
    %6254 = vmatmul.mubr.f32.gmra.mrb[0].mxu0 %v4730
    %v6255 = vpop.f32.mrb[0].mxu0
    %v6256 = vadd.f32 0.0, %v6255
    %v6257 = vpop.f32.mrb[0].mxu0
    %6258 = vmatprep.mubr.f32.mxu0 0.0
    %6259 = vmatmul.mubr.f32.gmra.mrb[0].mxu0 %v4733
    %v6260 = vpop.f32.mrb[0].mxu0
    %v6261 = vadd.f32 0.0, %v6260
    %v6262 = vpop.f32.mrb[0].mxu0
    %6263 = vmatprep.mubr.f32.mxu0 0.0
    %6264 = vmatmul.mubr.f32.gmra.mrb[0].mxu0 %v4736
    %v6265 = vpop.f32.mrb[0].mxu0
    %v6266 = vadd.f32 0.0, %v6265
    %v6267 = vpop.f32.mrb[0].mxu0
    %6268 = vmatprep.mubr.f32.mxu0 0.0
    %6269 = vmatmul.mubr.f32.gmra.mrb[0].mxu0 %v4739
    %v6270 = vpop.f32.mrb[0].mxu0
    %v6271 = vadd.f32 0.0, %v6270
    %v6272 = vpop.f32.mrb[0].mxu0
    %6273 = vmatprep.mubr.f32.mxu0 0.0
    %6274 = vmatmul.mubr.f32.gmra.mrb[0].mxu0 %v4742
    %v6275 = vpop.f32.mrb[0].mxu0
    %v6276 = vadd.f32 0.0, %v6275
    %v6277 = vpop.f32.mrb[0].mxu0
    %6278 = vmatprep.mubr.f32.mxu0 0.0
    %6279 = vmatmul.mubr.f32.gmra.mrb[0].mxu0 %v4745
    %v6280 = vpop.f32.mrb[0].mxu0
    %v6281 = vadd.f32 0.0, %v6280
    %v6282 = vpop.f32.mrb[0].mxu0
    %6283 = vmatprep.mubr.f32.mxu0 0.0
    %6284 = vmatmul.mubr.f32.gmra.mrb[0].mxu0 %v4748
    %v6285 = vpop.f32.mrb[0].mxu0
    %v6286 = vadd.f32 0.0, %v6285
    %v6287 = vpop.f32.mrb[0].mxu0
    %6288 = vmatprep.mubr.f32.mxu0 0.0
    %6289 = vmatmul.mubr.f32.gmra.mrb[0].mxu0 %v4751
    %v6290 = vpop.f32.mrb[0].mxu0
    %v6291 = vadd.f32 0.0, %v6290
    %v6292 = vpop.f32.mrb[0].mxu0
    %6293 = vdwg.mxu0
    %s6294 = scalar_lea.vmem [#allocation5], 128
    %v6295 = vld [vmem:[%s6294] sm:$0xff]
    %v6296 = vld [vmem:[%s6294 + $0x8] sm:$0xff]
    %6297 = vmatprep.subr.mxu0 0.0
    %6298 = vmatpush1.msra.mxu0 %v6295
    %6299 = vmatprep.subr.mxu0 0.0
    %6300 = vmatpush1.msra.mxu0 %v6296
    %6301 = vmatprep.subr.mxu0 0.0
    %6302 = vmatpush1.msra.mxu0 0.0
    %6303 = vmatprep.subr.mxu0 0.0
    %6304 = vmatpush1.msra.mxu0 0.0
    %6305 = vmatprep.subr.mxu0 0.0
    %6306 = vmatpush1.msra.mxu0 0.0
    %6307 = vmatprep.subr.mxu0 0.0
    %6308 = vmatpush1.msra.mxu0 0.0
    %6309 = vmatprep.subr.mxu0 0.0
    %6310 = vmatpush1.msra.mxu0 0.0
    %6311 = vmatprep.subr.mxu0 0.0
    %6312 = vmatpush1.msra.mxu0 0.0
    %6313 = vmatprep.subr.mxu0 0.0
    %6314 = vmatpush1.msra.mxu0 0.0
    %6315 = vmatprep.subr.mxu0 0.0
    %6316 = vmatpush1.msra.mxu0 0.0
    %6317 = vmatprep.subr.mxu0 0.0
    %6318 = vmatpush1.msra.mxu0 0.0
    %6319 = vmatprep.subr.mxu0 0.0
    %6320 = vmatpush1.msra.mxu0 0.0
    %6321 = vmatprep.subr.mxu0 0.0
    %6322 = vmatpush1.msra.mxu0 0.0
    %6323 = vmatprep.subr.mxu0 0.0
    %6324 = vmatpush1.msra.mxu0 0.0
    %6325 = vmatprep.subr.mxu0 0.0
    %6326 = vmatpush1.msra.mxu0 0.0
    %6327 = vmatprep.subr.mxu0 0.0
    %6328 = vmatpush1.msra.mxu0 0.0
    %6329 = vmatprep.subr.mxu0 0.0
    %6330 = vmatpush1.msra.mxu0 0.0
    %6331 = vmatprep.subr.mxu0 0.0
    %6332 = vmatpush1.msra.mxu0 0.0
    %6333 = vmatprep.subr.mxu0 0.0
    %6334 = vmatpush1.msra.mxu0 0.0
    %6335 = vmatprep.subr.mxu0 0.0
    %6336 = vmatpush1.msra.mxu0 0.0
    %6337 = vmatprep.subr.mxu0 0.0
    %6338 = vmatpush1.msra.mxu0 0.0
    %6339 = vmatprep.subr.mxu0 0.0
    %6340 = vmatpush1.msra.mxu0 0.0
    %6341 = vmatprep.subr.mxu0 0.0
    %6342 = vmatpush1.msra.mxu0 0.0
    %6343 = vmatprep.subr.mxu0 0.0
    %6344 = vmatpush1.msra.mxu0 0.0
    %6345 = vmatprep.subr.mxu0 0.0
    %6346 = vmatpush1.msra.mxu0 0.0
    %6347 = vmatprep.subr.mxu0 0.0
    %6348 = vmatpush1.msra.mxu0 0.0
    %6349 = vmatprep.subr.mxu0 0.0
    %6350 = vmatpush1.msra.mxu0 0.0
    %6351 = vmatprep.subr.mxu0 0.0
    %6352 = vmatpush1.msra.mxu0 0.0
    %6353 = vmatprep.subr.mxu0 0.0
    %6354 = vmatpush1.msra.mxu0 0.0
    %6355 = vmatprep.subr.mxu0 0.0
    %6356 = vmatpush1.msra.mxu0 0.0
    %6357 = vmatprep.subr.mxu0 0.0
    %6358 = vmatpush1.msra.mxu0 0.0
    %6359 = vmatprep.subr.mxu0 0.0
    %6360 = vmatpush1.msra.mxu0 0.0
    %6361 = vmatprep.mubr.f32.mxu0 0.0
    %6362 = vmatmul.mubr.f32.gmra.mrb[0].mxu0 %v4679
    %v6363 = vpop.f32.mrb[0].mxu0
    %v6364 = vadd.f32 0.0, %v6363
    %v6365 = vpop.f32.mrb[0].mxu0
    %6366 = vmatprep.mubr.f32.mxu0 0.0
    %6367 = vmatmul.mubr.f32.gmra.mrb[0].mxu0 %v4682
    %v6368 = vpop.f32.mrb[0].mxu0
    %v6369 = vadd.f32 0.0, %v6368
    %v6370 = vpop.f32.mrb[0].mxu0
    %6371 = vmatprep.mubr.f32.mxu0 0.0
    %6372 = vmatmul.mubr.f32.gmra.mrb[0].mxu0 %v4685
    %v6373 = vpop.f32.mrb[0].mxu0
    %v6374 = vadd.f32 0.0, %v6373
    %v6375 = vpop.f32.mrb[0].mxu0
    %6376 = vmatprep.mubr.f32.mxu0 0.0
    %6377 = vmatmul.mubr.f32.gmra.mrb[0].mxu0 %v4688
    %v6378 = vpop.f32.mrb[0].mxu0
    %v6379 = vadd.f32 0.0, %v6378
    %v6380 = vpop.f32.mrb[0].mxu0
    %6381 = vmatprep.mubr.f32.mxu0 0.0
    %6382 = vmatmul.mubr.f32.gmra.mrb[0].mxu0 %v4691
    %v6383 = vpop.f32.mrb[0].mxu0
    %v6384 = vadd.f32 0.0, %v6383
    %v6385 = vpop.f32.mrb[0].mxu0
    %6386 = vmatprep.mubr.f32.mxu0 0.0
    %6387 = vmatmul.mubr.f32.gmra.mrb[0].mxu0 %v4694
    %v6388 = vpop.f32.mrb[0].mxu0
    %v6389 = vadd.f32 0.0, %v6388
    %v6390 = vpop.f32.mrb[0].mxu0
    %6391 = vmatprep.mubr.f32.mxu0 0.0
    %6392 = vmatmul.mubr.f32.gmra.mrb[0].mxu0 %v4697
    %v6393 = vpop.f32.mrb[0].mxu0
    %v6394 = vadd.f32 0.0, %v6393
    %v6395 = vpop.f32.mrb[0].mxu0
    %6396 = vmatprep.mubr.f32.mxu0 0.0
    %6397 = vmatmul.mubr.f32.gmra.mrb[0].mxu0 %v4700
    %v6398 = vpop.f32.mrb[0].mxu0
    %v6399 = vadd.f32 0.0, %v6398
    %v6400 = vpop.f32.mrb[0].mxu0
    %6401 = vmatprep.mubr.f32.mxu0 0.0
    %6402 = vmatmul.mubr.f32.gmra.mrb[0].mxu0 %v4703
    %v6403 = vpop.f32.mrb[0].mxu0
    %v6404 = vadd.f32 0.0, %v6403
    %v6405 = vpop.f32.mrb[0].mxu0
    %6406 = vmatprep.mubr.f32.mxu0 0.0
    %6407 = vmatmul.mubr.f32.gmra.mrb[0].mxu0 %v4706
    %v6408 = vpop.f32.mrb[0].mxu0
    %v6409 = vadd.f32 0.0, %v6408
    %v6410 = vpop.f32.mrb[0].mxu0
    %6411 = vmatprep.mubr.f32.mxu0 0.0
    %6412 = vmatmul.mubr.f32.gmra.mrb[0].mxu0 %v4709
    %v6413 = vpop.f32.mrb[0].mxu0
    %v6414 = vadd.f32 0.0, %v6413
    %v6415 = vpop.f32.mrb[0].mxu0
    %6416 = vmatprep.mubr.f32.mxu0 0.0
    %6417 = vmatmul.mubr.f32.gmra.mrb[0].mxu0 %v4712
    %v6418 = vpop.f32.mrb[0].mxu0
    %v6419 = vadd.f32 0.0, %v6418
    %v6420 = vpop.f32.mrb[0].mxu0
    %6421 = vmatprep.mubr.f32.mxu0 0.0
    %6422 = vmatmul.mubr.f32.gmra.mrb[0].mxu0 %v4715
    %v6423 = vpop.f32.mrb[0].mxu0
    %v6424 = vadd.f32 0.0, %v6423
    %v6425 = vpop.f32.mrb[0].mxu0
    %6426 = vmatprep.mubr.f32.mxu0 0.0
    %6427 = vmatmul.mubr.f32.gmra.mrb[0].mxu0 %v4718
    %v6428 = vpop.f32.mrb[0].mxu0
    %v6429 = vadd.f32 0.0, %v6428
    %v6430 = vpop.f32.mrb[0].mxu0
    %6431 = vmatprep.mubr.f32.mxu0 0.0
    %6432 = vmatmul.mubr.f32.gmra.mrb[0].mxu0 %v4721
    %v6433 = vpop.f32.mrb[0].mxu0
    %v6434 = vadd.f32 0.0, %v6433
    %v6435 = vpop.f32.mrb[0].mxu0
    %6436 = vmatprep.mubr.f32.mxu0 0.0
    %6437 = vmatmul.mubr.f32.gmra.mrb[0].mxu0 %v4724
    %v6438 = vpop.f32.mrb[0].mxu0
    %v6439 = vadd.f32 0.0, %v6438
    %v6440 = vpop.f32.mrb[0].mxu0
    %6441 = vmatprep.mubr.f32.mxu0 0.0
    %6442 = vmatmul.mubr.f32.gmra.mrb[0].mxu0 %v4727
    %v6443 = vpop.f32.mrb[0].mxu0
    %v6444 = vadd.f32 0.0, %v6443
    %v6445 = vpop.f32.mrb[0].mxu0
    %6446 = vmatprep.mubr.f32.mxu0 0.0
    %6447 = vmatmul.mubr.f32.gmra.mrb[0].mxu0 %v4730
    %v6448 = vpop.f32.mrb[0].mxu0
    %v6449 = vadd.f32 0.0, %v6448
    %v6450 = vpop.f32.mrb[0].mxu0
    %6451 = vmatprep.mubr.f32.mxu0 0.0
    %6452 = vmatmul.mubr.f32.gmra.mrb[0].mxu0 %v4733
    %v6453 = vpop.f32.mrb[0].mxu0
    %v6454 = vadd.f32 0.0, %v6453
    %v6455 = vpop.f32.mrb[0].mxu0
    %6456 = vmatprep.mubr.f32.mxu0 0.0
    %6457 = vmatmul.mubr.f32.gmra.mrb[0].mxu0 %v4736
    %v6458 = vpop.f32.mrb[0].mxu0
    %v6459 = vadd.f32 0.0, %v6458
    %v6460 = vpop.f32.mrb[0].mxu0
    %6461 = vmatprep.mubr.f32.mxu0 0.0
    %6462 = vmatmul.mubr.f32.gmra.mrb[0].mxu0 %v4739
    %v6463 = vpop.f32.mrb[0].mxu0
    %v6464 = vadd.f32 0.0, %v6463
    %v6465 = vpop.f32.mrb[0].mxu0
    %6466 = vmatprep.mubr.f32.mxu0 0.0
    %6467 = vmatmul.mubr.f32.gmra.mrb[0].mxu0 %v4742
    %v6468 = vpop.f32.mrb[0].mxu0
    %v6469 = vadd.f32 0.0, %v6468
    %v6470 = vpop.f32.mrb[0].mxu0
    %6471 = vmatprep.mubr.f32.mxu0 0.0
    %6472 = vmatmul.mubr.f32.gmra.mrb[0].mxu0 %v4745
    %v6473 = vpop.f32.mrb[0].mxu0
    %v6474 = vadd.f32 0.0, %v6473
    %v6475 = vpop.f32.mrb[0].mxu0
    %6476 = vmatprep.mubr.f32.mxu0 0.0
    %6477 = vmatmul.mubr.f32.gmra.mrb[0].mxu0 %v4748
    %v6478 = vpop.f32.mrb[0].mxu0
    %v6479 = vadd.f32 0.0, %v6478
    %v6480 = vpop.f32.mrb[0].mxu0
    %6481 = vmatprep.mubr.f32.mxu0 0.0
    %6482 = vmatmul.mubr.f32.gmra.mrb[0].mxu0 %v4751
    %v6483 = vpop.f32.mrb[0].mxu0
    %v6484 = vadd.f32 0.0, %v6483
    %v6485 = vpop.f32.mrb[0].mxu0
    %6486 = vdwg.mxu0
    %v6487 = vld [vmem:[%s3] sm:$0xff]
    %v6488 = vld [vmem:[%s3 + $0x8] sm:$0xff]
    %v6489 = vld [vmem:[%s3 + $0x10] sm:$0xff]
    %v6490 = vld [vmem:[%s3 + $0x18] sm:$0xff]
    %v6491 = vld [vmem:[%s3 + $0x20] sm:$0xff]
    %v6492 = vld [vmem:[%s3 + $0x28] sm:$0xff]
    %v6493 = vld [vmem:[%s3 + $0x30] sm:$0xff]
    %v6494 = vld [vmem:[%s3 + $0x38] sm:$0xf]
    %v6495 = vld [vmem:[%s3 + $0x3c] sm:$0xff]
    %v6496 = vld [vmem:[%s3 + $0x44] sm:$0xff]
    %v6497 = vld [vmem:[%s3 + $0x4c] sm:$0xff]
    %v6498 = vld [vmem:[%s3 + $0x54] sm:$0xff]
    %v6499 = vld [vmem:[%s3 + $0x5c] sm:$0xff]
    %v6500 = vld [vmem:[%s3 + $0x64] sm:$0xff]
    %v6501 = vld [vmem:[%s3 + $0x6c] sm:$0xff]
    %v6502 = vld [vmem:[%s3 + $0x74] sm:$0xf]
    %v6503 = vld [vmem:[%s3 + $0x78] sm:$0xff]
    %v6504 = vld [vmem:[%s3 + $0x80] sm:$0xff]
    %v6505 = vld [vmem:[%s3 + $0x88] sm:$0xff]
    %v6506 = vld [vmem:[%s3 + $0x90] sm:$0xff]
    %v6507 = vld [vmem:[%s3 + $0x98] sm:$0xff]
    %v6508 = vld [vmem:[%s3 + $0xa0] sm:$0xff]
    %v6509 = vld [vmem:[%s3 + $0xa8] sm:$0xff]
    %v6510 = vld [vmem:[%s3 + $0xb0] sm:$0xf]
    %v6511 = vld [vmem:[%s3 + $0xb4] sm:$0xff]
    %v6512 = vld [vmem:[%s3 + $0xbc] sm:$0xff]
    %v6513 = vld [vmem:[%s3 + $0xc4] sm:$0xff]
    %v6514 = vld [vmem:[%s3 + $0xcc] sm:$0xff]
    %v6515 = vld [vmem:[%s3 + $0xd4] sm:$0xff]
    %v6516 = vld [vmem:[%s3 + $0xdc] sm:$0xff]
    %v6517 = vld [vmem:[%s3 + $0xe4] sm:$0xff]
    %v6518 = vld [vmem:[%s3 + $0xec] sm:$0xf]
    %v6519 = vunpack.c.l.bf16 %v6487
    %v6520 = vunpack.c.h.bf16 %v6487
    %v6521 = vunpack.c.l.bf16 %v6488
    %v6522 = vunpack.c.h.bf16 %v6488
    %v6523 = vunpack.c.l.bf16 %v6489
    %v6524 = vunpack.c.h.bf16 %v6489
    %v6525 = vunpack.c.l.bf16 %v6490
    %v6526 = vunpack.c.h.bf16 %v6490
    %v6527 = vunpack.c.l.bf16 %v6491
    %v6528 = vunpack.c.h.bf16 %v6491
    %v6529 = vunpack.c.l.bf16 %v6492
    %v6530 = vunpack.c.h.bf16 %v6492
    %v6531 = vunpack.c.l.bf16 %v6493
    %v6532 = vunpack.c.h.bf16 %v6493
    %v6533 = vunpack.c.l.bf16 %v6494
    %v6534 = vunpack.c.l.bf16 %v6495
    %v6535 = vunpack.c.h.bf16 %v6495
    %v6536 = vunpack.c.l.bf16 %v6496
    %v6537 = vunpack.c.h.bf16 %v6496
    %v6538 = vunpack.c.l.bf16 %v6497
    %v6539 = vunpack.c.h.bf16 %v6497
    %v6540 = vunpack.c.l.bf16 %v6498
    %v6541 = vunpack.c.h.bf16 %v6498
    %v6542 = vunpack.c.l.bf16 %v6499
    %v6543 = vunpack.c.h.bf16 %v6499
    %v6544 = vunpack.c.l.bf16 %v6500
    %v6545 = vunpack.c.h.bf16 %v6500
    %v6546 = vunpack.c.l.bf16 %v6501
    %v6547 = vunpack.c.h.bf16 %v6501
    %v6548 = vunpack.c.l.bf16 %v6502
    %v6549 = vunpack.c.l.bf16 %v6503
    %v6550 = vunpack.c.h.bf16 %v6503
    %v6551 = vunpack.c.l.bf16 %v6504
    %v6552 = vunpack.c.h.bf16 %v6504
    %v6553 = vunpack.c.l.bf16 %v6505
    %v6554 = vunpack.c.h.bf16 %v6505
    %v6555 = vunpack.c.l.bf16 %v6506
    %v6556 = vunpack.c.h.bf16 %v6506
    %v6557 = vunpack.c.l.bf16 %v6507
    %v6558 = vunpack.c.h.bf16 %v6507
    %v6559 = vunpack.c.l.bf16 %v6508
    %v6560 = vunpack.c.h.bf16 %v6508
    %v6561 = vunpack.c.l.bf16 %v6509
    %v6562 = vunpack.c.h.bf16 %v6509
    %v6563 = vunpack.c.l.bf16 %v6510
    %v6564 = vunpack.c.l.bf16 %v6511
    %v6565 = vunpack.c.h.bf16 %v6511
    %v6566 = vunpack.c.l.bf16 %v6512
    %v6567 = vunpack.c.h.bf16 %v6512
    %v6568 = vunpack.c.l.bf16 %v6513
    %v6569 = vunpack.c.h.bf16 %v6513
    %v6570 = vunpack.c.l.bf16 %v6514
    %v6571 = vunpack.c.h.bf16 %v6514
    %v6572 = vunpack.c.l.bf16 %v6515
    %v6573 = vunpack.c.h.bf16 %v6515
    %v6574 = vunpack.c.l.bf16 %v6516
    %v6575 = vunpack.c.h.bf16 %v6516
    %v6576 = vunpack.c.l.bf16 %v6517
    %v6577 = vunpack.c.h.bf16 %v6517
    %v6578 = vunpack.c.l.bf16 %v6518
    %v6579 = vld [vmem:[%s8 + $0x1] sm:$0x1]
    %v6580 = vlaneseq
    %v6581 = vshrl.u32 %v6580, 7
    %v6582 = vsub.s32 0, %v6581
    %v6583 = vrot.slane %v6579, %v6582
    %vm6584 = vcmask 64512
    %v6586 = vsel %vm6584, %v6533, 0
    %v6589 = vsel %vm6584, %v6548, 0
    %v6592 = vsel %vm6584, %v6563, 0
    %v6595 = vsel %vm6584, %v6578, 0
    %6597 = vmatprep.subr.mxu0 0.0
    %6598 = vmatpush1.msra.mxu0 %v4820
    %6599 = vmatprep.subr.mxu0 0.0
    %6600 = vmatpush1.msra.mxu0 %v4825
    %6601 = vmatprep.subr.mxu0 0.0
    %6602 = vmatpush1.msra.mxu0 %v4830
    %6603 = vmatprep.subr.mxu0 0.0
    %6604 = vmatpush1.msra.mxu0 %v4835
    %6605 = vmatprep.subr.mxu0 0.0
    %6606 = vmatpush1.msra.mxu0 %v4840
    %6607 = vmatprep.subr.mxu0 0.0
    %6608 = vmatpush1.msra.mxu0 %v4845
    %6609 = vmatprep.subr.mxu0 0.0
    %6610 = vmatpush1.msra.mxu0 %v4850
    %6611 = vmatprep.subr.mxu0 0.0
    %6612 = vmatpush1.msra.mxu0 %v4855
    %6613 = vmatprep.subr.mxu0 0.0
    %6614 = vmatpush1.msra.mxu0 %v4860
    %6615 = vmatprep.subr.mxu0 0.0
    %6616 = vmatpush1.msra.mxu0 %v4865
    %6617 = vmatprep.subr.mxu0 0.0
    %6618 = vmatpush1.msra.mxu0 %v4870
    %6619 = vmatprep.subr.mxu0 0.0
    %6620 = vmatpush1.msra.mxu0 %v4875
    %6621 = vmatprep.subr.mxu0 0.0
    %6622 = vmatpush1.msra.mxu0 %v4880
    %6623 = vmatprep.subr.mxu0 0.0
    %6624 = vmatpush1.msra.mxu0 %v4885
    %6625 = vmatprep.subr.mxu0 0.0
    %6626 = vmatpush1.msra.mxu0 %v4890
    %6627 = vmatprep.subr.mxu0 0.0
    %6628 = vmatpush1.msra.mxu0 %v4895
    %6629 = vmatprep.subr.mxu0 0.0
    %6630 = vmatpush1.msra.mxu0 %v4900
    %6631 = vmatprep.subr.mxu0 0.0
    %6632 = vmatpush1.msra.mxu0 %v4905
    %6633 = vmatprep.subr.mxu0 0.0
    %6634 = vmatpush1.msra.mxu0 %v4910
    %6635 = vmatprep.subr.mxu0 0.0
    %6636 = vmatpush1.msra.mxu0 %v4915
    %6637 = vmatprep.subr.mxu0 0.0
    %6638 = vmatpush1.msra.mxu0 %v4920
    %6639 = vmatprep.subr.mxu0 0.0
    %6640 = vmatpush1.msra.mxu0 %v4925
    %6641 = vmatprep.subr.mxu0 0.0
    %6642 = vmatpush1.msra.mxu0 %v4930
    %6643 = vmatprep.subr.mxu0 0.0
    %6644 = vmatpush1.msra.mxu0 %v4935
    %6645 = vmatprep.subr.mxu0 0.0
    %6646 = vmatpush1.msra.mxu0 %v4940
    %6647 = vmatprep.subr.mxu0 0.0
    %6648 = vmatpush1.msra.mxu0 %v5013
    %6649 = vmatprep.subr.mxu0 0.0
    %6650 = vmatpush1.msra.mxu0 %v5018
    %6651 = vmatprep.subr.mxu0 0.0
    %6652 = vmatpush1.msra.mxu0 %v5023
    %6653 = vmatprep.subr.mxu0 0.0
    %6654 = vmatpush1.msra.mxu0 %v5028
    %6655 = vmatprep.subr.mxu0 0.0
    %6656 = vmatpush1.msra.mxu0 %v5033
    %6657 = vmatprep.subr.mxu0 0.0
    %6658 = vmatpush1.msra.mxu0 %v5038
    %6659 = vmatprep.subr.mxu0 0.0
    %6660 = vmatpush1.msra.mxu0 %v5043
    %6661 = vmatprep.mubr.f32.mxu0 %v6520
    %6662 = vmatmul.mubr.f32.gmra.mrb[0].mxu0 %v6519
    %v6663 = vpop.f32.mrb[0].mxu0
    %v6664 = vadd.f32 %v6583, %v6663
    %v6665 = vpop.f32.mrb[0].mxu0
    %6666 = vmatprep.mubr.f32.mxu0 %v6535
    %6667 = vmatmul.mubr.f32.gmra.mrb[0].mxu0 %v6534
    %v6668 = vpop.f32.mrb[0].mxu0
    %v6669 = vadd.f32 %v6583, %v6668
    %v6670 = vpop.f32.mrb[0].mxu0
    %6671 = vmatprep.mubr.f32.mxu0 %v6550
    %6672 = vmatmul.mubr.f32.gmra.mrb[0].mxu0 %v6549
    %v6673 = vpop.f32.mrb[0].mxu0
    %v6674 = vadd.f32 %v6583, %v6673
    %v6675 = vpop.f32.mrb[0].mxu0
    %6676 = vmatprep.mubr.f32.mxu0 %v6565
    %6677 = vmatmul.mubr.f32.gmra.mrb[0].mxu0 %v6564
    %v6678 = vpop.f32.mrb[0].mxu0
    %v6679 = vadd.f32 %v6583, %v6678
    %v6680 = vpop.f32.mrb[0].mxu0
    %6681 = vdwg.mxu0
    %6682 = vmatprep.subr.mxu0 0.0
    %6683 = vmatpush1.msra.mxu0 %v5048
    %6684 = vmatprep.subr.mxu0 0.0
    %6685 = vmatpush1.msra.mxu0 %v5053
    %6686 = vmatprep.subr.mxu0 0.0
    %6687 = vmatpush1.msra.mxu0 %v5058
    %6688 = vmatprep.subr.mxu0 0.0
    %6689 = vmatpush1.msra.mxu0 %v5063
    %6690 = vmatprep.subr.mxu0 0.0
    %6691 = vmatpush1.msra.mxu0 %v5068
    %6692 = vmatprep.subr.mxu0 0.0
    %6693 = vmatpush1.msra.mxu0 %v5073
    %6694 = vmatprep.subr.mxu0 0.0
    %6695 = vmatpush1.msra.mxu0 %v5078
    %6696 = vmatprep.subr.mxu0 0.0
    %6697 = vmatpush1.msra.mxu0 %v5083
    %6698 = vmatprep.subr.mxu0 0.0
    %6699 = vmatpush1.msra.mxu0 %v5088
    %6700 = vmatprep.subr.mxu0 0.0
    %6701 = vmatpush1.msra.mxu0 %v5093
    %6702 = vmatprep.subr.mxu0 0.0
    %6703 = vmatpush1.msra.mxu0 %v5098
    %6704 = vmatprep.subr.mxu0 0.0
    %6705 = vmatpush1.msra.mxu0 %v5103
    %6706 = vmatprep.subr.mxu0 0.0
    %6707 = vmatpush1.msra.mxu0 %v5108
    %6708 = vmatprep.subr.mxu0 0.0
    %6709 = vmatpush1.msra.mxu0 %v5113
    %6710 = vmatprep.subr.mxu0 0.0
    %6711 = vmatpush1.msra.mxu0 %v5118
    %6712 = vmatprep.subr.mxu0 0.0
    %6713 = vmatpush1.msra.mxu0 %v5123
    %6714 = vmatprep.subr.mxu0 0.0
    %6715 = vmatpush1.msra.mxu0 %v5128
    %6716 = vmatprep.subr.mxu0 0.0
    %6717 = vmatpush1.msra.mxu0 %v5133
    %6718 = vmatprep.subr.mxu0 0.0
    %6719 = vmatpush1.msra.mxu0 %v5206
    %6720 = vmatprep.subr.mxu0 0.0
    %6721 = vmatpush1.msra.mxu0 %v5211
    %6722 = vmatprep.subr.mxu0 0.0
    %6723 = vmatpush1.msra.mxu0 %v5216
    %6724 = vmatprep.subr.mxu0 0.0
    %6725 = vmatpush1.msra.mxu0 %v5221
    %6726 = vmatprep.subr.mxu0 0.0
    %6727 = vmatpush1.msra.mxu0 %v5226
    %6728 = vmatprep.subr.mxu0 0.0
    %6729 = vmatpush1.msra.mxu0 %v5231
    %6730 = vmatprep.subr.mxu0 0.0
    %6731 = vmatpush1.msra.mxu0 %v5236
    %6732 = vmatprep.subr.mxu0 0.0
    %6733 = vmatpush1.msra.mxu0 %v5241
    %6734 = vmatprep.subr.mxu0 0.0
    %6735 = vmatpush1.msra.mxu0 %v5246
    %6736 = vmatprep.subr.mxu0 0.0
    %6737 = vmatpush1.msra.mxu0 %v5251
    %6738 = vmatprep.subr.mxu0 0.0
    %6739 = vmatpush1.msra.mxu0 %v5256
    %6740 = vmatprep.subr.mxu0 0.0
    %6741 = vmatpush1.msra.mxu0 %v5261
    %6742 = vmatprep.subr.mxu0 0.0
    %6743 = vmatpush1.msra.mxu0 %v5266
    %6744 = vmatprep.subr.mxu0 0.0
    %6745 = vmatpush1.msra.mxu0 %v5271
    %6746 = vmatprep.mubr.f32.mxu0 %v6522
    %6747 = vmatmul.mubr.f32.gmra.mrb[0].mxu0 %v6521
    %v6748 = vpop.f32.mrb[0].mxu0
    %v6749 = vadd.f32 %v6664, %v6748
    %v6750 = vpop.f32.mrb[0].mxu0
    %6751 = vmatprep.mubr.f32.mxu0 %v6537
    %6752 = vmatmul.mubr.f32.gmra.mrb[0].mxu0 %v6536
    %v6753 = vpop.f32.mrb[0].mxu0
    %v6754 = vadd.f32 %v6669, %v6753
    %v6755 = vpop.f32.mrb[0].mxu0
    %6756 = vmatprep.mubr.f32.mxu0 %v6552
    %6757 = vmatmul.mubr.f32.gmra.mrb[0].mxu0 %v6551
    %v6758 = vpop.f32.mrb[0].mxu0
    %v6759 = vadd.f32 %v6674, %v6758
    %v6760 = vpop.f32.mrb[0].mxu0
    %6761 = vmatprep.mubr.f32.mxu0 %v6567
    %6762 = vmatmul.mubr.f32.gmra.mrb[0].mxu0 %v6566
    %v6763 = vpop.f32.mrb[0].mxu0
    %v6764 = vadd.f32 %v6679, %v6763
    %v6765 = vpop.f32.mrb[0].mxu0
    %6766 = vdwg.mxu0
    %6767 = vmatprep.subr.mxu0 0.0
    %6768 = vmatpush1.msra.mxu0 %v5276
    %6769 = vmatprep.subr.mxu0 0.0
    %6770 = vmatpush1.msra.mxu0 %v5281
    %6771 = vmatprep.subr.mxu0 0.0
    %6772 = vmatpush1.msra.mxu0 %v5286
    %6773 = vmatprep.subr.mxu0 0.0
    %6774 = vmatpush1.msra.mxu0 %v5291
    %6775 = vmatprep.subr.mxu0 0.0
    %6776 = vmatpush1.msra.mxu0 %v5296
    %6777 = vmatprep.subr.mxu0 0.0
    %6778 = vmatpush1.msra.mxu0 %v5301
    %6779 = vmatprep.subr.mxu0 0.0
    %6780 = vmatpush1.msra.mxu0 %v5306
    %6781 = vmatprep.subr.mxu0 0.0
    %6782 = vmatpush1.msra.mxu0 %v5311
    %6783 = vmatprep.subr.mxu0 0.0
    %6784 = vmatpush1.msra.mxu0 %v5316
    %6785 = vmatprep.subr.mxu0 0.0
    %6786 = vmatpush1.msra.mxu0 %v5321
    %6787 = vmatprep.subr.mxu0 0.0
    %6788 = vmatpush1.msra.mxu0 %v5326
    %6789 = vmatprep.subr.mxu0 0.0
    %6790 = vmatpush1.msra.mxu0 %v5399
    %6791 = vmatprep.subr.mxu0 0.0
    %6792 = vmatpush1.msra.mxu0 %v5404
    %6793 = vmatprep.subr.mxu0 0.0
    %6794 = vmatpush1.msra.mxu0 %v5409
    %6795 = vmatprep.subr.mxu0 0.0
    %6796 = vmatpush1.msra.mxu0 %v5414
    %6797 = vmatprep.subr.mxu0 0.0
    %6798 = vmatpush1.msra.mxu0 %v5419
    %6799 = vmatprep.subr.mxu0 0.0
    %6800 = vmatpush1.msra.mxu0 %v5424
    %6801 = vmatprep.subr.mxu0 0.0
    %6802 = vmatpush1.msra.mxu0 %v5429
    %6803 = vmatprep.subr.mxu0 0.0
    %6804 = vmatpush1.msra.mxu0 %v5434
    %6805 = vmatprep.subr.mxu0 0.0
    %6806 = vmatpush1.msra.mxu0 %v5439
    %6807 = vmatprep.subr.mxu0 0.0
    %6808 = vmatpush1.msra.mxu0 %v5444
    %6809 = vmatprep.subr.mxu0 0.0
    %6810 = vmatpush1.msra.mxu0 %v5449
    %6811 = vmatprep.subr.mxu0 0.0
    %6812 = vmatpush1.msra.mxu0 %v5454
    %6813 = vmatprep.subr.mxu0 0.0
    %6814 = vmatpush1.msra.mxu0 %v5459
    %6815 = vmatprep.subr.mxu0 0.0
    %6816 = vmatpush1.msra.mxu0 %v5464
    %6817 = vmatprep.subr.mxu0 0.0
    %6818 = vmatpush1.msra.mxu0 %v5469
    %6819 = vmatprep.subr.mxu0 0.0
    %6820 = vmatpush1.msra.mxu0 %v5474
    %6821 = vmatprep.subr.mxu0 0.0
    %6822 = vmatpush1.msra.mxu0 %v5479
    %6823 = vmatprep.subr.mxu0 0.0
    %6824 = vmatpush1.msra.mxu0 %v5484
    %6825 = vmatprep.subr.mxu0 0.0
    %6826 = vmatpush1.msra.mxu0 %v5489
    %6827 = vmatprep.subr.mxu0 0.0
    %6828 = vmatpush1.msra.mxu0 %v5494
    %6829 = vmatprep.subr.mxu0 0.0
    %6830 = vmatpush1.msra.mxu0 %v5499
    %6831 = vmatprep.mubr.f32.mxu0 %v6524
    %6832 = vmatmul.mubr.f32.gmra.mrb[0].mxu0 %v6523
    %v6833 = vpop.f32.mrb[0].mxu0
    %v6834 = vadd.f32 %v6749, %v6833
    %v6835 = vpop.f32.mrb[0].mxu0
    %6836 = vmatprep.mubr.f32.mxu0 %v6539
    %6837 = vmatmul.mubr.f32.gmra.mrb[0].mxu0 %v6538
    %v6838 = vpop.f32.mrb[0].mxu0
    %v6839 = vadd.f32 %v6754, %v6838
    %v6840 = vpop.f32.mrb[0].mxu0
    %6841 = vmatprep.mubr.f32.mxu0 %v6554
    %6842 = vmatmul.mubr.f32.gmra.mrb[0].mxu0 %v6553
    %v6843 = vpop.f32.mrb[0].mxu0
    %v6844 = vadd.f32 %v6759, %v6843
    %v6845 = vpop.f32.mrb[0].mxu0
    %6846 = vmatprep.mubr.f32.mxu0 %v6569
    %6847 = vmatmul.mubr.f32.gmra.mrb[0].mxu0 %v6568
    %v6848 = vpop.f32.mrb[0].mxu0
    %v6849 = vadd.f32 %v6764, %v6848
    %v6850 = vpop.f32.mrb[0].mxu0
    %6851 = vdwg.mxu0
    %6852 = vmatprep.subr.mxu0 0.0
    %6853 = vmatpush1.msra.mxu0 %v5504
    %6854 = vmatprep.subr.mxu0 0.0
    %6855 = vmatpush1.msra.mxu0 %v5509
    %6856 = vmatprep.subr.mxu0 0.0
    %6857 = vmatpush1.msra.mxu0 %v5514
    %6858 = vmatprep.subr.mxu0 0.0
    %6859 = vmatpush1.msra.mxu0 %v5519
    %6860 = vmatprep.subr.mxu0 0.0
    %6861 = vmatpush1.msra.mxu0 %v5592
    %6862 = vmatprep.subr.mxu0 0.0
    %6863 = vmatpush1.msra.mxu0 %v5597
    %6864 = vmatprep.subr.mxu0 0.0
    %6865 = vmatpush1.msra.mxu0 %v5602
    %6866 = vmatprep.subr.mxu0 0.0
    %6867 = vmatpush1.msra.mxu0 %v5607
    %6868 = vmatprep.subr.mxu0 0.0
    %6869 = vmatpush1.msra.mxu0 %v5612
    %6870 = vmatprep.subr.mxu0 0.0
    %6871 = vmatpush1.msra.mxu0 %v5617
    %6872 = vmatprep.subr.mxu0 0.0
    %6873 = vmatpush1.msra.mxu0 %v5622
    %6874 = vmatprep.subr.mxu0 0.0
    %6875 = vmatpush1.msra.mxu0 %v5627
    %6876 = vmatprep.subr.mxu0 0.0
    %6877 = vmatpush1.msra.mxu0 %v5632
    %6878 = vmatprep.subr.mxu0 0.0
    %6879 = vmatpush1.msra.mxu0 %v5637
    %6880 = vmatprep.subr.mxu0 0.0
    %6881 = vmatpush1.msra.mxu0 %v5642
    %6882 = vmatprep.subr.mxu0 0.0
    %6883 = vmatpush1.msra.mxu0 %v5647
    %6884 = vmatprep.subr.mxu0 0.0
    %6885 = vmatpush1.msra.mxu0 %v5652
    %6886 = vmatprep.subr.mxu0 0.0
    %6887 = vmatpush1.msra.mxu0 %v5657
    %6888 = vmatprep.subr.mxu0 0.0
    %6889 = vmatpush1.msra.mxu0 %v5662
    %6890 = vmatprep.subr.mxu0 0.0
    %6891 = vmatpush1.msra.mxu0 %v5667
    %6892 = vmatprep.subr.mxu0 0.0
    %6893 = vmatpush1.msra.mxu0 %v5672
    %6894 = vmatprep.subr.mxu0 0.0
    %6895 = vmatpush1.msra.mxu0 %v5677
    %6896 = vmatprep.subr.mxu0 0.0
    %6897 = vmatpush1.msra.mxu0 %v5682
    %6898 = vmatprep.subr.mxu0 0.0
    %6899 = vmatpush1.msra.mxu0 %v5687
    %6900 = vmatprep.subr.mxu0 0.0
    %6901 = vmatpush1.msra.mxu0 %v5692
    %6902 = vmatprep.subr.mxu0 0.0
    %6903 = vmatpush1.msra.mxu0 %v5697
    %6904 = vmatprep.subr.mxu0 0.0
    %6905 = vmatpush1.msra.mxu0 %v5702
    %6906 = vmatprep.subr.mxu0 0.0
    %6907 = vmatpush1.msra.mxu0 %v5707
    %6908 = vmatprep.subr.mxu0 0.0
    %6909 = vmatpush1.msra.mxu0 %v5712
    %6910 = vmatprep.subr.mxu0 0.0
    %6911 = vmatpush1.msra.mxu0 %v5785
    %6912 = vmatprep.subr.mxu0 0.0
    %6913 = vmatpush1.msra.mxu0 %v5790
    %6914 = vmatprep.subr.mxu0 0.0
    %6915 = vmatpush1.msra.mxu0 %v5795
    %6916 = vmatprep.mubr.f32.mxu0 %v6526
    %6917 = vmatmul.mubr.f32.gmra.mrb[0].mxu0 %v6525
    %v6918 = vpop.f32.mrb[0].mxu0
    %v6919 = vadd.f32 %v6834, %v6918
    %v6920 = vpop.f32.mrb[0].mxu0
    %6921 = vmatprep.mubr.f32.mxu0 %v6541
    %6922 = vmatmul.mubr.f32.gmra.mrb[0].mxu0 %v6540
    %v6923 = vpop.f32.mrb[0].mxu0
    %v6924 = vadd.f32 %v6839, %v6923
    %v6925 = vpop.f32.mrb[0].mxu0
    %6926 = vmatprep.mubr.f32.mxu0 %v6556
    %6927 = vmatmul.mubr.f32.gmra.mrb[0].mxu0 %v6555
    %v6928 = vpop.f32.mrb[0].mxu0
    %v6929 = vadd.f32 %v6844, %v6928
    %v6930 = vpop.f32.mrb[0].mxu0
    %6931 = vmatprep.mubr.f32.mxu0 %v6571
    %6932 = vmatmul.mubr.f32.gmra.mrb[0].mxu0 %v6570
    %v6933 = vpop.f32.mrb[0].mxu0
    %v6934 = vadd.f32 %v6849, %v6933
    %v6935 = vpop.f32.mrb[0].mxu0
    %6936 = vdwg.mxu0
    %6937 = vmatprep.subr.mxu0 0.0
    %6938 = vmatpush1.msra.mxu0 %v5800
    %6939 = vmatprep.subr.mxu0 0.0
    %6940 = vmatpush1.msra.mxu0 %v5805
    %6941 = vmatprep.subr.mxu0 0.0
    %6942 = vmatpush1.msra.mxu0 %v5810
    %6943 = vmatprep.subr.mxu0 0.0
    %6944 = vmatpush1.msra.mxu0 %v5815
    %6945 = vmatprep.subr.mxu0 0.0
    %6946 = vmatpush1.msra.mxu0 %v5820
    %6947 = vmatprep.subr.mxu0 0.0
    %6948 = vmatpush1.msra.mxu0 %v5825
    %6949 = vmatprep.subr.mxu0 0.0
    %6950 = vmatpush1.msra.mxu0 %v5830
    %6951 = vmatprep.subr.mxu0 0.0
    %6952 = vmatpush1.msra.mxu0 %v5835
    %6953 = vmatprep.subr.mxu0 0.0
    %6954 = vmatpush1.msra.mxu0 %v5840
    %6955 = vmatprep.subr.mxu0 0.0
    %6956 = vmatpush1.msra.mxu0 %v5845
    %6957 = vmatprep.subr.mxu0 0.0
    %6958 = vmatpush1.msra.mxu0 %v5850
    %6959 = vmatprep.subr.mxu0 0.0
    %6960 = vmatpush1.msra.mxu0 %v5855
    %6961 = vmatprep.subr.mxu0 0.0
    %6962 = vmatpush1.msra.mxu0 %v5860
    %6963 = vmatprep.subr.mxu0 0.0
    %6964 = vmatpush1.msra.mxu0 %v5865
    %6965 = vmatprep.subr.mxu0 0.0
    %6966 = vmatpush1.msra.mxu0 %v5870
    %6967 = vmatprep.subr.mxu0 0.0
    %6968 = vmatpush1.msra.mxu0 %v5875
    %6969 = vmatprep.subr.mxu0 0.0
    %6970 = vmatpush1.msra.mxu0 %v5880
    %6971 = vmatprep.subr.mxu0 0.0
    %6972 = vmatpush1.msra.mxu0 %v5885
    %6973 = vmatprep.subr.mxu0 0.0
    %6974 = vmatpush1.msra.mxu0 %v5890
    %6975 = vmatprep.subr.mxu0 0.0
    %6976 = vmatpush1.msra.mxu0 %v5895
    %6977 = vmatprep.subr.mxu0 0.0
    %6978 = vmatpush1.msra.mxu0 %v5900
    %6979 = vmatprep.subr.mxu0 0.0
    %6980 = vmatpush1.msra.mxu0 %v5905
    %6981 = vmatprep.subr.mxu0 0.0
    %6982 = vmatpush1.msra.mxu0 %v5978
    %6983 = vmatprep.subr.mxu0 0.0
    %6984 = vmatpush1.msra.mxu0 %v5983
    %6985 = vmatprep.subr.mxu0 0.0
    %6986 = vmatpush1.msra.mxu0 %v5988
    %6987 = vmatprep.subr.mxu0 0.0
    %6988 = vmatpush1.msra.mxu0 %v5993
    %6989 = vmatprep.subr.mxu0 0.0
    %6990 = vmatpush1.msra.mxu0 %v5998
    %6991 = vmatprep.subr.mxu0 0.0
    %6992 = vmatpush1.msra.mxu0 %v6003
    %6993 = vmatprep.subr.mxu0 0.0
    %6994 = vmatpush1.msra.mxu0 %v6008
    %6995 = vmatprep.subr.mxu0 0.0
    %6996 = vmatpush1.msra.mxu0 %v6013
    %6997 = vmatprep.subr.mxu0 0.0
    %6998 = vmatpush1.msra.mxu0 %v6018
    %6999 = vmatprep.subr.mxu0 0.0
    %7000 = vmatpush1.msra.mxu0 %v6023
    %7001 = vmatprep.mubr.f32.mxu0 %v6528
    %7002 = vmatmul.mubr.f32.gmra.mrb[0].mxu0 %v6527
    %v7003 = vpop.f32.mrb[0].mxu0
    %v7004 = vadd.f32 %v6919, %v7003
    %v7005 = vpop.f32.mrb[0].mxu0
    %7006 = vmatprep.mubr.f32.mxu0 %v6543
    %7007 = vmatmul.mubr.f32.gmra.mrb[0].mxu0 %v6542
    %v7008 = vpop.f32.mrb[0].mxu0
    %v7009 = vadd.f32 %v6924, %v7008
    %v7010 = vpop.f32.mrb[0].mxu0
    %7011 = vmatprep.mubr.f32.mxu0 %v6558
    %7012 = vmatmul.mubr.f32.gmra.mrb[0].mxu0 %v6557
    %v7013 = vpop.f32.mrb[0].mxu0
    %v7014 = vadd.f32 %v6929, %v7013
    %v7015 = vpop.f32.mrb[0].mxu0
    %7016 = vmatprep.mubr.f32.mxu0 %v6573
    %7017 = vmatmul.mubr.f32.gmra.mrb[0].mxu0 %v6572
    %v7018 = vpop.f32.mrb[0].mxu0
    %v7019 = vadd.f32 %v6934, %v7018
    %v7020 = vpop.f32.mrb[0].mxu0
    %7021 = vdwg.mxu0
    %7022 = vmatprep.subr.mxu0 0.0
    %7023 = vmatpush1.msra.mxu0 %v6028
    %7024 = vmatprep.subr.mxu0 0.0
    %7025 = vmatpush1.msra.mxu0 %v6033
    %7026 = vmatprep.subr.mxu0 0.0
    %7027 = vmatpush1.msra.mxu0 %v6038
    %7028 = vmatprep.subr.mxu0 0.0
    %7029 = vmatpush1.msra.mxu0 %v6043
    %7030 = vmatprep.subr.mxu0 0.0
    %7031 = vmatpush1.msra.mxu0 %v6048
    %7032 = vmatprep.subr.mxu0 0.0
    %7033 = vmatpush1.msra.mxu0 %v6053
    %7034 = vmatprep.subr.mxu0 0.0
    %7035 = vmatpush1.msra.mxu0 %v6058
    %7036 = vmatprep.subr.mxu0 0.0
    %7037 = vmatpush1.msra.mxu0 %v6063
    %7038 = vmatprep.subr.mxu0 0.0
    %7039 = vmatpush1.msra.mxu0 %v6068
    %7040 = vmatprep.subr.mxu0 0.0
    %7041 = vmatpush1.msra.mxu0 %v6073
    %7042 = vmatprep.subr.mxu0 0.0
    %7043 = vmatpush1.msra.mxu0 %v6078
    %7044 = vmatprep.subr.mxu0 0.0
    %7045 = vmatpush1.msra.mxu0 %v6083
    %7046 = vmatprep.subr.mxu0 0.0
    %7047 = vmatpush1.msra.mxu0 %v6088
    %7048 = vmatprep.subr.mxu0 0.0
    %7049 = vmatpush1.msra.mxu0 %v6093
    %7050 = vmatprep.subr.mxu0 0.0
    %7051 = vmatpush1.msra.mxu0 %v6098
    %7052 = vmatprep.subr.mxu0 0.0
    %7053 = vmatpush1.msra.mxu0 %v6171
    %7054 = vmatprep.subr.mxu0 0.0
    %7055 = vmatpush1.msra.mxu0 %v6176
    %7056 = vmatprep.subr.mxu0 0.0
    %7057 = vmatpush1.msra.mxu0 %v6181
    %7058 = vmatprep.subr.mxu0 0.0
    %7059 = vmatpush1.msra.mxu0 %v6186
    %7060 = vmatprep.subr.mxu0 0.0
    %7061 = vmatpush1.msra.mxu0 %v6191
    %7062 = vmatprep.subr.mxu0 0.0
    %7063 = vmatpush1.msra.mxu0 %v6196
    %7064 = vmatprep.subr.mxu0 0.0
    %7065 = vmatpush1.msra.mxu0 %v6201
    %7066 = vmatprep.subr.mxu0 0.0
    %7067 = vmatpush1.msra.mxu0 %v6206
    %7068 = vmatprep.subr.mxu0 0.0
    %7069 = vmatpush1.msra.mxu0 %v6211
    %7070 = vmatprep.subr.mxu0 0.0
    %7071 = vmatpush1.msra.mxu0 %v6216
    %7072 = vmatprep.subr.mxu0 0.0
    %7073 = vmatpush1.msra.mxu0 %v6221
    %7074 = vmatprep.subr.mxu0 0.0
    %7075 = vmatpush1.msra.mxu0 %v6226
    %7076 = vmatprep.subr.mxu0 0.0
    %7077 = vmatpush1.msra.mxu0 %v6231
    %7078 = vmatprep.subr.mxu0 0.0
    %7079 = vmatpush1.msra.mxu0 %v6236
    %7080 = vmatprep.subr.mxu0 0.0
    %7081 = vmatpush1.msra.mxu0 %v6241
    %7082 = vmatprep.subr.mxu0 0.0
    %7083 = vmatpush1.msra.mxu0 %v6246
    %7084 = vmatprep.subr.mxu0 0.0
    %7085 = vmatpush1.msra.mxu0 %v6251
    %7086 = vmatprep.mubr.f32.mxu0 %v6530
    %7087 = vmatmul.mubr.f32.gmra.mrb[0].mxu0 %v6529
    %v7088 = vpop.f32.mrb[0].mxu0
    %v7089 = vadd.f32 %v7004, %v7088
    %v7090 = vpop.f32.mrb[0].mxu0
    %7091 = vmatprep.mubr.f32.mxu0 %v6545
    %7092 = vmatmul.mubr.f32.gmra.mrb[0].mxu0 %v6544
    %v7093 = vpop.f32.mrb[0].mxu0
    %v7094 = vadd.f32 %v7009, %v7093
    %v7095 = vpop.f32.mrb[0].mxu0
    %7096 = vmatprep.mubr.f32.mxu0 %v6560
    %7097 = vmatmul.mubr.f32.gmra.mrb[0].mxu0 %v6559
    %v7098 = vpop.f32.mrb[0].mxu0
    %v7099 = vadd.f32 %v7014, %v7098
    %v7100 = vpop.f32.mrb[0].mxu0
    %7101 = vmatprep.mubr.f32.mxu0 %v6575
    %7102 = vmatmul.mubr.f32.gmra.mrb[0].mxu0 %v6574
    %v7103 = vpop.f32.mrb[0].mxu0
    %v7104 = vadd.f32 %v7019, %v7103
    %v7105 = vpop.f32.mrb[0].mxu0
    %7106 = vdwg.mxu0
    %7107 = vmatprep.subr.mxu0 0.0
    %7108 = vmatpush1.msra.mxu0 %v6256
    %7109 = vmatprep.subr.mxu0 0.0
    %7110 = vmatpush1.msra.mxu0 %v6261
    %7111 = vmatprep.subr.mxu0 0.0
    %7112 = vmatpush1.msra.mxu0 %v6266
    %7113 = vmatprep.subr.mxu0 0.0
    %7114 = vmatpush1.msra.mxu0 %v6271
    %7115 = vmatprep.subr.mxu0 0.0
    %7116 = vmatpush1.msra.mxu0 %v6276
    %7117 = vmatprep.subr.mxu0 0.0
    %7118 = vmatpush1.msra.mxu0 %v6281
    %7119 = vmatprep.subr.mxu0 0.0
    %7120 = vmatpush1.msra.mxu0 %v6286
    %7121 = vmatprep.subr.mxu0 0.0
    %7122 = vmatpush1.msra.mxu0 %v6291
    %7123 = vmatprep.subr.mxu0 0.0
    %7124 = vmatpush1.msra.mxu0 %v6364
    %7125 = vmatprep.subr.mxu0 0.0
    %7126 = vmatpush1.msra.mxu0 %v6369
    %7127 = vmatprep.subr.mxu0 0.0
    %7128 = vmatpush1.msra.mxu0 %v6374
    %7129 = vmatprep.subr.mxu0 0.0
    %7130 = vmatpush1.msra.mxu0 %v6379
    %7131 = vmatprep.subr.mxu0 0.0
    %7132 = vmatpush1.msra.mxu0 %v6384
    %7133 = vmatprep.subr.mxu0 0.0
    %7134 = vmatpush1.msra.mxu0 %v6389
    %7135 = vmatprep.subr.mxu0 0.0
    %7136 = vmatpush1.msra.mxu0 %v6394
    %7137 = vmatprep.subr.mxu0 0.0
    %7138 = vmatpush1.msra.mxu0 %v6399
    %7139 = vmatprep.subr.mxu0 0.0
    %7140 = vmatpush1.msra.mxu0 %v6404
    %7141 = vmatprep.subr.mxu0 0.0
    %7142 = vmatpush1.msra.mxu0 %v6409
    %7143 = vmatprep.subr.mxu0 0.0
    %7144 = vmatpush1.msra.mxu0 %v6414
    %7145 = vmatprep.subr.mxu0 0.0
    %7146 = vmatpush1.msra.mxu0 %v6419
    %7147 = vmatprep.subr.mxu0 0.0
    %7148 = vmatpush1.msra.mxu0 %v6424
    %7149 = vmatprep.subr.mxu0 0.0
    %7150 = vmatpush1.msra.mxu0 %v6429
    %7151 = vmatprep.subr.mxu0 0.0
    %7152 = vmatpush1.msra.mxu0 %v6434
    %7153 = vmatprep.subr.mxu0 0.0
    %7154 = vmatpush1.msra.mxu0 %v6439
    %7155 = vmatprep.subr.mxu0 0.0
    %7156 = vmatpush1.msra.mxu0 %v6444
    %7157 = vmatprep.subr.mxu0 0.0
    %7158 = vmatpush1.msra.mxu0 %v6449
    %7159 = vmatprep.subr.mxu0 0.0
    %7160 = vmatpush1.msra.mxu0 %v6454
    %7161 = vmatprep.subr.mxu0 0.0
    %7162 = vmatpush1.msra.mxu0 %v6459
    %7163 = vmatprep.subr.mxu0 0.0
    %7164 = vmatpush1.msra.mxu0 %v6464
    %7165 = vmatprep.subr.mxu0 0.0
    %7166 = vmatpush1.msra.mxu0 %v6469
    %7167 = vmatprep.subr.mxu0 0.0
    %7168 = vmatpush1.msra.mxu0 %v6474
    %7169 = vmatprep.subr.mxu0 0.0
    %7170 = vmatpush1.msra.mxu0 %v6479
    %7171 = vmatprep.mubr.f32.mxu0 %v6532
    %7172 = vmatmul.mubr.f32.gmra.mrb[0].mxu0 %v6531
    %v7173 = vpop.f32.mrb[0].mxu0
    %v7174 = vadd.f32 %v7089, %v7173
    %v7175 = vpop.f32.mrb[0].mxu0
    %7176 = vmatprep.mubr.f32.mxu0 %v6547
    %7177 = vmatmul.mubr.f32.gmra.mrb[0].mxu0 %v6546
    %v7178 = vpop.f32.mrb[0].mxu0
    %v7179 = vadd.f32 %v7094, %v7178
    %v7180 = vpop.f32.mrb[0].mxu0
    %7181 = vmatprep.mubr.f32.mxu0 %v6562
    %7182 = vmatmul.mubr.f32.gmra.mrb[0].mxu0 %v6561
    %v7183 = vpop.f32.mrb[0].mxu0
    %v7184 = vadd.f32 %v7099, %v7183
    %v7185 = vpop.f32.mrb[0].mxu0
    %7186 = vmatprep.mubr.f32.mxu0 %v6577
    %7187 = vmatmul.mubr.f32.gmra.mrb[0].mxu0 %v6576
    %v7188 = vpop.f32.mrb[0].mxu0
    %v7189 = vadd.f32 %v7104, %v7188
    %v7190 = vpop.f32.mrb[0].mxu0
    %7191 = vdwg.mxu0
    %7192 = vmatprep.subr.mxu0 0.0
    %7193 = vmatpush1.msra.mxu0 %v6484
    %7194 = vmatprep.subr.mxu0 0.0
    %7195 = vmatpush1.msra.mxu0 0.0
    %7196 = vmatprep.subr.mxu0 0.0
    %7197 = vmatpush1.msra.mxu0 0.0
    %7198 = vmatprep.subr.mxu0 0.0
    %7199 = vmatpush1.msra.mxu0 0.0
    %7200 = vmatprep.subr.mxu0 0.0
    %7201 = vmatpush1.msra.mxu0 0.0
    %7202 = vmatprep.subr.mxu0 0.0
    %7203 = vmatpush1.msra.mxu0 0.0
    %7204 = vmatprep.subr.mxu0 0.0
    %7205 = vmatpush1.msra.mxu0 0.0
    %7206 = vmatprep.subr.mxu0 0.0
    %7207 = vmatpush1.msra.mxu0 0.0
    %7208 = vmatprep.subr.mxu0 0.0
    %7209 = vmatpush1.msra.mxu0 0.0
    %7210 = vmatprep.subr.mxu0 0.0
    %7211 = vmatpush1.msra.mxu0 0.0
    %7212 = vmatprep.subr.mxu0 0.0
    %7213 = vmatpush1.msra.mxu0 0.0
    %7214 = vmatprep.subr.mxu0 0.0
    %7215 = vmatpush1.msra.mxu0 0.0
    %7216 = vmatprep.subr.mxu0 0.0
    %7217 = vmatpush1.msra.mxu0 0.0
    %7218 = vmatprep.subr.mxu0 0.0
    %7219 = vmatpush1.msra.mxu0 0.0
    %7220 = vmatprep.subr.mxu0 0.0
    %7221 = vmatpush1.msra.mxu0 0.0
    %7222 = vmatprep.subr.mxu0 0.0
    %7223 = vmatpush1.msra.mxu0 0.0
    %7224 = vmatprep.subr.mxu0 0.0
    %7225 = vmatpush1.msra.mxu0 0.0
    %7226 = vmatprep.subr.mxu0 0.0
    %7227 = vmatpush1.msra.mxu0 0.0
    %7228 = vmatprep.subr.mxu0 0.0
    %7229 = vmatpush1.msra.mxu0 0.0
    %7230 = vmatprep.subr.mxu0 0.0
    %7231 = vmatpush1.msra.mxu0 0.0
    %7232 = vmatprep.subr.mxu0 0.0
    %7233 = vmatpush1.msra.mxu0 0.0
    %7234 = vmatprep.subr.mxu0 0.0
    %7235 = vmatpush1.msra.mxu0 0.0
    %7236 = vmatprep.subr.mxu0 0.0
    %7237 = vmatpush1.msra.mxu0 0.0
    %7238 = vmatprep.subr.mxu0 0.0
    %7239 = vmatpush1.msra.mxu0 0.0
    %7240 = vmatprep.subr.mxu0 0.0
    %7241 = vmatpush1.msra.mxu0 0.0
    %7242 = vmatprep.subr.mxu0 0.0
    %7243 = vmatpush1.msra.mxu0 0.0
    %7244 = vmatprep.subr.mxu0 0.0
    %7245 = vmatpush1.msra.mxu0 0.0
    %7246 = vmatprep.subr.mxu0 0.0
    %7247 = vmatpush1.msra.mxu0 0.0
    %7248 = vmatprep.subr.mxu0 0.0
    %7249 = vmatpush1.msra.mxu0 0.0
    %7250 = vmatprep.subr.mxu0 0.0
    %7251 = vmatpush1.msra.mxu0 0.0
    %7252 = vmatprep.subr.mxu0 0.0
    %7253 = vmatpush1.msra.mxu0 0.0
    %7254 = vmatprep.subr.mxu0 0.0
    %7255 = vmatpush1.msra.mxu0 0.0
    %7256 = vmatprep.mubr.f32.mxu0 0.0
    %7257 = vmatmul.mubr.f32.gmra.mrb[0].mxu0 %v6586
    %v7258 = vpop.f32.mrb[0].mxu0
    %v7259 = vadd.f32 %v7174, %v7258
    %v7260 = vpop.f32.mrb[0].mxu0
    %7261 = vmatprep.mubr.f32.mxu0 0.0
    %7262 = vmatmul.mubr.f32.gmra.mrb[0].mxu0 %v6589
    %v7263 = vpop.f32.mrb[0].mxu0
    %v7264 = vadd.f32 %v7179, %v7263
    %v7265 = vpop.f32.mrb[0].mxu0
    %7266 = vmatprep.mubr.f32.mxu0 0.0
    %7267 = vmatmul.mubr.f32.gmra.mrb[0].mxu0 %v6592
    %v7268 = vpop.f32.mrb[0].mxu0
    %v7269 = vadd.f32 %v7184, %v7268
    %v7270 = vpop.f32.mrb[0].mxu0
    %7271 = vmatprep.mubr.f32.mxu0 0.0
    %7272 = vmatmul.mubr.f32.gmra.mrb[0].mxu0 %v6595
    %v7273 = vpop.f32.mrb[0].mxu0
    %v7274 = vadd.f32 %v7189, %v7273
    %v7275 = vpop.f32.mrb[0].mxu0
    %7276 = vdwg.mxu0
    %v7277 = vmax.f32 %v7259, 0.0
    %v7278 = vmax.f32 %v7264, 0.0
    %v7279 = vmax.f32 %v7269, 0.0
    %v7280 = vmax.f32 %v7274, 0.0
    %v7281 = vld [vmem:[%s5] sm:$0x3]
    %vm7282 = vcmask 261120
    %v7284 = vsel %vm7282, %v7281, 0
    %7286 = vmatprep.subr.mxu0 0.0
    %7287 = vmatpush1.msra.mxu0 %v7277
    %7288 = vmatprep.subr.mxu0 0.0
    %7289 = vmatpush1.msra.mxu0 %v7278
    %7290 = vmatprep.subr.mxu0 0.0
    %7291 = vmatpush1.msra.mxu0 %v7279
    %7292 = vmatprep.subr.mxu0 0.0
    %7293 = vmatpush1.msra.mxu0 %v7280
    %7294 = vmatprep.subr.mxu0 0.0
    %7295 = vmatpush1.msra.mxu0 0.0
    %7296 = vmatprep.subr.mxu0 0.0
    %7297 = vmatpush1.msra.mxu0 0.0
    %7298 = vmatprep.subr.mxu0 0.0
    %7299 = vmatpush1.msra.mxu0 0.0
    %7300 = vmatprep.subr.mxu0 0.0
    %7301 = vmatpush1.msra.mxu0 0.0
    %7302 = vmatprep.subr.mxu0 0.0
    %7303 = vmatpush1.msra.mxu0 0.0
    %7304 = vmatprep.subr.mxu0 0.0
    %7305 = vmatpush1.msra.mxu0 0.0
    %7306 = vmatprep.subr.mxu0 0.0
    %7307 = vmatpush1.msra.mxu0 0.0
    %7308 = vmatprep.subr.mxu0 0.0
    %7309 = vmatpush1.msra.mxu0 0.0
    %7310 = vmatprep.subr.mxu0 0.0
    %7311 = vmatpush1.msra.mxu0 0.0
    %7312 = vmatprep.subr.mxu0 0.0
    %7313 = vmatpush1.msra.mxu0 0.0
    %7314 = vmatprep.subr.mxu0 0.0
    %7315 = vmatpush1.msra.mxu0 0.0
    %7316 = vmatprep.subr.mxu0 0.0
    %7317 = vmatpush1.msra.mxu0 0.0
    %7318 = vmatprep.subr.mxu0 0.0
    %7319 = vmatpush1.msra.mxu0 0.0
    %7320 = vmatprep.subr.mxu0 0.0
    %7321 = vmatpush1.msra.mxu0 0.0
    %7322 = vmatprep.subr.mxu0 0.0
    %7323 = vmatpush1.msra.mxu0 0.0
    %7324 = vmatprep.subr.mxu0 0.0
    %7325 = vmatpush1.msra.mxu0 0.0
    %7326 = vmatprep.subr.mxu0 0.0
    %7327 = vmatpush1.msra.mxu0 0.0
    %7328 = vmatprep.subr.mxu0 0.0
    %7329 = vmatpush1.msra.mxu0 0.0
    %7330 = vmatprep.subr.mxu0 0.0
    %7331 = vmatpush1.msra.mxu0 0.0
    %7332 = vmatprep.subr.mxu0 0.0
    %7333 = vmatpush1.msra.mxu0 0.0
    %7334 = vmatprep.subr.mxu0 0.0
    %7335 = vmatpush1.msra.mxu0 0.0
    %7336 = vmatprep.subr.mxu0 0.0
    %7337 = vmatpush1.msra.mxu0 0.0
    %7338 = vmatprep.subr.mxu0 0.0
    %7339 = vmatpush1.msra.mxu0 0.0
    %7340 = vmatprep.subr.mxu0 0.0
    %7341 = vmatpush1.msra.mxu0 0.0
    %7342 = vmatprep.subr.mxu0 0.0
    %7343 = vmatpush1.msra.mxu0 0.0
    %7344 = vmatprep.subr.mxu0 0.0
    %7345 = vmatpush1.msra.mxu0 0.0
    %7346 = vmatprep.subr.mxu0 0.0
    %7347 = vmatpush1.msra.mxu0 0.0
    %7348 = vmatprep.subr.mxu0 0.0
    %7349 = vmatpush1.msra.mxu0 0.0
    %7350 = vmatprep.mubr.f32.mxu0 0.0
    %7351 = vmatmul.mubr.f32.gmra.mrb[0].mxu0 %v7284
    %v7352 = vpop.f32.mrb[0].mxu0
    %v7353 = vadd.f32 0.0, %v7352
    %v7354 = vpop.f32.mrb[0].mxu0
    %7355 = vdwg.mxu0
    %vm7356 = vcmask 123904
    %v7357 = vsel %vm7356, %v7353, -inf
    %v7358 = vrot.slane %v7357, 4
    %v7359 = vmax.f32 %v7357, %v7358
    %v7360 = vrot.slane %v7359, 2
    %v7361 = vmax.f32 %v7359, %v7360
    %v7362 = vrot.slane %v7361, 1
    %v7363 = vmax.f32 %v7361, %v7362
    %v7364 = vsel %vm7356, %v7353, 0.0
    %v7365 = vrot.slane %v7364, 4
    %v7366 = vadd.f32 %v7364, %v7365
    %v7367 = vrot.slane %v7366, 2
    %v7368 = vadd.f32 %v7366, %v7367
    %v7369 = vrot.slane %v7368, 1
    %v7370 = vadd.f32 %v7368, %v7369
    %v7371 = vrcp.pop 2.0
    %v7372 = vmul.f32 %v7370, %v7371
    %v7373 = vadd.f32 %v7363, %v7372
    %vm7374 = vcmask 255104
    %v7375 = vsel %vm7374, %v7353, -inf
    %v7376 = vrot.slane %v7375, 4
    %v7377 = vmax.f32 %v7375, %v7376
    %v7378 = vrot.slane %v7377, 2
    %v7379 = vmax.f32 %v7377, %v7378
    %v7380 = vrot.slane %v7379, 1
    %v7381 = vmax.f32 %v7379, %v7380
    %v7382 = vsel %vm7374, %v7353, 0.0
    %v7383 = vrot.slane %v7382, 4
    %v7384 = vadd.f32 %v7382, %v7383
    %v7385 = vrot.slane %v7384, 2
    %v7386 = vadd.f32 %v7384, %v7385
    %v7387 = vrot.slane %v7386, 1
    %v7388 = vadd.f32 %v7386, %v7387
    %v7389 = vmul.f32 %v7388, %v7371
    %v7390 = vadd.f32 %v7381, %v7389
    %7392 = vrot.lane.b32.xlu0 %v7390, 112
    %v7393 = vpop.permute.xlu0 %7392
    %vm7395 = vcmask 1040384
    %v7396 = vsel %vm7395, %v7373, %v7393
    %v7397 = vld [vmem:[%s8 + $0x2] sm:$0x1]
    %v7398 = vld [vmem:[%s6] sm:$0xff]
    %v7399 = vld [vmem:[%s6 + $0x8] sm:$0xff]
    %v7400 = vlaneseq
    %v7401 = vshrl.u32 %v7400, 7
    %v7402 = vsub.s32 0, %v7401
    %v7403 = vrot.slane %v7397, %v7402
    %v7405 = vsel %vm4677, %v7396, 0
    %7407 = vmatprep.subr.mxu0 0.0
    %7408 = vmatpush1.msra.mxu0 %v7398
    %7409 = vmatprep.subr.mxu0 0.0
    %7410 = vmatpush1.msra.mxu0 %v7399
    %7411 = vmatprep.subr.mxu0 0.0
    %7412 = vmatpush1.msra.mxu0 0.0
    %7413 = vmatprep.subr.mxu0 0.0
    %7414 = vmatpush1.msra.mxu0 0.0
    %7415 = vmatprep.subr.mxu0 0.0
    %7416 = vmatpush1.msra.mxu0 0.0
    %7417 = vmatprep.subr.mxu0 0.0
    %7418 = vmatpush1.msra.mxu0 0.0
    %7419 = vmatprep.subr.mxu0 0.0
    %7420 = vmatpush1.msra.mxu0 0.0
    %7421 = vmatprep.subr.mxu0 0.0
    %7422 = vmatpush1.msra.mxu0 0.0
    %7423 = vmatprep.subr.mxu0 0.0
    %7424 = vmatpush1.msra.mxu0 0.0
    %7425 = vmatprep.subr.mxu0 0.0
    %7426 = vmatpush1.msra.mxu0 0.0
    %7427 = vmatprep.subr.mxu0 0.0
    %7428 = vmatpush1.msra.mxu0 0.0
    %7429 = vmatprep.subr.mxu0 0.0
    %7430 = vmatpush1.msra.mxu0 0.0
    %7431 = vmatprep.subr.mxu0 0.0
    %7432 = vmatpush1.msra.mxu0 0.0
    %7433 = vmatprep.subr.mxu0 0.0
    %7434 = vmatpush1.msra.mxu0 0.0
    %7435 = vmatprep.subr.mxu0 0.0
    %7436 = vmatpush1.msra.mxu0 0.0
    %7437 = vmatprep.subr.mxu0 0.0
    %7438 = vmatpush1.msra.mxu0 0.0
    %7439 = vmatprep.subr.mxu0 0.0
    %7440 = vmatpush1.msra.mxu0 0.0
    %7441 = vmatprep.subr.mxu0 0.0
    %7442 = vmatpush1.msra.mxu0 0.0
    %7443 = vmatprep.subr.mxu0 0.0
    %7444 = vmatpush1.msra.mxu0 0.0
    %7445 = vmatprep.subr.mxu0 0.0
    %7446 = vmatpush1.msra.mxu0 0.0
    %7447 = vmatprep.subr.mxu0 0.0
    %7448 = vmatpush1.msra.mxu0 0.0
    %7449 = vmatprep.subr.mxu0 0.0
    %7450 = vmatpush1.msra.mxu0 0.0
    %7451 = vmatprep.subr.mxu0 0.0
    %7452 = vmatpush1.msra.mxu0 0.0
    %7453 = vmatprep.subr.mxu0 0.0
    %7454 = vmatpush1.msra.mxu0 0.0
    %7455 = vmatprep.subr.mxu0 0.0
    %7456 = vmatpush1.msra.mxu0 0.0
    %7457 = vmatprep.subr.mxu0 0.0
    %7458 = vmatpush1.msra.mxu0 0.0
    %7459 = vmatprep.subr.mxu0 0.0
    %7460 = vmatpush1.msra.mxu0 0.0
    %7461 = vmatprep.subr.mxu0 0.0
    %7462 = vmatpush1.msra.mxu0 0.0
    %7463 = vmatprep.subr.mxu0 0.0
    %7464 = vmatpush1.msra.mxu0 0.0
    %7465 = vmatprep.subr.mxu0 0.0
    %7466 = vmatpush1.msra.mxu0 0.0
    %7467 = vmatprep.subr.mxu0 0.0
    %7468 = vmatpush1.msra.mxu0 0.0
    %7469 = vmatprep.subr.mxu0 0.0
    %7470 = vmatpush1.msra.mxu0 0.0
    %7471 = vmatprep.mubr.f32.mxu0 0.0
    %7472 = vmatmul.mubr.f32.gmra.mrb[0].mxu0 %v7405
    %v7473 = vpop.f32.mrb[0].mxu0
    %v7474 = vadd.f32 %v7403, %v7473
    %v7475 = vpop.f32.mrb[0].mxu0
    %7476 = vdwg.mxu0
    %v7477 = vmax.f32 %v7474, 0.0
    %v7478 = vld [vmem:[%s8 + $0x3] sm:$0x1]
    %v7479 = vld [vmem:[%s7] sm:$0xff]
    %v7480 = vld [vmem:[%s7 + $0x8] sm:$0xff]
    %v7481 = vld [vmem:[%s7 + $0x10] sm:$0xff]
    %v7482 = vld [vmem:[%s7 + $0x18] sm:$0xff]
    %v7483 = vlaneseq
    %v7484 = vshrl.u32 %v7483, 7
    %v7485 = vsub.s32 0, %v7484
    %v7486 = vrot.slane %v7478, %v7485
    %v7488 = vsel %vm7282, %v7477, 0
    %7490 = vmatprep.subr.mxu0 0.0
    %7491 = vmatpush1.msra.mxu0 %v7479
    %7492 = vmatprep.subr.mxu0 0.0
    %7493 = vmatpush1.msra.mxu0 %v7480
    %7494 = vmatprep.subr.mxu0 0.0
    %7495 = vmatpush1.msra.mxu0 %v7481
    %7496 = vmatprep.subr.mxu0 0.0
    %7497 = vmatpush1.msra.mxu0 %v7482
    %7498 = vmatprep.subr.mxu0 0.0
    %7499 = vmatpush1.msra.mxu0 0.0
    %7500 = vmatprep.subr.mxu0 0.0
    %7501 = vmatpush1.msra.mxu0 0.0
    %7502 = vmatprep.subr.mxu0 0.0
    %7503 = vmatpush1.msra.mxu0 0.0
    %7504 = vmatprep.subr.mxu0 0.0
    %7505 = vmatpush1.msra.mxu0 0.0
    %7506 = vmatprep.subr.mxu0 0.0
    %7507 = vmatpush1.msra.mxu0 0.0
    %7508 = vmatprep.subr.mxu0 0.0
    %7509 = vmatpush1.msra.mxu0 0.0
    %7510 = vmatprep.subr.mxu0 0.0
    %7511 = vmatpush1.msra.mxu0 0.0
    %7512 = vmatprep.subr.mxu0 0.0
    %7513 = vmatpush1.msra.mxu0 0.0
    %7514 = vmatprep.subr.mxu0 0.0
    %7515 = vmatpush1.msra.mxu0 0.0
    %7516 = vmatprep.subr.mxu0 0.0
    %7517 = vmatpush1.msra.mxu0 0.0
    %7518 = vmatprep.subr.mxu0 0.0
    %7519 = vmatpush1.msra.mxu0 0.0
    %7520 = vmatprep.subr.mxu0 0.0
    %7521 = vmatpush1.msra.mxu0 0.0
    %7522 = vmatprep.subr.mxu0 0.0
    %7523 = vmatpush1.msra.mxu0 0.0
    %7524 = vmatprep.subr.mxu0 0.0
    %7525 = vmatpush1.msra.mxu0 0.0
    %7526 = vmatprep.subr.mxu0 0.0
    %7527 = vmatpush1.msra.mxu0 0.0
    %7528 = vmatprep.subr.mxu0 0.0
    %7529 = vmatpush1.msra.mxu0 0.0
    %7530 = vmatprep.subr.mxu0 0.0
    %7531 = vmatpush1.msra.mxu0 0.0
    %7532 = vmatprep.subr.mxu0 0.0
    %7533 = vmatpush1.msra.mxu0 0.0
    %7534 = vmatprep.subr.mxu0 0.0
    %7535 = vmatpush1.msra.mxu0 0.0
    %7536 = vmatprep.subr.mxu0 0.0
    %7537 = vmatpush1.msra.mxu0 0.0
    %7538 = vmatprep.subr.mxu0 0.0
    %7539 = vmatpush1.msra.mxu0 0.0
    %7540 = vmatprep.subr.mxu0 0.0
    %7541 = vmatpush1.msra.mxu0 0.0
    %7542 = vmatprep.subr.mxu0 0.0
    %7543 = vmatpush1.msra.mxu0 0.0
    %7544 = vmatprep.subr.mxu0 0.0
    %7545 = vmatpush1.msra.mxu0 0.0
    %7546 = vmatprep.subr.mxu0 0.0
    %7547 = vmatpush1.msra.mxu0 0.0
    %7548 = vmatprep.subr.mxu0 0.0
    %7549 = vmatpush1.msra.mxu0 0.0
    %7550 = vmatprep.subr.mxu0 0.0
    %7551 = vmatpush1.msra.mxu0 0.0
    %7552 = vmatprep.subr.mxu0 0.0
    %7553 = vmatpush1.msra.mxu0 0.0
    %7554 = vmatprep.mubr.f32.mxu0 0.0
    %7555 = vmatmul.mubr.f32.gmra.mrb[0].mxu0 %v7488
    %v7556 = vpop.f32.mrb[0].mxu0
    %v7557 = vadd.f32 %v7486, %v7556
    %v7558 = vpop.f32.mrb[0].mxu0
    %7559 = vdwg.mxu0
    %vm7560 = vcmask 74752
    %7561 = vst.msk [vmem:[#allocation7] sm:$0x3] %vm7560, %v7557
    // Predicated region
    $region46: #{tpu_custom_call.1} parent=1 // pred_check
      _
    $region47: #{tpu_custom_call.1} parent=1 // pred_check_branch
      %7563 = sbr.rel (0) target = $region49
    $region48: #{tpu_custom_call.1} parent=1 // pred_region
      %s7565 = ssub.s32 32, 32
      %7566 = vsyncadd [#allocation4], %s7565
      %s7568 = sshll.u32 [#allocation7], 4
      %s7569 = int_to_ptr.vmem [resolvable:$true] %s7568
      %7571 = dma.vmem_to_hbm [thread:$0]  %s7569, 32, %s9, [#allocation4]
    $region49: #{tpu_custom_call.1} parent=1 // pred_fallthru
      _
    // Predicated region
    $region50: #{tpu_custom_call.1} parent=1 // pred_check
      _
    $region51: #{tpu_custom_call.1} parent=1 // pred_check_branch
      %7573 = sbr.rel (0) target = $region53
    $region52: #{tpu_custom_call.1} parent=1 // pred_region
      %7574 = dma.done [#allocation4], 32
    $region53: #{tpu_custom_call.1} parent=1 // pred_fallthru
      _
    %7575 = vsyncpa [#allocation3], 1
    %7576 = vsyncpa [#allocation6], 1
    %7577 = vsyncpa [#allocation4], 1

</llo_original>
